<compile_context>
chip_gen: v7x
topology: tpu7x:2x2x1
jax: 0.10.0
libtpu: 0.0.40
codegen_flags: <defaults>
</compile_context>

<pallas_src>
import functools

import jax
import jax.numpy as jnp
from jax.experimental import pallas as pl
from jax.experimental.pallas import tpu as pltpu

_BN_EPS = 1e-5
_PARALLEL = pltpu.CompilerParams(dimension_semantics=("parallel",))


# ---------------------------- Pallas kernels ----------------------------

def _matmul_stats_kernel(x_ref, w_ref, o_ref, s1_ref, s2_ref, *, nrows):
    # out = x @ w  (bf16 MXU, f32 acc) + per-block sum / sumsq of the output.
    i = pl.program_id(0)
    tm = x_ref.shape[0]
    row = i * tm + jax.lax.broadcasted_iota(jnp.int32, (tm, 1), 0)
    valid = row < nrows
    x = jnp.where(valid, x_ref[...], 0).astype(jnp.bfloat16)
    out = jnp.dot(x, w_ref[...], preferred_element_type=jnp.float32)
    o_ref[...] = out
    s1_ref[0] = jnp.sum(out, axis=0, keepdims=True)
    s2_ref[0] = jnp.sum(out * out, axis=0, keepdims=True)


def _bnrelu_matmul_stats_kernel(x_ref, m_ref, scale_ref, shift_ref, w_ref,
                                o_ref, s1_ref, s2_ref, *, nrows):
    # Fused 1x1 conv: relu(x*scale+shift) masked at spatial-pad border rows,
    # bf16 matmul, BN-stats epilogue of the output.
    i = pl.program_id(0)
    tm = x_ref.shape[0]
    row = i * tm + jax.lax.broadcasted_iota(jnp.int32, (tm, 1), 0)
    valid = row < nrows
    a = jnp.maximum(x_ref[...] * scale_ref[...] + shift_ref[...], 0.0)
    a = a * m_ref[...]                       # keep zero-border rows exactly 0
    a = jnp.where(valid, a, 0.0).astype(jnp.bfloat16)
    out = jnp.dot(a, w_ref[...], preferred_element_type=jnp.float32)
    o_ref[...] = out
    s1_ref[0] = jnp.sum(out, axis=0, keepdims=True)
    s2_ref[0] = jnp.sum(out * out, axis=0, keepdims=True)


def _conv3x3_kernel(x_ref, m_ref, scale_ref, shift_ref, w_ref,
                    o_ref, s1_ref, s2_ref, buf_ref, *, wp):
    # One padded-flat image per grid step.
    #   x_ref : (1, P, C) f32, P=(H+2)*(W+2), zero spatial border (pre-BN)
    #   w_ref : (9, C, G) bf16, tap t = di*3 + dj
    # 3x3 conv == sum over 9 taps of a constant row-shift (off) + 1x1 matmul.
    p = x_ref.shape[1]
    g = o_ref.shape[2]
    halo = wp + 1                                        # max |row shift|
    a = jnp.maximum(x_ref[0] * scale_ref[...] + shift_ref[...], 0.0)
    a = a * m_ref[...]                                   # border rows -> 0
    buf_ref[...] = jnp.zeros_like(buf_ref)
    buf_ref[halo:halo + p, :] = a
    acc = jnp.zeros((p, g), jnp.float32)
    for t in range(9):
        off = (t // 3 - 1) * wp + (t % 3 - 1)
        win = buf_ref[halo + off:halo + off + p, :].astype(jnp.bfloat16)
        acc = acc + jnp.dot(win, w_ref[t], preferred_element_type=jnp.float32)
    acc = acc * m_ref[...]                               # keep zero-border invariant
    o_ref[0] = acc
    s1_ref[0] = jnp.sum(acc, axis=0, keepdims=True)
    s2_ref[0] = jnp.sum(acc * acc, axis=0, keepdims=True)


def _bnrelu_kernel(x_ref, scale_ref, shift_ref, o_ref):
    o_ref[...] = jnp.maximum(x_ref[...] * scale_ref[...] + shift_ref[...], 0.0)


def _stats_kernel(x_ref, s1_ref, s2_ref, *, nrows):
    i = pl.program_id(0)
    tm = x_ref.shape[0]
    row = i * tm + jax.lax.broadcasted_iota(jnp.int32, (tm, 1), 0)
    x = jnp.where(row < nrows, x_ref[...], 0.0)
    s1_ref[0] = jnp.sum(x, axis=0, keepdims=True)
    s2_ref[0] = jnp.sum(x * x, axis=0, keepdims=True)


def _head_kernel(x_ref, m_ref, scale_ref, shift_ref, w_ref, b_ref, o_ref, *, inv_hw):
    # norm5 -> relu -> global avg pool -> linear, one image per grid step.
    a = jnp.maximum(x_ref[0] * scale_ref[...] + shift_ref[...], 0.0) * m_ref[...]
    pooled = jnp.sum(a, axis=0, keepdims=True) * inv_hw           # (1, C)
    o_ref[0] = jnp.dot(pooled, w_ref[...],
                       preferred_element_type=jnp.float32) + b_ref[...]


# ---------------------------- Pallas wrappers ----------------------------

def _round_up(x, m):
    return ((x + m - 1) // m) * m


def _row_tile(r):
    return min(512, _round_up(r, 8))


def pallas_matmul_stats(x_bf16, w_bf16):
    r, k = x_bf16.shape
    cout = w_bf16.shape[1]
    tm = _row_tile(r)
    gm = pl.cdiv(r, tm)
    out, s1, s2 = pl.pallas_call(
        functools.partial(_matmul_stats_kernel, nrows=r),
        out_shape=(jax.ShapeDtypeStruct((r, cout), jnp.float32),
                   jax.ShapeDtypeStruct((gm, 1, cout), jnp.float32),
                   jax.ShapeDtypeStruct((gm, 1, cout), jnp.float32)),
        grid=(gm,),
        in_specs=[pl.BlockSpec((tm, k), lambda i: (i, 0)),
                  pl.BlockSpec((k, cout), lambda i: (0, 0))],
        out_specs=(pl.BlockSpec((tm, cout), lambda i: (i, 0)),
                   pl.BlockSpec((1, 1, cout), lambda i: (i, 0, 0)),
                   pl.BlockSpec((1, 1, cout), lambda i: (i, 0, 0))),
        compiler_params=_PARALLEL,
    )(x_bf16, w_bf16)
    return out, jnp.sum(s1, axis=(0, 1)), jnp.sum(s2, axis=(0, 1))


def pallas_bnrelu_conv1x1(x2d, mask2d, scale, shift, w_bf16):
    r, cin = x2d.shape
    cout = w_bf16.shape[1]
    tm = _row_tile(r)
    gm = pl.cdiv(r, tm)
    out, s1, s2 = pl.pallas_call(
        functools.partial(_bnrelu_matmul_stats_kernel, nrows=r),
        out_shape=(jax.ShapeDtypeStruct((r, cout), jnp.float32),
                   jax.ShapeDtypeStruct((gm, 1, cout), jnp.float32),
                   jax.ShapeDtypeStruct((gm, 1, cout), jnp.float32)),
        grid=(gm,),
        in_specs=[pl.BlockSpec((tm, cin), lambda i: (i, 0)),
                  pl.BlockSpec((tm, 1), lambda i: (i, 0)),
                  pl.BlockSpec((1, cin), lambda i: (0, 0)),
                  pl.BlockSpec((1, cin), lambda i: (0, 0)),
                  pl.BlockSpec((cin, cout), lambda i: (0, 0))],
        out_specs=(pl.BlockSpec((tm, cout), lambda i: (i, 0)),
                   pl.BlockSpec((1, 1, cout), lambda i: (i, 0, 0)),
                   pl.BlockSpec((1, 1, cout), lambda i: (i, 0, 0))),
        compiler_params=_PARALLEL,
    )(x2d, mask2d, scale.reshape(1, cin), shift.reshape(1, cin), w_bf16)
    return out, jnp.sum(s1, axis=(0, 1)), jnp.sum(s2, axis=(0, 1))


def pallas_conv3x3(x3d, mask_p, scale, shift, w_taps_bf16, wp):
    n, p, c = x3d.shape
    g = w_taps_bf16.shape[2]
    halo = wp + 1
    out, s1, s2 = pl.pallas_call(
        functools.partial(_conv3x3_kernel, wp=wp),
        out_shape=(jax.ShapeDtypeStruct((n, p, g), jnp.float32),
                   jax.ShapeDtypeStruct((n, 1, g), jnp.float32),
                   jax.ShapeDtypeStruct((n, 1, g), jnp.float32)),
        grid=(n,),
        in_specs=[pl.BlockSpec((1, p, c), lambda i: (i, 0, 0)),
                  pl.BlockSpec((p, 1), lambda i: (0, 0)),
                  pl.BlockSpec((1, c), lambda i: (0, 0)),
                  pl.BlockSpec((1, c), lambda i: (0, 0)),
                  pl.BlockSpec((9, c, g), lambda i: (0, 0, 0))],
        out_specs=(pl.BlockSpec((1, p, g), lambda i: (i, 0, 0)),
                   pl.BlockSpec((1, 1, g), lambda i: (i, 0, 0)),
                   pl.BlockSpec((1, 1, g), lambda i: (i, 0, 0))),
        scratch_shapes=[pltpu.VMEM((p + 2 * halo, c), jnp.float32)],
        compiler_params=_PARALLEL,
    )(x3d, mask_p, scale.reshape(1, c), shift.reshape(1, c), w_taps_bf16)
    return out, jnp.sum(s1, axis=(0, 1)), jnp.sum(s2, axis=(0, 1))


def pallas_bnrelu(x2d, scale, shift):
    r, c = x2d.shape
    tm = _row_tile(r)
    gm = pl.cdiv(r, tm)
    return pl.pallas_call(
        _bnrelu_kernel,
        out_shape=jax.ShapeDtypeStruct((r, c), jnp.float32),
        grid=(gm,),
        in_specs=[pl.BlockSpec((tm, c), lambda i: (i, 0)),
                  pl.BlockSpec((1, c), lambda i: (0, 0)),
                  pl.BlockSpec((1, c), lambda i: (0, 0))],
        out_specs=pl.BlockSpec((tm, c), lambda i: (i, 0)),
        compiler_params=_PARALLEL,
    )(x2d, scale.reshape(1, c), shift.reshape(1, c))


def pallas_stats(x2d):
    r, c = x2d.shape
    tm = _row_tile(r)
    gm = pl.cdiv(r, tm)
    s1, s2 = pl.pallas_call(
        functools.partial(_stats_kernel, nrows=r),
        out_shape=(jax.ShapeDtypeStruct((gm, 1, c), jnp.float32),
                   jax.ShapeDtypeStruct((gm, 1, c), jnp.float32)),
        grid=(gm,),
        in_specs=[pl.BlockSpec((tm, c), lambda i: (i, 0))],
        out_specs=(pl.BlockSpec((1, 1, c), lambda i: (i, 0, 0)),
                   pl.BlockSpec((1, 1, c), lambda i: (i, 0, 0))),
        compiler_params=_PARALLEL,
    )(x2d)
    return jnp.sum(s1, axis=(0, 1)), jnp.sum(s2, axis=(0, 1))


def pallas_head(x3d, mask_p, scale, shift, w_cls, b_cls, hw):
    n, p, c = x3d.shape
    nc = b_cls.shape[0]
    out = pl.pallas_call(
        functools.partial(_head_kernel, inv_hw=1.0 / float(hw)),
        out_shape=jax.ShapeDtypeStruct((n, 1, nc), jnp.float32),
        grid=(n,),
        in_specs=[pl.BlockSpec((1, p, c), lambda i: (i, 0, 0)),
                  pl.BlockSpec((p, 1), lambda i: (0, 0)),
                  pl.BlockSpec((1, c), lambda i: (0, 0)),
                  pl.BlockSpec((1, c), lambda i: (0, 0)),
                  pl.BlockSpec((c, nc), lambda i: (0, 0)),
                  pl.BlockSpec((1, nc), lambda i: (0, 0))],
        out_specs=pl.BlockSpec((1, 1, nc), lambda i: (i, 0, 0)),
        compiler_params=_PARALLEL,
    )(x3d, mask_p, scale.reshape(1, c), shift.reshape(1, c),
      w_cls.T, b_cls.reshape(1, nc))
    return out.reshape(n, nc)


# ---------------------------- plain-JAX glue ----------------------------

def _bn_scale_shift_from_sums(s1, s2, gamma, beta, count, eps=_BN_EPS):
    """Training-mode BN (biased variance) from one-pass sums of the activation."""
    mean = s1 / count
    var = jnp.maximum(s2 / count - mean * mean, 0.0)
    scale = gamma * jax.lax.rsqrt(var + eps)
    shift = beta - mean * scale
    return scale, shift


def _to_padded_flat(x_nhwc):
    # (N,H,W,C) -> (N, (H+2)*(W+2), C), zero spatial border (invariant kept
    # by all kernels so 3x3 zero-padding and BN stats stay exact).
    n, h, w, c = x_nhwc.shape
    xp = jnp.pad(x_nhwc, ((0, 0), (1, 1), (1, 1), (0, 0)))
    return xp.reshape(n, (h + 2) * (w + 2), c)


def _from_padded_flat(x3d, h, w):
    n, p, c = x3d.shape
    return x3d.reshape(n, h + 2, w + 2, c)[:, 1:h + 1, 1:w + 1, :]


def _border_mask(h, w):
    hp, wp = h + 2, w + 2
    row = jnp.arange(hp * wp)
    i = row // wp
    j = row % wp
    valid = (i >= 1) & (i <= h) & (j >= 1) & (j <= w)
    return valid.astype(jnp.float32).reshape(hp * wp, 1)


def _im2col(x, kh, kw, stride, pad):
    n, h, w, c = x.shape
    xp = jnp.pad(x, ((0, 0), (pad, pad), (pad, pad), (0, 0)))
    ho = (h + 2 * pad - kh) // stride + 1
    wo = (w + 2 * pad - kw) // stride + 1
    patches = [xp[:, i:i + stride * ho:stride, j:j + stride * wo:stride, :]
               for i in range(kh) for j in range(kw)]
    cols = jnp.concatenate(patches, axis=-1)
    return cols.reshape(n * ho * wo, kh * kw * c), (n, ho, wo)


def _maxpool_3x3_s2_p1(x):
    n, h, w, c = x.shape
    xp = jnp.pad(x, ((0, 0), (1, 1), (1, 1), (0, 0)), constant_values=-jnp.inf)
    ho = (h + 2 - 3) // 2 + 1
    wo = (w + 2 - 3) // 2 + 1
    out = None
    for i in range(3):
        for j in range(3):
            s = xp[:, i:i + 2 * ho:2, j:j + 2 * wo:2, :]
            out = s if out is None else jnp.maximum(out, s)
    return out


def _dense_layer(x3d, s1, s2, lp, mask_flat, mask_p, wp, count):
    n, p, cin = x3d.shape
    # norm1 -> relu1 -> conv1 (1x1), fused, with norm2-stats epilogue.
    scale1, shift1 = _bn_scale_shift_from_sums(s1, s2, *lp["norm1"], count)
    w1 = lp["conv1"][:, :, 0, 0].T.astype(jnp.bfloat16)          # (cin, inter)
    inter = w1.shape[1]
    y2d, ys1, ys2 = pallas_bnrelu_conv1x1(x3d.reshape(n * p, cin), mask_flat,
                                          scale1, shift1, w1)
    # norm2 -> relu2 -> conv2 (3x3, pad 1), one kernel per image.
    scale2, shift2 = _bn_scale_shift_from_sums(ys1, ys2, *lp["norm2"], count)
    w2 = lp["conv2"]                                             # (G, inter, 3, 3)
    growth = w2.shape[0]
    w2m = jnp.transpose(w2, (2, 3, 1, 0)).reshape(9, inter, growth)
    new3d, n1, n2 = pallas_conv3x3(y2d.reshape(n, p, inter), mask_p,
                                   scale2, shift2, w2m.astype(jnp.bfloat16), wp)
    # TODO(synk): nn.functional.dropout for drop_rate > 0 not implemented
    #             (module default drop_rate=0 makes it a no-op).
    # TODO(synk): write-in-place concat via input_output_aliases not used;
    #             existing-channel BN stats are carried so no re-reduction.
    x3d = jnp.concatenate([x3d, new3d], axis=-1)
    return x3d, jnp.concatenate([s1, n1]), jnp.concatenate([s2, n2])


def densenet_forward(params, x_nchw):
    x = jnp.transpose(x_nchw, (0, 2, 3, 1)).astype(jnp.float32)   # NCHW -> NHWC
    n = x.shape[0]

    # stem: conv 7x7 s2 p3 (im2col, bf16) + norm0 stats epilogue -> BN+ReLU -> maxpool
    cols, (_, ho, wo) = _im2col(x, 7, 7, 2, 3)
    w0 = params["conv0"]
    c0 = w0.shape[0]
    w0m = jnp.transpose(w0, (2, 3, 1, 0)).reshape(-1, c0).astype(jnp.bfloat16)
    y, s1, s2 = pallas_matmul_stats(cols.astype(jnp.bfloat16), w0m)
    scale0, shift0 = _bn_scale_shift_from_sums(s1, s2, *params["norm0"], n * ho * wo)
    y = pallas_bnrelu(y, scale0, shift0).reshape(n, ho, wo, c0)
    y = _maxpool_3x3_s2_p1(y)

    h, w = y.shape[1], y.shape[2]
    x3d = _to_padded_flat(y)
    count = n * h * w
    wp = w + 2
    mask_p = _border_mask(h, w)
    mask_flat = jnp.tile(mask_p, (n, 1))
    s1, s2 = pallas_stats(x3d.reshape(n * (h + 2) * (w + 2), c0))

    for layers, trans in zip(params["blocks"], params["transitions"]):
        for lp in layers:
            x3d, s1, s2 = _dense_layer(x3d, s1, s2, lp, mask_flat, mask_p, wp, count)
        if trans is not None:
            # transition: norm -> relu -> conv 1x1 (fused) -> avgpool 2x2
            scale_t, shift_t = _bn_scale_shift_from_sums(s1, s2, *trans["norm"], count)
            cin = x3d.shape[2]
            wt = trans["conv"][:, :, 0, 0].T.astype(jnp.bfloat16)
            y2d, _, _ = pallas_bnrelu_conv1x1(x3d.reshape(n * x3d.shape[1], cin),
                                              mask_flat, scale_t, shift_t, wt)
            cout = wt.shape[1]
            yt = _from_padded_flat(y2d.reshape(n, x3d.shape[1], cout), h, w)
            yt = yt.reshape(n, h // 2, 2, w // 2, 2, cout).mean(axis=(2, 4))
            h, w = h // 2, w // 2
            count = n * h * w
            wp = w + 2
            x3d = _to_padded_flat(yt)
            mask_p = _border_mask(h, w)
            mask_flat = jnp.tile(mask_p, (n, 1))
            s1, s2 = pallas_stats(x3d.reshape(n * (h + 2) * (w + 2), cout))

    # head: norm5 -> relu -> adaptive_avg_pool2d((1,1)) -> flatten -> linear
    scale5, shift5 = _bn_scale_shift_from_sums(s1, s2, *params["norm5"], count)
    return pallas_head(x3d, mask_p, scale5, shift5,
                       params["classifier_w"], params["classifier_b"], h * w)


# ---------------------------- parameter init ----------------------------

def _kaiming_conv(key, cout, cin, kh, kw):
    fan_in = cin * kh * kw
    std = (2.0 / fan_in) ** 0.5
    return jax.random.normal(key, (cout, cin, kh, kw), jnp.float32) * std


def init_densenet_params(key, growth_rate, block_config, num_init_features,
                         bn_size, num_classes):
    n_keys = 4 + 2 * sum(block_config) + len(block_config)
    kit = iter(jax.random.split(key, n_keys))
    ones = lambda c: jnp.ones((c,), jnp.float32)
    zeros = lambda c: jnp.zeros((c,), jnp.float32)

    params = {}
    params["conv0"] = _kaiming_conv(next(kit), num_init_features, 3, 7, 7)
    params["norm0"] = (ones(num_init_features), zeros(num_init_features))

    num_features = num_init_features
    blocks, transitions = [], []
    for i, num_layers in enumerate(block_config):
        layers = []
        for l in range(num_layers):
            nin = num_features + l * growth_rate
            inter = bn_size * growth_rate
            layers.append(dict(
                norm1=(ones(nin), zeros(nin)),
                conv1=_kaiming_conv(next(kit), inter, nin, 1, 1),
                norm2=(ones(inter), zeros(inter)),
                conv2=_kaiming_conv(next(kit), growth_rate, inter, 3, 3),
            ))
        blocks.append(layers)
        num_features += num_layers * growth_rate
        if i != len(block_config) - 1:
            transitions.append(dict(
                norm=(ones(num_features), zeros(num_features)),
                conv=_kaiming_conv(next(kit), num_features // 2, num_features, 1, 1),
            ))
            num_features //= 2
        else:
            transitions.append(None)

    params["blocks"] = blocks
    params["transitions"] = transitions
    params["norm5"] = (ones(num_features), zeros(num_features))

    bound = 1.0 / (num_features ** 0.5)
    params["classifier_w"] = jax.random.uniform(
        next(kit), (num_classes, num_features), jnp.float32, -bound, bound)
    params["classifier_b"] = zeros(num_classes)
    return params


# ---------------------------- main ----------------------------

if __name__ == "__main__":
    key = jax.random.PRNGKey(0)
    k_params, k_x = jax.random.split(key)

    cfg = dict(growth_rate=8, block_config=(2, 2), num_init_features=16,
               bn_size=4, num_classes=17)
    params = init_densenet_params(k_params, **cfg)

    x = jax.random.normal(k_x, (2, 3, 32, 32), jnp.float32)   # NCHW like PyTorch

    fwd = jax.jit(functools.partial(densenet_forward, params))
    logits = fwd(x)
    jax.block_until_ready(logits)

    assert logits.shape == (2, cfg["num_classes"]), logits.shape
    assert logits.dtype == jnp.float32
    assert bool(jnp.all(jnp.isfinite(logits)))
    print("KERNEL_OK")
</pallas_src>

<mosaic_0001>
module attributes {stable_mosaic.version = 11 : i64} {
  func.func @_matmul_stats_kernel(%arg0: i32, %arg1: memref<512x147xbf16, #tpu.memory_space<vmem>>, %arg2: memref<147x16xbf16, #tpu.memory_space<vmem>>, %arg3: memref<512x16xf32, #tpu.memory_space<vmem>>, %arg4: memref<1x1x16xf32, #tpu.memory_space<vmem>>, %arg5: memref<1x1x16xf32, #tpu.memory_space<vmem>>) attributes {dimension_semantics = [#tpu.dimension_semantics<parallel>], iteration_bounds = array<i64: 1>, scalar_prefetch = 0 : i64, scratch_operands = 0 : i64, tpu.core_type = #tpu.core_type<tc>, window_params = [{transform_indices = @transform_0, window_bounds = array<i64: 512, 147>}, {pipeline_mode = #tpu.pipeline_mode<synchronous>, transform_indices = @transform_1, window_bounds = array<i64: 147, 16>}, {transform_indices = @transform_2, window_bounds = array<i64: 512, 16>}, {transform_indices = @transform_3, window_bounds = array<i64: 1, 1, 16>}, {transform_indices = @transform_4, window_bounds = array<i64: 1, 1, 16>}]} {
    %c512_i32 = arith.constant 512 : i32
    %0 = arith.muli %arg0, %c512_i32 : i32
    %1 = tpu.iota {dimensions = array<i32: 0>} : vector<512x1xi32>
    %2 = vector.broadcast %0 : i32 to vector<512x1xi32>
    %3 = arith.addi %2, %1 : vector<512x1xi32>
    %c512_i32_0 = arith.constant 512 : i32
    %4 = vector.broadcast %c512_i32_0 : i32 to vector<512x1xi32>
    %5 = arith.cmpi slt, %3, %4 : vector<512x1xi32>
    %c0 = arith.constant 0 : index
    %c0_1 = arith.constant 0 : index
    %6 = vector.load %arg1[%c0, %c0_1] : memref<512x147xbf16, #tpu.memory_space<vmem>>, vector<512x147xbf16>
    %c0_i32 = arith.constant 0 : i32
    %7 = arith.sitofp %c0_i32 : i32 to bf16
    %8 = vector.shape_cast %5 : vector<512x1xi1> to vector<512x1xi1>
    %9 = vector.broadcast %8 : vector<512x1xi1> to vector<512x147xi1>
    %10 = vector.broadcast %7 : bf16 to vector<512x147xbf16>
    %11 = arith.select %9, %6, %10 : vector<512x147xi1>, vector<512x147xbf16>
    %c0_2 = arith.constant 0 : index
    %c0_3 = arith.constant 0 : index
    %12 = vector.load %arg2[%c0_2, %c0_3] : memref<147x16xbf16, #tpu.memory_space<vmem>>, vector<147x16xbf16>
    %cst = arith.constant dense<0.000000e+00> : vector<512x16xf32>
    %13 = tpu.matmul %11, %12, %cst {dimension_numbers = #tpu.dot_dimension_numbers<[1], [0], [0], [1], [0, 0, 1, 1], [], []>} : vector<512x147xbf16>, vector<147x16xbf16>, vector<512x16xf32> -> vector<512x16xf32>
    %c0_4 = arith.constant 0 : index
    %c0_5 = arith.constant 0 : index
    %14 = vector.load %arg3[%c0_4, %c0_5] : memref<512x16xf32, #tpu.memory_space<vmem>>, vector<512x16xf32>
    tpu.vector_store %arg3[%c0_4, %c0_5], %13 {strides = array<i32>} : memref<512x16xf32, #tpu.memory_space<vmem>>, vector<512x16xf32>,
    %cst_6 = arith.constant dense<0.000000e+00> : vector<16xf32>
    %15 = vector.multi_reduction <add>, %13, %cst_6 [0] : vector<512x16xf32> to vector<16xf32>
    %16 = vector.shape_cast %15 : vector<16xf32> to vector<1x16xf32>
    %c0_7 = arith.constant 0 : index
    %c0_8 = arith.constant 0 : index
    %c0_9 = arith.constant 0 : index
    %17 = vector.load %arg4[%c0_7, %c0_8, %c0_9] : memref<1x1x16xf32, #tpu.memory_space<vmem>>, vector<1x1x16xf32>
    %18 = vector.shape_cast %17 : vector<1x1x16xf32> to vector<1x16xf32>
    %19 = vector.shape_cast %16 : vector<1x16xf32> to vector<1x1x16xf32>
    tpu.vector_store %arg4[%c0_7, %c0_8, %c0_9], %19 {strides = array<i32>} : memref<1x1x16xf32, #tpu.memory_space<vmem>>, vector<1x1x16xf32>,
    %20 = arith.mulf %13, %13 : vector<512x16xf32>
    %cst_10 = arith.constant dense<0.000000e+00> : vector<16xf32>
    %21 = vector.multi_reduction <add>, %20, %cst_10 [0] : vector<512x16xf32> to vector<16xf32>
    %22 = vector.shape_cast %21 : vector<16xf32> to vector<1x16xf32>
    %c0_11 = arith.constant 0 : index
    %c0_12 = arith.constant 0 : index
    %c0_13 = arith.constant 0 : index
    %23 = vector.load %arg5[%c0_11, %c0_12, %c0_13] : memref<1x1x16xf32, #tpu.memory_space<vmem>>, vector<1x1x16xf32>
    %24 = vector.shape_cast %23 : vector<1x1x16xf32> to vector<1x16xf32>
    %25 = vector.shape_cast %22 : vector<1x16xf32> to vector<1x1x16xf32>
    tpu.vector_store %arg5[%c0_11, %c0_12, %c0_13], %25 {strides = array<i32>} : memref<1x1x16xf32, #tpu.memory_space<vmem>>, vector<1x1x16xf32>,
    return
  }
  func.func @transform_0(%arg0: i32) -> (i32, i32) {
    %c0_i32 = arith.constant 0 : i32
    %c0_i32_0 = arith.constant 0 : i32
    return %arg0, %c0_i32 : i32, i32
  }
  func.func @transform_1(%arg0: i32) -> (i32, i32) {
    %c0_i32 = arith.constant 0 : i32
    %c0_i32_0 = arith.constant 0 : i32
    %c0_i32_1 = arith.constant 0 : i32
    return %c0_i32, %c0_i32_0 : i32, i32
  }
  func.func @transform_2(%arg0: i32) -> (i32, i32) {
    %c0_i32 = arith.constant 0 : i32
    %c0_i32_0 = arith.constant 0 : i32
    return %arg0, %c0_i32 : i32, i32
  }
  func.func @transform_3(%arg0: i32) -> (i32, i32, i32) {
    %c0_i32 = arith.constant 0 : i32
    %c0_i32_0 = arith.constant 0 : i32
    %c0_i32_1 = arith.constant 0 : i32
    return %arg0, %c0_i32, %c0_i32_0 : i32, i32, i32
  }
  func.func @transform_4(%arg0: i32) -> (i32, i32, i32) {
    %c0_i32 = arith.constant 0 : i32
    %c0_i32_0 = arith.constant 0 : i32
    %c0_i32_1 = arith.constant 0 : i32
    return %arg0, %c0_i32, %c0_i32_0 : i32, i32, i32
  }
}

module attributes {stable_mosaic.version = 11 : i64} {
  func.func @_bnrelu_kernel(%arg0: i32, %arg1: memref<512x16xf32, #tpu.memory_space<vmem>>, %arg2: memref<1x16xf32, #tpu.memory_space<vmem>>, %arg3: memref<1x16xf32, #tpu.memory_space<vmem>>, %arg4: memref<512x16xf32, #tpu.memory_space<vmem>>) attributes {dimension_semantics = [#tpu.dimension_semantics<parallel>], iteration_bounds = array<i64: 1>, scalar_prefetch = 0 : i64, scratch_operands = 0 : i64, tpu.core_type = #tpu.core_type<tc>, window_params = [{transform_indices = @transform_0, window_bounds = array<i64: 512, 16>}, {pipeline_mode = #tpu.pipeline_mode<synchronous>, transform_indices = @transform_1, window_bounds = array<i64: 1, 16>}, {pipeline_mode = #tpu.pipeline_mode<synchronous>, transform_indices = @transform_2, window_bounds = array<i64: 1, 16>}, {transform_indices = @transform_3, window_bounds = array<i64: 512, 16>}]} {
    %c0 = arith.constant 0 : index
    %c0_0 = arith.constant 0 : index
    %0 = vector.load %arg1[%c0, %c0_0] : memref<512x16xf32, #tpu.memory_space<vmem>>, vector<512x16xf32>
    %c0_1 = arith.constant 0 : index
    %c0_2 = arith.constant 0 : index
    %1 = vector.load %arg2[%c0_1, %c0_2] : memref<1x16xf32, #tpu.memory_space<vmem>>, vector<1x16xf32>
    %2 = vector.broadcast %1 : vector<1x16xf32> to vector<512x16xf32>
    %3 = arith.mulf %0, %2 : vector<512x16xf32>
    %c0_3 = arith.constant 0 : index
    %c0_4 = arith.constant 0 : index
    %4 = vector.load %arg3[%c0_3, %c0_4] : memref<1x16xf32, #tpu.memory_space<vmem>>, vector<1x16xf32>
    %5 = vector.broadcast %4 : vector<1x16xf32> to vector<512x16xf32>
    %6 = arith.addf %3, %5 : vector<512x16xf32>
    %cst = arith.constant 0.000000e+00 : f32
    %7 = vector.broadcast %cst : f32 to vector<512x16xf32>
    %8 = arith.maximumf %6, %7 : vector<512x16xf32>
    %c0_5 = arith.constant 0 : index
    %c0_6 = arith.constant 0 : index
    %9 = vector.load %arg4[%c0_5, %c0_6] : memref<512x16xf32, #tpu.memory_space<vmem>>, vector<512x16xf32>
    tpu.vector_store %arg4[%c0_5, %c0_6], %8 {strides = array<i32>} : memref<512x16xf32, #tpu.memory_space<vmem>>, vector<512x16xf32>,
    return
  }
  func.func @transform_0(%arg0: i32) -> (i32, i32) {
    %c0_i32 = arith.constant 0 : i32
    %c0_i32_0 = arith.constant 0 : i32
    return %arg0, %c0_i32 : i32, i32
  }
  func.func @transform_1(%arg0: i32) -> (i32, i32) {
    %c0_i32 = arith.constant 0 : i32
    %c0_i32_0 = arith.constant 0 : i32
    %c0_i32_1 = arith.constant 0 : i32
    return %c0_i32, %c0_i32_0 : i32, i32
  }
  func.func @transform_2(%arg0: i32) -> (i32, i32) {
    %c0_i32 = arith.constant 0 : i32
    %c0_i32_0 = arith.constant 0 : i32
    %c0_i32_1 = arith.constant 0 : i32
    return %c0_i32, %c0_i32_0 : i32, i32
  }
  func.func @transform_3(%arg0: i32) -> (i32, i32) {
    %c0_i32 = arith.constant 0 : i32
    %c0_i32_0 = arith.constant 0 : i32
    return %arg0, %c0_i32 : i32, i32
  }
}

module attributes {stable_mosaic.version = 11 : i64} {
  func.func @_stats_kernel(%arg0: i32, %arg1: memref<200x16xf32, #tpu.memory_space<vmem>>, %arg2: memref<1x1x16xf32, #tpu.memory_space<vmem>>, %arg3: memref<1x1x16xf32, #tpu.memory_space<vmem>>) attributes {dimension_semantics = [#tpu.dimension_semantics<parallel>], iteration_bounds = array<i64: 1>, scalar_prefetch = 0 : i64, scratch_operands = 0 : i64, tpu.core_type = #tpu.core_type<tc>, window_params = [{transform_indices = @transform_0, window_bounds = array<i64: 200, 16>}, {transform_indices = @transform_1, window_bounds = array<i64: 1, 1, 16>}, {transform_indices = @transform_2, window_bounds = array<i64: 1, 1, 16>}]} {
    %c200_i32 = arith.constant 200 : i32
    %0 = arith.muli %arg0, %c200_i32 : i32
    %1 = tpu.iota {dimensions = array<i32: 0>} : vector<200x1xi32>
    %2 = vector.broadcast %0 : i32 to vector<200x1xi32>
    %3 = arith.addi %2, %1 : vector<200x1xi32>
    %c200_i32_0 = arith.constant 200 : i32
    %4 = vector.broadcast %c200_i32_0 : i32 to vector<200x1xi32>
    %5 = arith.cmpi slt, %3, %4 : vector<200x1xi32>
    %c0 = arith.constant 0 : index
    %c0_1 = arith.constant 0 : index
    %6 = vector.load %arg1[%c0, %c0_1] : memref<200x16xf32, #tpu.memory_space<vmem>>, vector<200x16xf32>
    %cst = arith.constant 0.000000e+00 : f32
    %7 = vector.shape_cast %5 : vector<200x1xi1> to vector<200x1xi1>
    %8 = vector.broadcast %7 : vector<200x1xi1> to vector<200x16xi1>
    %9 = vector.broadcast %cst : f32 to vector<200x16xf32>
    %10 = arith.select %8, %6, %9 : vector<200x16xi1>, vector<200x16xf32>
    %cst_2 = arith.constant dense<0.000000e+00> : vector<16xf32>
    %11 = vector.multi_reduction <add>, %10, %cst_2 [0] : vector<200x16xf32> to vector<16xf32>
    %12 = vector.shape_cast %11 : vector<16xf32> to vector<1x16xf32>
    %c0_3 = arith.constant 0 : index
    %c0_4 = arith.constant 0 : index
    %c0_5 = arith.constant 0 : index
    %13 = vector.load %arg2[%c0_3, %c0_4, %c0_5] : memref<1x1x16xf32, #tpu.memory_space<vmem>>, vector<1x1x16xf32>
    %14 = vector.shape_cast %13 : vector<1x1x16xf32> to vector<1x16xf32>
    %15 = vector.shape_cast %12 : vector<1x16xf32> to vector<1x1x16xf32>
    tpu.vector_store %arg2[%c0_3, %c0_4, %c0_5], %15 {strides = array<i32>} : memref<1x1x16xf32, #tpu.memory_space<vmem>>, vector<1x1x16xf32>,
    %16 = arith.mulf %10, %10 : vector<200x16xf32>
    %cst_6 = arith.constant dense<0.000000e+00> : vector<16xf32>
    %17 = vector.multi_reduction <add>, %16, %cst_6 [0] : vector<200x16xf32> to vector<16xf32>
    %18 = vector.shape_cast %17 : vector<16xf32> to vector<1x16xf32>
    %c0_7 = arith.constant 0 : index
    %c0_8 = arith.constant 0 : index
    %c0_9 = arith.constant 0 : index
    %19 = vector.load %arg3[%c0_7, %c0_8, %c0_9] : memref<1x1x16xf32, #tpu.memory_space<vmem>>, vector<1x1x16xf32>
    %20 = vector.shape_cast %19 : vector<1x1x16xf32> to vector<1x16xf32>
    %21 = vector.shape_cast %18 : vector<1x16xf32> to vector<1x1x16xf32>
    tpu.vector_store %arg3[%c0_7, %c0_8, %c0_9], %21 {strides = array<i32>} : memref<1x1x16xf32, #tpu.memory_space<vmem>>, vector<1x1x16xf32>,
    return
  }
  func.func @transform_0(%arg0: i32) -> (i32, i32) {
    %c0_i32 = arith.constant 0 : i32
    %c0_i32_0 = arith.constant 0 : i32
    return %arg0, %c0_i32 : i32, i32
  }
  func.func @transform_1(%arg0: i32) -> (i32, i32, i32) {
    %c0_i32 = arith.constant 0 : i32
    %c0_i32_0 = arith.constant 0 : i32
    %c0_i32_1 = arith.constant 0 : i32
    return %arg0, %c0_i32, %c0_i32_0 : i32, i32, i32
  }
  func.func @transform_2(%arg0: i32) -> (i32, i32, i32) {
    %c0_i32 = arith.constant 0 : i32
    %c0_i32_0 = arith.constant 0 : i32
    %c0_i32_1 = arith.constant 0 : i32
    return %arg0, %c0_i32, %c0_i32_0 : i32, i32, i32
  }
}

module attributes {stable_mosaic.version = 11 : i64} {
  func.func @_bnrelu_matmul_stats_kernel(%arg0: i32, %arg1: memref<200x16xf32, #tpu.memory_space<vmem>>, %arg2: memref<200x1xf32, #tpu.memory_space<vmem>>, %arg3: memref<1x16xf32, #tpu.memory_space<vmem>>, %arg4: memref<1x16xf32, #tpu.memory_space<vmem>>, %arg5: memref<16x32xbf16, #tpu.memory_space<vmem>>, %arg6: memref<200x32xf32, #tpu.memory_space<vmem>>, %arg7: memref<1x1x32xf32, #tpu.memory_space<vmem>>, %arg8: memref<1x1x32xf32, #tpu.memory_space<vmem>>) attributes {dimension_semantics = [#tpu.dimension_semantics<parallel>], iteration_bounds = array<i64: 1>, scalar_prefetch = 0 : i64, scratch_operands = 0 : i64, tpu.core_type = #tpu.core_type<tc>, window_params = [{transform_indices = @transform_0, window_bounds = array<i64: 200, 16>}, {transform_indices = @transform_1, window_bounds = array<i64: 200, 1>}, {pipeline_mode = #tpu.pipeline_mode<synchronous>, transform_indices = @transform_2, window_bounds = array<i64: 1, 16>}, {pipeline_mode = #tpu.pipeline_mode<synchronous>, transform_indices = @transform_3, window_bounds = array<i64: 1, 16>}, {pipeline_mode = #tpu.pipeline_mode<synchronous>, transform_indices = @transform_4, window_bounds = array<i64: 16, 32>}, {transform_indices = @transform_5, window_bounds = array<i64: 200, 32>}, {transform_indices = @transform_6, window_bounds = array<i64: 1, 1, 32>}, {transform_indices = @transform_7, window_bounds = array<i64: 1, 1, 32>}]} {
    %c200_i32 = arith.constant 200 : i32
    %0 = arith.muli %arg0, %c200_i32 : i32
    %1 = tpu.iota {dimensions = array<i32: 0>} : vector<200x1xi32>
    %2 = vector.broadcast %0 : i32 to vector<200x1xi32>
    %3 = arith.addi %2, %1 : vector<200x1xi32>
    %c200_i32_0 = arith.constant 200 : i32
    %4 = vector.broadcast %c200_i32_0 : i32 to vector<200x1xi32>
    %5 = arith.cmpi slt, %3, %4 : vector<200x1xi32>
    %c0 = arith.constant 0 : index
    %c0_1 = arith.constant 0 : index
    %6 = vector.load %arg1[%c0, %c0_1] : memref<200x16xf32, #tpu.memory_space<vmem>>, vector<200x16xf32>
    %c0_2 = arith.constant 0 : index
    %c0_3 = arith.constant 0 : index
    %7 = vector.load %arg3[%c0_2, %c0_3] : memref<1x16xf32, #tpu.memory_space<vmem>>, vector<1x16xf32>
    %8 = vector.broadcast %7 : vector<1x16xf32> to vector<200x16xf32>
    %9 = arith.mulf %6, %8 : vector<200x16xf32>
    %c0_4 = arith.constant 0 : index
    %c0_5 = arith.constant 0 : index
    %10 = vector.load %arg4[%c0_4, %c0_5] : memref<1x16xf32, #tpu.memory_space<vmem>>, vector<1x16xf32>
    %11 = vector.broadcast %10 : vector<1x16xf32> to vector<200x16xf32>
    %12 = arith.addf %9, %11 : vector<200x16xf32>
    %cst = arith.constant 0.000000e+00 : f32
    %13 = vector.broadcast %cst : f32 to vector<200x16xf32>
    %14 = arith.maximumf %12, %13 : vector<200x16xf32>
    %c0_6 = arith.constant 0 : index
    %c0_7 = arith.constant 0 : index
    %15 = vector.load %arg2[%c0_6, %c0_7] : memref<200x1xf32, #tpu.memory_space<vmem>>, vector<200x1xf32>
    %16 = vector.broadcast %15 : vector<200x1xf32> to vector<200x16xf32>
    %17 = arith.mulf %14, %16 : vector<200x16xf32>
    %cst_8 = arith.constant 0.000000e+00 : f32
    %18 = vector.shape_cast %5 : vector<200x1xi1> to vector<200x1xi1>
    %19 = vector.broadcast %18 : vector<200x1xi1> to vector<200x16xi1>
    %20 = vector.broadcast %cst_8 : f32 to vector<200x16xf32>
    %21 = arith.select %19, %17, %20 : vector<200x16xi1>, vector<200x16xf32>
    %22 = arith.truncf %21 : vector<200x16xf32> to vector<200x16xbf16>
    %c0_9 = arith.constant 0 : index
    %c0_10 = arith.constant 0 : index
    %23 = vector.load %arg5[%c0_9, %c0_10] : memref<16x32xbf16, #tpu.memory_space<vmem>>, vector<16x32xbf16>
    %cst_11 = arith.constant dense<0.000000e+00> : vector<200x32xf32>
    %24 = tpu.matmul %22, %23, %cst_11 {dimension_numbers = #tpu.dot_dimension_numbers<[1], [0], [0], [1], [0, 0, 1, 1], [], []>} : vector<200x16xbf16>, vector<16x32xbf16>, vector<200x32xf32> -> vector<200x32xf32>
    %c0_12 = arith.constant 0 : index
    %c0_13 = arith.constant 0 : index
    %25 = vector.load %arg6[%c0_12, %c0_13] : memref<200x32xf32, #tpu.memory_space<vmem>>, vector<200x32xf32>
    tpu.vector_store %arg6[%c0_12, %c0_13], %24 {strides = array<i32>} : memref<200x32xf32, #tpu.memory_space<vmem>>, vector<200x32xf32>,
    %cst_14 = arith.constant dense<0.000000e+00> : vector<32xf32>
    %26 = vector.multi_reduction <add>, %24, %cst_14 [0] : vector<200x32xf32> to vector<32xf32>
    %27 = vector.shape_cast %26 : vector<32xf32> to vector<1x32xf32>
    %c0_15 = arith.constant 0 : index
    %c0_16 = arith.constant 0 : index
    %c0_17 = arith.constant 0 : index
    %28 = vector.load %arg7[%c0_15, %c0_16, %c0_17] : memref<1x1x32xf32, #tpu.memory_space<vmem>>, vector<1x1x32xf32>
    %29 = vector.shape_cast %28 : vector<1x1x32xf32> to vector<1x32xf32>
    %30 = vector.shape_cast %27 : vector<1x32xf32> to vector<1x1x32xf32>
    tpu.vector_store %arg7[%c0_15, %c0_16, %c0_17], %30 {strides = array<i32>} : memref<1x1x32xf32, #tpu.memory_space<vmem>>, vector<1x1x32xf32>,
    %31 = arith.mulf %24, %24 : vector<200x32xf32>
    %cst_18 = arith.constant dense<0.000000e+00> : vector<32xf32>
    %32 = vector.multi_reduction <add>, %31, %cst_18 [0] : vector<200x32xf32> to vector<32xf32>
    %33 = vector.shape_cast %32 : vector<32xf32> to vector<1x32xf32>
    %c0_19 = arith.constant 0 : index
    %c0_20 = arith.constant 0 : index
    %c0_21 = arith.constant 0 : index
    %34 = vector.load %arg8[%c0_19, %c0_20, %c0_21] : memref<1x1x32xf32, #tpu.memory_space<vmem>>, vector<1x1x32xf32>
    %35 = vector.shape_cast %34 : vector<1x1x32xf32> to vector<1x32xf32>
    %36 = vector.shape_cast %33 : vector<1x32xf32> to vector<1x1x32xf32>
    tpu.vector_store %arg8[%c0_19, %c0_20, %c0_21], %36 {strides = array<i32>} : memref<1x1x32xf32, #tpu.memory_space<vmem>>, vector<1x1x32xf32>,
    return
  }
  func.func @transform_0(%arg0: i32) -> (i32, i32) {
    %c0_i32 = arith.constant 0 : i32
    %c0_i32_0 = arith.constant 0 : i32
    return %arg0, %c0_i32 : i32, i32
  }
  func.func @transform_1(%arg0: i32) -> (i32, i32) {
    %c0_i32 = arith.constant 0 : i32
    %c0_i32_0 = arith.constant 0 : i32
    return %arg0, %c0_i32 : i32, i32
  }
  func.func @transform_2(%arg0: i32) -> (i32, i32) {
    %c0_i32 = arith.constant 0 : i32
    %c0_i32_0 = arith.constant 0 : i32
    %c0_i32_1 = arith.constant 0 : i32
    return %c0_i32, %c0_i32_0 : i32, i32
  }
  func.func @transform_3(%arg0: i32) -> (i32, i32) {
    %c0_i32 = arith.constant 0 : i32
    %c0_i32_0 = arith.constant 0 : i32
    %c0_i32_1 = arith.constant 0 : i32
    return %c0_i32, %c0_i32_0 : i32, i32
  }
  func.func @transform_4(%arg0: i32) -> (i32, i32) {
    %c0_i32 = arith.constant 0 : i32
    %c0_i32_0 = arith.constant 0 : i32
    %c0_i32_1 = arith.constant 0 : i32
    return %c0_i32, %c0_i32_0 : i32, i32
  }
  func.func @transform_5(%arg0: i32) -> (i32, i32) {
    %c0_i32 = arith.constant 0 : i32
    %c0_i32_0 = arith.constant 0 : i32
    return %arg0, %c0_i32 : i32, i32
  }
  func.func @transform_6(%arg0: i32) -> (i32, i32, i32) {
    %c0_i32 = arith.constant 0 : i32
    %c0_i32_0 = arith.constant 0 : i32
    %c0_i32_1 = arith.constant 0 : i32
    return %arg0, %c0_i32, %c0_i32_0 : i32, i32, i32
  }
  func.func @transform_7(%arg0: i32) -> (i32, i32, i32) {
    %c0_i32 = arith.constant 0 : i32
    %c0_i32_0 = arith.constant 0 : i32
    %c0_i32_1 = arith.constant 0 : i32
    return %arg0, %c0_i32, %c0_i32_0 : i32, i32, i32
  }
}

module attributes {stable_mosaic.version = 11 : i64} {
  func.func @_conv3x3_kernel(%arg0: i32, %arg1: memref<1x100x32xf32, #tpu.memory_space<vmem>>, %arg2: memref<100x1xf32, #tpu.memory_space<vmem>>, %arg3: memref<1x32xf32, #tpu.memory_space<vmem>>, %arg4: memref<1x32xf32, #tpu.memory_space<vmem>>, %arg5: memref<9x32x8xbf16, #tpu.memory_space<vmem>>, %arg6: memref<1x100x8xf32, #tpu.memory_space<vmem>>, %arg7: memref<1x1x8xf32, #tpu.memory_space<vmem>>, %arg8: memref<1x1x8xf32, #tpu.memory_space<vmem>>, %arg9: memref<122x32xf32, #tpu.memory_space<vmem>>) attributes {dimension_semantics = [#tpu.dimension_semantics<parallel>], iteration_bounds = array<i64: 2>, scalar_prefetch = 0 : i64, scratch_operands = 1 : i64, tpu.core_type = #tpu.core_type<tc>, window_params = [{transform_indices = @transform_0, window_bounds = array<i64: 1, 100, 32>}, {pipeline_mode = #tpu.pipeline_mode<synchronous>, transform_indices = @transform_1, window_bounds = array<i64: 100, 1>}, {pipeline_mode = #tpu.pipeline_mode<synchronous>, transform_indices = @transform_2, window_bounds = array<i64: 1, 32>}, {pipeline_mode = #tpu.pipeline_mode<synchronous>, transform_indices = @transform_3, window_bounds = array<i64: 1, 32>}, {pipeline_mode = #tpu.pipeline_mode<synchronous>, transform_indices = @transform_4, window_bounds = array<i64: 9, 32, 8>}, {transform_indices = @transform_5, window_bounds = array<i64: 1, 100, 8>}, {transform_indices = @transform_6, window_bounds = array<i64: 1, 1, 8>}, {transform_indices = @transform_7, window_bounds = array<i64: 1, 1, 8>}]} {
    %c0 = arith.constant 0 : index
    %c0_0 = arith.constant 0 : index
    %c0_1 = arith.constant 0 : index
    %0 = vector.load %arg1[%c0, %c0_0, %c0_1] : memref<1x100x32xf32, #tpu.memory_space<vmem>>, vector<1x100x32xf32>
    %1 = vector.shape_cast %0 : vector<1x100x32xf32> to vector<100x32xf32>
    %c0_2 = arith.constant 0 : index
    %c0_3 = arith.constant 0 : index
    %2 = vector.load %arg3[%c0_2, %c0_3] : memref<1x32xf32, #tpu.memory_space<vmem>>, vector<1x32xf32>
    %3 = vector.broadcast %2 : vector<1x32xf32> to vector<100x32xf32>
    %4 = arith.mulf %1, %3 : vector<100x32xf32>
    %c0_4 = arith.constant 0 : index
    %c0_5 = arith.constant 0 : index
    %5 = vector.load %arg4[%c0_4, %c0_5] : memref<1x32xf32, #tpu.memory_space<vmem>>, vector<1x32xf32>
    %6 = vector.broadcast %5 : vector<1x32xf32> to vector<100x32xf32>
    %7 = arith.addf %4, %6 : vector<100x32xf32>
    %cst = arith.constant 0.000000e+00 : f32
    %8 = vector.broadcast %cst : f32 to vector<100x32xf32>
    %9 = arith.maximumf %7, %8 : vector<100x32xf32>
    %c0_6 = arith.constant 0 : index
    %c0_7 = arith.constant 0 : index
    %10 = vector.load %arg2[%c0_6, %c0_7] : memref<100x1xf32, #tpu.memory_space<vmem>>, vector<100x1xf32>
    %11 = vector.broadcast %10 : vector<100x1xf32> to vector<100x32xf32>
    %12 = arith.mulf %9, %11 : vector<100x32xf32>
    %cst_8 = arith.constant 0.000000e+00 : f32
    %13 = vector.broadcast %cst_8 : f32 to vector<122x32xf32>
    %c0_9 = arith.constant 0 : index
    %c0_10 = arith.constant 0 : index
    %14 = vector.load %arg9[%c0_9, %c0_10] : memref<122x32xf32, #tpu.memory_space<vmem>>, vector<122x32xf32>
    tpu.vector_store %arg9[%c0_9, %c0_10], %13 {strides = array<i32>} : memref<122x32xf32, #tpu.memory_space<vmem>>, vector<122x32xf32>,
    %c11 = arith.constant 11 : index
    %c0_11 = arith.constant 0 : index
    %15 = vector.load %arg9[%c11, %c0_11] : memref<122x32xf32, #tpu.memory_space<vmem>>, vector<100x32xf32>
    tpu.vector_store %arg9[%c11, %c0_11], %12 {strides = array<i32>} : memref<122x32xf32, #tpu.memory_space<vmem>>, vector<100x32xf32>,
    %cst_12 = arith.constant 0.000000e+00 : f32
    %16 = vector.broadcast %cst_12 : f32 to vector<100x8xf32>
    %c0_13 = arith.constant 0 : index
    %c0_14 = arith.constant 0 : index
    %17 = vector.load %arg9[%c0_13, %c0_14] : memref<122x32xf32, #tpu.memory_space<vmem>>, vector<100x32xf32>
    %18 = arith.truncf %17 : vector<100x32xf32> to vector<100x32xbf16>
    %c0_15 = arith.constant 0 : index
    %c0_16 = arith.constant 0 : index
    %c0_17 = arith.constant 0 : index
    %19 = vector.load %arg5[%c0_15, %c0_16, %c0_17] : memref<9x32x8xbf16, #tpu.memory_space<vmem>>, vector<1x32x8xbf16>
    %20 = vector.shape_cast %19 : vector<1x32x8xbf16> to vector<32x8xbf16>
    %cst_18 = arith.constant dense<0.000000e+00> : vector<100x8xf32>
    %21 = tpu.matmul %18, %20, %cst_18 {dimension_numbers = #tpu.dot_dimension_numbers<[1], [0], [0], [1], [0, 0, 1, 1], [], []>} : vector<100x32xbf16>, vector<32x8xbf16>, vector<100x8xf32> -> vector<100x8xf32>
    %22 = arith.addf %16, %21 : vector<100x8xf32>
    %c1 = arith.constant 1 : index
    %c0_19 = arith.constant 0 : index
    %23 = vector.load %arg9[%c1, %c0_19] : memref<122x32xf32, #tpu.memory_space<vmem>>, vector<100x32xf32>
    %24 = arith.truncf %23 : vector<100x32xf32> to vector<100x32xbf16>
    %c1_20 = arith.constant 1 : index
    %c0_21 = arith.constant 0 : index
    %c0_22 = arith.constant 0 : index
    %25 = vector.load %arg5[%c1_20, %c0_21, %c0_22] : memref<9x32x8xbf16, #tpu.memory_space<vmem>>, vector<1x32x8xbf16>
    %26 = vector.shape_cast %25 : vector<1x32x8xbf16> to vector<32x8xbf16>
    %cst_23 = arith.constant dense<0.000000e+00> : vector<100x8xf32>
    %27 = tpu.matmul %24, %26, %cst_23 {dimension_numbers = #tpu.dot_dimension_numbers<[1], [0], [0], [1], [0, 0, 1, 1], [], []>} : vector<100x32xbf16>, vector<32x8xbf16>, vector<100x8xf32> -> vector<100x8xf32>
    %28 = arith.addf %22, %27 : vector<100x8xf32>
    %c2 = arith.constant 2 : index
    %c0_24 = arith.constant 0 : index
    %29 = vector.load %arg9[%c2, %c0_24] : memref<122x32xf32, #tpu.memory_space<vmem>>, vector<100x32xf32>
    %30 = arith.truncf %29 : vector<100x32xf32> to vector<100x32xbf16>
    %c2_25 = arith.constant 2 : index
    %c0_26 = arith.constant 0 : index
    %c0_27 = arith.constant 0 : index
    %31 = vector.load %arg5[%c2_25, %c0_26, %c0_27] : memref<9x32x8xbf16, #tpu.memory_space<vmem>>, vector<1x32x8xbf16>
    %32 = vector.shape_cast %31 : vector<1x32x8xbf16> to vector<32x8xbf16>
    %cst_28 = arith.constant dense<0.000000e+00> : vector<100x8xf32>
    %33 = tpu.matmul %30, %32, %cst_28 {dimension_numbers = #tpu.dot_dimension_numbers<[1], [0], [0], [1], [0, 0, 1, 1], [], []>} : vector<100x32xbf16>, vector<32x8xbf16>, vector<100x8xf32> -> vector<100x8xf32>
    %34 = arith.addf %28, %33 : vector<100x8xf32>
    %c10 = arith.constant 10 : index
    %c0_29 = arith.constant 0 : index
    %35 = vector.load %arg9[%c10, %c0_29] : memref<122x32xf32, #tpu.memory_space<vmem>>, vector<100x32xf32>
    %36 = arith.truncf %35 : vector<100x32xf32> to vector<100x32xbf16>
    %c3 = arith.constant 3 : index
    %c0_30 = arith.constant 0 : index
    %c0_31 = arith.constant 0 : index
    %37 = vector.load %arg5[%c3, %c0_30, %c0_31] : memref<9x32x8xbf16, #tpu.memory_space<vmem>>, vector<1x32x8xbf16>
    %38 = vector.shape_cast %37 : vector<1x32x8xbf16> to vector<32x8xbf16>
    %cst_32 = arith.constant dense<0.000000e+00> : vector<100x8xf32>
    %39 = tpu.matmul %36, %38, %cst_32 {dimension_numbers = #tpu.dot_dimension_numbers<[1], [0], [0], [1], [0, 0, 1, 1], [], []>} : vector<100x32xbf16>, vector<32x8xbf16>, vector<100x8xf32> -> vector<100x8xf32>
    %40 = arith.addf %34, %39 : vector<100x8xf32>
    %c11_33 = arith.constant 11 : index
    %c0_34 = arith.constant 0 : index
    %41 = vector.load %arg9[%c11_33, %c0_34] : memref<122x32xf32, #tpu.memory_space<vmem>>, vector<100x32xf32>
    %42 = arith.truncf %41 : vector<100x32xf32> to vector<100x32xbf16>
    %c4 = arith.constant 4 : index
    %c0_35 = arith.constant 0 : index
    %c0_36 = arith.constant 0 : index
    %43 = vector.load %arg5[%c4, %c0_35, %c0_36] : memref<9x32x8xbf16, #tpu.memory_space<vmem>>, vector<1x32x8xbf16>
    %44 = vector.shape_cast %43 : vector<1x32x8xbf16> to vector<32x8xbf16>
    %cst_37 = arith.constant dense<0.000000e+00> : vector<100x8xf32>
    %45 = tpu.matmul %42, %44, %cst_37 {dimension_numbers = #tpu.dot_dimension_numbers<[1], [0], [0], [1], [0, 0, 1, 1], [], []>} : vector<100x32xbf16>, vector<32x8xbf16>, vector<100x8xf32> -> vector<100x8xf32>
    %46 = arith.addf %40, %45 : vector<100x8xf32>
    %c12 = arith.constant 12 : index
    %c0_38 = arith.constant 0 : index
    %47 = vector.load %arg9[%c12, %c0_38] : memref<122x32xf32, #tpu.memory_space<vmem>>, vector<100x32xf32>
    %48 = arith.truncf %47 : vector<100x32xf32> to vector<100x32xbf16>
    %c5 = arith.constant 5 : index
    %c0_39 = arith.constant 0 : index
    %c0_40 = arith.constant 0 : index
    %49 = vector.load %arg5[%c5, %c0_39, %c0_40] : memref<9x32x8xbf16, #tpu.memory_space<vmem>>, vector<1x32x8xbf16>
    %50 = vector.shape_cast %49 : vector<1x32x8xbf16> to vector<32x8xbf16>
    %cst_41 = arith.constant dense<0.000000e+00> : vector<100x8xf32>
    %51 = tpu.matmul %48, %50, %cst_41 {dimension_numbers = #tpu.dot_dimension_numbers<[1], [0], [0], [1], [0, 0, 1, 1], [], []>} : vector<100x32xbf16>, vector<32x8xbf16>, vector<100x8xf32> -> vector<100x8xf32>
    %52 = arith.addf %46, %51 : vector<100x8xf32>
    %c20 = arith.constant 20 : index
    %c0_42 = arith.constant 0 : index
    %53 = vector.load %arg9[%c20, %c0_42] : memref<122x32xf32, #tpu.memory_space<vmem>>, vector<100x32xf32>
    %54 = arith.truncf %53 : vector<100x32xf32> to vector<100x32xbf16>
    %c6 = arith.constant 6 : index
    %c0_43 = arith.constant 0 : index
    %c0_44 = arith.constant 0 : index
    %55 = vector.load %arg5[%c6, %c0_43, %c0_44] : memref<9x32x8xbf16, #tpu.memory_space<vmem>>, vector<1x32x8xbf16>
    %56 = vector.shape_cast %55 : vector<1x32x8xbf16> to vector<32x8xbf16>
    %cst_45 = arith.constant dense<0.000000e+00> : vector<100x8xf32>
    %57 = tpu.matmul %54, %56, %cst_45 {dimension_numbers = #tpu.dot_dimension_numbers<[1], [0], [0], [1], [0, 0, 1, 1], [], []>} : vector<100x32xbf16>, vector<32x8xbf16>, vector<100x8xf32> -> vector<100x8xf32>
    %58 = arith.addf %52, %57 : vector<100x8xf32>
    %c21 = arith.constant 21 : index
    %c0_46 = arith.constant 0 : index
    %59 = vector.load %arg9[%c21, %c0_46] : memref<122x32xf32, #tpu.memory_space<vmem>>, vector<100x32xf32>
    %60 = arith.truncf %59 : vector<100x32xf32> to vector<100x32xbf16>
    %c7 = arith.constant 7 : index
    %c0_47 = arith.constant 0 : index
    %c0_48 = arith.constant 0 : index
    %61 = vector.load %arg5[%c7, %c0_47, %c0_48] : memref<9x32x8xbf16, #tpu.memory_space<vmem>>, vector<1x32x8xbf16>
    %62 = vector.shape_cast %61 : vector<1x32x8xbf16> to vector<32x8xbf16>
    %cst_49 = arith.constant dense<0.000000e+00> : vector<100x8xf32>
    %63 = tpu.matmul %60, %62, %cst_49 {dimension_numbers = #tpu.dot_dimension_numbers<[1], [0], [0], [1], [0, 0, 1, 1], [], []>} : vector<100x32xbf16>, vector<32x8xbf16>, vector<100x8xf32> -> vector<100x8xf32>
    %64 = arith.addf %58, %63 : vector<100x8xf32>
    %c22 = arith.constant 22 : index
    %c0_50 = arith.constant 0 : index
    %65 = vector.load %arg9[%c22, %c0_50] : memref<122x32xf32, #tpu.memory_space<vmem>>, vector<100x32xf32>
    %66 = arith.truncf %65 : vector<100x32xf32> to vector<100x32xbf16>
    %c8 = arith.constant 8 : index
    %c0_51 = arith.constant 0 : index
    %c0_52 = arith.constant 0 : index
    %67 = vector.load %arg5[%c8, %c0_51, %c0_52] : memref<9x32x8xbf16, #tpu.memory_space<vmem>>, vector<1x32x8xbf16>
    %68 = vector.shape_cast %67 : vector<1x32x8xbf16> to vector<32x8xbf16>
    %cst_53 = arith.constant dense<0.000000e+00> : vector<100x8xf32>
    %69 = tpu.matmul %66, %68, %cst_53 {dimension_numbers = #tpu.dot_dimension_numbers<[1], [0], [0], [1], [0, 0, 1, 1], [], []>} : vector<100x32xbf16>, vector<32x8xbf16>, vector<100x8xf32> -> vector<100x8xf32>
    %70 = arith.addf %64, %69 : vector<100x8xf32>
    %c0_54 = arith.constant 0 : index
    %c0_55 = arith.constant 0 : index
    %71 = vector.load %arg2[%c0_54, %c0_55] : memref<100x1xf32, #tpu.memory_space<vmem>>, vector<100x1xf32>
    %72 = vector.broadcast %71 : vector<100x1xf32> to vector<100x8xf32>
    %73 = arith.mulf %70, %72 : vector<100x8xf32>
    %c0_56 = arith.constant 0 : index
    %c0_57 = arith.constant 0 : index
    %c0_58 = arith.constant 0 : index
    %74 = vector.load %arg6[%c0_56, %c0_57, %c0_58] : memref<1x100x8xf32, #tpu.memory_space<vmem>>, vector<1x100x8xf32>
    %75 = vector.shape_cast %74 : vector<1x100x8xf32> to vector<100x8xf32>
    %76 = vector.shape_cast %73 : vector<100x8xf32> to vector<1x100x8xf32>
    tpu.vector_store %arg6[%c0_56, %c0_57, %c0_58], %76 {strides = array<i32>} : memref<1x100x8xf32, #tpu.memory_space<vmem>>, vector<1x100x8xf32>,
    %cst_59 = arith.constant dense<0.000000e+00> : vector<8xf32>
    %77 = vector.multi_reduction <add>, %73, %cst_59 [0] : vector<100x8xf32> to vector<8xf32>
    %78 = vector.shape_cast %77 : vector<8xf32> to vector<1x8xf32>
    %c0_60 = arith.constant 0 : index
    %c0_61 = arith.constant 0 : index
    %c0_62 = arith.constant 0 : index
    %79 = vector.load %arg7[%c0_60, %c0_61, %c0_62] : memref<1x1x8xf32, #tpu.memory_space<vmem>>, vector<1x1x8xf32>
    %80 = vector.shape_cast %79 : vector<1x1x8xf32> to vector<1x8xf32>
    %81 = vector.shape_cast %78 : vector<1x8xf32> to vector<1x1x8xf32>
    tpu.vector_store %arg7[%c0_60, %c0_61, %c0_62], %81 {strides = array<i32>} : memref<1x1x8xf32, #tpu.memory_space<vmem>>, vector<1x1x8xf32>,
    %82 = arith.mulf %73, %73 : vector<100x8xf32>
    %cst_63 = arith.constant dense<0.000000e+00> : vector<8xf32>
    %83 = vector.multi_reduction <add>, %82, %cst_63 [0] : vector<100x8xf32> to vector<8xf32>
    %84 = vector.shape_cast %83 : vector<8xf32> to vector<1x8xf32>
    %c0_64 = arith.constant 0 : index
    %c0_65 = arith.constant 0 : index
    %c0_66 = arith.constant 0 : index
    %85 = vector.load %arg8[%c0_64, %c0_65, %c0_66] : memref<1x1x8xf32, #tpu.memory_space<vmem>>, vector<1x1x8xf32>
    %86 = vector.shape_cast %85 : vector<1x1x8xf32> to vector<1x8xf32>
    %87 = vector.shape_cast %84 : vector<1x8xf32> to vector<1x1x8xf32>
    tpu.vector_store %arg8[%c0_64, %c0_65, %c0_66], %87 {strides = array<i32>} : memref<1x1x8xf32, #tpu.memory_space<vmem>>, vector<1x1x8xf32>,
    return
  }
  func.func @transform_0(%arg0: i32) -> (i32, i32, i32) {
    %c0_i32 = arith.constant 0 : i32
    %c0_i32_0 = arith.constant 0 : i32
    %c0_i32_1 = arith.constant 0 : i32
    return %arg0, %c0_i32, %c0_i32_0 : i32, i32, i32
  }
  func.func @transform_1(%arg0: i32) -> (i32, i32) {
    %c0_i32 = arith.constant 0 : i32
    %c0_i32_0 = arith.constant 0 : i32
    %c0_i32_1 = arith.constant 0 : i32
    return %c0_i32, %c0_i32_0 : i32, i32
  }
  func.func @transform_2(%arg0: i32) -> (i32, i32) {
    %c0_i32 = arith.constant 0 : i32
    %c0_i32_0 = arith.constant 0 : i32
    %c0_i32_1 = arith.constant 0 : i32
    return %c0_i32, %c0_i32_0 : i32, i32
  }
  func.func @transform_3(%arg0: i32) -> (i32, i32) {
    %c0_i32 = arith.constant 0 : i32
    %c0_i32_0 = arith.constant 0 : i32
    %c0_i32_1 = arith.constant 0 : i32
    return %c0_i32, %c0_i32_0 : i32, i32
  }
  func.func @transform_4(%arg0: i32) -> (i32, i32, i32) {
    %c0_i32 = arith.constant 0 : i32
    %c0_i32_0 = arith.constant 0 : i32
    %c0_i32_1 = arith.constant 0 : i32
    %c0_i32_2 = arith.constant 0 : i32
    return %c0_i32, %c0_i32_0, %c0_i32_1 : i32, i32, i32
  }
  func.func @transform_5(%arg0: i32) -> (i32, i32, i32) {
    %c0_i32 = arith.constant 0 : i32
    %c0_i32_0 = arith.constant 0 : i32
    %c0_i32_1 = arith.constant 0 : i32
    return %arg0, %c0_i32, %c0_i32_0 : i32, i32, i32
  }
  func.func @transform_6(%arg0: i32) -> (i32, i32, i32) {
    %c0_i32 = arith.constant 0 : i32
    %c0_i32_0 = arith.constant 0 : i32
    %c0_i32_1 = arith.constant 0 : i32
    return %arg0, %c0_i32, %c0_i32_0 : i32, i32, i32
  }
  func.func @transform_7(%arg0: i32) -> (i32, i32, i32) {
    %c0_i32 = arith.constant 0 : i32
    %c0_i32_0 = arith.constant 0 : i32
    %c0_i32_1 = arith.constant 0 : i32
    return %arg0, %c0_i32, %c0_i32_0 : i32, i32, i32
  }
}

module attributes {stable_mosaic.version = 11 : i64} {
  func.func @_bnrelu_matmul_stats_kernel(%arg0: i32, %arg1: memref<200x24xf32, #tpu.memory_space<vmem>>, %arg2: memref<200x1xf32, #tpu.memory_space<vmem>>, %arg3: memref<1x24xf32, #tpu.memory_space<vmem>>, %arg4: memref<1x24xf32, #tpu.memory_space<vmem>>, %arg5: memref<24x32xbf16, #tpu.memory_space<vmem>>, %arg6: memref<200x32xf32, #tpu.memory_space<vmem>>, %arg7: memref<1x1x32xf32, #tpu.memory_space<vmem>>, %arg8: memref<1x1x32xf32, #tpu.memory_space<vmem>>) attributes {dimension_semantics = [#tpu.dimension_semantics<parallel>], iteration_bounds = array<i64: 1>, scalar_prefetch = 0 : i64, scratch_operands = 0 : i64, tpu.core_type = #tpu.core_type<tc>, window_params = [{transform_indices = @transform_0, window_bounds = array<i64: 200, 24>}, {transform_indices = @transform_1, window_bounds = array<i64: 200, 1>}, {pipeline_mode = #tpu.pipeline_mode<synchronous>, transform_indices = @transform_2, window_bounds = array<i64: 1, 24>}, {pipeline_mode = #tpu.pipeline_mode<synchronous>, transform_indices = @transform_3, window_bounds = array<i64: 1, 24>}, {pipeline_mode = #tpu.pipeline_mode<synchronous>, transform_indices = @transform_4, window_bounds = array<i64: 24, 32>}, {transform_indices = @transform_5, window_bounds = array<i64: 200, 32>}, {transform_indices = @transform_6, window_bounds = array<i64: 1, 1, 32>}, {transform_indices = @transform_7, window_bounds = array<i64: 1, 1, 32>}]} {
    %c200_i32 = arith.constant 200 : i32
    %0 = arith.muli %arg0, %c200_i32 : i32
    %1 = tpu.iota {dimensions = array<i32: 0>} : vector<200x1xi32>
    %2 = vector.broadcast %0 : i32 to vector<200x1xi32>
    %3 = arith.addi %2, %1 : vector<200x1xi32>
    %c200_i32_0 = arith.constant 200 : i32
    %4 = vector.broadcast %c200_i32_0 : i32 to vector<200x1xi32>
    %5 = arith.cmpi slt, %3, %4 : vector<200x1xi32>
    %c0 = arith.constant 0 : index
    %c0_1 = arith.constant 0 : index
    %6 = vector.load %arg1[%c0, %c0_1] : memref<200x24xf32, #tpu.memory_space<vmem>>, vector<200x24xf32>
    %c0_2 = arith.constant 0 : index
    %c0_3 = arith.constant 0 : index
    %7 = vector.load %arg3[%c0_2, %c0_3] : memref<1x24xf32, #tpu.memory_space<vmem>>, vector<1x24xf32>
    %8 = vector.broadcast %7 : vector<1x24xf32> to vector<200x24xf32>
    %9 = arith.mulf %6, %8 : vector<200x24xf32>
    %c0_4 = arith.constant 0 : index
    %c0_5 = arith.constant 0 : index
    %10 = vector.load %arg4[%c0_4, %c0_5] : memref<1x24xf32, #tpu.memory_space<vmem>>, vector<1x24xf32>
    %11 = vector.broadcast %10 : vector<1x24xf32> to vector<200x24xf32>
    %12 = arith.addf %9, %11 : vector<200x24xf32>
    %cst = arith.constant 0.000000e+00 : f32
    %13 = vector.broadcast %cst : f32 to vector<200x24xf32>
    %14 = arith.maximumf %12, %13 : vector<200x24xf32>
    %c0_6 = arith.constant 0 : index
    %c0_7 = arith.constant 0 : index
    %15 = vector.load %arg2[%c0_6, %c0_7] : memref<200x1xf32, #tpu.memory_space<vmem>>, vector<200x1xf32>
    %16 = vector.broadcast %15 : vector<200x1xf32> to vector<200x24xf32>
    %17 = arith.mulf %14, %16 : vector<200x24xf32>
    %cst_8 = arith.constant 0.000000e+00 : f32
    %18 = vector.shape_cast %5 : vector<200x1xi1> to vector<200x1xi1>
    %19 = vector.broadcast %18 : vector<200x1xi1> to vector<200x24xi1>
    %20 = vector.broadcast %cst_8 : f32 to vector<200x24xf32>
    %21 = arith.select %19, %17, %20 : vector<200x24xi1>, vector<200x24xf32>
    %22 = arith.truncf %21 : vector<200x24xf32> to vector<200x24xbf16>
    %c0_9 = arith.constant 0 : index
    %c0_10 = arith.constant 0 : index
    %23 = vector.load %arg5[%c0_9, %c0_10] : memref<24x32xbf16, #tpu.memory_space<vmem>>, vector<24x32xbf16>
    %cst_11 = arith.constant dense<0.000000e+00> : vector<200x32xf32>
    %24 = tpu.matmul %22, %23, %cst_11 {dimension_numbers = #tpu.dot_dimension_numbers<[1], [0], [0], [1], [0, 0, 1, 1], [], []>} : vector<200x24xbf16>, vector<24x32xbf16>, vector<200x32xf32> -> vector<200x32xf32>
    %c0_12 = arith.constant 0 : index
    %c0_13 = arith.constant 0 : index
    %25 = vector.load %arg6[%c0_12, %c0_13] : memref<200x32xf32, #tpu.memory_space<vmem>>, vector<200x32xf32>
    tpu.vector_store %arg6[%c0_12, %c0_13], %24 {strides = array<i32>} : memref<200x32xf32, #tpu.memory_space<vmem>>, vector<200x32xf32>,
    %cst_14 = arith.constant dense<0.000000e+00> : vector<32xf32>
    %26 = vector.multi_reduction <add>, %24, %cst_14 [0] : vector<200x32xf32> to vector<32xf32>
    %27 = vector.shape_cast %26 : vector<32xf32> to vector<1x32xf32>
    %c0_15 = arith.constant 0 : index
    %c0_16 = arith.constant 0 : index
    %c0_17 = arith.constant 0 : index
    %28 = vector.load %arg7[%c0_15, %c0_16, %c0_17] : memref<1x1x32xf32, #tpu.memory_space<vmem>>, vector<1x1x32xf32>
    %29 = vector.shape_cast %28 : vector<1x1x32xf32> to vector<1x32xf32>
    %30 = vector.shape_cast %27 : vector<1x32xf32> to vector<1x1x32xf32>
    tpu.vector_store %arg7[%c0_15, %c0_16, %c0_17], %30 {strides = array<i32>} : memref<1x1x32xf32, #tpu.memory_space<vmem>>, vector<1x1x32xf32>,
    %31 = arith.mulf %24, %24 : vector<200x32xf32>
    %cst_18 = arith.constant dense<0.000000e+00> : vector<32xf32>
    %32 = vector.multi_reduction <add>, %31, %cst_18 [0] : vector<200x32xf32> to vector<32xf32>
    %33 = vector.shape_cast %32 : vector<32xf32> to vector<1x32xf32>
    %c0_19 = arith.constant 0 : index
    %c0_20 = arith.constant 0 : index
    %c0_21 = arith.constant 0 : index
    %34 = vector.load %arg8[%c0_19, %c0_20, %c0_21] : memref<1x1x32xf32, #tpu.memory_space<vmem>>, vector<1x1x32xf32>
    %35 = vector.shape_cast %34 : vector<1x1x32xf32> to vector<1x32xf32>
    %36 = vector.shape_cast %33 : vector<1x32xf32> to vector<1x1x32xf32>
    tpu.vector_store %arg8[%c0_19, %c0_20, %c0_21], %36 {strides = array<i32>} : memref<1x1x32xf32, #tpu.memory_space<vmem>>, vector<1x1x32xf32>,
    return
  }
  func.func @transform_0(%arg0: i32) -> (i32, i32) {
    %c0_i32 = arith.constant 0 : i32
    %c0_i32_0 = arith.constant 0 : i32
    return %arg0, %c0_i32 : i32, i32
  }
  func.func @transform_1(%arg0: i32) -> (i32, i32) {
    %c0_i32 = arith.constant 0 : i32
    %c0_i32_0 = arith.constant 0 : i32
    return %arg0, %c0_i32 : i32, i32
  }
  func.func @transform_2(%arg0: i32) -> (i32, i32) {
    %c0_i32 = arith.constant 0 : i32
    %c0_i32_0 = arith.constant 0 : i32
    %c0_i32_1 = arith.constant 0 : i32
    return %c0_i32, %c0_i32_0 : i32, i32
  }
  func.func @transform_3(%arg0: i32) -> (i32, i32) {
    %c0_i32 = arith.constant 0 : i32
    %c0_i32_0 = arith.constant 0 : i32
    %c0_i32_1 = arith.constant 0 : i32
    return %c0_i32, %c0_i32_0 : i32, i32
  }
  func.func @transform_4(%arg0: i32) -> (i32, i32) {
    %c0_i32 = arith.constant 0 : i32
    %c0_i32_0 = arith.constant 0 : i32
    %c0_i32_1 = arith.constant 0 : i32
    return %c0_i32, %c0_i32_0 : i32, i32
  }
  func.func @transform_5(%arg0: i32) -> (i32, i32) {
    %c0_i32 = arith.constant 0 : i32
    %c0_i32_0 = arith.constant 0 : i32
    return %arg0, %c0_i32 : i32, i32
  }
  func.func @transform_6(%arg0: i32) -> (i32, i32, i32) {
    %c0_i32 = arith.constant 0 : i32
    %c0_i32_0 = arith.constant 0 : i32
    %c0_i32_1 = arith.constant 0 : i32
    return %arg0, %c0_i32, %c0_i32_0 : i32, i32, i32
  }
  func.func @transform_7(%arg0: i32) -> (i32, i32, i32) {
    %c0_i32 = arith.constant 0 : i32
    %c0_i32_0 = arith.constant 0 : i32
    %c0_i32_1 = arith.constant 0 : i32
    return %arg0, %c0_i32, %c0_i32_0 : i32, i32, i32
  }
}

module attributes {stable_mosaic.version = 11 : i64} {
  func.func @_bnrelu_matmul_stats_kernel(%arg0: i32, %arg1: memref<200x32xf32, #tpu.memory_space<vmem>>, %arg2: memref<200x1xf32, #tpu.memory_space<vmem>>, %arg3: memref<1x32xf32, #tpu.memory_space<vmem>>, %arg4: memref<1x32xf32, #tpu.memory_space<vmem>>, %arg5: memref<32x16xbf16, #tpu.memory_space<vmem>>, %arg6: memref<200x16xf32, #tpu.memory_space<vmem>>, %arg7: memref<1x1x16xf32, #tpu.memory_space<vmem>>, %arg8: memref<1x1x16xf32, #tpu.memory_space<vmem>>) attributes {dimension_semantics = [#tpu.dimension_semantics<parallel>], iteration_bounds = array<i64: 1>, scalar_prefetch = 0 : i64, scratch_operands = 0 : i64, tpu.core_type = #tpu.core_type<tc>, window_params = [{transform_indices = @transform_0, window_bounds = array<i64: 200, 32>}, {transform_indices = @transform_1, window_bounds = array<i64: 200, 1>}, {pipeline_mode = #tpu.pipeline_mode<synchronous>, transform_indices = @transform_2, window_bounds = array<i64: 1, 32>}, {pipeline_mode = #tpu.pipeline_mode<synchronous>, transform_indices = @transform_3, window_bounds = array<i64: 1, 32>}, {pipeline_mode = #tpu.pipeline_mode<synchronous>, transform_indices = @transform_4, window_bounds = array<i64: 32, 16>}, {transform_indices = @transform_5, window_bounds = array<i64: 200, 16>}, {transform_indices = @transform_6, window_bounds = array<i64: 1, 1, 16>}, {transform_indices = @transform_7, window_bounds = array<i64: 1, 1, 16>}]} {
    %c200_i32 = arith.constant 200 : i32
    %0 = arith.muli %arg0, %c200_i32 : i32
    %1 = tpu.iota {dimensions = array<i32: 0>} : vector<200x1xi32>
    %2 = vector.broadcast %0 : i32 to vector<200x1xi32>
    %3 = arith.addi %2, %1 : vector<200x1xi32>
    %c200_i32_0 = arith.constant 200 : i32
    %4 = vector.broadcast %c200_i32_0 : i32 to vector<200x1xi32>
    %5 = arith.cmpi slt, %3, %4 : vector<200x1xi32>
    %c0 = arith.constant 0 : index
    %c0_1 = arith.constant 0 : index
    %6 = vector.load %arg1[%c0, %c0_1] : memref<200x32xf32, #tpu.memory_space<vmem>>, vector<200x32xf32>
    %c0_2 = arith.constant 0 : index
    %c0_3 = arith.constant 0 : index
    %7 = vector.load %arg3[%c0_2, %c0_3] : memref<1x32xf32, #tpu.memory_space<vmem>>, vector<1x32xf32>
    %8 = vector.broadcast %7 : vector<1x32xf32> to vector<200x32xf32>
    %9 = arith.mulf %6, %8 : vector<200x32xf32>
    %c0_4 = arith.constant 0 : index
    %c0_5 = arith.constant 0 : index
    %10 = vector.load %arg4[%c0_4, %c0_5] : memref<1x32xf32, #tpu.memory_space<vmem>>, vector<1x32xf32>
    %11 = vector.broadcast %10 : vector<1x32xf32> to vector<200x32xf32>
    %12 = arith.addf %9, %11 : vector<200x32xf32>
    %cst = arith.constant 0.000000e+00 : f32
    %13 = vector.broadcast %cst : f32 to vector<200x32xf32>
    %14 = arith.maximumf %12, %13 : vector<200x32xf32>
    %c0_6 = arith.constant 0 : index
    %c0_7 = arith.constant 0 : index
    %15 = vector.load %arg2[%c0_6, %c0_7] : memref<200x1xf32, #tpu.memory_space<vmem>>, vector<200x1xf32>
    %16 = vector.broadcast %15 : vector<200x1xf32> to vector<200x32xf32>
    %17 = arith.mulf %14, %16 : vector<200x32xf32>
    %cst_8 = arith.constant 0.000000e+00 : f32
    %18 = vector.shape_cast %5 : vector<200x1xi1> to vector<200x1xi1>
    %19 = vector.broadcast %18 : vector<200x1xi1> to vector<200x32xi1>
    %20 = vector.broadcast %cst_8 : f32 to vector<200x32xf32>
    %21 = arith.select %19, %17, %20 : vector<200x32xi1>, vector<200x32xf32>
    %22 = arith.truncf %21 : vector<200x32xf32> to vector<200x32xbf16>
    %c0_9 = arith.constant 0 : index
    %c0_10 = arith.constant 0 : index
    %23 = vector.load %arg5[%c0_9, %c0_10] : memref<32x16xbf16, #tpu.memory_space<vmem>>, vector<32x16xbf16>
    %cst_11 = arith.constant dense<0.000000e+00> : vector<200x16xf32>
    %24 = tpu.matmul %22, %23, %cst_11 {dimension_numbers = #tpu.dot_dimension_numbers<[1], [0], [0], [1], [0, 0, 1, 1], [], []>} : vector<200x32xbf16>, vector<32x16xbf16>, vector<200x16xf32> -> vector<200x16xf32>
    %c0_12 = arith.constant 0 : index
    %c0_13 = arith.constant 0 : index
    %25 = vector.load %arg6[%c0_12, %c0_13] : memref<200x16xf32, #tpu.memory_space<vmem>>, vector<200x16xf32>
    tpu.vector_store %arg6[%c0_12, %c0_13], %24 {strides = array<i32>} : memref<200x16xf32, #tpu.memory_space<vmem>>, vector<200x16xf32>,
    %cst_14 = arith.constant dense<0.000000e+00> : vector<16xf32>
    %26 = vector.multi_reduction <add>, %24, %cst_14 [0] : vector<200x16xf32> to vector<16xf32>
    %27 = vector.shape_cast %26 : vector<16xf32> to vector<1x16xf32>
    %c0_15 = arith.constant 0 : index
    %c0_16 = arith.constant 0 : index
    %c0_17 = arith.constant 0 : index
    %28 = vector.load %arg7[%c0_15, %c0_16, %c0_17] : memref<1x1x16xf32, #tpu.memory_space<vmem>>, vector<1x1x16xf32>
    %29 = vector.shape_cast %28 : vector<1x1x16xf32> to vector<1x16xf32>
    %30 = vector.shape_cast %27 : vector<1x16xf32> to vector<1x1x16xf32>
    tpu.vector_store %arg7[%c0_15, %c0_16, %c0_17], %30 {strides = array<i32>} : memref<1x1x16xf32, #tpu.memory_space<vmem>>, vector<1x1x16xf32>,
    %31 = arith.mulf %24, %24 : vector<200x16xf32>
    %cst_18 = arith.constant dense<0.000000e+00> : vector<16xf32>
    %32 = vector.multi_reduction <add>, %31, %cst_18 [0] : vector<200x16xf32> to vector<16xf32>
    %33 = vector.shape_cast %32 : vector<16xf32> to vector<1x16xf32>
    %c0_19 = arith.constant 0 : index
    %c0_20 = arith.constant 0 : index
    %c0_21 = arith.constant 0 : index
    %34 = vector.load %arg8[%c0_19, %c0_20, %c0_21] : memref<1x1x16xf32, #tpu.memory_space<vmem>>, vector<1x1x16xf32>
    %35 = vector.shape_cast %34 : vector<1x1x16xf32> to vector<1x16xf32>
    %36 = vector.shape_cast %33 : vector<1x16xf32> to vector<1x1x16xf32>
    tpu.vector_store %arg8[%c0_19, %c0_20, %c0_21], %36 {strides = array<i32>} : memref<1x1x16xf32, #tpu.memory_space<vmem>>, vector<1x1x16xf32>,
    return
  }
  func.func @transform_0(%arg0: i32) -> (i32, i32) {
    %c0_i32 = arith.constant 0 : i32
    %c0_i32_0 = arith.constant 0 : i32
    return %arg0, %c0_i32 : i32, i32
  }
  func.func @transform_1(%arg0: i32) -> (i32, i32) {
    %c0_i32 = arith.constant 0 : i32
    %c0_i32_0 = arith.constant 0 : i32
    return %arg0, %c0_i32 : i32, i32
  }
  func.func @transform_2(%arg0: i32) -> (i32, i32) {
    %c0_i32 = arith.constant 0 : i32
    %c0_i32_0 = arith.constant 0 : i32
    %c0_i32_1 = arith.constant 0 : i32
    return %c0_i32, %c0_i32_0 : i32, i32
  }
  func.func @transform_3(%arg0: i32) -> (i32, i32) {
    %c0_i32 = arith.constant 0 : i32
    %c0_i32_0 = arith.constant 0 : i32
    %c0_i32_1 = arith.constant 0 : i32
    return %c0_i32, %c0_i32_0 : i32, i32
  }
  func.func @transform_4(%arg0: i32) -> (i32, i32) {
    %c0_i32 = arith.constant 0 : i32
    %c0_i32_0 = arith.constant 0 : i32
    %c0_i32_1 = arith.constant 0 : i32
    return %c0_i32, %c0_i32_0 : i32, i32
  }
  func.func @transform_5(%arg0: i32) -> (i32, i32) {
    %c0_i32 = arith.constant 0 : i32
    %c0_i32_0 = arith.constant 0 : i32
    return %arg0, %c0_i32 : i32, i32
  }
  func.func @transform_6(%arg0: i32) -> (i32, i32, i32) {
    %c0_i32 = arith.constant 0 : i32
    %c0_i32_0 = arith.constant 0 : i32
    %c0_i32_1 = arith.constant 0 : i32
    return %arg0, %c0_i32, %c0_i32_0 : i32, i32, i32
  }
  func.func @transform_7(%arg0: i32) -> (i32, i32, i32) {
    %c0_i32 = arith.constant 0 : i32
    %c0_i32_0 = arith.constant 0 : i32
    %c0_i32_1 = arith.constant 0 : i32
    return %arg0, %c0_i32, %c0_i32_0 : i32, i32, i32
  }
}

module attributes {stable_mosaic.version = 11 : i64} {
  func.func @_stats_kernel(%arg0: i32, %arg1: memref<72x16xf32, #tpu.memory_space<vmem>>, %arg2: memref<1x1x16xf32, #tpu.memory_space<vmem>>, %arg3: memref<1x1x16xf32, #tpu.memory_space<vmem>>) attributes {dimension_semantics = [#tpu.dimension_semantics<parallel>], iteration_bounds = array<i64: 1>, scalar_prefetch = 0 : i64, scratch_operands = 0 : i64, tpu.core_type = #tpu.core_type<tc>, window_params = [{transform_indices = @transform_0, window_bounds = array<i64: 72, 16>}, {transform_indices = @transform_1, window_bounds = array<i64: 1, 1, 16>}, {transform_indices = @transform_2, window_bounds = array<i64: 1, 1, 16>}]} {
    %c72_i32 = arith.constant 72 : i32
    %0 = arith.muli %arg0, %c72_i32 : i32
    %1 = tpu.iota {dimensions = array<i32: 0>} : vector<72x1xi32>
    %2 = vector.broadcast %0 : i32 to vector<72x1xi32>
    %3 = arith.addi %2, %1 : vector<72x1xi32>
    %c72_i32_0 = arith.constant 72 : i32
    %4 = vector.broadcast %c72_i32_0 : i32 to vector<72x1xi32>
    %5 = arith.cmpi slt, %3, %4 : vector<72x1xi32>
    %c0 = arith.constant 0 : index
    %c0_1 = arith.constant 0 : index
    %6 = vector.load %arg1[%c0, %c0_1] : memref<72x16xf32, #tpu.memory_space<vmem>>, vector<72x16xf32>
    %cst = arith.constant 0.000000e+00 : f32
    %7 = vector.shape_cast %5 : vector<72x1xi1> to vector<72x1xi1>
    %8 = vector.broadcast %7 : vector<72x1xi1> to vector<72x16xi1>
    %9 = vector.broadcast %cst : f32 to vector<72x16xf32>
    %10 = arith.select %8, %6, %9 : vector<72x16xi1>, vector<72x16xf32>
    %cst_2 = arith.constant dense<0.000000e+00> : vector<16xf32>
    %11 = vector.multi_reduction <add>, %10, %cst_2 [0] : vector<72x16xf32> to vector<16xf32>
    %12 = vector.shape_cast %11 : vector<16xf32> to vector<1x16xf32>
    %c0_3 = arith.constant 0 : index
    %c0_4 = arith.constant 0 : index
    %c0_5 = arith.constant 0 : index
    %13 = vector.load %arg2[%c0_3, %c0_4, %c0_5] : memref<1x1x16xf32, #tpu.memory_space<vmem>>, vector<1x1x16xf32>
    %14 = vector.shape_cast %13 : vector<1x1x16xf32> to vector<1x16xf32>
    %15 = vector.shape_cast %12 : vector<1x16xf32> to vector<1x1x16xf32>
    tpu.vector_store %arg2[%c0_3, %c0_4, %c0_5], %15 {strides = array<i32>} : memref<1x1x16xf32, #tpu.memory_space<vmem>>, vector<1x1x16xf32>,
    %16 = arith.mulf %10, %10 : vector<72x16xf32>
    %cst_6 = arith.constant dense<0.000000e+00> : vector<16xf32>
    %17 = vector.multi_reduction <add>, %16, %cst_6 [0] : vector<72x16xf32> to vector<16xf32>
    %18 = vector.shape_cast %17 : vector<16xf32> to vector<1x16xf32>
    %c0_7 = arith.constant 0 : index
    %c0_8 = arith.constant 0 : index
    %c0_9 = arith.constant 0 : index
    %19 = vector.load %arg3[%c0_7, %c0_8, %c0_9] : memref<1x1x16xf32, #tpu.memory_space<vmem>>, vector<1x1x16xf32>
    %20 = vector.shape_cast %19 : vector<1x1x16xf32> to vector<1x16xf32>
    %21 = vector.shape_cast %18 : vector<1x16xf32> to vector<1x1x16xf32>
    tpu.vector_store %arg3[%c0_7, %c0_8, %c0_9], %21 {strides = array<i32>} : memref<1x1x16xf32, #tpu.memory_space<vmem>>, vector<1x1x16xf32>,
    return
  }
  func.func @transform_0(%arg0: i32) -> (i32, i32) {
    %c0_i32 = arith.constant 0 : i32
    %c0_i32_0 = arith.constant 0 : i32
    return %arg0, %c0_i32 : i32, i32
  }
  func.func @transform_1(%arg0: i32) -> (i32, i32, i32) {
    %c0_i32 = arith.constant 0 : i32
    %c0_i32_0 = arith.constant 0 : i32
    %c0_i32_1 = arith.constant 0 : i32
    return %arg0, %c0_i32, %c0_i32_0 : i32, i32, i32
  }
  func.func @transform_2(%arg0: i32) -> (i32, i32, i32) {
    %c0_i32 = arith.constant 0 : i32
    %c0_i32_0 = arith.constant 0 : i32
    %c0_i32_1 = arith.constant 0 : i32
    return %arg0, %c0_i32, %c0_i32_0 : i32, i32, i32
  }
}

module attributes {stable_mosaic.version = 11 : i64} {
  func.func @_bnrelu_matmul_stats_kernel(%arg0: i32, %arg1: memref<72x16xf32, #tpu.memory_space<vmem>>, %arg2: memref<72x1xf32, #tpu.memory_space<vmem>>, %arg3: memref<1x16xf32, #tpu.memory_space<vmem>>, %arg4: memref<1x16xf32, #tpu.memory_space<vmem>>, %arg5: memref<16x32xbf16, #tpu.memory_space<vmem>>, %arg6: memref<72x32xf32, #tpu.memory_space<vmem>>, %arg7: memref<1x1x32xf32, #tpu.memory_space<vmem>>, %arg8: memref<1x1x32xf32, #tpu.memory_space<vmem>>) attributes {dimension_semantics = [#tpu.dimension_semantics<parallel>], iteration_bounds = array<i64: 1>, scalar_prefetch = 0 : i64, scratch_operands = 0 : i64, tpu.core_type = #tpu.core_type<tc>, window_params = [{transform_indices = @transform_0, window_bounds = array<i64: 72, 16>}, {transform_indices = @transform_1, window_bounds = array<i64: 72, 1>}, {pipeline_mode = #tpu.pipeline_mode<synchronous>, transform_indices = @transform_2, window_bounds = array<i64: 1, 16>}, {pipeline_mode = #tpu.pipeline_mode<synchronous>, transform_indices = @transform_3, window_bounds = array<i64: 1, 16>}, {pipeline_mode = #tpu.pipeline_mode<synchronous>, transform_indices = @transform_4, window_bounds = array<i64: 16, 32>}, {transform_indices = @transform_5, window_bounds = array<i64: 72, 32>}, {transform_indices = @transform_6, window_bounds = array<i64: 1, 1, 32>}, {transform_indices = @transform_7, window_bounds = array<i64: 1, 1, 32>}]} {
    %c72_i32 = arith.constant 72 : i32
    %0 = arith.muli %arg0, %c72_i32 : i32
    %1 = tpu.iota {dimensions = array<i32: 0>} : vector<72x1xi32>
    %2 = vector.broadcast %0 : i32 to vector<72x1xi32>
    %3 = arith.addi %2, %1 : vector<72x1xi32>
    %c72_i32_0 = arith.constant 72 : i32
    %4 = vector.broadcast %c72_i32_0 : i32 to vector<72x1xi32>
    %5 = arith.cmpi slt, %3, %4 : vector<72x1xi32>
    %c0 = arith.constant 0 : index
    %c0_1 = arith.constant 0 : index
    %6 = vector.load %arg1[%c0, %c0_1] : memref<72x16xf32, #tpu.memory_space<vmem>>, vector<72x16xf32>
    %c0_2 = arith.constant 0 : index
    %c0_3 = arith.constant 0 : index
    %7 = vector.load %arg3[%c0_2, %c0_3] : memref<1x16xf32, #tpu.memory_space<vmem>>, vector<1x16xf32>
    %8 = vector.broadcast %7 : vector<1x16xf32> to vector<72x16xf32>
    %9 = arith.mulf %6, %8 : vector<72x16xf32>
    %c0_4 = arith.constant 0 : index
    %c0_5 = arith.constant 0 : index
    %10 = vector.load %arg4[%c0_4, %c0_5] : memref<1x16xf32, #tpu.memory_space<vmem>>, vector<1x16xf32>
    %11 = vector.broadcast %10 : vector<1x16xf32> to vector<72x16xf32>
    %12 = arith.addf %9, %11 : vector<72x16xf32>
    %cst = arith.constant 0.000000e+00 : f32
    %13 = vector.broadcast %cst : f32 to vector<72x16xf32>
    %14 = arith.maximumf %12, %13 : vector<72x16xf32>
    %c0_6 = arith.constant 0 : index
    %c0_7 = arith.constant 0 : index
    %15 = vector.load %arg2[%c0_6, %c0_7] : memref<72x1xf32, #tpu.memory_space<vmem>>, vector<72x1xf32>
    %16 = vector.broadcast %15 : vector<72x1xf32> to vector<72x16xf32>
    %17 = arith.mulf %14, %16 : vector<72x16xf32>
    %cst_8 = arith.constant 0.000000e+00 : f32
    %18 = vector.shape_cast %5 : vector<72x1xi1> to vector<72x1xi1>
    %19 = vector.broadcast %18 : vector<72x1xi1> to vector<72x16xi1>
    %20 = vector.broadcast %cst_8 : f32 to vector<72x16xf32>
    %21 = arith.select %19, %17, %20 : vector<72x16xi1>, vector<72x16xf32>
    %22 = arith.truncf %21 : vector<72x16xf32> to vector<72x16xbf16>
    %c0_9 = arith.constant 0 : index
    %c0_10 = arith.constant 0 : index
    %23 = vector.load %arg5[%c0_9, %c0_10] : memref<16x32xbf16, #tpu.memory_space<vmem>>, vector<16x32xbf16>
    %cst_11 = arith.constant dense<0.000000e+00> : vector<72x32xf32>
    %24 = tpu.matmul %22, %23, %cst_11 {dimension_numbers = #tpu.dot_dimension_numbers<[1], [0], [0], [1], [0, 0, 1, 1], [], []>} : vector<72x16xbf16>, vector<16x32xbf16>, vector<72x32xf32> -> vector<72x32xf32>
    %c0_12 = arith.constant 0 : index
    %c0_13 = arith.constant 0 : index
    %25 = vector.load %arg6[%c0_12, %c0_13] : memref<72x32xf32, #tpu.memory_space<vmem>>, vector<72x32xf32>
    tpu.vector_store %arg6[%c0_12, %c0_13], %24 {strides = array<i32>} : memref<72x32xf32, #tpu.memory_space<vmem>>, vector<72x32xf32>,
    %cst_14 = arith.constant dense<0.000000e+00> : vector<32xf32>
    %26 = vector.multi_reduction <add>, %24, %cst_14 [0] : vector<72x32xf32> to vector<32xf32>
    %27 = vector.shape_cast %26 : vector<32xf32> to vector<1x32xf32>
    %c0_15 = arith.constant 0 : index
    %c0_16 = arith.constant 0 : index
    %c0_17 = arith.constant 0 : index
    %28 = vector.load %arg7[%c0_15, %c0_16, %c0_17] : memref<1x1x32xf32, #tpu.memory_space<vmem>>, vector<1x1x32xf32>
    %29 = vector.shape_cast %28 : vector<1x1x32xf32> to vector<1x32xf32>
    %30 = vector.shape_cast %27 : vector<1x32xf32> to vector<1x1x32xf32>
    tpu.vector_store %arg7[%c0_15, %c0_16, %c0_17], %30 {strides = array<i32>} : memref<1x1x32xf32, #tpu.memory_space<vmem>>, vector<1x1x32xf32>,
    %31 = arith.mulf %24, %24 : vector<72x32xf32>
    %cst_18 = arith.constant dense<0.000000e+00> : vector<32xf32>
    %32 = vector.multi_reduction <add>, %31, %cst_18 [0] : vector<72x32xf32> to vector<32xf32>
    %33 = vector.shape_cast %32 : vector<32xf32> to vector<1x32xf32>
    %c0_19 = arith.constant 0 : index
    %c0_20 = arith.constant 0 : index
    %c0_21 = arith.constant 0 : index
    %34 = vector.load %arg8[%c0_19, %c0_20, %c0_21] : memref<1x1x32xf32, #tpu.memory_space<vmem>>, vector<1x1x32xf32>
    %35 = vector.shape_cast %34 : vector<1x1x32xf32> to vector<1x32xf32>
    %36 = vector.shape_cast %33 : vector<1x32xf32> to vector<1x1x32xf32>
    tpu.vector_store %arg8[%c0_19, %c0_20, %c0_21], %36 {strides = array<i32>} : memref<1x1x32xf32, #tpu.memory_space<vmem>>, vector<1x1x32xf32>,
    return
  }
  func.func @transform_0(%arg0: i32) -> (i32, i32) {
    %c0_i32 = arith.constant 0 : i32
    %c0_i32_0 = arith.constant 0 : i32
    return %arg0, %c0_i32 : i32, i32
  }
  func.func @transform_1(%arg0: i32) -> (i32, i32) {
    %c0_i32 = arith.constant 0 : i32
    %c0_i32_0 = arith.constant 0 : i32
    return %arg0, %c0_i32 : i32, i32
  }
  func.func @transform_2(%arg0: i32) -> (i32, i32) {
    %c0_i32 = arith.constant 0 : i32
    %c0_i32_0 = arith.constant 0 : i32
    %c0_i32_1 = arith.constant 0 : i32
    return %c0_i32, %c0_i32_0 : i32, i32
  }
  func.func @transform_3(%arg0: i32) -> (i32, i32) {
    %c0_i32 = arith.constant 0 : i32
    %c0_i32_0 = arith.constant 0 : i32
    %c0_i32_1 = arith.constant 0 : i32
    return %c0_i32, %c0_i32_0 : i32, i32
  }
  func.func @transform_4(%arg0: i32) -> (i32, i32) {
    %c0_i32 = arith.constant 0 : i32
    %c0_i32_0 = arith.constant 0 : i32
    %c0_i32_1 = arith.constant 0 : i32
    return %c0_i32, %c0_i32_0 : i32, i32
  }
  func.func @transform_5(%arg0: i32) -> (i32, i32) {
    %c0_i32 = arith.constant 0 : i32
    %c0_i32_0 = arith.constant 0 : i32
    return %arg0, %c0_i32 : i32, i32
  }
  func.func @transform_6(%arg0: i32) -> (i32, i32, i32) {
    %c0_i32 = arith.constant 0 : i32
    %c0_i32_0 = arith.constant 0 : i32
    %c0_i32_1 = arith.constant 0 : i32
    return %arg0, %c0_i32, %c0_i32_0 : i32, i32, i32
  }
  func.func @transform_7(%arg0: i32) -> (i32, i32, i32) {
    %c0_i32 = arith.constant 0 : i32
    %c0_i32_0 = arith.constant 0 : i32
    %c0_i32_1 = arith.constant 0 : i32
    return %arg0, %c0_i32, %c0_i32_0 : i32, i32, i32
  }
}

module attributes {stable_mosaic.version = 11 : i64} {
  func.func @_conv3x3_kernel(%arg0: i32, %arg1: memref<1x36x32xf32, #tpu.memory_space<vmem>>, %arg2: memref<36x1xf32, #tpu.memory_space<vmem>>, %arg3: memref<1x32xf32, #tpu.memory_space<vmem>>, %arg4: memref<1x32xf32, #tpu.memory_space<vmem>>, %arg5: memref<9x32x8xbf16, #tpu.memory_space<vmem>>, %arg6: memref<1x36x8xf32, #tpu.memory_space<vmem>>, %arg7: memref<1x1x8xf32, #tpu.memory_space<vmem>>, %arg8: memref<1x1x8xf32, #tpu.memory_space<vmem>>, %arg9: memref<50x32xf32, #tpu.memory_space<vmem>>) attributes {dimension_semantics = [#tpu.dimension_semantics<parallel>], iteration_bounds = array<i64: 2>, scalar_prefetch = 0 : i64, scratch_operands = 1 : i64, tpu.core_type = #tpu.core_type<tc>, window_params = [{transform_indices = @transform_0, window_bounds = array<i64: 1, 36, 32>}, {pipeline_mode = #tpu.pipeline_mode<synchronous>, transform_indices = @transform_1, window_bounds = array<i64: 36, 1>}, {pipeline_mode = #tpu.pipeline_mode<synchronous>, transform_indices = @transform_2, window_bounds = array<i64: 1, 32>}, {pipeline_mode = #tpu.pipeline_mode<synchronous>, transform_indices = @transform_3, window_bounds = array<i64: 1, 32>}, {pipeline_mode = #tpu.pipeline_mode<synchronous>, transform_indices = @transform_4, window_bounds = array<i64: 9, 32, 8>}, {transform_indices = @transform_5, window_bounds = array<i64: 1, 36, 8>}, {transform_indices = @transform_6, window_bounds = array<i64: 1, 1, 8>}, {transform_indices = @transform_7, window_bounds = array<i64: 1, 1, 8>}]} {
    %c0 = arith.constant 0 : index
    %c0_0 = arith.constant 0 : index
    %c0_1 = arith.constant 0 : index
    %0 = vector.load %arg1[%c0, %c0_0, %c0_1] : memref<1x36x32xf32, #tpu.memory_space<vmem>>, vector<1x36x32xf32>
    %1 = vector.shape_cast %0 : vector<1x36x32xf32> to vector<36x32xf32>
    %c0_2 = arith.constant 0 : index
    %c0_3 = arith.constant 0 : index
    %2 = vector.load %arg3[%c0_2, %c0_3] : memref<1x32xf32, #tpu.memory_space<vmem>>, vector<1x32xf32>
    %3 = vector.broadcast %2 : vector<1x32xf32> to vector<36x32xf32>
    %4 = arith.mulf %1, %3 : vector<36x32xf32>
    %c0_4 = arith.constant 0 : index
    %c0_5 = arith.constant 0 : index
    %5 = vector.load %arg4[%c0_4, %c0_5] : memref<1x32xf32, #tpu.memory_space<vmem>>, vector<1x32xf32>
    %6 = vector.broadcast %5 : vector<1x32xf32> to vector<36x32xf32>
    %7 = arith.addf %4, %6 : vector<36x32xf32>
    %cst = arith.constant 0.000000e+00 : f32
    %8 = vector.broadcast %cst : f32 to vector<36x32xf32>
    %9 = arith.maximumf %7, %8 : vector<36x32xf32>
    %c0_6 = arith.constant 0 : index
    %c0_7 = arith.constant 0 : index
    %10 = vector.load %arg2[%c0_6, %c0_7] : memref<36x1xf32, #tpu.memory_space<vmem>>, vector<36x1xf32>
    %11 = vector.broadcast %10 : vector<36x1xf32> to vector<36x32xf32>
    %12 = arith.mulf %9, %11 : vector<36x32xf32>
    %cst_8 = arith.constant 0.000000e+00 : f32
    %13 = vector.broadcast %cst_8 : f32 to vector<50x32xf32>
    %c0_9 = arith.constant 0 : index
    %c0_10 = arith.constant 0 : index
    %14 = vector.load %arg9[%c0_9, %c0_10] : memref<50x32xf32, #tpu.memory_space<vmem>>, vector<50x32xf32>
    tpu.vector_store %arg9[%c0_9, %c0_10], %13 {strides = array<i32>} : memref<50x32xf32, #tpu.memory_space<vmem>>, vector<50x32xf32>,
    %c7 = arith.constant 7 : index
    %c0_11 = arith.constant 0 : index
    %15 = vector.load %arg9[%c7, %c0_11] : memref<50x32xf32, #tpu.memory_space<vmem>>, vector<36x32xf32>
    tpu.vector_store %arg9[%c7, %c0_11], %12 {strides = array<i32>} : memref<50x32xf32, #tpu.memory_space<vmem>>, vector<36x32xf32>,
    %cst_12 = arith.constant 0.000000e+00 : f32
    %16 = vector.broadcast %cst_12 : f32 to vector<36x8xf32>
    %c0_13 = arith.constant 0 : index
    %c0_14 = arith.constant 0 : index
    %17 = vector.load %arg9[%c0_13, %c0_14] : memref<50x32xf32, #tpu.memory_space<vmem>>, vector<36x32xf32>
    %18 = arith.truncf %17 : vector<36x32xf32> to vector<36x32xbf16>
    %c0_15 = arith.constant 0 : index
    %c0_16 = arith.constant 0 : index
    %c0_17 = arith.constant 0 : index
    %19 = vector.load %arg5[%c0_15, %c0_16, %c0_17] : memref<9x32x8xbf16, #tpu.memory_space<vmem>>, vector<1x32x8xbf16>
    %20 = vector.shape_cast %19 : vector<1x32x8xbf16> to vector<32x8xbf16>
    %cst_18 = arith.constant dense<0.000000e+00> : vector<36x8xf32>
    %21 = tpu.matmul %18, %20, %cst_18 {dimension_numbers = #tpu.dot_dimension_numbers<[1], [0], [0], [1], [0, 0, 1, 1], [], []>} : vector<36x32xbf16>, vector<32x8xbf16>, vector<36x8xf32> -> vector<36x8xf32>
    %22 = arith.addf %16, %21 : vector<36x8xf32>
    %c1 = arith.constant 1 : index
    %c0_19 = arith.constant 0 : index
    %23 = vector.load %arg9[%c1, %c0_19] : memref<50x32xf32, #tpu.memory_space<vmem>>, vector<36x32xf32>
    %24 = arith.truncf %23 : vector<36x32xf32> to vector<36x32xbf16>
    %c1_20 = arith.constant 1 : index
    %c0_21 = arith.constant 0 : index
    %c0_22 = arith.constant 0 : index
    %25 = vector.load %arg5[%c1_20, %c0_21, %c0_22] : memref<9x32x8xbf16, #tpu.memory_space<vmem>>, vector<1x32x8xbf16>
    %26 = vector.shape_cast %25 : vector<1x32x8xbf16> to vector<32x8xbf16>
    %cst_23 = arith.constant dense<0.000000e+00> : vector<36x8xf32>
    %27 = tpu.matmul %24, %26, %cst_23 {dimension_numbers = #tpu.dot_dimension_numbers<[1], [0], [0], [1], [0, 0, 1, 1], [], []>} : vector<36x32xbf16>, vector<32x8xbf16>, vector<36x8xf32> -> vector<36x8xf32>
    %28 = arith.addf %22, %27 : vector<36x8xf32>
    %c2 = arith.constant 2 : index
    %c0_24 = arith.constant 0 : index
    %29 = vector.load %arg9[%c2, %c0_24] : memref<50x32xf32, #tpu.memory_space<vmem>>, vector<36x32xf32>
    %30 = arith.truncf %29 : vector<36x32xf32> to vector<36x32xbf16>
    %c2_25 = arith.constant 2 : index
    %c0_26 = arith.constant 0 : index
    %c0_27 = arith.constant 0 : index
    %31 = vector.load %arg5[%c2_25, %c0_26, %c0_27] : memref<9x32x8xbf16, #tpu.memory_space<vmem>>, vector<1x32x8xbf16>
    %32 = vector.shape_cast %31 : vector<1x32x8xbf16> to vector<32x8xbf16>
    %cst_28 = arith.constant dense<0.000000e+00> : vector<36x8xf32>
    %33 = tpu.matmul %30, %32, %cst_28 {dimension_numbers = #tpu.dot_dimension_numbers<[1], [0], [0], [1], [0, 0, 1, 1], [], []>} : vector<36x32xbf16>, vector<32x8xbf16>, vector<36x8xf32> -> vector<36x8xf32>
    %34 = arith.addf %28, %33 : vector<36x8xf32>
    %c6 = arith.constant 6 : index
    %c0_29 = arith.constant 0 : index
    %35 = vector.load %arg9[%c6, %c0_29] : memref<50x32xf32, #tpu.memory_space<vmem>>, vector<36x32xf32>
    %36 = arith.truncf %35 : vector<36x32xf32> to vector<36x32xbf16>
    %c3 = arith.constant 3 : index
    %c0_30 = arith.constant 0 : index
    %c0_31 = arith.constant 0 : index
    %37 = vector.load %arg5[%c3, %c0_30, %c0_31] : memref<9x32x8xbf16, #tpu.memory_space<vmem>>, vector<1x32x8xbf16>
    %38 = vector.shape_cast %37 : vector<1x32x8xbf16> to vector<32x8xbf16>
    %cst_32 = arith.constant dense<0.000000e+00> : vector<36x8xf32>
    %39 = tpu.matmul %36, %38, %cst_32 {dimension_numbers = #tpu.dot_dimension_numbers<[1], [0], [0], [1], [0, 0, 1, 1], [], []>} : vector<36x32xbf16>, vector<32x8xbf16>, vector<36x8xf32> -> vector<36x8xf32>
    %40 = arith.addf %34, %39 : vector<36x8xf32>
    %c7_33 = arith.constant 7 : index
    %c0_34 = arith.constant 0 : index
    %41 = vector.load %arg9[%c7_33, %c0_34] : memref<50x32xf32, #tpu.memory_space<vmem>>, vector<36x32xf32>
    %42 = arith.truncf %41 : vector<36x32xf32> to vector<36x32xbf16>
    %c4 = arith.constant 4 : index
    %c0_35 = arith.constant 0 : index
    %c0_36 = arith.constant 0 : index
    %43 = vector.load %arg5[%c4, %c0_35, %c0_36] : memref<9x32x8xbf16, #tpu.memory_space<vmem>>, vector<1x32x8xbf16>
    %44 = vector.shape_cast %43 : vector<1x32x8xbf16> to vector<32x8xbf16>
    %cst_37 = arith.constant dense<0.000000e+00> : vector<36x8xf32>
    %45 = tpu.matmul %42, %44, %cst_37 {dimension_numbers = #tpu.dot_dimension_numbers<[1], [0], [0], [1], [0, 0, 1, 1], [], []>} : vector<36x32xbf16>, vector<32x8xbf16>, vector<36x8xf32> -> vector<36x8xf32>
    %46 = arith.addf %40, %45 : vector<36x8xf32>
    %c8 = arith.constant 8 : index
    %c0_38 = arith.constant 0 : index
    %47 = vector.load %arg9[%c8, %c0_38] : memref<50x32xf32, #tpu.memory_space<vmem>>, vector<36x32xf32>
    %48 = arith.truncf %47 : vector<36x32xf32> to vector<36x32xbf16>
    %c5 = arith.constant 5 : index
    %c0_39 = arith.constant 0 : index
    %c0_40 = arith.constant 0 : index
    %49 = vector.load %arg5[%c5, %c0_39, %c0_40] : memref<9x32x8xbf16, #tpu.memory_space<vmem>>, vector<1x32x8xbf16>
    %50 = vector.shape_cast %49 : vector<1x32x8xbf16> to vector<32x8xbf16>
    %cst_41 = arith.constant dense<0.000000e+00> : vector<36x8xf32>
    %51 = tpu.matmul %48, %50, %cst_41 {dimension_numbers = #tpu.dot_dimension_numbers<[1], [0], [0], [1], [0, 0, 1, 1], [], []>} : vector<36x32xbf16>, vector<32x8xbf16>, vector<36x8xf32> -> vector<36x8xf32>
    %52 = arith.addf %46, %51 : vector<36x8xf32>
    %c12 = arith.constant 12 : index
    %c0_42 = arith.constant 0 : index
    %53 = vector.load %arg9[%c12, %c0_42] : memref<50x32xf32, #tpu.memory_space<vmem>>, vector<36x32xf32>
    %54 = arith.truncf %53 : vector<36x32xf32> to vector<36x32xbf16>
    %c6_43 = arith.constant 6 : index
    %c0_44 = arith.constant 0 : index
    %c0_45 = arith.constant 0 : index
    %55 = vector.load %arg5[%c6_43, %c0_44, %c0_45] : memref<9x32x8xbf16, #tpu.memory_space<vmem>>, vector<1x32x8xbf16>
    %56 = vector.shape_cast %55 : vector<1x32x8xbf16> to vector<32x8xbf16>
    %cst_46 = arith.constant dense<0.000000e+00> : vector<36x8xf32>
    %57 = tpu.matmul %54, %56, %cst_46 {dimension_numbers = #tpu.dot_dimension_numbers<[1], [0], [0], [1], [0, 0, 1, 1], [], []>} : vector<36x32xbf16>, vector<32x8xbf16>, vector<36x8xf32> -> vector<36x8xf32>
    %58 = arith.addf %52, %57 : vector<36x8xf32>
    %c13 = arith.constant 13 : index
    %c0_47 = arith.constant 0 : index
    %59 = vector.load %arg9[%c13, %c0_47] : memref<50x32xf32, #tpu.memory_space<vmem>>, vector<36x32xf32>
    %60 = arith.truncf %59 : vector<36x32xf32> to vector<36x32xbf16>
    %c7_48 = arith.constant 7 : index
    %c0_49 = arith.constant 0 : index
    %c0_50 = arith.constant 0 : index
    %61 = vector.load %arg5[%c7_48, %c0_49, %c0_50] : memref<9x32x8xbf16, #tpu.memory_space<vmem>>, vector<1x32x8xbf16>
    %62 = vector.shape_cast %61 : vector<1x32x8xbf16> to vector<32x8xbf16>
    %cst_51 = arith.constant dense<0.000000e+00> : vector<36x8xf32>
    %63 = tpu.matmul %60, %62, %cst_51 {dimension_numbers = #tpu.dot_dimension_numbers<[1], [0], [0], [1], [0, 0, 1, 1], [], []>} : vector<36x32xbf16>, vector<32x8xbf16>, vector<36x8xf32> -> vector<36x8xf32>
    %64 = arith.addf %58, %63 : vector<36x8xf32>
    %c14 = arith.constant 14 : index
    %c0_52 = arith.constant 0 : index
    %65 = vector.load %arg9[%c14, %c0_52] : memref<50x32xf32, #tpu.memory_space<vmem>>, vector<36x32xf32>
    %66 = arith.truncf %65 : vector<36x32xf32> to vector<36x32xbf16>
    %c8_53 = arith.constant 8 : index
    %c0_54 = arith.constant 0 : index
    %c0_55 = arith.constant 0 : index
    %67 = vector.load %arg5[%c8_53, %c0_54, %c0_55] : memref<9x32x8xbf16, #tpu.memory_space<vmem>>, vector<1x32x8xbf16>
    %68 = vector.shape_cast %67 : vector<1x32x8xbf16> to vector<32x8xbf16>
    %cst_56 = arith.constant dense<0.000000e+00> : vector<36x8xf32>
    %69 = tpu.matmul %66, %68, %cst_56 {dimension_numbers = #tpu.dot_dimension_numbers<[1], [0], [0], [1], [0, 0, 1, 1], [], []>} : vector<36x32xbf16>, vector<32x8xbf16>, vector<36x8xf32> -> vector<36x8xf32>
    %70 = arith.addf %64, %69 : vector<36x8xf32>
    %c0_57 = arith.constant 0 : index
    %c0_58 = arith.constant 0 : index
    %71 = vector.load %arg2[%c0_57, %c0_58] : memref<36x1xf32, #tpu.memory_space<vmem>>, vector<36x1xf32>
    %72 = vector.broadcast %71 : vector<36x1xf32> to vector<36x8xf32>
    %73 = arith.mulf %70, %72 : vector<36x8xf32>
    %c0_59 = arith.constant 0 : index
    %c0_60 = arith.constant 0 : index
    %c0_61 = arith.constant 0 : index
    %74 = vector.load %arg6[%c0_59, %c0_60, %c0_61] : memref<1x36x8xf32, #tpu.memory_space<vmem>>, vector<1x36x8xf32>
    %75 = vector.shape_cast %74 : vector<1x36x8xf32> to vector<36x8xf32>
    %76 = vector.shape_cast %73 : vector<36x8xf32> to vector<1x36x8xf32>
    tpu.vector_store %arg6[%c0_59, %c0_60, %c0_61], %76 {strides = array<i32>} : memref<1x36x8xf32, #tpu.memory_space<vmem>>, vector<1x36x8xf32>,
    %cst_62 = arith.constant dense<0.000000e+00> : vector<8xf32>
    %77 = vector.multi_reduction <add>, %73, %cst_62 [0] : vector<36x8xf32> to vector<8xf32>
    %78 = vector.shape_cast %77 : vector<8xf32> to vector<1x8xf32>
    %c0_63 = arith.constant 0 : index
    %c0_64 = arith.constant 0 : index
    %c0_65 = arith.constant 0 : index
    %79 = vector.load %arg7[%c0_63, %c0_64, %c0_65] : memref<1x1x8xf32, #tpu.memory_space<vmem>>, vector<1x1x8xf32>
    %80 = vector.shape_cast %79 : vector<1x1x8xf32> to vector<1x8xf32>
    %81 = vector.shape_cast %78 : vector<1x8xf32> to vector<1x1x8xf32>
    tpu.vector_store %arg7[%c0_63, %c0_64, %c0_65], %81 {strides = array<i32>} : memref<1x1x8xf32, #tpu.memory_space<vmem>>, vector<1x1x8xf32>,
    %82 = arith.mulf %73, %73 : vector<36x8xf32>
    %cst_66 = arith.constant dense<0.000000e+00> : vector<8xf32>
    %83 = vector.multi_reduction <add>, %82, %cst_66 [0] : vector<36x8xf32> to vector<8xf32>
    %84 = vector.shape_cast %83 : vector<8xf32> to vector<1x8xf32>
    %c0_67 = arith.constant 0 : index
    %c0_68 = arith.constant 0 : index
    %c0_69 = arith.constant 0 : index
    %85 = vector.load %arg8[%c0_67, %c0_68, %c0_69] : memref<1x1x8xf32, #tpu.memory_space<vmem>>, vector<1x1x8xf32>
    %86 = vector.shape_cast %85 : vector<1x1x8xf32> to vector<1x8xf32>
    %87 = vector.shape_cast %84 : vector<1x8xf32> to vector<1x1x8xf32>
    tpu.vector_store %arg8[%c0_67, %c0_68, %c0_69], %87 {strides = array<i32>} : memref<1x1x8xf32, #tpu.memory_space<vmem>>, vector<1x1x8xf32>,
    return
  }
  func.func @transform_0(%arg0: i32) -> (i32, i32, i32) {
    %c0_i32 = arith.constant 0 : i32
    %c0_i32_0 = arith.constant 0 : i32
    %c0_i32_1 = arith.constant 0 : i32
    return %arg0, %c0_i32, %c0_i32_0 : i32, i32, i32
  }
  func.func @transform_1(%arg0: i32) -> (i32, i32) {
    %c0_i32 = arith.constant 0 : i32
    %c0_i32_0 = arith.constant 0 : i32
    %c0_i32_1 = arith.constant 0 : i32
    return %c0_i32, %c0_i32_0 : i32, i32
  }
  func.func @transform_2(%arg0: i32) -> (i32, i32) {
    %c0_i32 = arith.constant 0 : i32
    %c0_i32_0 = arith.constant 0 : i32
    %c0_i32_1 = arith.constant 0 : i32
    return %c0_i32, %c0_i32_0 : i32, i32
  }
  func.func @transform_3(%arg0: i32) -> (i32, i32) {
    %c0_i32 = arith.constant 0 : i32
    %c0_i32_0 = arith.constant 0 : i32
    %c0_i32_1 = arith.constant 0 : i32
    return %c0_i32, %c0_i32_0 : i32, i32
  }
  func.func @transform_4(%arg0: i32) -> (i32, i32, i32) {
    %c0_i32 = arith.constant 0 : i32
    %c0_i32_0 = arith.constant 0 : i32
    %c0_i32_1 = arith.constant 0 : i32
    %c0_i32_2 = arith.constant 0 : i32
    return %c0_i32, %c0_i32_0, %c0_i32_1 : i32, i32, i32
  }
  func.func @transform_5(%arg0: i32) -> (i32, i32, i32) {
    %c0_i32 = arith.constant 0 : i32
    %c0_i32_0 = arith.constant 0 : i32
    %c0_i32_1 = arith.constant 0 : i32
    return %arg0, %c0_i32, %c0_i32_0 : i32, i32, i32
  }
  func.func @transform_6(%arg0: i32) -> (i32, i32, i32) {
    %c0_i32 = arith.constant 0 : i32
    %c0_i32_0 = arith.constant 0 : i32
    %c0_i32_1 = arith.constant 0 : i32
    return %arg0, %c0_i32, %c0_i32_0 : i32, i32, i32
  }
  func.func @transform_7(%arg0: i32) -> (i32, i32, i32) {
    %c0_i32 = arith.constant 0 : i32
    %c0_i32_0 = arith.constant 0 : i32
    %c0_i32_1 = arith.constant 0 : i32
    return %arg0, %c0_i32, %c0_i32_0 : i32, i32, i32
  }
}

module attributes {stable_mosaic.version = 11 : i64} {
  func.func @_bnrelu_matmul_stats_kernel(%arg0: i32, %arg1: memref<72x24xf32, #tpu.memory_space<vmem>>, %arg2: memref<72x1xf32, #tpu.memory_space<vmem>>, %arg3: memref<1x24xf32, #tpu.memory_space<vmem>>, %arg4: memref<1x24xf32, #tpu.memory_space<vmem>>, %arg5: memref<24x32xbf16, #tpu.memory_space<vmem>>, %arg6: memref<72x32xf32, #tpu.memory_space<vmem>>, %arg7: memref<1x1x32xf32, #tpu.memory_space<vmem>>, %arg8: memref<1x1x32xf32, #tpu.memory_space<vmem>>) attributes {dimension_semantics = [#tpu.dimension_semantics<parallel>], iteration_bounds = array<i64: 1>, scalar_prefetch = 0 : i64, scratch_operands = 0 : i64, tpu.core_type = #tpu.core_type<tc>, window_params = [{transform_indices = @transform_0, window_bounds = array<i64: 72, 24>}, {transform_indices = @transform_1, window_bounds = array<i64: 72, 1>}, {pipeline_mode = #tpu.pipeline_mode<synchronous>, transform_indices = @transform_2, window_bounds = array<i64: 1, 24>}, {pipeline_mode = #tpu.pipeline_mode<synchronous>, transform_indices = @transform_3, window_bounds = array<i64: 1, 24>}, {pipeline_mode = #tpu.pipeline_mode<synchronous>, transform_indices = @transform_4, window_bounds = array<i64: 24, 32>}, {transform_indices = @transform_5, window_bounds = array<i64: 72, 32>}, {transform_indices = @transform_6, window_bounds = array<i64: 1, 1, 32>}, {transform_indices = @transform_7, window_bounds = array<i64: 1, 1, 32>}]} {
    %c72_i32 = arith.constant 72 : i32
    %0 = arith.muli %arg0, %c72_i32 : i32
    %1 = tpu.iota {dimensions = array<i32: 0>} : vector<72x1xi32>
    %2 = vector.broadcast %0 : i32 to vector<72x1xi32>
    %3 = arith.addi %2, %1 : vector<72x1xi32>
    %c72_i32_0 = arith.constant 72 : i32
    %4 = vector.broadcast %c72_i32_0 : i32 to vector<72x1xi32>
    %5 = arith.cmpi slt, %3, %4 : vector<72x1xi32>
    %c0 = arith.constant 0 : index
    %c0_1 = arith.constant 0 : index
    %6 = vector.load %arg1[%c0, %c0_1] : memref<72x24xf32, #tpu.memory_space<vmem>>, vector<72x24xf32>
    %c0_2 = arith.constant 0 : index
    %c0_3 = arith.constant 0 : index
    %7 = vector.load %arg3[%c0_2, %c0_3] : memref<1x24xf32, #tpu.memory_space<vmem>>, vector<1x24xf32>
    %8 = vector.broadcast %7 : vector<1x24xf32> to vector<72x24xf32>
    %9 = arith.mulf %6, %8 : vector<72x24xf32>
    %c0_4 = arith.constant 0 : index
    %c0_5 = arith.constant 0 : index
    %10 = vector.load %arg4[%c0_4, %c0_5] : memref<1x24xf32, #tpu.memory_space<vmem>>, vector<1x24xf32>
    %11 = vector.broadcast %10 : vector<1x24xf32> to vector<72x24xf32>
    %12 = arith.addf %9, %11 : vector<72x24xf32>
    %cst = arith.constant 0.000000e+00 : f32
    %13 = vector.broadcast %cst : f32 to vector<72x24xf32>
    %14 = arith.maximumf %12, %13 : vector<72x24xf32>
    %c0_6 = arith.constant 0 : index
    %c0_7 = arith.constant 0 : index
    %15 = vector.load %arg2[%c0_6, %c0_7] : memref<72x1xf32, #tpu.memory_space<vmem>>, vector<72x1xf32>
    %16 = vector.broadcast %15 : vector<72x1xf32> to vector<72x24xf32>
    %17 = arith.mulf %14, %16 : vector<72x24xf32>
    %cst_8 = arith.constant 0.000000e+00 : f32
    %18 = vector.shape_cast %5 : vector<72x1xi1> to vector<72x1xi1>
    %19 = vector.broadcast %18 : vector<72x1xi1> to vector<72x24xi1>
    %20 = vector.broadcast %cst_8 : f32 to vector<72x24xf32>
    %21 = arith.select %19, %17, %20 : vector<72x24xi1>, vector<72x24xf32>
    %22 = arith.truncf %21 : vector<72x24xf32> to vector<72x24xbf16>
    %c0_9 = arith.constant 0 : index
    %c0_10 = arith.constant 0 : index
    %23 = vector.load %arg5[%c0_9, %c0_10] : memref<24x32xbf16, #tpu.memory_space<vmem>>, vector<24x32xbf16>
    %cst_11 = arith.constant dense<0.000000e+00> : vector<72x32xf32>
    %24 = tpu.matmul %22, %23, %cst_11 {dimension_numbers = #tpu.dot_dimension_numbers<[1], [0], [0], [1], [0, 0, 1, 1], [], []>} : vector<72x24xbf16>, vector<24x32xbf16>, vector<72x32xf32> -> vector<72x32xf32>
    %c0_12 = arith.constant 0 : index
    %c0_13 = arith.constant 0 : index
    %25 = vector.load %arg6[%c0_12, %c0_13] : memref<72x32xf32, #tpu.memory_space<vmem>>, vector<72x32xf32>
    tpu.vector_store %arg6[%c0_12, %c0_13], %24 {strides = array<i32>} : memref<72x32xf32, #tpu.memory_space<vmem>>, vector<72x32xf32>,
    %cst_14 = arith.constant dense<0.000000e+00> : vector<32xf32>
    %26 = vector.multi_reduction <add>, %24, %cst_14 [0] : vector<72x32xf32> to vector<32xf32>
    %27 = vector.shape_cast %26 : vector<32xf32> to vector<1x32xf32>
    %c0_15 = arith.constant 0 : index
    %c0_16 = arith.constant 0 : index
    %c0_17 = arith.constant 0 : index
    %28 = vector.load %arg7[%c0_15, %c0_16, %c0_17] : memref<1x1x32xf32, #tpu.memory_space<vmem>>, vector<1x1x32xf32>
    %29 = vector.shape_cast %28 : vector<1x1x32xf32> to vector<1x32xf32>
    %30 = vector.shape_cast %27 : vector<1x32xf32> to vector<1x1x32xf32>
    tpu.vector_store %arg7[%c0_15, %c0_16, %c0_17], %30 {strides = array<i32>} : memref<1x1x32xf32, #tpu.memory_space<vmem>>, vector<1x1x32xf32>,
    %31 = arith.mulf %24, %24 : vector<72x32xf32>
    %cst_18 = arith.constant dense<0.000000e+00> : vector<32xf32>
    %32 = vector.multi_reduction <add>, %31, %cst_18 [0] : vector<72x32xf32> to vector<32xf32>
    %33 = vector.shape_cast %32 : vector<32xf32> to vector<1x32xf32>
    %c0_19 = arith.constant 0 : index
    %c0_20 = arith.constant 0 : index
    %c0_21 = arith.constant 0 : index
    %34 = vector.load %arg8[%c0_19, %c0_20, %c0_21] : memref<1x1x32xf32, #tpu.memory_space<vmem>>, vector<1x1x32xf32>
    %35 = vector.shape_cast %34 : vector<1x1x32xf32> to vector<1x32xf32>
    %36 = vector.shape_cast %33 : vector<1x32xf32> to vector<1x1x32xf32>
    tpu.vector_store %arg8[%c0_19, %c0_20, %c0_21], %36 {strides = array<i32>} : memref<1x1x32xf32, #tpu.memory_space<vmem>>, vector<1x1x32xf32>,
    return
  }
  func.func @transform_0(%arg0: i32) -> (i32, i32) {
    %c0_i32 = arith.constant 0 : i32
    %c0_i32_0 = arith.constant 0 : i32
    return %arg0, %c0_i32 : i32, i32
  }
  func.func @transform_1(%arg0: i32) -> (i32, i32) {
    %c0_i32 = arith.constant 0 : i32
    %c0_i32_0 = arith.constant 0 : i32
    return %arg0, %c0_i32 : i32, i32
  }
  func.func @transform_2(%arg0: i32) -> (i32, i32) {
    %c0_i32 = arith.constant 0 : i32
    %c0_i32_0 = arith.constant 0 : i32
    %c0_i32_1 = arith.constant 0 : i32
    return %c0_i32, %c0_i32_0 : i32, i32
  }
  func.func @transform_3(%arg0: i32) -> (i32, i32) {
    %c0_i32 = arith.constant 0 : i32
    %c0_i32_0 = arith.constant 0 : i32
    %c0_i32_1 = arith.constant 0 : i32
    return %c0_i32, %c0_i32_0 : i32, i32
  }
  func.func @transform_4(%arg0: i32) -> (i32, i32) {
    %c0_i32 = arith.constant 0 : i32
    %c0_i32_0 = arith.constant 0 : i32
    %c0_i32_1 = arith.constant 0 : i32
    return %c0_i32, %c0_i32_0 : i32, i32
  }
  func.func @transform_5(%arg0: i32) -> (i32, i32) {
    %c0_i32 = arith.constant 0 : i32
    %c0_i32_0 = arith.constant 0 : i32
    return %arg0, %c0_i32 : i32, i32
  }
  func.func @transform_6(%arg0: i32) -> (i32, i32, i32) {
    %c0_i32 = arith.constant 0 : i32
    %c0_i32_0 = arith.constant 0 : i32
    %c0_i32_1 = arith.constant 0 : i32
    return %arg0, %c0_i32, %c0_i32_0 : i32, i32, i32
  }
  func.func @transform_7(%arg0: i32) -> (i32, i32, i32) {
    %c0_i32 = arith.constant 0 : i32
    %c0_i32_0 = arith.constant 0 : i32
    %c0_i32_1 = arith.constant 0 : i32
    return %arg0, %c0_i32, %c0_i32_0 : i32, i32, i32
  }
}

module attributes {stable_mosaic.version = 11 : i64} {
  func.func @_head_kernel(%arg0: i32, %arg1: memref<1x36x32xf32, #tpu.memory_space<vmem>>, %arg2: memref<36x1xf32, #tpu.memory_space<vmem>>, %arg3: memref<1x32xf32, #tpu.memory_space<vmem>>, %arg4: memref<1x32xf32, #tpu.memory_space<vmem>>, %arg5: memref<32x17xf32, #tpu.memory_space<vmem>>, %arg6: memref<1x17xf32, #tpu.memory_space<vmem>>, %arg7: memref<1x1x17xf32, #tpu.memory_space<vmem>>) attributes {dimension_semantics = [#tpu.dimension_semantics<parallel>], iteration_bounds = array<i64: 2>, scalar_prefetch = 0 : i64, scratch_operands = 0 : i64, tpu.core_type = #tpu.core_type<tc>, window_params = [{transform_indices = @transform_0, window_bounds = array<i64: 1, 36, 32>}, {pipeline_mode = #tpu.pipeline_mode<synchronous>, transform_indices = @transform_1, window_bounds = array<i64: 36, 1>}, {pipeline_mode = #tpu.pipeline_mode<synchronous>, transform_indices = @transform_2, window_bounds = array<i64: 1, 32>}, {pipeline_mode = #tpu.pipeline_mode<synchronous>, transform_indices = @transform_3, window_bounds = array<i64: 1, 32>}, {pipeline_mode = #tpu.pipeline_mode<synchronous>, transform_indices = @transform_4, window_bounds = array<i64: 32, 17>}, {pipeline_mode = #tpu.pipeline_mode<synchronous>, transform_indices = @transform_5, window_bounds = array<i64: 1, 17>}, {transform_indices = @transform_6, window_bounds = array<i64: 1, 1, 17>}]} {
    %c0 = arith.constant 0 : index
    %c0_0 = arith.constant 0 : index
    %c0_1 = arith.constant 0 : index
    %0 = vector.load %arg1[%c0, %c0_0, %c0_1] : memref<1x36x32xf32, #tpu.memory_space<vmem>>, vector<1x36x32xf32>
    %1 = vector.shape_cast %0 : vector<1x36x32xf32> to vector<36x32xf32>
    %c0_2 = arith.constant 0 : index
    %c0_3 = arith.constant 0 : index
    %2 = vector.load %arg3[%c0_2, %c0_3] : memref<1x32xf32, #tpu.memory_space<vmem>>, vector<1x32xf32>
    %3 = vector.broadcast %2 : vector<1x32xf32> to vector<36x32xf32>
    %4 = arith.mulf %1, %3 : vector<36x32xf32>
    %c0_4 = arith.constant 0 : index
    %c0_5 = arith.constant 0 : index
    %5 = vector.load %arg4[%c0_4, %c0_5] : memref<1x32xf32, #tpu.memory_space<vmem>>, vector<1x32xf32>
    %6 = vector.broadcast %5 : vector<1x32xf32> to vector<36x32xf32>
    %7 = arith.addf %4, %6 : vector<36x32xf32>
    %cst = arith.constant 0.000000e+00 : f32
    %8 = vector.broadcast %cst : f32 to vector<36x32xf32>
    %9 = arith.maximumf %7, %8 : vector<36x32xf32>
    %c0_6 = arith.constant 0 : index
    %c0_7 = arith.constant 0 : index
    %10 = vector.load %arg2[%c0_6, %c0_7] : memref<36x1xf32, #tpu.memory_space<vmem>>, vector<36x1xf32>
    %11 = vector.broadcast %10 : vector<36x1xf32> to vector<36x32xf32>
    %12 = arith.mulf %9, %11 : vector<36x32xf32>
    %cst_8 = arith.constant dense<0.000000e+00> : vector<32xf32>
    %13 = vector.multi_reduction <add>, %12, %cst_8 [0] : vector<36x32xf32> to vector<32xf32>
    %14 = vector.shape_cast %13 : vector<32xf32> to vector<1x32xf32>
    %cst_9 = arith.constant 6.250000e-02 : f32
    %15 = vector.broadcast %cst_9 : f32 to vector<1x32xf32>
    %16 = arith.mulf %14, %15 : vector<1x32xf32>
    %c0_10 = arith.constant 0 : index
    %c0_11 = arith.constant 0 : index
    %17 = vector.load %arg5[%c0_10, %c0_11] : memref<32x17xf32, #tpu.memory_space<vmem>>, vector<32x17xf32>
    %cst_12 = arith.constant dense<0.000000e+00> : vector<1x17xf32>
    %18 = tpu.matmul %16, %17, %cst_12 {dimension_numbers = #tpu.dot_dimension_numbers<[1], [0], [0], [1], [0, 0, 1, 1], [], []>} : vector<1x32xf32>, vector<32x17xf32>, vector<1x17xf32> -> vector<1x17xf32>
    %c0_13 = arith.constant 0 : index
    %c0_14 = arith.constant 0 : index
    %19 = vector.load %arg6[%c0_13, %c0_14] : memref<1x17xf32, #tpu.memory_space<vmem>>, vector<1x17xf32>
    %20 = arith.addf %18, %19 : vector<1x17xf32>
    %c0_15 = arith.constant 0 : index
    %c0_16 = arith.constant 0 : index
    %c0_17 = arith.constant 0 : index
    %21 = vector.load %arg7[%c0_15, %c0_16, %c0_17] : memref<1x1x17xf32, #tpu.memory_space<vmem>>, vector<1x1x17xf32>
    %22 = vector.shape_cast %21 : vector<1x1x17xf32> to vector<1x17xf32>
    %23 = vector.shape_cast %20 : vector<1x17xf32> to vector<1x1x17xf32>
    tpu.vector_store %arg7[%c0_15, %c0_16, %c0_17], %23 {strides = array<i32>} : memref<1x1x17xf32, #tpu.memory_space<vmem>>, vector<1x1x17xf32>,
    return
  }
  func.func @transform_0(%arg0: i32) -> (i32, i32, i32) {
    %c0_i32 = arith.constant 0 : i32
    %c0_i32_0 = arith.constant 0 : i32
    %c0_i32_1 = arith.constant 0 : i32
    return %arg0, %c0_i32, %c0_i32_0 : i32, i32, i32
  }
  func.func @transform_1(%arg0: i32) -> (i32, i32) {
    %c0_i32 = arith.constant 0 : i32
    %c0_i32_0 = arith.constant 0 : i32
    %c0_i32_1 = arith.constant 0 : i32
    return %c0_i32, %c0_i32_0 : i32, i32
  }
  func.func @transform_2(%arg0: i32) -> (i32, i32) {
    %c0_i32 = arith.constant 0 : i32
    %c0_i32_0 = arith.constant 0 : i32
    %c0_i32_1 = arith.constant 0 : i32
    return %c0_i32, %c0_i32_0 : i32, i32
  }
  func.func @transform_3(%arg0: i32) -> (i32, i32) {
    %c0_i32 = arith.constant 0 : i32
    %c0_i32_0 = arith.constant 0 : i32
    %c0_i32_1 = arith.constant 0 : i32
    return %c0_i32, %c0_i32_0 : i32, i32
  }
  func.func @transform_4(%arg0: i32) -> (i32, i32) {
    %c0_i32 = arith.constant 0 : i32
    %c0_i32_0 = arith.constant 0 : i32
    %c0_i32_1 = arith.constant 0 : i32
    return %c0_i32, %c0_i32_0 : i32, i32
  }
  func.func @transform_5(%arg0: i32) -> (i32, i32) {
    %c0_i32 = arith.constant 0 : i32
    %c0_i32_0 = arith.constant 0 : i32
    %c0_i32_1 = arith.constant 0 : i32
    return %c0_i32, %c0_i32_0 : i32, i32
  }
  func.func @transform_6(%arg0: i32) -> (i32, i32, i32) {
    %c0_i32 = arith.constant 0 : i32
    %c0_i32_0 = arith.constant 0 : i32
    %c0_i32_1 = arith.constant 0 : i32
    return %arg0, %c0_i32, %c0_i32_0 : i32, i32, i32
  }
}

</mosaic_0001>

<llo_original>
// kernel: densenet_forward.15
$region0: #{densenet_forward.15}
  #allocation0 [shape = 'u32[]', space=smem, size = 0x4, offset = 0x4, fixed_abs, tag = 'smem constant byte address 0x4 - core index']
  #allocation1 [shape = 'u32[144,128]{1,0:T(1,128)}', space=vmem, size = 0x12000, scoped, tag = 'internal scratch']
  %s0 = inlined_call_operand.vmem [shape: f32[512,16], index: 0, kind: input, shape index: {}]
  %s1 = inlined_call_operand.vmem [shape: f32[1,16], index: 1, kind: input, shape index: {}]
  %s2 = inlined_call_operand.vmem [shape: f32[1,16], index: 2, kind: input, shape index: {}]
  %s3 = inlined_call_operand.vmem [shape: f32[512,16], index: 3, kind: output, shape index: {}]
  %s4 = sld [smem:[#allocation0]]
  $region22: #{densenet_forward.15} parent=0
    _
  %s6 = ssub.s32 1, %s4
  %s7 = scalar_select 0, %s6, %s4
  // Predicated region
  $region2: #{densenet_forward.15} parent=0 // pred_check
    _
  $region3: #{densenet_forward.15} parent=0 // pred_check_branch
    %9 = sbr.rel (0) target = $region5
  $region4: #{densenet_forward.15} parent=0 // pred_region
    _
  $region5: #{densenet_forward.15} parent=0 // pred_fallthru
    _
  // Predicated region
  $region6: #{densenet_forward.15} parent=0 // pred_check
    _
  $region7: #{densenet_forward.15} parent=0 // pred_check_branch
    %11 = sbr.rel (0) target = $region9
  $region8: #{densenet_forward.15} parent=0 // pred_region
    _
  $region9: #{densenet_forward.15} parent=0 // pred_fallthru
    _
  // Predicated region
  $region10: #{densenet_forward.15} parent=0 // pred_check
    _
  $region11: #{densenet_forward.15} parent=0 // pred_check_branch
    %13 = sbr.rel (0) target = $region13
  $region12: #{densenet_forward.15} parent=0 // pred_region
    _
  $region13: #{densenet_forward.15} parent=0 // pred_fallthru
    _
  %v14 = vld [vmem:[%s0] sm:$0xff]
  %v15 = vld [vmem:[%s0 + $0x8] sm:$0xff]
  %v16 = vld [vmem:[%s0 + $0x10] sm:$0xff]
  %v17 = vld [vmem:[%s0 + $0x18] sm:$0xff]
  %v18 = vld [vmem:[%s0 + $0x20] sm:$0xff]
  %v19 = vld [vmem:[%s0 + $0x28] sm:$0xff]
  %v20 = vld [vmem:[%s0 + $0x30] sm:$0xff]
  %v21 = vld [vmem:[%s0 + $0x38] sm:$0xff]
  %v22 = vld [vmem:[%s0 + $0x40] sm:$0xff]
  %v23 = vld [vmem:[%s0 + $0x48] sm:$0xff]
  %v24 = vld [vmem:[%s0 + $0x50] sm:$0xff]
  %v25 = vld [vmem:[%s0 + $0x58] sm:$0xff]
  %v26 = vld [vmem:[%s0 + $0x60] sm:$0xff]
  %v27 = vld [vmem:[%s0 + $0x68] sm:$0xff]
  %v28 = vld [vmem:[%s0 + $0x70] sm:$0xff]
  %v29 = vld [vmem:[%s0 + $0x78] sm:$0xff]
  %v30 = vld [vmem:[%s0 + $0x80] sm:$0xff]
  %v31 = vld [vmem:[%s0 + $0x88] sm:$0xff]
  %v32 = vld [vmem:[%s0 + $0x90] sm:$0xff]
  %v33 = vld [vmem:[%s0 + $0x98] sm:$0xff]
  %v34 = vld [vmem:[%s0 + $0xa0] sm:$0xff]
  %v35 = vld [vmem:[%s0 + $0xa8] sm:$0xff]
  %v36 = vld [vmem:[%s0 + $0xb0] sm:$0xff]
  %v37 = vld [vmem:[%s0 + $0xb8] sm:$0xff]
  %v38 = vld [vmem:[%s0 + $0xc0] sm:$0xff]
  %v39 = vld [vmem:[%s0 + $0xc8] sm:$0xff]
  %v40 = vld [vmem:[%s0 + $0xd0] sm:$0xff]
  %v41 = vld [vmem:[%s0 + $0xd8] sm:$0xff]
  %v42 = vld [vmem:[%s0 + $0xe0] sm:$0xff]
  %v43 = vld [vmem:[%s0 + $0xe8] sm:$0xff]
  %v44 = vld [vmem:[%s0 + $0xf0] sm:$0xff]
  %v45 = vld [vmem:[%s0 + $0xf8] sm:$0xff]
  %v46 = vld [vmem:[%s0 + $0x100] sm:$0xff]
  %v47 = vld [vmem:[%s0 + $0x108] sm:$0xff]
  %v48 = vld [vmem:[%s0 + $0x110] sm:$0xff]
  %v49 = vld [vmem:[%s0 + $0x118] sm:$0xff]
  %v50 = vld [vmem:[%s0 + $0x120] sm:$0xff]
  %v51 = vld [vmem:[%s0 + $0x128] sm:$0xff]
  %v52 = vld [vmem:[%s0 + $0x130] sm:$0xff]
  %v53 = vld [vmem:[%s0 + $0x138] sm:$0xff]
  %v54 = vld [vmem:[%s0 + $0x140] sm:$0xff]
  %v55 = vld [vmem:[%s0 + $0x148] sm:$0xff]
  %v56 = vld [vmem:[%s0 + $0x150] sm:$0xff]
  %v57 = vld [vmem:[%s0 + $0x158] sm:$0xff]
  %v58 = vld [vmem:[%s0 + $0x160] sm:$0xff]
  %v59 = vld [vmem:[%s0 + $0x168] sm:$0xff]
  %v60 = vld [vmem:[%s0 + $0x170] sm:$0xff]
  %v61 = vld [vmem:[%s0 + $0x178] sm:$0xff]
  %v62 = vld [vmem:[%s0 + $0x180] sm:$0xff]
  %v63 = vld [vmem:[%s0 + $0x188] sm:$0xff]
  %v64 = vld [vmem:[%s0 + $0x190] sm:$0xff]
  %v65 = vld [vmem:[%s0 + $0x198] sm:$0xff]
  %v66 = vld [vmem:[%s0 + $0x1a0] sm:$0xff]
  %v67 = vld [vmem:[%s0 + $0x1a8] sm:$0xff]
  %v68 = vld [vmem:[%s0 + $0x1b0] sm:$0xff]
  %v69 = vld [vmem:[%s0 + $0x1b8] sm:$0xff]
  %v70 = vld [vmem:[%s0 + $0x1c0] sm:$0xff]
  %v71 = vld [vmem:[%s0 + $0x1c8] sm:$0xff]
  %v72 = vld [vmem:[%s0 + $0x1d0] sm:$0xff]
  %v73 = vld [vmem:[%s0 + $0x1d8] sm:$0xff]
  %v74 = vld [vmem:[%s0 + $0x1e0] sm:$0xff]
  %v75 = vld [vmem:[%s0 + $0x1e8] sm:$0xff]
  %v76 = vld [vmem:[%s0 + $0x1f0] sm:$0xff]
  %v77 = vld [vmem:[%s0 + $0x1f8] sm:$0xff]
  %v78 = vld [vmem:[%s1] sm:$0x1]
  %v80 = vlaneseq
  %v81 = vshrl.u32 %v80, 7
  %v82 = vsub.s32 0, %v81
  %v83 = vrot.slane %v78, %v82
  %v85 = vmul.f32 %v14, %v83
  %v86 = vmul.f32 %v15, %v83
  %v87 = vmul.f32 %v16, %v83
  %v88 = vmul.f32 %v17, %v83
  %v89 = vmul.f32 %v18, %v83
  %v90 = vmul.f32 %v19, %v83
  %v91 = vmul.f32 %v20, %v83
  %v92 = vmul.f32 %v21, %v83
  %v93 = vmul.f32 %v22, %v83
  %v94 = vmul.f32 %v23, %v83
  %v95 = vmul.f32 %v24, %v83
  %v96 = vmul.f32 %v25, %v83
  %v97 = vmul.f32 %v26, %v83
  %v98 = vmul.f32 %v27, %v83
  %v99 = vmul.f32 %v28, %v83
  %v100 = vmul.f32 %v29, %v83
  %v101 = vmul.f32 %v30, %v83
  %v102 = vmul.f32 %v31, %v83
  %v103 = vmul.f32 %v32, %v83
  %v104 = vmul.f32 %v33, %v83
  %v105 = vmul.f32 %v34, %v83
  %v106 = vmul.f32 %v35, %v83
  %v107 = vmul.f32 %v36, %v83
  %v108 = vmul.f32 %v37, %v83
  %v109 = vmul.f32 %v38, %v83
  %v110 = vmul.f32 %v39, %v83
  %v111 = vmul.f32 %v40, %v83
  %v112 = vmul.f32 %v41, %v83
  %v113 = vmul.f32 %v42, %v83
  %v114 = vmul.f32 %v43, %v83
  %v115 = vmul.f32 %v44, %v83
  %v116 = vmul.f32 %v45, %v83
  %v117 = vmul.f32 %v46, %v83
  %v118 = vmul.f32 %v47, %v83
  %v119 = vmul.f32 %v48, %v83
  %v120 = vmul.f32 %v49, %v83
  %v121 = vmul.f32 %v50, %v83
  %v122 = vmul.f32 %v51, %v83
  %v123 = vmul.f32 %v52, %v83
  %v124 = vmul.f32 %v53, %v83
  %v125 = vmul.f32 %v54, %v83
  %v126 = vmul.f32 %v55, %v83
  %v127 = vmul.f32 %v56, %v83
  %v128 = vmul.f32 %v57, %v83
  %v129 = vmul.f32 %v58, %v83
  %v130 = vmul.f32 %v59, %v83
  %v131 = vmul.f32 %v60, %v83
  %v132 = vmul.f32 %v61, %v83
  %v133 = vmul.f32 %v62, %v83
  %v134 = vmul.f32 %v63, %v83
  %v135 = vmul.f32 %v64, %v83
  %v136 = vmul.f32 %v65, %v83
  %v137 = vmul.f32 %v66, %v83
  %v138 = vmul.f32 %v67, %v83
  %v139 = vmul.f32 %v68, %v83
  %v140 = vmul.f32 %v69, %v83
  %v141 = vmul.f32 %v70, %v83
  %v142 = vmul.f32 %v71, %v83
  %v143 = vmul.f32 %v72, %v83
  %v144 = vmul.f32 %v73, %v83
  %v145 = vmul.f32 %v74, %v83
  %v146 = vmul.f32 %v75, %v83
  %v147 = vmul.f32 %v76, %v83
  %v148 = vmul.f32 %v77, %v83
  %v149 = vld [vmem:[%s2] sm:$0x1]
  %v151 = vlaneseq
  %v152 = vshrl.u32 %v151, 7
  %v153 = vsub.s32 0, %v152
  %v154 = vrot.slane %v149, %v153
  %v156 = vadd.f32 %v85, %v154
  %v157 = vadd.f32 %v86, %v154
  %v158 = vadd.f32 %v87, %v154
  %v159 = vadd.f32 %v88, %v154
  %v160 = vadd.f32 %v89, %v154
  %v161 = vadd.f32 %v90, %v154
  %v162 = vadd.f32 %v91, %v154
  %v163 = vadd.f32 %v92, %v154
  %v164 = vadd.f32 %v93, %v154
  %v165 = vadd.f32 %v94, %v154
  %v166 = vadd.f32 %v95, %v154
  %v167 = vadd.f32 %v96, %v154
  %v168 = vadd.f32 %v97, %v154
  %v169 = vadd.f32 %v98, %v154
  %v170 = vadd.f32 %v99, %v154
  %v171 = vadd.f32 %v100, %v154
  %v172 = vadd.f32 %v101, %v154
  %v173 = vadd.f32 %v102, %v154
  %v174 = vadd.f32 %v103, %v154
  %v175 = vadd.f32 %v104, %v154
  %v176 = vadd.f32 %v105, %v154
  %v177 = vadd.f32 %v106, %v154
  %v178 = vadd.f32 %v107, %v154
  %v179 = vadd.f32 %v108, %v154
  %v180 = vadd.f32 %v109, %v154
  %v181 = vadd.f32 %v110, %v154
  %v182 = vadd.f32 %v111, %v154
  %v183 = vadd.f32 %v112, %v154
  %v184 = vadd.f32 %v113, %v154
  %v185 = vadd.f32 %v114, %v154
  %v186 = vadd.f32 %v115, %v154
  %v187 = vadd.f32 %v116, %v154
  %v188 = vadd.f32 %v117, %v154
  %v189 = vadd.f32 %v118, %v154
  %v190 = vadd.f32 %v119, %v154
  %v191 = vadd.f32 %v120, %v154
  %v192 = vadd.f32 %v121, %v154
  %v193 = vadd.f32 %v122, %v154
  %v194 = vadd.f32 %v123, %v154
  %v195 = vadd.f32 %v124, %v154
  %v196 = vadd.f32 %v125, %v154
  %v197 = vadd.f32 %v126, %v154
  %v198 = vadd.f32 %v127, %v154
  %v199 = vadd.f32 %v128, %v154
  %v200 = vadd.f32 %v129, %v154
  %v201 = vadd.f32 %v130, %v154
  %v202 = vadd.f32 %v131, %v154
  %v203 = vadd.f32 %v132, %v154
  %v204 = vadd.f32 %v133, %v154
  %v205 = vadd.f32 %v134, %v154
  %v206 = vadd.f32 %v135, %v154
  %v207 = vadd.f32 %v136, %v154
  %v208 = vadd.f32 %v137, %v154
  %v209 = vadd.f32 %v138, %v154
  %v210 = vadd.f32 %v139, %v154
  %v211 = vadd.f32 %v140, %v154
  %v212 = vadd.f32 %v141, %v154
  %v213 = vadd.f32 %v142, %v154
  %v214 = vadd.f32 %v143, %v154
  %v215 = vadd.f32 %v144, %v154
  %v216 = vadd.f32 %v145, %v154
  %v217 = vadd.f32 %v146, %v154
  %v218 = vadd.f32 %v147, %v154
  %v219 = vadd.f32 %v148, %v154
  %v220 = vmax.f32 %v156, 0.0
  %v221 = vmax.f32 %v157, 0.0
  %v222 = vmax.f32 %v158, 0.0
  %v223 = vmax.f32 %v159, 0.0
  %v224 = vmax.f32 %v160, 0.0
  %v225 = vmax.f32 %v161, 0.0
  %v226 = vmax.f32 %v162, 0.0
  %v227 = vmax.f32 %v163, 0.0
  %v228 = vmax.f32 %v164, 0.0
  %v229 = vmax.f32 %v165, 0.0
  %v230 = vmax.f32 %v166, 0.0
  %v231 = vmax.f32 %v167, 0.0
  %v232 = vmax.f32 %v168, 0.0
  %v233 = vmax.f32 %v169, 0.0
  %v234 = vmax.f32 %v170, 0.0
  %v235 = vmax.f32 %v171, 0.0
  %v236 = vmax.f32 %v172, 0.0
  %v237 = vmax.f32 %v173, 0.0
  %v238 = vmax.f32 %v174, 0.0
  %v239 = vmax.f32 %v175, 0.0
  %v240 = vmax.f32 %v176, 0.0
  %v241 = vmax.f32 %v177, 0.0
  %v242 = vmax.f32 %v178, 0.0
  %v243 = vmax.f32 %v179, 0.0
  %v244 = vmax.f32 %v180, 0.0
  %v245 = vmax.f32 %v181, 0.0
  %v246 = vmax.f32 %v182, 0.0
  %v247 = vmax.f32 %v183, 0.0
  %v248 = vmax.f32 %v184, 0.0
  %v249 = vmax.f32 %v185, 0.0
  %v250 = vmax.f32 %v186, 0.0
  %v251 = vmax.f32 %v187, 0.0
  %v252 = vmax.f32 %v188, 0.0
  %v253 = vmax.f32 %v189, 0.0
  %v254 = vmax.f32 %v190, 0.0
  %v255 = vmax.f32 %v191, 0.0
  %v256 = vmax.f32 %v192, 0.0
  %v257 = vmax.f32 %v193, 0.0
  %v258 = vmax.f32 %v194, 0.0
  %v259 = vmax.f32 %v195, 0.0
  %v260 = vmax.f32 %v196, 0.0
  %v261 = vmax.f32 %v197, 0.0
  %v262 = vmax.f32 %v198, 0.0
  %v263 = vmax.f32 %v199, 0.0
  %v264 = vmax.f32 %v200, 0.0
  %v265 = vmax.f32 %v201, 0.0
  %v266 = vmax.f32 %v202, 0.0
  %v267 = vmax.f32 %v203, 0.0
  %v268 = vmax.f32 %v204, 0.0
  %v269 = vmax.f32 %v205, 0.0
  %v270 = vmax.f32 %v206, 0.0
  %v271 = vmax.f32 %v207, 0.0
  %v272 = vmax.f32 %v208, 0.0
  %v273 = vmax.f32 %v209, 0.0
  %v274 = vmax.f32 %v210, 0.0
  %v275 = vmax.f32 %v211, 0.0
  %v276 = vmax.f32 %v212, 0.0
  %v277 = vmax.f32 %v213, 0.0
  %v278 = vmax.f32 %v214, 0.0
  %v279 = vmax.f32 %v215, 0.0
  %v280 = vmax.f32 %v216, 0.0
  %v281 = vmax.f32 %v217, 0.0
  %v282 = vmax.f32 %v218, 0.0
  %v283 = vmax.f32 %v219, 0.0
  %vm284 = vcmask 130048
  %285 = vst.msk [vmem:[%s3] sm:$0xff] %vm284, %v220
  %286 = vst.msk [vmem:[%s3 + $0x8] sm:$0xff] %vm284, %v221
  %287 = vst.msk [vmem:[%s3 + $0x10] sm:$0xff] %vm284, %v222
  %288 = vst.msk [vmem:[%s3 + $0x18] sm:$0xff] %vm284, %v223
  %289 = vst.msk [vmem:[%s3 + $0x20] sm:$0xff] %vm284, %v224
  %290 = vst.msk [vmem:[%s3 + $0x28] sm:$0xff] %vm284, %v225
  %291 = vst.msk [vmem:[%s3 + $0x30] sm:$0xff] %vm284, %v226
  %292 = vst.msk [vmem:[%s3 + $0x38] sm:$0xff] %vm284, %v227
  %293 = vst.msk [vmem:[%s3 + $0x40] sm:$0xff] %vm284, %v228
  %294 = vst.msk [vmem:[%s3 + $0x48] sm:$0xff] %vm284, %v229
  %295 = vst.msk [vmem:[%s3 + $0x50] sm:$0xff] %vm284, %v230
  %296 = vst.msk [vmem:[%s3 + $0x58] sm:$0xff] %vm284, %v231
  %297 = vst.msk [vmem:[%s3 + $0x60] sm:$0xff] %vm284, %v232
  %298 = vst.msk [vmem:[%s3 + $0x68] sm:$0xff] %vm284, %v233
  %299 = vst.msk [vmem:[%s3 + $0x70] sm:$0xff] %vm284, %v234
  %300 = vst.msk [vmem:[%s3 + $0x78] sm:$0xff] %vm284, %v235
  %301 = vst.msk [vmem:[%s3 + $0x80] sm:$0xff] %vm284, %v236
  %302 = vst.msk [vmem:[%s3 + $0x88] sm:$0xff] %vm284, %v237
  %303 = vst.msk [vmem:[%s3 + $0x90] sm:$0xff] %vm284, %v238
  %304 = vst.msk [vmem:[%s3 + $0x98] sm:$0xff] %vm284, %v239
  %305 = vst.msk [vmem:[%s3 + $0xa0] sm:$0xff] %vm284, %v240
  %306 = vst.msk [vmem:[%s3 + $0xa8] sm:$0xff] %vm284, %v241
  %307 = vst.msk [vmem:[%s3 + $0xb0] sm:$0xff] %vm284, %v242
  %308 = vst.msk [vmem:[%s3 + $0xb8] sm:$0xff] %vm284, %v243
  %309 = vst.msk [vmem:[%s3 + $0xc0] sm:$0xff] %vm284, %v244
  %310 = vst.msk [vmem:[%s3 + $0xc8] sm:$0xff] %vm284, %v245
  %311 = vst.msk [vmem:[%s3 + $0xd0] sm:$0xff] %vm284, %v246
  %312 = vst.msk [vmem:[%s3 + $0xd8] sm:$0xff] %vm284, %v247
  %313 = vst.msk [vmem:[%s3 + $0xe0] sm:$0xff] %vm284, %v248
  %314 = vst.msk [vmem:[%s3 + $0xe8] sm:$0xff] %vm284, %v249
  %315 = vst.msk [vmem:[%s3 + $0xf0] sm:$0xff] %vm284, %v250
  %316 = vst.msk [vmem:[%s3 + $0xf8] sm:$0xff] %vm284, %v251
  %317 = vst.msk [vmem:[%s3 + $0x100] sm:$0xff] %vm284, %v252
  %318 = vst.msk [vmem:[%s3 + $0x108] sm:$0xff] %vm284, %v253
  %319 = vst.msk [vmem:[%s3 + $0x110] sm:$0xff] %vm284, %v254
  %320 = vst.msk [vmem:[%s3 + $0x118] sm:$0xff] %vm284, %v255
  %321 = vst.msk [vmem:[%s3 + $0x120] sm:$0xff] %vm284, %v256
  %322 = vst.msk [vmem:[%s3 + $0x128] sm:$0xff] %vm284, %v257
  %323 = vst.msk [vmem:[%s3 + $0x130] sm:$0xff] %vm284, %v258
  %324 = vst.msk [vmem:[%s3 + $0x138] sm:$0xff] %vm284, %v259
  %325 = vst.msk [vmem:[%s3 + $0x140] sm:$0xff] %vm284, %v260
  %326 = vst.msk [vmem:[%s3 + $0x148] sm:$0xff] %vm284, %v261
  %327 = vst.msk [vmem:[%s3 + $0x150] sm:$0xff] %vm284, %v262
  %328 = vst.msk [vmem:[%s3 + $0x158] sm:$0xff] %vm284, %v263
  %329 = vst.msk [vmem:[%s3 + $0x160] sm:$0xff] %vm284, %v264
  %330 = vst.msk [vmem:[%s3 + $0x168] sm:$0xff] %vm284, %v265
  %331 = vst.msk [vmem:[%s3 + $0x170] sm:$0xff] %vm284, %v266
  %332 = vst.msk [vmem:[%s3 + $0x178] sm:$0xff] %vm284, %v267
  %333 = vst.msk [vmem:[%s3 + $0x180] sm:$0xff] %vm284, %v268
  %334 = vst.msk [vmem:[%s3 + $0x188] sm:$0xff] %vm284, %v269
  %335 = vst.msk [vmem:[%s3 + $0x190] sm:$0xff] %vm284, %v270
  %336 = vst.msk [vmem:[%s3 + $0x198] sm:$0xff] %vm284, %v271
  %337 = vst.msk [vmem:[%s3 + $0x1a0] sm:$0xff] %vm284, %v272
  %338 = vst.msk [vmem:[%s3 + $0x1a8] sm:$0xff] %vm284, %v273
  %339 = vst.msk [vmem:[%s3 + $0x1b0] sm:$0xff] %vm284, %v274
  %340 = vst.msk [vmem:[%s3 + $0x1b8] sm:$0xff] %vm284, %v275
  %341 = vst.msk [vmem:[%s3 + $0x1c0] sm:$0xff] %vm284, %v276
  %342 = vst.msk [vmem:[%s3 + $0x1c8] sm:$0xff] %vm284, %v277
  %343 = vst.msk [vmem:[%s3 + $0x1d0] sm:$0xff] %vm284, %v278
  %344 = vst.msk [vmem:[%s3 + $0x1d8] sm:$0xff] %vm284, %v279
  %345 = vst.msk [vmem:[%s3 + $0x1e0] sm:$0xff] %vm284, %v280
  %346 = vst.msk [vmem:[%s3 + $0x1e8] sm:$0xff] %vm284, %v281
  %347 = vst.msk [vmem:[%s3 + $0x1f0] sm:$0xff] %vm284, %v282
  %348 = vst.msk [vmem:[%s3 + $0x1f8] sm:$0xff] %vm284, %v283
  // Predicated region
  $region14: #{densenet_forward.15} parent=0 // pred_check
    _
  $region15: #{densenet_forward.15} parent=0 // pred_check_branch
    %350 = sbr.rel (0) target = $region17
  $region16: #{densenet_forward.15} parent=0 // pred_region
    _
  $region17: #{densenet_forward.15} parent=0 // pred_fallthru
    _
  // Predicated region
  $region18: #{densenet_forward.15} parent=0 // pred_check
    _
  $region19: #{densenet_forward.15} parent=0 // pred_check_branch
    %352 = sbr.rel (0) target = $region21
  $region20: #{densenet_forward.15} parent=0 // pred_region
    _
  $region21: #{densenet_forward.15} parent=0 // pred_fallthru
    _

// kernel: densenet_forward.14
$region0: #{densenet_forward.14}
  #allocation0 [shape = 'u32[]', space=smem, size = 0x4, offset = 0x4, fixed_abs, tag = 'smem constant byte address 0x4 - core index']
  #allocation1 [shape = 'u32[144,128]{1,0:T(1,128)}', space=vmem, size = 0x12000, scoped, tag = 'internal scratch']
  %s0 = inlined_call_operand.vmem [shape: bf16[512,147], index: 0, kind: input, shape index: {}]
  %s1 = inlined_call_operand.vmem [shape: bf16[147,16], index: 1, kind: input, shape index: {}]
  %s2 = inlined_call_operand.vmem [shape: f32[512,16], index: 2, kind: output, shape index: {0}]
  %s3 = inlined_call_operand.vmem [shape: f32[1,1,16], index: 3, kind: output, shape index: {1}]
  %s4 = inlined_call_operand.vmem [shape: f32[1,1,16], index: 4, kind: output, shape index: {2}]
  %5 = xla_tuple %s2, %s3, %s4
  %s6 = sld [smem:[#allocation0]]
  $region34: #{densenet_forward.14} parent=0
    _
  %s8 = ssub.s32 1, %s6
  %s9 = scalar_select 0, %s8, %s6
  // Predicated region
  $region2: #{densenet_forward.14} parent=0 // pred_check
    _
  $region3: #{densenet_forward.14} parent=0 // pred_check_branch
    %11 = sbr.rel (0) target = $region5
  $region4: #{densenet_forward.14} parent=0 // pred_region
    _
  $region5: #{densenet_forward.14} parent=0 // pred_fallthru
    _
  // Predicated region
  $region6: #{densenet_forward.14} parent=0 // pred_check
    _
  $region7: #{densenet_forward.14} parent=0 // pred_check_branch
    %13 = sbr.rel (0) target = $region9
  $region8: #{densenet_forward.14} parent=0 // pred_region
    _
  $region9: #{densenet_forward.14} parent=0 // pred_fallthru
    _
  %s15 = smul.u32 0, 512
  %v16 = vlaneseq
  %v17 = vshrl.u32 %v16, 7
  %v18 = vadd.s32 %v17, 8
  %v19 = vadd.s32 %v17, 16
  %v20 = vadd.s32 %v17, 24
  %v21 = vadd.s32 %v17, 32
  %v22 = vadd.s32 %v17, 40
  %v23 = vadd.s32 %v17, 48
  %v24 = vadd.s32 %v17, 56
  %v25 = vadd.s32 %v17, 64
  %v26 = vadd.s32 %v17, 72
  %v27 = vadd.s32 %v17, 80
  %v28 = vadd.s32 %v17, 88
  %v29 = vadd.s32 %v17, 96
  %v30 = vadd.s32 %v17, 104
  %v31 = vadd.s32 %v17, 112
  %v32 = vadd.s32 %v17, 120
  %v33 = vadd.s32 %v17, 128
  %v34 = vadd.s32 %v17, 136
  %v35 = vadd.s32 %v17, 144
  %v36 = vadd.s32 %v17, 152
  %v37 = vadd.s32 %v17, 160
  %v38 = vadd.s32 %v17, 168
  %v39 = vadd.s32 %v17, 176
  %v40 = vadd.s32 %v17, 184
  %v41 = vadd.s32 %v17, 192
  %v42 = vadd.s32 %v17, 200
  %v43 = vadd.s32 %v17, 208
  %v44 = vadd.s32 %v17, 216
  %v45 = vadd.s32 %v17, 224
  %v46 = vadd.s32 %v17, 232
  %v47 = vadd.s32 %v17, 240
  %v48 = vadd.s32 %v17, 248
  %v49 = vadd.s32 %v17, 256
  %v50 = vadd.s32 %v17, 264
  %v51 = vadd.s32 %v17, 272
  %v52 = vadd.s32 %v17, 280
  %v53 = vadd.s32 %v17, 288
  %v54 = vadd.s32 %v17, 296
  %v55 = vadd.s32 %v17, 304
  %v56 = vadd.s32 %v17, 312
  %v57 = vadd.s32 %v17, 320
  %v58 = vadd.s32 %v17, 328
  %v59 = vadd.s32 %v17, 336
  %v60 = vadd.s32 %v17, 344
  %v61 = vadd.s32 %v17, 352
  %v62 = vadd.s32 %v17, 360
  %v63 = vadd.s32 %v17, 368
  %v64 = vadd.s32 %v17, 376
  %v65 = vadd.s32 %v17, 384
  %v66 = vadd.s32 %v17, 392
  %v67 = vadd.s32 %v17, 400
  %v68 = vadd.s32 %v17, 408
  %v69 = vadd.s32 %v17, 416
  %v70 = vadd.s32 %v17, 424
  %v71 = vadd.s32 %v17, 432
  %v72 = vadd.s32 %v17, 440
  %v73 = vadd.s32 %v17, 448
  %v74 = vadd.s32 %v17, 456
  %v75 = vadd.s32 %v17, 464
  %v76 = vadd.s32 %v17, 472
  %v77 = vadd.s32 %v17, 480
  %v78 = vadd.s32 %v17, 488
  %v79 = vadd.s32 %v17, 496
  %v80 = vadd.s32 %v17, 504
  %v81 = vstv %s15
  %v82 = vadd.s32 %v81, %v17
  %v83 = vadd.s32 %v81, %v18
  %v84 = vadd.s32 %v81, %v19
  %v85 = vadd.s32 %v81, %v20
  %v86 = vadd.s32 %v81, %v21
  %v87 = vadd.s32 %v81, %v22
  %v88 = vadd.s32 %v81, %v23
  %v89 = vadd.s32 %v81, %v24
  %v90 = vadd.s32 %v81, %v25
  %v91 = vadd.s32 %v81, %v26
  %v92 = vadd.s32 %v81, %v27
  %v93 = vadd.s32 %v81, %v28
  %v94 = vadd.s32 %v81, %v29
  %v95 = vadd.s32 %v81, %v30
  %v96 = vadd.s32 %v81, %v31
  %v97 = vadd.s32 %v81, %v32
  %v98 = vadd.s32 %v81, %v33
  %v99 = vadd.s32 %v81, %v34
  %v100 = vadd.s32 %v81, %v35
  %v101 = vadd.s32 %v81, %v36
  %v102 = vadd.s32 %v81, %v37
  %v103 = vadd.s32 %v81, %v38
  %v104 = vadd.s32 %v81, %v39
  %v105 = vadd.s32 %v81, %v40
  %v106 = vadd.s32 %v81, %v41
  %v107 = vadd.s32 %v81, %v42
  %v108 = vadd.s32 %v81, %v43
  %v109 = vadd.s32 %v81, %v44
  %v110 = vadd.s32 %v81, %v45
  %v111 = vadd.s32 %v81, %v46
  %v112 = vadd.s32 %v81, %v47
  %v113 = vadd.s32 %v81, %v48
  %v114 = vadd.s32 %v81, %v49
  %v115 = vadd.s32 %v81, %v50
  %v116 = vadd.s32 %v81, %v51
  %v117 = vadd.s32 %v81, %v52
  %v118 = vadd.s32 %v81, %v53
  %v119 = vadd.s32 %v81, %v54
  %v120 = vadd.s32 %v81, %v55
  %v121 = vadd.s32 %v81, %v56
  %v122 = vadd.s32 %v81, %v57
  %v123 = vadd.s32 %v81, %v58
  %v124 = vadd.s32 %v81, %v59
  %v125 = vadd.s32 %v81, %v60
  %v126 = vadd.s32 %v81, %v61
  %v127 = vadd.s32 %v81, %v62
  %v128 = vadd.s32 %v81, %v63
  %v129 = vadd.s32 %v81, %v64
  %v130 = vadd.s32 %v81, %v65
  %v131 = vadd.s32 %v81, %v66
  %v132 = vadd.s32 %v81, %v67
  %v133 = vadd.s32 %v81, %v68
  %v134 = vadd.s32 %v81, %v69
  %v135 = vadd.s32 %v81, %v70
  %v136 = vadd.s32 %v81, %v71
  %v137 = vadd.s32 %v81, %v72
  %v138 = vadd.s32 %v81, %v73
  %v139 = vadd.s32 %v81, %v74
  %v140 = vadd.s32 %v81, %v75
  %v141 = vadd.s32 %v81, %v76
  %v142 = vadd.s32 %v81, %v77
  %v143 = vadd.s32 %v81, %v78
  %v144 = vadd.s32 %v81, %v79
  %v145 = vadd.s32 %v81, %v80
  %vm146 = vcmp.lt.s32.totalorder %v82, 512
  %vm147 = vcmp.lt.s32.totalorder %v83, 512
  %vm148 = vcmp.lt.s32.totalorder %v84, 512
  %vm149 = vcmp.lt.s32.totalorder %v85, 512
  %vm150 = vcmp.lt.s32.totalorder %v86, 512
  %vm151 = vcmp.lt.s32.totalorder %v87, 512
  %vm152 = vcmp.lt.s32.totalorder %v88, 512
  %vm153 = vcmp.lt.s32.totalorder %v89, 512
  %vm154 = vcmp.lt.s32.totalorder %v90, 512
  %vm155 = vcmp.lt.s32.totalorder %v91, 512
  %vm156 = vcmp.lt.s32.totalorder %v92, 512
  %vm157 = vcmp.lt.s32.totalorder %v93, 512
  %vm158 = vcmp.lt.s32.totalorder %v94, 512
  %vm159 = vcmp.lt.s32.totalorder %v95, 512
  %vm160 = vcmp.lt.s32.totalorder %v96, 512
  %vm161 = vcmp.lt.s32.totalorder %v97, 512
  %vm162 = vcmp.lt.s32.totalorder %v98, 512
  %vm163 = vcmp.lt.s32.totalorder %v99, 512
  %vm164 = vcmp.lt.s32.totalorder %v100, 512
  %vm165 = vcmp.lt.s32.totalorder %v101, 512
  %vm166 = vcmp.lt.s32.totalorder %v102, 512
  %vm167 = vcmp.lt.s32.totalorder %v103, 512
  %vm168 = vcmp.lt.s32.totalorder %v104, 512
  %vm169 = vcmp.lt.s32.totalorder %v105, 512
  %vm170 = vcmp.lt.s32.totalorder %v106, 512
  %vm171 = vcmp.lt.s32.totalorder %v107, 512
  %vm172 = vcmp.lt.s32.totalorder %v108, 512
  %vm173 = vcmp.lt.s32.totalorder %v109, 512
  %vm174 = vcmp.lt.s32.totalorder %v110, 512
  %vm175 = vcmp.lt.s32.totalorder %v111, 512
  %vm176 = vcmp.lt.s32.totalorder %v112, 512
  %vm177 = vcmp.lt.s32.totalorder %v113, 512
  %vm178 = vcmp.lt.s32.totalorder %v114, 512
  %vm179 = vcmp.lt.s32.totalorder %v115, 512
  %vm180 = vcmp.lt.s32.totalorder %v116, 512
  %vm181 = vcmp.lt.s32.totalorder %v117, 512
  %vm182 = vcmp.lt.s32.totalorder %v118, 512
  %vm183 = vcmp.lt.s32.totalorder %v119, 512
  %vm184 = vcmp.lt.s32.totalorder %v120, 512
  %vm185 = vcmp.lt.s32.totalorder %v121, 512
  %vm186 = vcmp.lt.s32.totalorder %v122, 512
  %vm187 = vcmp.lt.s32.totalorder %v123, 512
  %vm188 = vcmp.lt.s32.totalorder %v124, 512
  %vm189 = vcmp.lt.s32.totalorder %v125, 512
  %vm190 = vcmp.lt.s32.totalorder %v126, 512
  %vm191 = vcmp.lt.s32.totalorder %v127, 512
  %vm192 = vcmp.lt.s32.totalorder %v128, 512
  %vm193 = vcmp.lt.s32.totalorder %v129, 512
  %vm194 = vcmp.lt.s32.totalorder %v130, 512
  %vm195 = vcmp.lt.s32.totalorder %v131, 512
  %vm196 = vcmp.lt.s32.totalorder %v132, 512
  %vm197 = vcmp.lt.s32.totalorder %v133, 512
  %vm198 = vcmp.lt.s32.totalorder %v134, 512
  %vm199 = vcmp.lt.s32.totalorder %v135, 512
  %vm200 = vcmp.lt.s32.totalorder %v136, 512
  %vm201 = vcmp.lt.s32.totalorder %v137, 512
  %vm202 = vcmp.lt.s32.totalorder %v138, 512
  %vm203 = vcmp.lt.s32.totalorder %v139, 512
  %vm204 = vcmp.lt.s32.totalorder %v140, 512
  %vm205 = vcmp.lt.s32.totalorder %v141, 512
  %vm206 = vcmp.lt.s32.totalorder %v142, 512
  %vm207 = vcmp.lt.s32.totalorder %v143, 512
  %vm208 = vcmp.lt.s32.totalorder %v144, 512
  %vm209 = vcmp.lt.s32.totalorder %v145, 512
  %v210 = vld [vmem:[%s0] sm:$0xff]
  %v211 = vld [vmem:[%s0 + $0x8] sm:$0xff]
  %v212 = vld [vmem:[%s0 + $0x10] sm:$0xff]
  %v213 = vld [vmem:[%s0 + $0x18] sm:$0xff]
  %v214 = vld [vmem:[%s0 + $0x20] sm:$0xff]
  %v215 = vld [vmem:[%s0 + $0x28] sm:$0xff]
  %v216 = vld [vmem:[%s0 + $0x30] sm:$0xff]
  %v217 = vld [vmem:[%s0 + $0x38] sm:$0xff]
  %v218 = vld [vmem:[%s0 + $0x40] sm:$0xff]
  %v219 = vld [vmem:[%s0 + $0x48] sm:$0xff]
  %v220 = vld [vmem:[%s0 + $0x50] sm:$0xff]
  %v221 = vld [vmem:[%s0 + $0x58] sm:$0xff]
  %v222 = vld [vmem:[%s0 + $0x60] sm:$0xff]
  %v223 = vld [vmem:[%s0 + $0x68] sm:$0xff]
  %v224 = vld [vmem:[%s0 + $0x70] sm:$0xff]
  %v225 = vld [vmem:[%s0 + $0x78] sm:$0xff]
  %v226 = vld [vmem:[%s0 + $0x80] sm:$0xff]
  %v227 = vld [vmem:[%s0 + $0x88] sm:$0xff]
  %v228 = vld [vmem:[%s0 + $0x90] sm:$0xff]
  %v229 = vld [vmem:[%s0 + $0x98] sm:$0xff]
  %v230 = vld [vmem:[%s0 + $0xa0] sm:$0xff]
  %v231 = vld [vmem:[%s0 + $0xa8] sm:$0xff]
  %v232 = vld [vmem:[%s0 + $0xb0] sm:$0xff]
  %v233 = vld [vmem:[%s0 + $0xb8] sm:$0xff]
  %v234 = vld [vmem:[%s0 + $0xc0] sm:$0xff]
  %v235 = vld [vmem:[%s0 + $0xc8] sm:$0xff]
  %v236 = vld [vmem:[%s0 + $0xd0] sm:$0xff]
  %v237 = vld [vmem:[%s0 + $0xd8] sm:$0xff]
  %v238 = vld [vmem:[%s0 + $0xe0] sm:$0xff]
  %v239 = vld [vmem:[%s0 + $0xe8] sm:$0xff]
  %v240 = vld [vmem:[%s0 + $0xf0] sm:$0xff]
  %v241 = vld [vmem:[%s0 + $0xf8] sm:$0xff]
  %v242 = vld [vmem:[%s0 + $0x100] sm:$0xff]
  %v243 = vld [vmem:[%s0 + $0x108] sm:$0xff]
  %v244 = vld [vmem:[%s0 + $0x110] sm:$0xff]
  %v245 = vld [vmem:[%s0 + $0x118] sm:$0xff]
  %v246 = vld [vmem:[%s0 + $0x120] sm:$0xff]
  %v247 = vld [vmem:[%s0 + $0x128] sm:$0xff]
  %v248 = vld [vmem:[%s0 + $0x130] sm:$0xff]
  %v249 = vld [vmem:[%s0 + $0x138] sm:$0xff]
  %v250 = vld [vmem:[%s0 + $0x140] sm:$0xff]
  %v251 = vld [vmem:[%s0 + $0x148] sm:$0xff]
  %v252 = vld [vmem:[%s0 + $0x150] sm:$0xff]
  %v253 = vld [vmem:[%s0 + $0x158] sm:$0xff]
  %v254 = vld [vmem:[%s0 + $0x160] sm:$0xff]
  %v255 = vld [vmem:[%s0 + $0x168] sm:$0xff]
  %v256 = vld [vmem:[%s0 + $0x170] sm:$0xff]
  %v257 = vld [vmem:[%s0 + $0x178] sm:$0xff]
  %v258 = vld [vmem:[%s0 + $0x180] sm:$0xff]
  %v259 = vld [vmem:[%s0 + $0x188] sm:$0xff]
  %v260 = vld [vmem:[%s0 + $0x190] sm:$0xff]
  %v261 = vld [vmem:[%s0 + $0x198] sm:$0xff]
  %v262 = vld [vmem:[%s0 + $0x1a0] sm:$0xff]
  %v263 = vld [vmem:[%s0 + $0x1a8] sm:$0xff]
  %v264 = vld [vmem:[%s0 + $0x1b0] sm:$0xff]
  %v265 = vld [vmem:[%s0 + $0x1b8] sm:$0xff]
  %v266 = vld [vmem:[%s0 + $0x1c0] sm:$0xff]
  %v267 = vld [vmem:[%s0 + $0x1c8] sm:$0xff]
  %v268 = vld [vmem:[%s0 + $0x1d0] sm:$0xff]
  %v269 = vld [vmem:[%s0 + $0x1d8] sm:$0xff]
  %v270 = vld [vmem:[%s0 + $0x1e0] sm:$0xff]
  %v271 = vld [vmem:[%s0 + $0x1e8] sm:$0xff]
  %v272 = vld [vmem:[%s0 + $0x1f0] sm:$0xff]
  %v273 = vld [vmem:[%s0 + $0x1f8] sm:$0xff]
  %v274 = vsel %vm146, 1, 0
  %v275 = vsel %vm147, 1, 0
  %v276 = vsel %vm148, 1, 0
  %v277 = vsel %vm149, 1, 0
  %v278 = vsel %vm150, 1, 0
  %v279 = vsel %vm151, 1, 0
  %v280 = vsel %vm152, 1, 0
  %v281 = vsel %vm153, 1, 0
  %v282 = vsel %vm154, 1, 0
  %v283 = vsel %vm155, 1, 0
  %v284 = vsel %vm156, 1, 0
  %v285 = vsel %vm157, 1, 0
  %v286 = vsel %vm158, 1, 0
  %v287 = vsel %vm159, 1, 0
  %v288 = vsel %vm160, 1, 0
  %v289 = vsel %vm161, 1, 0
  %v290 = vsel %vm162, 1, 0
  %v291 = vsel %vm163, 1, 0
  %v292 = vsel %vm164, 1, 0
  %v293 = vsel %vm165, 1, 0
  %v294 = vsel %vm166, 1, 0
  %v295 = vsel %vm167, 1, 0
  %v296 = vsel %vm168, 1, 0
  %v297 = vsel %vm169, 1, 0
  %v298 = vsel %vm170, 1, 0
  %v299 = vsel %vm171, 1, 0
  %v300 = vsel %vm172, 1, 0
  %v301 = vsel %vm173, 1, 0
  %v302 = vsel %vm174, 1, 0
  %v303 = vsel %vm175, 1, 0
  %v304 = vsel %vm176, 1, 0
  %v305 = vsel %vm177, 1, 0
  %v306 = vsel %vm178, 1, 0
  %v307 = vsel %vm179, 1, 0
  %v308 = vsel %vm180, 1, 0
  %v309 = vsel %vm181, 1, 0
  %v310 = vsel %vm182, 1, 0
  %v311 = vsel %vm183, 1, 0
  %v312 = vsel %vm184, 1, 0
  %v313 = vsel %vm185, 1, 0
  %v314 = vsel %vm186, 1, 0
  %v315 = vsel %vm187, 1, 0
  %v316 = vsel %vm188, 1, 0
  %v317 = vsel %vm189, 1, 0
  %v318 = vsel %vm190, 1, 0
  %v319 = vsel %vm191, 1, 0
  %v320 = vsel %vm192, 1, 0
  %v321 = vsel %vm193, 1, 0
  %v322 = vsel %vm194, 1, 0
  %v323 = vsel %vm195, 1, 0
  %v324 = vsel %vm196, 1, 0
  %v325 = vsel %vm197, 1, 0
  %v326 = vsel %vm198, 1, 0
  %v327 = vsel %vm199, 1, 0
  %v328 = vsel %vm200, 1, 0
  %v329 = vsel %vm201, 1, 0
  %v330 = vsel %vm202, 1, 0
  %v331 = vsel %vm203, 1, 0
  %v332 = vsel %vm204, 1, 0
  %v333 = vsel %vm205, 1, 0
  %v334 = vsel %vm206, 1, 0
  %v335 = vsel %vm207, 1, 0
  %v336 = vsel %vm208, 1, 0
  %v337 = vsel %vm209, 1, 0
  %vm338 = vcmp.eq.s32.totalorder %v274, 1
  %vm339 = vcmp.eq.s32.totalorder %v275, 1
  %vm340 = vcmp.eq.s32.totalorder %v276, 1
  %vm341 = vcmp.eq.s32.totalorder %v277, 1
  %vm342 = vcmp.eq.s32.totalorder %v278, 1
  %vm343 = vcmp.eq.s32.totalorder %v279, 1
  %vm344 = vcmp.eq.s32.totalorder %v280, 1
  %vm345 = vcmp.eq.s32.totalorder %v281, 1
  %vm346 = vcmp.eq.s32.totalorder %v282, 1
  %vm347 = vcmp.eq.s32.totalorder %v283, 1
  %vm348 = vcmp.eq.s32.totalorder %v284, 1
  %vm349 = vcmp.eq.s32.totalorder %v285, 1
  %vm350 = vcmp.eq.s32.totalorder %v286, 1
  %vm351 = vcmp.eq.s32.totalorder %v287, 1
  %vm352 = vcmp.eq.s32.totalorder %v288, 1
  %vm353 = vcmp.eq.s32.totalorder %v289, 1
  %vm354 = vcmp.eq.s32.totalorder %v290, 1
  %vm355 = vcmp.eq.s32.totalorder %v291, 1
  %vm356 = vcmp.eq.s32.totalorder %v292, 1
  %vm357 = vcmp.eq.s32.totalorder %v293, 1
  %vm358 = vcmp.eq.s32.totalorder %v294, 1
  %vm359 = vcmp.eq.s32.totalorder %v295, 1
  %vm360 = vcmp.eq.s32.totalorder %v296, 1
  %vm361 = vcmp.eq.s32.totalorder %v297, 1
  %vm362 = vcmp.eq.s32.totalorder %v298, 1
  %vm363 = vcmp.eq.s32.totalorder %v299, 1
  %vm364 = vcmp.eq.s32.totalorder %v300, 1
  %vm365 = vcmp.eq.s32.totalorder %v301, 1
  %vm366 = vcmp.eq.s32.totalorder %v302, 1
  %vm367 = vcmp.eq.s32.totalorder %v303, 1
  %vm368 = vcmp.eq.s32.totalorder %v304, 1
  %vm369 = vcmp.eq.s32.totalorder %v305, 1
  %vm370 = vcmp.eq.s32.totalorder %v306, 1
  %vm371 = vcmp.eq.s32.totalorder %v307, 1
  %vm372 = vcmp.eq.s32.totalorder %v308, 1
  %vm373 = vcmp.eq.s32.totalorder %v309, 1
  %vm374 = vcmp.eq.s32.totalorder %v310, 1
  %vm375 = vcmp.eq.s32.totalorder %v311, 1
  %vm376 = vcmp.eq.s32.totalorder %v312, 1
  %vm377 = vcmp.eq.s32.totalorder %v313, 1
  %vm378 = vcmp.eq.s32.totalorder %v314, 1
  %vm379 = vcmp.eq.s32.totalorder %v315, 1
  %vm380 = vcmp.eq.s32.totalorder %v316, 1
  %vm381 = vcmp.eq.s32.totalorder %v317, 1
  %vm382 = vcmp.eq.s32.totalorder %v318, 1
  %vm383 = vcmp.eq.s32.totalorder %v319, 1
  %vm384 = vcmp.eq.s32.totalorder %v320, 1
  %vm385 = vcmp.eq.s32.totalorder %v321, 1
  %vm386 = vcmp.eq.s32.totalorder %v322, 1
  %vm387 = vcmp.eq.s32.totalorder %v323, 1
  %vm388 = vcmp.eq.s32.totalorder %v324, 1
  %vm389 = vcmp.eq.s32.totalorder %v325, 1
  %vm390 = vcmp.eq.s32.totalorder %v326, 1
  %vm391 = vcmp.eq.s32.totalorder %v327, 1
  %vm392 = vcmp.eq.s32.totalorder %v328, 1
  %vm393 = vcmp.eq.s32.totalorder %v329, 1
  %vm394 = vcmp.eq.s32.totalorder %v330, 1
  %vm395 = vcmp.eq.s32.totalorder %v331, 1
  %vm396 = vcmp.eq.s32.totalorder %v332, 1
  %vm397 = vcmp.eq.s32.totalorder %v333, 1
  %vm398 = vcmp.eq.s32.totalorder %v334, 1
  %vm399 = vcmp.eq.s32.totalorder %v335, 1
  %vm400 = vcmp.eq.s32.totalorder %v336, 1
  %vm401 = vcmp.eq.s32.totalorder %v337, 1
  %vm402 = vmpackc.low %vm338, %vm338
  %vm403 = vmpackc.low %vm339, %vm339
  %vm404 = vmpackc.low %vm340, %vm340
  %vm405 = vmpackc.low %vm341, %vm341
  %vm406 = vmpackc.low %vm342, %vm342
  %vm407 = vmpackc.low %vm343, %vm343
  %vm408 = vmpackc.low %vm344, %vm344
  %vm409 = vmpackc.low %vm345, %vm345
  %vm410 = vmpackc.low %vm346, %vm346
  %vm411 = vmpackc.low %vm347, %vm347
  %vm412 = vmpackc.low %vm348, %vm348
  %vm413 = vmpackc.low %vm349, %vm349
  %vm414 = vmpackc.low %vm350, %vm350
  %vm415 = vmpackc.low %vm351, %vm351
  %vm416 = vmpackc.low %vm352, %vm352
  %vm417 = vmpackc.low %vm353, %vm353
  %vm418 = vmpackc.low %vm354, %vm354
  %vm419 = vmpackc.low %vm355, %vm355
  %vm420 = vmpackc.low %vm356, %vm356
  %vm421 = vmpackc.low %vm357, %vm357
  %vm422 = vmpackc.low %vm358, %vm358
  %vm423 = vmpackc.low %vm359, %vm359
  %vm424 = vmpackc.low %vm360, %vm360
  %vm425 = vmpackc.low %vm361, %vm361
  %vm426 = vmpackc.low %vm362, %vm362
  %vm427 = vmpackc.low %vm363, %vm363
  %vm428 = vmpackc.low %vm364, %vm364
  %vm429 = vmpackc.low %vm365, %vm365
  %vm430 = vmpackc.low %vm366, %vm366
  %vm431 = vmpackc.low %vm367, %vm367
  %vm432 = vmpackc.low %vm368, %vm368
  %vm433 = vmpackc.low %vm369, %vm369
  %vm434 = vmpackc.low %vm370, %vm370
  %vm435 = vmpackc.low %vm371, %vm371
  %vm436 = vmpackc.low %vm372, %vm372
  %vm437 = vmpackc.low %vm373, %vm373
  %vm438 = vmpackc.low %vm374, %vm374
  %vm439 = vmpackc.low %vm375, %vm375
  %vm440 = vmpackc.low %vm376, %vm376
  %vm441 = vmpackc.low %vm377, %vm377
  %vm442 = vmpackc.low %vm378, %vm378
  %vm443 = vmpackc.low %vm379, %vm379
  %vm444 = vmpackc.low %vm380, %vm380
  %vm445 = vmpackc.low %vm381, %vm381
  %vm446 = vmpackc.low %vm382, %vm382
  %vm447 = vmpackc.low %vm383, %vm383
  %vm448 = vmpackc.low %vm384, %vm384
  %vm449 = vmpackc.low %vm385, %vm385
  %vm450 = vmpackc.low %vm386, %vm386
  %vm451 = vmpackc.low %vm387, %vm387
  %vm452 = vmpackc.low %vm388, %vm388
  %vm453 = vmpackc.low %vm389, %vm389
  %vm454 = vmpackc.low %vm390, %vm390
  %vm455 = vmpackc.low %vm391, %vm391
  %vm456 = vmpackc.low %vm392, %vm392
  %vm457 = vmpackc.low %vm393, %vm393
  %vm458 = vmpackc.low %vm394, %vm394
  %vm459 = vmpackc.low %vm395, %vm395
  %vm460 = vmpackc.low %vm396, %vm396
  %vm461 = vmpackc.low %vm397, %vm397
  %vm462 = vmpackc.low %vm398, %vm398
  %vm463 = vmpackc.low %vm399, %vm399
  %vm464 = vmpackc.low %vm400, %vm400
  %vm465 = vmpackc.low %vm401, %vm401
  %v466 = vsel %vm402, %v210, 0
  %v467 = vsel %vm403, %v211, 0
  %v468 = vsel %vm404, %v212, 0
  %v469 = vsel %vm405, %v213, 0
  %v470 = vsel %vm406, %v214, 0
  %v471 = vsel %vm407, %v215, 0
  %v472 = vsel %vm408, %v216, 0
  %v473 = vsel %vm409, %v217, 0
  %v474 = vsel %vm410, %v218, 0
  %v475 = vsel %vm411, %v219, 0
  %v476 = vsel %vm412, %v220, 0
  %v477 = vsel %vm413, %v221, 0
  %v478 = vsel %vm414, %v222, 0
  %v479 = vsel %vm415, %v223, 0
  %v480 = vsel %vm416, %v224, 0
  %v481 = vsel %vm417, %v225, 0
  %v482 = vsel %vm418, %v226, 0
  %v483 = vsel %vm419, %v227, 0
  %v484 = vsel %vm420, %v228, 0
  %v485 = vsel %vm421, %v229, 0
  %v486 = vsel %vm422, %v230, 0
  %v487 = vsel %vm423, %v231, 0
  %v488 = vsel %vm424, %v232, 0
  %v489 = vsel %vm425, %v233, 0
  %v490 = vsel %vm426, %v234, 0
  %v491 = vsel %vm427, %v235, 0
  %v492 = vsel %vm428, %v236, 0
  %v493 = vsel %vm429, %v237, 0
  %v494 = vsel %vm430, %v238, 0
  %v495 = vsel %vm431, %v239, 0
  %v496 = vsel %vm432, %v240, 0
  %v497 = vsel %vm433, %v241, 0
  %v498 = vsel %vm434, %v242, 0
  %v499 = vsel %vm435, %v243, 0
  %v500 = vsel %vm436, %v244, 0
  %v501 = vsel %vm437, %v245, 0
  %v502 = vsel %vm438, %v246, 0
  %v503 = vsel %vm439, %v247, 0
  %v504 = vsel %vm440, %v248, 0
  %v505 = vsel %vm441, %v249, 0
  %v506 = vsel %vm442, %v250, 0
  %v507 = vsel %vm443, %v251, 0
  %v508 = vsel %vm444, %v252, 0
  %v509 = vsel %vm445, %v253, 0
  %v510 = vsel %vm446, %v254, 0
  %v511 = vsel %vm447, %v255, 0
  %v512 = vsel %vm448, %v256, 0
  %v513 = vsel %vm449, %v257, 0
  %v514 = vsel %vm450, %v258, 0
  %v515 = vsel %vm451, %v259, 0
  %v516 = vsel %vm452, %v260, 0
  %v517 = vsel %vm453, %v261, 0
  %v518 = vsel %vm454, %v262, 0
  %v519 = vsel %vm455, %v263, 0
  %v520 = vsel %vm456, %v264, 0
  %v521 = vsel %vm457, %v265, 0
  %v522 = vsel %vm458, %v266, 0
  %v523 = vsel %vm459, %v267, 0
  %v524 = vsel %vm460, %v268, 0
  %v525 = vsel %vm461, %v269, 0
  %v526 = vsel %vm462, %v270, 0
  %v527 = vsel %vm463, %v271, 0
  %v528 = vsel %vm464, %v272, 0
  %v529 = vsel %vm465, %v273, 0
  %v530 = vld [vmem:[%s1] sm:$0xf]
  %v531 = vld [vmem:[%s1 + $0x4] sm:$0xf]
  %v532 = vld [vmem:[%s1 + $0x8] sm:$0xf]
  %v533 = vld [vmem:[%s1 + $0xc] sm:$0xf]
  %v534 = vld [vmem:[%s1 + $0x10] sm:$0xf]
  %v535 = vld [vmem:[%s1 + $0x14] sm:$0xf]
  %v536 = vld [vmem:[%s1 + $0x18] sm:$0xf]
  %v537 = vld [vmem:[%s1 + $0x1c] sm:$0xf]
  %v538 = vld [vmem:[%s1 + $0x20] sm:$0xf]
  %v539 = vld [vmem:[%s1 + $0x24] sm:$0xf]
  %v540 = vld [vmem:[%s1 + $0x28] sm:$0xf]
  %v541 = vld [vmem:[%s1 + $0x2c] sm:$0xf]
  %v542 = vld [vmem:[%s1 + $0x30] sm:$0xf]
  %v543 = vld [vmem:[%s1 + $0x34] sm:$0xf]
  %v544 = vld [vmem:[%s1 + $0x38] sm:$0xf]
  %v545 = vld [vmem:[%s1 + $0x3c] sm:$0xf]
  %v546 = vld [vmem:[%s1 + $0x40] sm:$0xf]
  %v547 = vld [vmem:[%s1 + $0x44] sm:$0xf]
  %v548 = vld [vmem:[%s1 + $0x48] sm:$0x3]
  %v613 = vunpack.c.l.b16 %v466
  %v614 = vunpack.c.h.b16 %v466
  %v615 = vunpack.c.l.b16 %v467
  %v616 = vunpack.c.h.b16 %v467
  %v617 = vunpack.c.l.b16 %v468
  %v618 = vunpack.c.h.b16 %v468
  %v619 = vunpack.c.l.b16 %v469
  %v620 = vunpack.c.h.b16 %v469
  %v621 = vunpack.c.l.b16 %v470
  %v622 = vunpack.c.h.b16 %v470
  %v623 = vunpack.c.l.b16 %v471
  %v624 = vunpack.c.h.b16 %v471
  %v625 = vunpack.c.l.b16 %v472
  %v626 = vunpack.c.h.b16 %v472
  %v627 = vunpack.c.l.b16 %v473
  %v628 = vunpack.c.h.b16 %v473
  %v629 = vunpack.c.l.b16 %v474
  %v630 = vunpack.c.h.b16 %v474
  %v631 = vunpack.c.l.b16 %v475
  %v632 = vunpack.c.h.b16 %v475
  %v633 = vunpack.c.l.b16 %v476
  %v634 = vunpack.c.h.b16 %v476
  %v635 = vunpack.c.l.b16 %v477
  %v636 = vunpack.c.h.b16 %v477
  %v637 = vunpack.c.l.b16 %v478
  %v638 = vunpack.c.h.b16 %v478
  %v639 = vunpack.c.l.b16 %v479
  %v640 = vunpack.c.h.b16 %v479
  %v641 = vunpack.c.l.b16 %v480
  %v642 = vunpack.c.h.b16 %v480
  %v643 = vunpack.c.l.b16 %v481
  %v644 = vunpack.c.h.b16 %v481
  %v645 = vunpack.c.l.b16 %v482
  %v646 = vunpack.c.h.b16 %v482
  %v647 = vunpack.c.l.b16 %v483
  %v648 = vunpack.c.h.b16 %v483
  %v649 = vunpack.c.l.b16 %v484
  %v650 = vunpack.c.h.b16 %v484
  %v651 = vunpack.c.l.b16 %v485
  %v652 = vunpack.c.h.b16 %v485
  %v653 = vunpack.c.l.b16 %v486
  %v654 = vunpack.c.h.b16 %v486
  %v655 = vunpack.c.l.b16 %v487
  %v656 = vunpack.c.h.b16 %v487
  %v657 = vunpack.c.l.b16 %v488
  %v658 = vunpack.c.h.b16 %v488
  %v659 = vunpack.c.l.b16 %v489
  %v660 = vunpack.c.h.b16 %v489
  %v661 = vunpack.c.l.b16 %v490
  %v662 = vunpack.c.h.b16 %v490
  %v663 = vunpack.c.l.b16 %v491
  %v664 = vunpack.c.h.b16 %v491
  %v665 = vunpack.c.l.b16 %v492
  %v666 = vunpack.c.h.b16 %v492
  %v667 = vunpack.c.l.b16 %v493
  %v668 = vunpack.c.h.b16 %v493
  %v669 = vunpack.c.l.b16 %v494
  %v670 = vunpack.c.h.b16 %v494
  %v671 = vunpack.c.l.b16 %v495
  %v672 = vunpack.c.h.b16 %v495
  %v673 = vunpack.c.l.b16 %v496
  %v674 = vunpack.c.h.b16 %v496
  %v675 = vunpack.c.l.b16 %v497
  %v676 = vunpack.c.h.b16 %v497
  %v677 = vunpack.c.l.b16 %v498
  %v678 = vunpack.c.h.b16 %v498
  %v679 = vunpack.c.l.b16 %v499
  %v680 = vunpack.c.h.b16 %v499
  %v681 = vunpack.c.l.b16 %v500
  %v682 = vunpack.c.h.b16 %v500
  %v683 = vunpack.c.l.b16 %v501
  %v684 = vunpack.c.h.b16 %v501
  %v685 = vunpack.c.l.b16 %v502
  %v686 = vunpack.c.h.b16 %v502
  %v687 = vunpack.c.l.b16 %v503
  %v688 = vunpack.c.h.b16 %v503
  %v689 = vunpack.c.l.b16 %v504
  %v690 = vunpack.c.h.b16 %v504
  %v691 = vunpack.c.l.b16 %v505
  %v692 = vunpack.c.h.b16 %v505
  %v693 = vunpack.c.l.b16 %v506
  %v694 = vunpack.c.h.b16 %v506
  %v695 = vunpack.c.l.b16 %v507
  %v696 = vunpack.c.h.b16 %v507
  %v697 = vunpack.c.l.b16 %v508
  %v698 = vunpack.c.h.b16 %v508
  %v699 = vunpack.c.l.b16 %v509
  %v700 = vunpack.c.h.b16 %v509
  %v701 = vunpack.c.l.b16 %v510
  %v702 = vunpack.c.h.b16 %v510
  %v703 = vunpack.c.l.b16 %v511
  %v704 = vunpack.c.h.b16 %v511
  %v705 = vunpack.c.l.b16 %v512
  %v706 = vunpack.c.h.b16 %v512
  %v707 = vunpack.c.l.b16 %v513
  %v708 = vunpack.c.h.b16 %v513
  %v709 = vunpack.c.l.b16 %v514
  %v710 = vunpack.c.h.b16 %v514
  %v711 = vunpack.c.l.b16 %v515
  %v712 = vunpack.c.h.b16 %v515
  %v713 = vunpack.c.l.b16 %v516
  %v714 = vunpack.c.h.b16 %v516
  %v715 = vunpack.c.l.b16 %v517
  %v716 = vunpack.c.h.b16 %v517
  %v717 = vunpack.c.l.b16 %v518
  %v718 = vunpack.c.h.b16 %v518
  %v719 = vunpack.c.l.b16 %v519
  %v720 = vunpack.c.h.b16 %v519
  %v721 = vunpack.c.l.b16 %v520
  %v722 = vunpack.c.h.b16 %v520
  %v723 = vunpack.c.l.b16 %v521
  %v724 = vunpack.c.h.b16 %v521
  %v725 = vunpack.c.l.b16 %v522
  %v726 = vunpack.c.h.b16 %v522
  %v727 = vunpack.c.l.b16 %v523
  %v728 = vunpack.c.h.b16 %v523
  %v729 = vunpack.c.l.b16 %v524
  %v730 = vunpack.c.h.b16 %v524
  %v731 = vunpack.c.l.b16 %v525
  %v732 = vunpack.c.h.b16 %v525
  %v733 = vunpack.c.l.b16 %v526
  %v734 = vunpack.c.h.b16 %v526
  %v735 = vunpack.c.l.b16 %v527
  %v736 = vunpack.c.h.b16 %v527
  %v737 = vunpack.c.l.b16 %v528
  %v738 = vunpack.c.h.b16 %v528
  %v739 = vunpack.c.l.b16 %v529
  %v740 = vunpack.c.h.b16 %v529
  %v741 = vpack.c.b16 %v615, %v613
  %v742 = vpack.c.b16 %v616, %v614
  %v743 = vpack.c.b16 %v619, %v617
  %v744 = vpack.c.b16 %v620, %v618
  %v745 = vpack.c.b16 %v623, %v621
  %v746 = vpack.c.b16 %v624, %v622
  %v747 = vpack.c.b16 %v627, %v625
  %v748 = vpack.c.b16 %v628, %v626
  %v749 = vpack.c.b16 %v631, %v629
  %v750 = vpack.c.b16 %v632, %v630
  %v751 = vpack.c.b16 %v635, %v633
  %v752 = vpack.c.b16 %v636, %v634
  %v753 = vpack.c.b16 %v639, %v637
  %v754 = vpack.c.b16 %v640, %v638
  %v755 = vpack.c.b16 %v643, %v641
  %v756 = vpack.c.b16 %v644, %v642
  %v757 = vpack.c.b16 %v647, %v645
  %v758 = vpack.c.b16 %v648, %v646
  %v759 = vpack.c.b16 %v651, %v649
  %v760 = vpack.c.b16 %v652, %v650
  %v761 = vpack.c.b16 %v655, %v653
  %v762 = vpack.c.b16 %v656, %v654
  %v763 = vpack.c.b16 %v659, %v657
  %v764 = vpack.c.b16 %v660, %v658
  %v765 = vpack.c.b16 %v663, %v661
  %v766 = vpack.c.b16 %v664, %v662
  %v767 = vpack.c.b16 %v667, %v665
  %v768 = vpack.c.b16 %v668, %v666
  %v769 = vpack.c.b16 %v671, %v669
  %v770 = vpack.c.b16 %v672, %v670
  %v771 = vpack.c.b16 %v675, %v673
  %v772 = vpack.c.b16 %v676, %v674
  %v773 = vpack.c.b16 %v679, %v677
  %v774 = vpack.c.b16 %v680, %v678
  %v775 = vpack.c.b16 %v683, %v681
  %v776 = vpack.c.b16 %v684, %v682
  %v777 = vpack.c.b16 %v687, %v685
  %v778 = vpack.c.b16 %v688, %v686
  %v779 = vpack.c.b16 %v691, %v689
  %v780 = vpack.c.b16 %v692, %v690
  %v781 = vpack.c.b16 %v695, %v693
  %v782 = vpack.c.b16 %v696, %v694
  %v783 = vpack.c.b16 %v699, %v697
  %v784 = vpack.c.b16 %v700, %v698
  %v785 = vpack.c.b16 %v703, %v701
  %v786 = vpack.c.b16 %v704, %v702
  %v787 = vpack.c.b16 %v707, %v705
  %v788 = vpack.c.b16 %v708, %v706
  %v789 = vpack.c.b16 %v711, %v709
  %v790 = vpack.c.b16 %v712, %v710
  %v791 = vpack.c.b16 %v715, %v713
  %v792 = vpack.c.b16 %v716, %v714
  %v793 = vpack.c.b16 %v719, %v717
  %v794 = vpack.c.b16 %v720, %v718
  %v795 = vpack.c.b16 %v723, %v721
  %v796 = vpack.c.b16 %v724, %v722
  %v797 = vpack.c.b16 %v727, %v725
  %v798 = vpack.c.b16 %v728, %v726
  %v799 = vpack.c.b16 %v731, %v729
  %v800 = vpack.c.b16 %v732, %v730
  %v801 = vpack.c.b16 %v735, %v733
  %v802 = vpack.c.b16 %v736, %v734
  %v803 = vpack.c.b16 %v739, %v737
  %v804 = vpack.c.b16 %v740, %v738
  %v856 = vunpack.c.l.b16 %v530
  %v857 = vunpack.c.l.b16 %v531
  %v858 = vunpack.c.l.b16 %v532
  %v859 = vunpack.c.l.b16 %v533
  %v860 = vunpack.c.l.b16 %v534
  %v861 = vunpack.c.l.b16 %v535
  %v862 = vunpack.c.l.b16 %v536
  %v863 = vunpack.c.l.b16 %v537
  %v864 = vunpack.c.l.b16 %v538
  %v865 = vunpack.c.l.b16 %v539
  %v866 = vunpack.c.l.b16 %v540
  %v867 = vunpack.c.l.b16 %v541
  %v868 = vunpack.c.l.b16 %v542
  %v869 = vunpack.c.l.b16 %v543
  %v870 = vunpack.c.l.b16 %v544
  %v871 = vunpack.c.l.b16 %v545
  %v872 = vunpack.c.l.b16 %v546
  %v873 = vunpack.c.l.b16 %v547
  %v874 = vunpack.c.l.b16 %v548
  %v875 = vpack.c.b16 %v857, %v856
  %v876 = vpack.c.b16 %v859, %v858
  %v877 = vpack.c.b16 %v861, %v860
  %v878 = vpack.c.b16 %v863, %v862
  %v879 = vpack.c.b16 %v865, %v864
  %v880 = vpack.c.b16 %v867, %v866
  %v881 = vpack.c.b16 %v869, %v868
  %v882 = vpack.c.b16 %v871, %v870
  %v883 = vpack.c.b16 %v873, %v872
  %v884 = vpack.c.b16 %v874, %v874
  %vm894 = vcmask 154624
  %v896 = vsel %vm894, %v742, 0
  %v899 = vsel %vm894, %v744, 0
  %v902 = vsel %vm894, %v746, 0
  %v905 = vsel %vm894, %v748, 0
  %v908 = vsel %vm894, %v750, 0
  %v911 = vsel %vm894, %v752, 0
  %v914 = vsel %vm894, %v754, 0
  %v917 = vsel %vm894, %v756, 0
  %v920 = vsel %vm894, %v758, 0
  %v923 = vsel %vm894, %v760, 0
  %v926 = vsel %vm894, %v762, 0
  %v929 = vsel %vm894, %v764, 0
  %v932 = vsel %vm894, %v766, 0
  %v935 = vsel %vm894, %v768, 0
  %v938 = vsel %vm894, %v770, 0
  %v941 = vsel %vm894, %v772, 0
  %v944 = vsel %vm894, %v774, 0
  %v947 = vsel %vm894, %v776, 0
  %v950 = vsel %vm894, %v778, 0
  %v953 = vsel %vm894, %v780, 0
  %v956 = vsel %vm894, %v782, 0
  %v959 = vsel %vm894, %v784, 0
  %v962 = vsel %vm894, %v786, 0
  %v965 = vsel %vm894, %v788, 0
  %v968 = vsel %vm894, %v790, 0
  %v971 = vsel %vm894, %v792, 0
  %v974 = vsel %vm894, %v794, 0
  %v977 = vsel %vm894, %v796, 0
  %v980 = vsel %vm894, %v798, 0
  %v983 = vsel %vm894, %v800, 0
  %v986 = vsel %vm894, %v802, 0
  %v989 = vsel %vm894, %v804, 0
  %vm991 = vcmask 1040384
  %vm992 = vcmask 1041408
  %v993 = vsel %vm991, 4294967295, 65535
  %v994 = vsel %vm992, %v993, 0
  %v996 = vand.u32 %v884, %v994
  %998 = vmatprep.subr.bf16.mxu0 0
  %999 = vmatpush1.bf16.msra.mxu0 %v875
  %1000 = vmatprep.subr.bf16.mxu0 0
  %1001 = vmatpush1.bf16.msra.mxu0 %v876
  %1002 = vmatprep.subr.bf16.mxu0 0
  %1003 = vmatpush1.bf16.msra.mxu0 %v877
  %1004 = vmatprep.subr.bf16.mxu0 0
  %1005 = vmatpush1.bf16.msra.mxu0 %v878
  %1006 = vmatprep.subr.bf16.mxu0 0
  %1007 = vmatpush1.bf16.msra.mxu0 %v879
  %1008 = vmatprep.subr.bf16.mxu0 0
  %1009 = vmatpush1.bf16.msra.mxu0 %v880
  %1010 = vmatprep.subr.bf16.mxu0 0
  %1011 = vmatpush1.bf16.msra.mxu0 %v881
  %1012 = vmatprep.subr.bf16.mxu0 0
  %1013 = vmatpush1.bf16.msra.mxu0 %v882
  %1014 = vmatprep.subr.bf16.mxu0 0
  %1015 = vmatpush1.bf16.msra.mxu0 %v883
  %1016 = vmatprep.subr.bf16.mxu0 0
  %1017 = vmatpush1.bf16.msra.mxu0 %v996
  %1018 = vmatprep.subr.bf16.mxu0 0
  %1019 = vmatpush1.bf16.msra.mxu0 0
  %1020 = vmatprep.subr.bf16.mxu0 0
  %1021 = vmatpush1.bf16.msra.mxu0 0
  %1022 = vmatprep.subr.bf16.mxu0 0
  %1023 = vmatpush1.bf16.msra.mxu0 0
  %1024 = vmatprep.subr.bf16.mxu0 0
  %1025 = vmatpush1.bf16.msra.mxu0 0
  %1026 = vmatprep.subr.bf16.mxu0 0
  %1027 = vmatpush1.bf16.msra.mxu0 0
  %1028 = vmatprep.subr.bf16.mxu0 0
  %1029 = vmatpush1.bf16.msra.mxu0 0
  %1030 = vmatprep.mubr.bf16.mxu0 %v896
  %1031 = vmatmul.mubr.bf16.gmra.mrb[0].mxu0 %v741
  %v1032 = vpop.f32.mrb[0].mxu0
  %v1033 = vadd.f32 0.0, %v1032
  %v1034 = vpop.f32.mrb[0].mxu0
  %v1035 = vpop.f32.mrb[0].mxu0
  %v1036 = vadd.f32 0.0, %v1035
  %v1037 = vpop.f32.mrb[0].mxu0
  %1038 = vmatprep.mubr.bf16.mxu0 %v899
  %1039 = vmatmul.mubr.bf16.gmra.mrb[0].mxu0 %v743
  %v1040 = vpop.f32.mrb[0].mxu0
  %v1041 = vadd.f32 0.0, %v1040
  %v1042 = vpop.f32.mrb[0].mxu0
  %v1043 = vpop.f32.mrb[0].mxu0
  %v1044 = vadd.f32 0.0, %v1043
  %v1045 = vpop.f32.mrb[0].mxu0
  %1046 = vmatprep.mubr.bf16.mxu0 %v902
  %1047 = vmatmul.mubr.bf16.gmra.mrb[0].mxu0 %v745
  %v1048 = vpop.f32.mrb[0].mxu0
  %v1049 = vadd.f32 0.0, %v1048
  %v1050 = vpop.f32.mrb[0].mxu0
  %v1051 = vpop.f32.mrb[0].mxu0
  %v1052 = vadd.f32 0.0, %v1051
  %v1053 = vpop.f32.mrb[0].mxu0
  %1054 = vmatprep.mubr.bf16.mxu0 %v905
  %1055 = vmatmul.mubr.bf16.gmra.mrb[0].mxu0 %v747
  %v1056 = vpop.f32.mrb[0].mxu0
  %v1057 = vadd.f32 0.0, %v1056
  %v1058 = vpop.f32.mrb[0].mxu0
  %v1059 = vpop.f32.mrb[0].mxu0
  %v1060 = vadd.f32 0.0, %v1059
  %v1061 = vpop.f32.mrb[0].mxu0
  %1062 = vmatprep.mubr.bf16.mxu0 %v908
  %1063 = vmatmul.mubr.bf16.gmra.mrb[0].mxu0 %v749
  %v1064 = vpop.f32.mrb[0].mxu0
  %v1065 = vadd.f32 0.0, %v1064
  %v1066 = vpop.f32.mrb[0].mxu0
  %v1067 = vpop.f32.mrb[0].mxu0
  %v1068 = vadd.f32 0.0, %v1067
  %v1069 = vpop.f32.mrb[0].mxu0
  %1070 = vmatprep.mubr.bf16.mxu0 %v911
  %1071 = vmatmul.mubr.bf16.gmra.mrb[0].mxu0 %v751
  %v1072 = vpop.f32.mrb[0].mxu0
  %v1073 = vadd.f32 0.0, %v1072
  %v1074 = vpop.f32.mrb[0].mxu0
  %v1075 = vpop.f32.mrb[0].mxu0
  %v1076 = vadd.f32 0.0, %v1075
  %v1077 = vpop.f32.mrb[0].mxu0
  %1078 = vmatprep.mubr.bf16.mxu0 %v914
  %1079 = vmatmul.mubr.bf16.gmra.mrb[0].mxu0 %v753
  %v1080 = vpop.f32.mrb[0].mxu0
  %v1081 = vadd.f32 0.0, %v1080
  %v1082 = vpop.f32.mrb[0].mxu0
  %v1083 = vpop.f32.mrb[0].mxu0
  %v1084 = vadd.f32 0.0, %v1083
  %v1085 = vpop.f32.mrb[0].mxu0
  %1086 = vmatprep.mubr.bf16.mxu0 %v917
  %1087 = vmatmul.mubr.bf16.gmra.mrb[0].mxu0 %v755
  %v1088 = vpop.f32.mrb[0].mxu0
  %v1089 = vadd.f32 0.0, %v1088
  %v1090 = vpop.f32.mrb[0].mxu0
  %v1091 = vpop.f32.mrb[0].mxu0
  %v1092 = vadd.f32 0.0, %v1091
  %v1093 = vpop.f32.mrb[0].mxu0
  %1094 = vmatprep.mubr.bf16.mxu0 %v920
  %1095 = vmatmul.mubr.bf16.gmra.mrb[0].mxu0 %v757
  %v1096 = vpop.f32.mrb[0].mxu0
  %v1097 = vadd.f32 0.0, %v1096
  %v1098 = vpop.f32.mrb[0].mxu0
  %v1099 = vpop.f32.mrb[0].mxu0
  %v1100 = vadd.f32 0.0, %v1099
  %v1101 = vpop.f32.mrb[0].mxu0
  %1102 = vmatprep.mubr.bf16.mxu0 %v923
  %1103 = vmatmul.mubr.bf16.gmra.mrb[0].mxu0 %v759
  %v1104 = vpop.f32.mrb[0].mxu0
  %v1105 = vadd.f32 0.0, %v1104
  %v1106 = vpop.f32.mrb[0].mxu0
  %v1107 = vpop.f32.mrb[0].mxu0
  %v1108 = vadd.f32 0.0, %v1107
  %v1109 = vpop.f32.mrb[0].mxu0
  %1110 = vmatprep.mubr.bf16.mxu0 %v926
  %1111 = vmatmul.mubr.bf16.gmra.mrb[0].mxu0 %v761
  %v1112 = vpop.f32.mrb[0].mxu0
  %v1113 = vadd.f32 0.0, %v1112
  %v1114 = vpop.f32.mrb[0].mxu0
  %v1115 = vpop.f32.mrb[0].mxu0
  %v1116 = vadd.f32 0.0, %v1115
  %v1117 = vpop.f32.mrb[0].mxu0
  %1118 = vmatprep.mubr.bf16.mxu0 %v929
  %1119 = vmatmul.mubr.bf16.gmra.mrb[0].mxu0 %v763
  %v1120 = vpop.f32.mrb[0].mxu0
  %v1121 = vadd.f32 0.0, %v1120
  %v1122 = vpop.f32.mrb[0].mxu0
  %v1123 = vpop.f32.mrb[0].mxu0
  %v1124 = vadd.f32 0.0, %v1123
  %v1125 = vpop.f32.mrb[0].mxu0
  %1126 = vmatprep.mubr.bf16.mxu0 %v932
  %1127 = vmatmul.mubr.bf16.gmra.mrb[0].mxu0 %v765
  %v1128 = vpop.f32.mrb[0].mxu0
  %v1129 = vadd.f32 0.0, %v1128
  %v1130 = vpop.f32.mrb[0].mxu0
  %v1131 = vpop.f32.mrb[0].mxu0
  %v1132 = vadd.f32 0.0, %v1131
  %v1133 = vpop.f32.mrb[0].mxu0
  %1134 = vmatprep.mubr.bf16.mxu0 %v935
  %1135 = vmatmul.mubr.bf16.gmra.mrb[0].mxu0 %v767
  %v1136 = vpop.f32.mrb[0].mxu0
  %v1137 = vadd.f32 0.0, %v1136
  %v1138 = vpop.f32.mrb[0].mxu0
  %v1139 = vpop.f32.mrb[0].mxu0
  %v1140 = vadd.f32 0.0, %v1139
  %v1141 = vpop.f32.mrb[0].mxu0
  %1142 = vmatprep.mubr.bf16.mxu0 %v938
  %1143 = vmatmul.mubr.bf16.gmra.mrb[0].mxu0 %v769
  %v1144 = vpop.f32.mrb[0].mxu0
  %v1145 = vadd.f32 0.0, %v1144
  %v1146 = vpop.f32.mrb[0].mxu0
  %v1147 = vpop.f32.mrb[0].mxu0
  %v1148 = vadd.f32 0.0, %v1147
  %v1149 = vpop.f32.mrb[0].mxu0
  %1150 = vmatprep.mubr.bf16.mxu0 %v941
  %1151 = vmatmul.mubr.bf16.gmra.mrb[0].mxu0 %v771
  %v1152 = vpop.f32.mrb[0].mxu0
  %v1153 = vadd.f32 0.0, %v1152
  %v1154 = vpop.f32.mrb[0].mxu0
  %v1155 = vpop.f32.mrb[0].mxu0
  %v1156 = vadd.f32 0.0, %v1155
  %v1157 = vpop.f32.mrb[0].mxu0
  %1158 = vmatprep.mubr.bf16.mxu0 %v944
  %1159 = vmatmul.mubr.bf16.gmra.mrb[0].mxu0 %v773
  %v1160 = vpop.f32.mrb[0].mxu0
  %v1161 = vadd.f32 0.0, %v1160
  %v1162 = vpop.f32.mrb[0].mxu0
  %v1163 = vpop.f32.mrb[0].mxu0
  %v1164 = vadd.f32 0.0, %v1163
  %v1165 = vpop.f32.mrb[0].mxu0
  %1166 = vmatprep.mubr.bf16.mxu0 %v947
  %1167 = vmatmul.mubr.bf16.gmra.mrb[0].mxu0 %v775
  %v1168 = vpop.f32.mrb[0].mxu0
  %v1169 = vadd.f32 0.0, %v1168
  %v1170 = vpop.f32.mrb[0].mxu0
  %v1171 = vpop.f32.mrb[0].mxu0
  %v1172 = vadd.f32 0.0, %v1171
  %v1173 = vpop.f32.mrb[0].mxu0
  %1174 = vmatprep.mubr.bf16.mxu0 %v950
  %1175 = vmatmul.mubr.bf16.gmra.mrb[0].mxu0 %v777
  %v1176 = vpop.f32.mrb[0].mxu0
  %v1177 = vadd.f32 0.0, %v1176
  %v1178 = vpop.f32.mrb[0].mxu0
  %v1179 = vpop.f32.mrb[0].mxu0
  %v1180 = vadd.f32 0.0, %v1179
  %v1181 = vpop.f32.mrb[0].mxu0
  %1182 = vmatprep.mubr.bf16.mxu0 %v953
  %1183 = vmatmul.mubr.bf16.gmra.mrb[0].mxu0 %v779
  %v1184 = vpop.f32.mrb[0].mxu0
  %v1185 = vadd.f32 0.0, %v1184
  %v1186 = vpop.f32.mrb[0].mxu0
  %v1187 = vpop.f32.mrb[0].mxu0
  %v1188 = vadd.f32 0.0, %v1187
  %v1189 = vpop.f32.mrb[0].mxu0
  %1190 = vmatprep.mubr.bf16.mxu0 %v956
  %1191 = vmatmul.mubr.bf16.gmra.mrb[0].mxu0 %v781
  %v1192 = vpop.f32.mrb[0].mxu0
  %v1193 = vadd.f32 0.0, %v1192
  %v1194 = vpop.f32.mrb[0].mxu0
  %v1195 = vpop.f32.mrb[0].mxu0
  %v1196 = vadd.f32 0.0, %v1195
  %v1197 = vpop.f32.mrb[0].mxu0
  %1198 = vmatprep.mubr.bf16.mxu0 %v959
  %1199 = vmatmul.mubr.bf16.gmra.mrb[0].mxu0 %v783
  %v1200 = vpop.f32.mrb[0].mxu0
  %v1201 = vadd.f32 0.0, %v1200
  %v1202 = vpop.f32.mrb[0].mxu0
  %v1203 = vpop.f32.mrb[0].mxu0
  %v1204 = vadd.f32 0.0, %v1203
  %v1205 = vpop.f32.mrb[0].mxu0
  %1206 = vmatprep.mubr.bf16.mxu0 %v962
  %1207 = vmatmul.mubr.bf16.gmra.mrb[0].mxu0 %v785
  %v1208 = vpop.f32.mrb[0].mxu0
  %v1209 = vadd.f32 0.0, %v1208
  %v1210 = vpop.f32.mrb[0].mxu0
  %v1211 = vpop.f32.mrb[0].mxu0
  %v1212 = vadd.f32 0.0, %v1211
  %v1213 = vpop.f32.mrb[0].mxu0
  %1214 = vmatprep.mubr.bf16.mxu0 %v965
  %1215 = vmatmul.mubr.bf16.gmra.mrb[0].mxu0 %v787
  %v1216 = vpop.f32.mrb[0].mxu0
  %v1217 = vadd.f32 0.0, %v1216
  %v1218 = vpop.f32.mrb[0].mxu0
  %v1219 = vpop.f32.mrb[0].mxu0
  %v1220 = vadd.f32 0.0, %v1219
  %v1221 = vpop.f32.mrb[0].mxu0
  %1222 = vmatprep.mubr.bf16.mxu0 %v968
  %1223 = vmatmul.mubr.bf16.gmra.mrb[0].mxu0 %v789
  %v1224 = vpop.f32.mrb[0].mxu0
  %v1225 = vadd.f32 0.0, %v1224
  %v1226 = vpop.f32.mrb[0].mxu0
  %v1227 = vpop.f32.mrb[0].mxu0
  %v1228 = vadd.f32 0.0, %v1227
  %v1229 = vpop.f32.mrb[0].mxu0
  %1230 = vmatprep.mubr.bf16.mxu0 %v971
  %1231 = vmatmul.mubr.bf16.gmra.mrb[0].mxu0 %v791
  %v1232 = vpop.f32.mrb[0].mxu0
  %v1233 = vadd.f32 0.0, %v1232
  %v1234 = vpop.f32.mrb[0].mxu0
  %v1235 = vpop.f32.mrb[0].mxu0
  %v1236 = vadd.f32 0.0, %v1235
  %v1237 = vpop.f32.mrb[0].mxu0
  %1238 = vmatprep.mubr.bf16.mxu0 %v974
  %1239 = vmatmul.mubr.bf16.gmra.mrb[0].mxu0 %v793
  %v1240 = vpop.f32.mrb[0].mxu0
  %v1241 = vadd.f32 0.0, %v1240
  %v1242 = vpop.f32.mrb[0].mxu0
  %v1243 = vpop.f32.mrb[0].mxu0
  %v1244 = vadd.f32 0.0, %v1243
  %v1245 = vpop.f32.mrb[0].mxu0
  %1246 = vmatprep.mubr.bf16.mxu0 %v977
  %1247 = vmatmul.mubr.bf16.gmra.mrb[0].mxu0 %v795
  %v1248 = vpop.f32.mrb[0].mxu0
  %v1249 = vadd.f32 0.0, %v1248
  %v1250 = vpop.f32.mrb[0].mxu0
  %v1251 = vpop.f32.mrb[0].mxu0
  %v1252 = vadd.f32 0.0, %v1251
  %v1253 = vpop.f32.mrb[0].mxu0
  %1254 = vmatprep.mubr.bf16.mxu0 %v980
  %1255 = vmatmul.mubr.bf16.gmra.mrb[0].mxu0 %v797
  %v1256 = vpop.f32.mrb[0].mxu0
  %v1257 = vadd.f32 0.0, %v1256
  %v1258 = vpop.f32.mrb[0].mxu0
  %v1259 = vpop.f32.mrb[0].mxu0
  %v1260 = vadd.f32 0.0, %v1259
  %v1261 = vpop.f32.mrb[0].mxu0
  %1262 = vmatprep.mubr.bf16.mxu0 %v983
  %1263 = vmatmul.mubr.bf16.gmra.mrb[0].mxu0 %v799
  %v1264 = vpop.f32.mrb[0].mxu0
  %v1265 = vadd.f32 0.0, %v1264
  %v1266 = vpop.f32.mrb[0].mxu0
  %v1267 = vpop.f32.mrb[0].mxu0
  %v1268 = vadd.f32 0.0, %v1267
  %v1269 = vpop.f32.mrb[0].mxu0
  %1270 = vmatprep.mubr.bf16.mxu0 %v986
  %1271 = vmatmul.mubr.bf16.gmra.mrb[0].mxu0 %v801
  %v1272 = vpop.f32.mrb[0].mxu0
  %v1273 = vadd.f32 0.0, %v1272
  %v1274 = vpop.f32.mrb[0].mxu0
  %v1275 = vpop.f32.mrb[0].mxu0
  %v1276 = vadd.f32 0.0, %v1275
  %v1277 = vpop.f32.mrb[0].mxu0
  %1278 = vmatprep.mubr.bf16.mxu0 %v989
  %1279 = vmatmul.mubr.bf16.gmra.mrb[0].mxu0 %v803
  %v1280 = vpop.f32.mrb[0].mxu0
  %v1281 = vadd.f32 0.0, %v1280
  %v1282 = vpop.f32.mrb[0].mxu0
  %v1283 = vpop.f32.mrb[0].mxu0
  %v1284 = vadd.f32 0.0, %v1283
  %v1285 = vpop.f32.mrb[0].mxu0
  %1286 = vdwg.mxu0
  %vm1287 = vcmask 130048
  %1288 = vst.msk [vmem:[%s2] sm:$0xff] %vm1287, %v1033
  %1289 = vst.msk [vmem:[%s2 + $0x8] sm:$0xff] %vm1287, %v1036
  %1290 = vst.msk [vmem:[%s2 + $0x10] sm:$0xff] %vm1287, %v1041
  %1291 = vst.msk [vmem:[%s2 + $0x18] sm:$0xff] %vm1287, %v1044
  %1292 = vst.msk [vmem:[%s2 + $0x20] sm:$0xff] %vm1287, %v1049
  %1293 = vst.msk [vmem:[%s2 + $0x28] sm:$0xff] %vm1287, %v1052
  %1294 = vst.msk [vmem:[%s2 + $0x30] sm:$0xff] %vm1287, %v1057
  %1295 = vst.msk [vmem:[%s2 + $0x38] sm:$0xff] %vm1287, %v1060
  %1296 = vst.msk [vmem:[%s2 + $0x40] sm:$0xff] %vm1287, %v1065
  %1297 = vst.msk [vmem:[%s2 + $0x48] sm:$0xff] %vm1287, %v1068
  %1298 = vst.msk [vmem:[%s2 + $0x50] sm:$0xff] %vm1287, %v1073
  %1299 = vst.msk [vmem:[%s2 + $0x58] sm:$0xff] %vm1287, %v1076
  %1300 = vst.msk [vmem:[%s2 + $0x60] sm:$0xff] %vm1287, %v1081
  %1301 = vst.msk [vmem:[%s2 + $0x68] sm:$0xff] %vm1287, %v1084
  %1302 = vst.msk [vmem:[%s2 + $0x70] sm:$0xff] %vm1287, %v1089
  %1303 = vst.msk [vmem:[%s2 + $0x78] sm:$0xff] %vm1287, %v1092
  %1304 = vst.msk [vmem:[%s2 + $0x80] sm:$0xff] %vm1287, %v1097
  %1305 = vst.msk [vmem:[%s2 + $0x88] sm:$0xff] %vm1287, %v1100
  %1306 = vst.msk [vmem:[%s2 + $0x90] sm:$0xff] %vm1287, %v1105
  %1307 = vst.msk [vmem:[%s2 + $0x98] sm:$0xff] %vm1287, %v1108
  %1308 = vst.msk [vmem:[%s2 + $0xa0] sm:$0xff] %vm1287, %v1113
  %1309 = vst.msk [vmem:[%s2 + $0xa8] sm:$0xff] %vm1287, %v1116
  %1310 = vst.msk [vmem:[%s2 + $0xb0] sm:$0xff] %vm1287, %v1121
  %1311 = vst.msk [vmem:[%s2 + $0xb8] sm:$0xff] %vm1287, %v1124
  %1312 = vst.msk [vmem:[%s2 + $0xc0] sm:$0xff] %vm1287, %v1129
  %1313 = vst.msk [vmem:[%s2 + $0xc8] sm:$0xff] %vm1287, %v1132
  %1314 = vst.msk [vmem:[%s2 + $0xd0] sm:$0xff] %vm1287, %v1137
  %1315 = vst.msk [vmem:[%s2 + $0xd8] sm:$0xff] %vm1287, %v1140
  %1316 = vst.msk [vmem:[%s2 + $0xe0] sm:$0xff] %vm1287, %v1145
  %1317 = vst.msk [vmem:[%s2 + $0xe8] sm:$0xff] %vm1287, %v1148
  %1318 = vst.msk [vmem:[%s2 + $0xf0] sm:$0xff] %vm1287, %v1153
  %1319 = vst.msk [vmem:[%s2 + $0xf8] sm:$0xff] %vm1287, %v1156
  %1320 = vst.msk [vmem:[%s2 + $0x100] sm:$0xff] %vm1287, %v1161
  %1321 = vst.msk [vmem:[%s2 + $0x108] sm:$0xff] %vm1287, %v1164
  %1322 = vst.msk [vmem:[%s2 + $0x110] sm:$0xff] %vm1287, %v1169
  %1323 = vst.msk [vmem:[%s2 + $0x118] sm:$0xff] %vm1287, %v1172
  %1324 = vst.msk [vmem:[%s2 + $0x120] sm:$0xff] %vm1287, %v1177
  %1325 = vst.msk [vmem:[%s2 + $0x128] sm:$0xff] %vm1287, %v1180
  %1326 = vst.msk [vmem:[%s2 + $0x130] sm:$0xff] %vm1287, %v1185
  %1327 = vst.msk [vmem:[%s2 + $0x138] sm:$0xff] %vm1287, %v1188
  %1328 = vst.msk [vmem:[%s2 + $0x140] sm:$0xff] %vm1287, %v1193
  %1329 = vst.msk [vmem:[%s2 + $0x148] sm:$0xff] %vm1287, %v1196
  %1330 = vst.msk [vmem:[%s2 + $0x150] sm:$0xff] %vm1287, %v1201
  %1331 = vst.msk [vmem:[%s2 + $0x158] sm:$0xff] %vm1287, %v1204
  %1332 = vst.msk [vmem:[%s2 + $0x160] sm:$0xff] %vm1287, %v1209
  %1333 = vst.msk [vmem:[%s2 + $0x168] sm:$0xff] %vm1287, %v1212
  %1334 = vst.msk [vmem:[%s2 + $0x170] sm:$0xff] %vm1287, %v1217
  %1335 = vst.msk [vmem:[%s2 + $0x178] sm:$0xff] %vm1287, %v1220
  %1336 = vst.msk [vmem:[%s2 + $0x180] sm:$0xff] %vm1287, %v1225
  %1337 = vst.msk [vmem:[%s2 + $0x188] sm:$0xff] %vm1287, %v1228
  %1338 = vst.msk [vmem:[%s2 + $0x190] sm:$0xff] %vm1287, %v1233
  %1339 = vst.msk [vmem:[%s2 + $0x198] sm:$0xff] %vm1287, %v1236
  %1340 = vst.msk [vmem:[%s2 + $0x1a0] sm:$0xff] %vm1287, %v1241
  %1341 = vst.msk [vmem:[%s2 + $0x1a8] sm:$0xff] %vm1287, %v1244
  %1342 = vst.msk [vmem:[%s2 + $0x1b0] sm:$0xff] %vm1287, %v1249
  %1343 = vst.msk [vmem:[%s2 + $0x1b8] sm:$0xff] %vm1287, %v1252
  %1344 = vst.msk [vmem:[%s2 + $0x1c0] sm:$0xff] %vm1287, %v1257
  %1345 = vst.msk [vmem:[%s2 + $0x1c8] sm:$0xff] %vm1287, %v1260
  %1346 = vst.msk [vmem:[%s2 + $0x1d0] sm:$0xff] %vm1287, %v1265
  %1347 = vst.msk [vmem:[%s2 + $0x1d8] sm:$0xff] %vm1287, %v1268
  %1348 = vst.msk [vmem:[%s2 + $0x1e0] sm:$0xff] %vm1287, %v1273
  %1349 = vst.msk [vmem:[%s2 + $0x1e8] sm:$0xff] %vm1287, %v1276
  %1350 = vst.msk [vmem:[%s2 + $0x1f0] sm:$0xff] %vm1287, %v1281
  %1351 = vst.msk [vmem:[%s2 + $0x1f8] sm:$0xff] %vm1287, %v1284
  %v1352 = vsel %vm1287, %v1033, 0.0
  %v1353 = vsel %vm1287, %v1036, 0.0
  %v1354 = vadd.f32 %v1352, %v1353
  %v1355 = vsel %vm1287, %v1041, 0.0
  %v1356 = vadd.f32 %v1354, %v1355
  %v1357 = vsel %vm1287, %v1044, 0.0
  %v1358 = vadd.f32 %v1356, %v1357
  %v1359 = vsel %vm1287, %v1049, 0.0
  %v1360 = vadd.f32 %v1358, %v1359
  %v1361 = vsel %vm1287, %v1052, 0.0
  %v1362 = vadd.f32 %v1360, %v1361
  %v1363 = vsel %vm1287, %v1057, 0.0
  %v1364 = vadd.f32 %v1362, %v1363
  %v1365 = vsel %vm1287, %v1060, 0.0
  %v1366 = vadd.f32 %v1364, %v1365
  %v1367 = vsel %vm1287, %v1065, 0.0
  %v1368 = vadd.f32 %v1366, %v1367
  %v1369 = vsel %vm1287, %v1068, 0.0
  %v1370 = vadd.f32 %v1368, %v1369
  %v1371 = vsel %vm1287, %v1073, 0.0
  %v1372 = vadd.f32 %v1370, %v1371
  %v1373 = vsel %vm1287, %v1076, 0.0
  %v1374 = vadd.f32 %v1372, %v1373
  %v1375 = vsel %vm1287, %v1081, 0.0
  %v1376 = vadd.f32 %v1374, %v1375
  %v1377 = vsel %vm1287, %v1084, 0.0
  %v1378 = vadd.f32 %v1376, %v1377
  %v1379 = vsel %vm1287, %v1089, 0.0
  %v1380 = vadd.f32 %v1378, %v1379
  %v1381 = vsel %vm1287, %v1092, 0.0
  %v1382 = vadd.f32 %v1380, %v1381
  %v1383 = vsel %vm1287, %v1097, 0.0
  %v1384 = vadd.f32 %v1382, %v1383
  %v1385 = vsel %vm1287, %v1100, 0.0
  %v1386 = vadd.f32 %v1384, %v1385
  %v1387 = vsel %vm1287, %v1105, 0.0
  %v1388 = vadd.f32 %v1386, %v1387
  %v1389 = vsel %vm1287, %v1108, 0.0
  %v1390 = vadd.f32 %v1388, %v1389
  %v1391 = vsel %vm1287, %v1113, 0.0
  %v1392 = vadd.f32 %v1390, %v1391
  %v1393 = vsel %vm1287, %v1116, 0.0
  %v1394 = vadd.f32 %v1392, %v1393
  %v1395 = vsel %vm1287, %v1121, 0.0
  %v1396 = vadd.f32 %v1394, %v1395
  %v1397 = vsel %vm1287, %v1124, 0.0
  %v1398 = vadd.f32 %v1396, %v1397
  %v1399 = vsel %vm1287, %v1129, 0.0
  %v1400 = vadd.f32 %v1398, %v1399
  %v1401 = vsel %vm1287, %v1132, 0.0
  %v1402 = vadd.f32 %v1400, %v1401
  %v1403 = vsel %vm1287, %v1137, 0.0
  %v1404 = vadd.f32 %v1402, %v1403
  %v1405 = vsel %vm1287, %v1140, 0.0
  %v1406 = vadd.f32 %v1404, %v1405
  %v1407 = vsel %vm1287, %v1145, 0.0
  %v1408 = vadd.f32 %v1406, %v1407
  %v1409 = vsel %vm1287, %v1148, 0.0
  %v1410 = vadd.f32 %v1408, %v1409
  %v1411 = vsel %vm1287, %v1153, 0.0
  %v1412 = vadd.f32 %v1410, %v1411
  %v1413 = vsel %vm1287, %v1156, 0.0
  %v1414 = vadd.f32 %v1412, %v1413
  %v1415 = vsel %vm1287, %v1161, 0.0
  %v1416 = vadd.f32 %v1414, %v1415
  %v1417 = vsel %vm1287, %v1164, 0.0
  %v1418 = vadd.f32 %v1416, %v1417
  %v1419 = vsel %vm1287, %v1169, 0.0
  %v1420 = vadd.f32 %v1418, %v1419
  %v1421 = vsel %vm1287, %v1172, 0.0
  %v1422 = vadd.f32 %v1420, %v1421
  %v1423 = vsel %vm1287, %v1177, 0.0
  %v1424 = vadd.f32 %v1422, %v1423
  %v1425 = vsel %vm1287, %v1180, 0.0
  %v1426 = vadd.f32 %v1424, %v1425
  %v1427 = vsel %vm1287, %v1185, 0.0
  %v1428 = vadd.f32 %v1426, %v1427
  %v1429 = vsel %vm1287, %v1188, 0.0
  %v1430 = vadd.f32 %v1428, %v1429
  %v1431 = vsel %vm1287, %v1193, 0.0
  %v1432 = vadd.f32 %v1430, %v1431
  %v1433 = vsel %vm1287, %v1196, 0.0
  %v1434 = vadd.f32 %v1432, %v1433
  %v1435 = vsel %vm1287, %v1201, 0.0
  %v1436 = vadd.f32 %v1434, %v1435
  %v1437 = vsel %vm1287, %v1204, 0.0
  %v1438 = vadd.f32 %v1436, %v1437
  %v1439 = vsel %vm1287, %v1209, 0.0
  %v1440 = vadd.f32 %v1438, %v1439
  %v1441 = vsel %vm1287, %v1212, 0.0
  %v1442 = vadd.f32 %v1440, %v1441
  %v1443 = vsel %vm1287, %v1217, 0.0
  %v1444 = vadd.f32 %v1442, %v1443
  %v1445 = vsel %vm1287, %v1220, 0.0
  %v1446 = vadd.f32 %v1444, %v1445
  %v1447 = vsel %vm1287, %v1225, 0.0
  %v1448 = vadd.f32 %v1446, %v1447
  %v1449 = vsel %vm1287, %v1228, 0.0
  %v1450 = vadd.f32 %v1448, %v1449
  %v1451 = vsel %vm1287, %v1233, 0.0
  %v1452 = vadd.f32 %v1450, %v1451
  %v1453 = vsel %vm1287, %v1236, 0.0
  %v1454 = vadd.f32 %v1452, %v1453
  %v1455 = vsel %vm1287, %v1241, 0.0
  %v1456 = vadd.f32 %v1454, %v1455
  %v1457 = vsel %vm1287, %v1244, 0.0
  %v1458 = vadd.f32 %v1456, %v1457
  %v1459 = vsel %vm1287, %v1249, 0.0
  %v1460 = vadd.f32 %v1458, %v1459
  %v1461 = vsel %vm1287, %v1252, 0.0
  %v1462 = vadd.f32 %v1460, %v1461
  %v1463 = vsel %vm1287, %v1257, 0.0
  %v1464 = vadd.f32 %v1462, %v1463
  %v1465 = vsel %vm1287, %v1260, 0.0
  %v1466 = vadd.f32 %v1464, %v1465
  %v1467 = vsel %vm1287, %v1265, 0.0
  %v1468 = vadd.f32 %v1466, %v1467
  %v1469 = vsel %vm1287, %v1268, 0.0
  %v1470 = vadd.f32 %v1468, %v1469
  %v1471 = vsel %vm1287, %v1273, 0.0
  %v1472 = vadd.f32 %v1470, %v1471
  %v1473 = vsel %vm1287, %v1276, 0.0
  %v1474 = vadd.f32 %v1472, %v1473
  %v1475 = vsel %vm1287, %v1281, 0.0
  %v1476 = vadd.f32 %v1474, %v1475
  %v1477 = vsel %vm1287, %v1284, 0.0
  %v1478 = vadd.f32 %v1476, %v1477
  %v1479 = vrot.slane %v1478, 4
  %v1480 = vadd.f32 %v1478, %v1479
  %v1481 = vrot.slane %v1480, 2
  %v1482 = vadd.f32 %v1480, %v1481
  %v1483 = vrot.slane %v1482, 1
  %v1484 = vadd.f32 %v1482, %v1483
  %vm1485 = vcmask 122880
  %1486 = vst.msk [vmem:[%s3] sm:$0x1] %vm1485, %v1484
  %v1487 = vmul.f32 %v1033, %v1033
  %v1488 = vmul.f32 %v1036, %v1036
  %v1489 = vmul.f32 %v1041, %v1041
  %v1490 = vmul.f32 %v1044, %v1044
  %v1491 = vmul.f32 %v1049, %v1049
  %v1492 = vmul.f32 %v1052, %v1052
  %v1493 = vmul.f32 %v1057, %v1057
  %v1494 = vmul.f32 %v1060, %v1060
  %v1495 = vmul.f32 %v1065, %v1065
  %v1496 = vmul.f32 %v1068, %v1068
  %v1497 = vmul.f32 %v1073, %v1073
  %v1498 = vmul.f32 %v1076, %v1076
  %v1499 = vmul.f32 %v1081, %v1081
  %v1500 = vmul.f32 %v1084, %v1084
  %v1501 = vmul.f32 %v1089, %v1089
  %v1502 = vmul.f32 %v1092, %v1092
  %v1503 = vmul.f32 %v1097, %v1097
  %v1504 = vmul.f32 %v1100, %v1100
  %v1505 = vmul.f32 %v1105, %v1105
  %v1506 = vmul.f32 %v1108, %v1108
  %v1507 = vmul.f32 %v1113, %v1113
  %v1508 = vmul.f32 %v1116, %v1116
  %v1509 = vmul.f32 %v1121, %v1121
  %v1510 = vmul.f32 %v1124, %v1124
  %v1511 = vmul.f32 %v1129, %v1129
  %v1512 = vmul.f32 %v1132, %v1132
  %v1513 = vmul.f32 %v1137, %v1137
  %v1514 = vmul.f32 %v1140, %v1140
  %v1515 = vmul.f32 %v1145, %v1145
  %v1516 = vmul.f32 %v1148, %v1148
  %v1517 = vmul.f32 %v1153, %v1153
  %v1518 = vmul.f32 %v1156, %v1156
  %v1519 = vmul.f32 %v1161, %v1161
  %v1520 = vmul.f32 %v1164, %v1164
  %v1521 = vmul.f32 %v1169, %v1169
  %v1522 = vmul.f32 %v1172, %v1172
  %v1523 = vmul.f32 %v1177, %v1177
  %v1524 = vmul.f32 %v1180, %v1180
  %v1525 = vmul.f32 %v1185, %v1185
  %v1526 = vmul.f32 %v1188, %v1188
  %v1527 = vmul.f32 %v1193, %v1193
  %v1528 = vmul.f32 %v1196, %v1196
  %v1529 = vmul.f32 %v1201, %v1201
  %v1530 = vmul.f32 %v1204, %v1204
  %v1531 = vmul.f32 %v1209, %v1209
  %v1532 = vmul.f32 %v1212, %v1212
  %v1533 = vmul.f32 %v1217, %v1217
  %v1534 = vmul.f32 %v1220, %v1220
  %v1535 = vmul.f32 %v1225, %v1225
  %v1536 = vmul.f32 %v1228, %v1228
  %v1537 = vmul.f32 %v1233, %v1233
  %v1538 = vmul.f32 %v1236, %v1236
  %v1539 = vmul.f32 %v1241, %v1241
  %v1540 = vmul.f32 %v1244, %v1244
  %v1541 = vmul.f32 %v1249, %v1249
  %v1542 = vmul.f32 %v1252, %v1252
  %v1543 = vmul.f32 %v1257, %v1257
  %v1544 = vmul.f32 %v1260, %v1260
  %v1545 = vmul.f32 %v1265, %v1265
  %v1546 = vmul.f32 %v1268, %v1268
  %v1547 = vmul.f32 %v1273, %v1273
  %v1548 = vmul.f32 %v1276, %v1276
  %v1549 = vmul.f32 %v1281, %v1281
  %v1550 = vmul.f32 %v1284, %v1284
  %v1551 = vsel %vm1287, %v1487, 0.0
  %v1552 = vsel %vm1287, %v1488, 0.0
  %v1553 = vadd.f32 %v1551, %v1552
  %v1554 = vsel %vm1287, %v1489, 0.0
  %v1555 = vadd.f32 %v1553, %v1554
  %v1556 = vsel %vm1287, %v1490, 0.0
  %v1557 = vadd.f32 %v1555, %v1556
  %v1558 = vsel %vm1287, %v1491, 0.0
  %v1559 = vadd.f32 %v1557, %v1558
  %v1560 = vsel %vm1287, %v1492, 0.0
  %v1561 = vadd.f32 %v1559, %v1560
  %v1562 = vsel %vm1287, %v1493, 0.0
  %v1563 = vadd.f32 %v1561, %v1562
  %v1564 = vsel %vm1287, %v1494, 0.0
  %v1565 = vadd.f32 %v1563, %v1564
  %v1566 = vsel %vm1287, %v1495, 0.0
  %v1567 = vadd.f32 %v1565, %v1566
  %v1568 = vsel %vm1287, %v1496, 0.0
  %v1569 = vadd.f32 %v1567, %v1568
  %v1570 = vsel %vm1287, %v1497, 0.0
  %v1571 = vadd.f32 %v1569, %v1570
  %v1572 = vsel %vm1287, %v1498, 0.0
  %v1573 = vadd.f32 %v1571, %v1572
  %v1574 = vsel %vm1287, %v1499, 0.0
  %v1575 = vadd.f32 %v1573, %v1574
  %v1576 = vsel %vm1287, %v1500, 0.0
  %v1577 = vadd.f32 %v1575, %v1576
  %v1578 = vsel %vm1287, %v1501, 0.0
  %v1579 = vadd.f32 %v1577, %v1578
  %v1580 = vsel %vm1287, %v1502, 0.0
  %v1581 = vadd.f32 %v1579, %v1580
  %v1582 = vsel %vm1287, %v1503, 0.0
  %v1583 = vadd.f32 %v1581, %v1582
  %v1584 = vsel %vm1287, %v1504, 0.0
  %v1585 = vadd.f32 %v1583, %v1584
  %v1586 = vsel %vm1287, %v1505, 0.0
  %v1587 = vadd.f32 %v1585, %v1586
  %v1588 = vsel %vm1287, %v1506, 0.0
  %v1589 = vadd.f32 %v1587, %v1588
  %v1590 = vsel %vm1287, %v1507, 0.0
  %v1591 = vadd.f32 %v1589, %v1590
  %v1592 = vsel %vm1287, %v1508, 0.0
  %v1593 = vadd.f32 %v1591, %v1592
  %v1594 = vsel %vm1287, %v1509, 0.0
  %v1595 = vadd.f32 %v1593, %v1594
  %v1596 = vsel %vm1287, %v1510, 0.0
  %v1597 = vadd.f32 %v1595, %v1596
  %v1598 = vsel %vm1287, %v1511, 0.0
  %v1599 = vadd.f32 %v1597, %v1598
  %v1600 = vsel %vm1287, %v1512, 0.0
  %v1601 = vadd.f32 %v1599, %v1600
  %v1602 = vsel %vm1287, %v1513, 0.0
  %v1603 = vadd.f32 %v1601, %v1602
  %v1604 = vsel %vm1287, %v1514, 0.0
  %v1605 = vadd.f32 %v1603, %v1604
  %v1606 = vsel %vm1287, %v1515, 0.0
  %v1607 = vadd.f32 %v1605, %v1606
  %v1608 = vsel %vm1287, %v1516, 0.0
  %v1609 = vadd.f32 %v1607, %v1608
  %v1610 = vsel %vm1287, %v1517, 0.0
  %v1611 = vadd.f32 %v1609, %v1610
  %v1612 = vsel %vm1287, %v1518, 0.0
  %v1613 = vadd.f32 %v1611, %v1612
  %v1614 = vsel %vm1287, %v1519, 0.0
  %v1615 = vadd.f32 %v1613, %v1614
  %v1616 = vsel %vm1287, %v1520, 0.0
  %v1617 = vadd.f32 %v1615, %v1616
  %v1618 = vsel %vm1287, %v1521, 0.0
  %v1619 = vadd.f32 %v1617, %v1618
  %v1620 = vsel %vm1287, %v1522, 0.0
  %v1621 = vadd.f32 %v1619, %v1620
  %v1622 = vsel %vm1287, %v1523, 0.0
  %v1623 = vadd.f32 %v1621, %v1622
  %v1624 = vsel %vm1287, %v1524, 0.0
  %v1625 = vadd.f32 %v1623, %v1624
  %v1626 = vsel %vm1287, %v1525, 0.0
  %v1627 = vadd.f32 %v1625, %v1626
  %v1628 = vsel %vm1287, %v1526, 0.0
  %v1629 = vadd.f32 %v1627, %v1628
  %v1630 = vsel %vm1287, %v1527, 0.0
  %v1631 = vadd.f32 %v1629, %v1630
  %v1632 = vsel %vm1287, %v1528, 0.0
  %v1633 = vadd.f32 %v1631, %v1632
  %v1634 = vsel %vm1287, %v1529, 0.0
  %v1635 = vadd.f32 %v1633, %v1634
  %v1636 = vsel %vm1287, %v1530, 0.0
  %v1637 = vadd.f32 %v1635, %v1636
  %v1638 = vsel %vm1287, %v1531, 0.0
  %v1639 = vadd.f32 %v1637, %v1638
  %v1640 = vsel %vm1287, %v1532, 0.0
  %v1641 = vadd.f32 %v1639, %v1640
  %v1642 = vsel %vm1287, %v1533, 0.0
  %v1643 = vadd.f32 %v1641, %v1642
  %v1644 = vsel %vm1287, %v1534, 0.0
  %v1645 = vadd.f32 %v1643, %v1644
  %v1646 = vsel %vm1287, %v1535, 0.0
  %v1647 = vadd.f32 %v1645, %v1646
  %v1648 = vsel %vm1287, %v1536, 0.0
  %v1649 = vadd.f32 %v1647, %v1648
  %v1650 = vsel %vm1287, %v1537, 0.0
  %v1651 = vadd.f32 %v1649, %v1650
  %v1652 = vsel %vm1287, %v1538, 0.0
  %v1653 = vadd.f32 %v1651, %v1652
  %v1654 = vsel %vm1287, %v1539, 0.0
  %v1655 = vadd.f32 %v1653, %v1654
  %v1656 = vsel %vm1287, %v1540, 0.0
  %v1657 = vadd.f32 %v1655, %v1656
  %v1658 = vsel %vm1287, %v1541, 0.0
  %v1659 = vadd.f32 %v1657, %v1658
  %v1660 = vsel %vm1287, %v1542, 0.0
  %v1661 = vadd.f32 %v1659, %v1660
  %v1662 = vsel %vm1287, %v1543, 0.0
  %v1663 = vadd.f32 %v1661, %v1662
  %v1664 = vsel %vm1287, %v1544, 0.0
  %v1665 = vadd.f32 %v1663, %v1664
  %v1666 = vsel %vm1287, %v1545, 0.0
  %v1667 = vadd.f32 %v1665, %v1666
  %v1668 = vsel %vm1287, %v1546, 0.0
  %v1669 = vadd.f32 %v1667, %v1668
  %v1670 = vsel %vm1287, %v1547, 0.0
  %v1671 = vadd.f32 %v1669, %v1670
  %v1672 = vsel %vm1287, %v1548, 0.0
  %v1673 = vadd.f32 %v1671, %v1672
  %v1674 = vsel %vm1287, %v1549, 0.0
  %v1675 = vadd.f32 %v1673, %v1674
  %v1676 = vsel %vm1287, %v1550, 0.0
  %v1677 = vadd.f32 %v1675, %v1676
  %v1678 = vrot.slane %v1677, 4
  %v1679 = vadd.f32 %v1677, %v1678
  %v1680 = vrot.slane %v1679, 2
  %v1681 = vadd.f32 %v1679, %v1680
  %v1682 = vrot.slane %v1681, 1
  %v1683 = vadd.f32 %v1681, %v1682
  %1684 = vst.msk [vmem:[%s4] sm:$0x1] %vm1485, %v1683
  // Predicated region
  $region10: #{densenet_forward.14} parent=0 // pred_check
    _
  $region11: #{densenet_forward.14} parent=0 // pred_check_branch
    %1686 = sbr.rel (0) target = $region13
  $region12: #{densenet_forward.14} parent=0 // pred_region
    _
  $region13: #{densenet_forward.14} parent=0 // pred_fallthru
    _
  // Predicated region
  $region14: #{densenet_forward.14} parent=0 // pred_check
    _
  $region15: #{densenet_forward.14} parent=0 // pred_check_branch
    %1688 = sbr.rel (0) target = $region17
  $region16: #{densenet_forward.14} parent=0 // pred_region
    _
  $region17: #{densenet_forward.14} parent=0 // pred_fallthru
    _
  // Predicated region
  $region18: #{densenet_forward.14} parent=0 // pred_check
    _
  $region19: #{densenet_forward.14} parent=0 // pred_check_branch
    %1690 = sbr.rel (0) target = $region21
  $region20: #{densenet_forward.14} parent=0 // pred_region
    _
  $region21: #{densenet_forward.14} parent=0 // pred_fallthru
    _
  // Predicated region
  $region22: #{densenet_forward.14} parent=0 // pred_check
    _
  $region23: #{densenet_forward.14} parent=0 // pred_check_branch
    %1692 = sbr.rel (0) target = $region25
  $region24: #{densenet_forward.14} parent=0 // pred_region
    _
  $region25: #{densenet_forward.14} parent=0 // pred_fallthru
    _
  // Predicated region
  $region26: #{densenet_forward.14} parent=0 // pred_check
    _
  $region27: #{densenet_forward.14} parent=0 // pred_check_branch
    %1694 = sbr.rel (0) target = $region29
  $region28: #{densenet_forward.14} parent=0 // pred_region
    _
  $region29: #{densenet_forward.14} parent=0 // pred_fallthru
    _
  // Predicated region
  $region30: #{densenet_forward.14} parent=0 // pred_check
    _
  $region31: #{densenet_forward.14} parent=0 // pred_check_branch
    %1696 = sbr.rel (0) target = $region33
  $region32: #{densenet_forward.14} parent=0 // pred_region
    _
  $region33: #{densenet_forward.14} parent=0 // pred_fallthru
    _

// kernel: densenet_forward.16
$region0: #{densenet_forward.16}
  #allocation0 [shape = 'u32[]', space=smem, size = 0x4, offset = 0x4, fixed_abs, tag = 'smem constant byte address 0x4 - core index']
  #allocation1 [shape = 'u32[144,128]{1,0:T(1,128)}', space=vmem, size = 0x12000, scoped, tag = 'internal scratch']
  %s0 = inlined_call_operand.vmem [shape: f32[200,16], index: 0, kind: input, shape index: {}]
  %s1 = inlined_call_operand.vmem [shape: f32[1,1,16], index: 1, kind: output, shape index: {0}]
  %s2 = inlined_call_operand.vmem [shape: f32[1,1,16], index: 2, kind: output, shape index: {1}]
  %3 = xla_tuple %s1, %s2
  %s4 = sld [smem:[#allocation0]]
  $region22: #{densenet_forward.16} parent=0
    _
  %s6 = ssub.s32 1, %s4
  %s7 = scalar_select 0, %s6, %s4
  // Predicated region
  $region2: #{densenet_forward.16} parent=0 // pred_check
    _
  $region3: #{densenet_forward.16} parent=0 // pred_check_branch
    %9 = sbr.rel (0) target = $region5
  $region4: #{densenet_forward.16} parent=0 // pred_region
    _
  $region5: #{densenet_forward.16} parent=0 // pred_fallthru
    _
  %s10 = smul.u32 0, 200
  %v11 = vlaneseq
  %v12 = vshrl.u32 %v11, 7
  %v13 = vadd.s32 %v12, 8
  %v14 = vadd.s32 %v12, 16
  %v15 = vadd.s32 %v12, 24
  %v16 = vadd.s32 %v12, 32
  %v17 = vadd.s32 %v12, 40
  %v18 = vadd.s32 %v12, 48
  %v19 = vadd.s32 %v12, 56
  %v20 = vadd.s32 %v12, 64
  %v21 = vadd.s32 %v12, 72
  %v22 = vadd.s32 %v12, 80
  %v23 = vadd.s32 %v12, 88
  %v24 = vadd.s32 %v12, 96
  %v25 = vadd.s32 %v12, 104
  %v26 = vadd.s32 %v12, 112
  %v27 = vadd.s32 %v12, 120
  %v28 = vadd.s32 %v12, 128
  %v29 = vadd.s32 %v12, 136
  %v30 = vadd.s32 %v12, 144
  %v31 = vadd.s32 %v12, 152
  %v32 = vadd.s32 %v12, 160
  %v33 = vadd.s32 %v12, 168
  %v34 = vadd.s32 %v12, 176
  %v35 = vadd.s32 %v12, 184
  %v36 = vadd.s32 %v12, 192
  %v37 = vstv %s10
  %v38 = vadd.s32 %v37, %v12
  %v39 = vadd.s32 %v37, %v13
  %v40 = vadd.s32 %v37, %v14
  %v41 = vadd.s32 %v37, %v15
  %v42 = vadd.s32 %v37, %v16
  %v43 = vadd.s32 %v37, %v17
  %v44 = vadd.s32 %v37, %v18
  %v45 = vadd.s32 %v37, %v19
  %v46 = vadd.s32 %v37, %v20
  %v47 = vadd.s32 %v37, %v21
  %v48 = vadd.s32 %v37, %v22
  %v49 = vadd.s32 %v37, %v23
  %v50 = vadd.s32 %v37, %v24
  %v51 = vadd.s32 %v37, %v25
  %v52 = vadd.s32 %v37, %v26
  %v53 = vadd.s32 %v37, %v27
  %v54 = vadd.s32 %v37, %v28
  %v55 = vadd.s32 %v37, %v29
  %v56 = vadd.s32 %v37, %v30
  %v57 = vadd.s32 %v37, %v31
  %v58 = vadd.s32 %v37, %v32
  %v59 = vadd.s32 %v37, %v33
  %v60 = vadd.s32 %v37, %v34
  %v61 = vadd.s32 %v37, %v35
  %v62 = vadd.s32 %v37, %v36
  %vm63 = vcmp.lt.s32.totalorder %v38, 200
  %vm64 = vcmp.lt.s32.totalorder %v39, 200
  %vm65 = vcmp.lt.s32.totalorder %v40, 200
  %vm66 = vcmp.lt.s32.totalorder %v41, 200
  %vm67 = vcmp.lt.s32.totalorder %v42, 200
  %vm68 = vcmp.lt.s32.totalorder %v43, 200
  %vm69 = vcmp.lt.s32.totalorder %v44, 200
  %vm70 = vcmp.lt.s32.totalorder %v45, 200
  %vm71 = vcmp.lt.s32.totalorder %v46, 200
  %vm72 = vcmp.lt.s32.totalorder %v47, 200
  %vm73 = vcmp.lt.s32.totalorder %v48, 200
  %vm74 = vcmp.lt.s32.totalorder %v49, 200
  %vm75 = vcmp.lt.s32.totalorder %v50, 200
  %vm76 = vcmp.lt.s32.totalorder %v51, 200
  %vm77 = vcmp.lt.s32.totalorder %v52, 200
  %vm78 = vcmp.lt.s32.totalorder %v53, 200
  %vm79 = vcmp.lt.s32.totalorder %v54, 200
  %vm80 = vcmp.lt.s32.totalorder %v55, 200
  %vm81 = vcmp.lt.s32.totalorder %v56, 200
  %vm82 = vcmp.lt.s32.totalorder %v57, 200
  %vm83 = vcmp.lt.s32.totalorder %v58, 200
  %vm84 = vcmp.lt.s32.totalorder %v59, 200
  %vm85 = vcmp.lt.s32.totalorder %v60, 200
  %vm86 = vcmp.lt.s32.totalorder %v61, 200
  %vm87 = vcmp.lt.s32.totalorder %v62, 200
  %v88 = vld [vmem:[%s0] sm:$0xff]
  %v89 = vld [vmem:[%s0 + $0x8] sm:$0xff]
  %v90 = vld [vmem:[%s0 + $0x10] sm:$0xff]
  %v91 = vld [vmem:[%s0 + $0x18] sm:$0xff]
  %v92 = vld [vmem:[%s0 + $0x20] sm:$0xff]
  %v93 = vld [vmem:[%s0 + $0x28] sm:$0xff]
  %v94 = vld [vmem:[%s0 + $0x30] sm:$0xff]
  %v95 = vld [vmem:[%s0 + $0x38] sm:$0xff]
  %v96 = vld [vmem:[%s0 + $0x40] sm:$0xff]
  %v97 = vld [vmem:[%s0 + $0x48] sm:$0xff]
  %v98 = vld [vmem:[%s0 + $0x50] sm:$0xff]
  %v99 = vld [vmem:[%s0 + $0x58] sm:$0xff]
  %v100 = vld [vmem:[%s0 + $0x60] sm:$0xff]
  %v101 = vld [vmem:[%s0 + $0x68] sm:$0xff]
  %v102 = vld [vmem:[%s0 + $0x70] sm:$0xff]
  %v103 = vld [vmem:[%s0 + $0x78] sm:$0xff]
  %v104 = vld [vmem:[%s0 + $0x80] sm:$0xff]
  %v105 = vld [vmem:[%s0 + $0x88] sm:$0xff]
  %v106 = vld [vmem:[%s0 + $0x90] sm:$0xff]
  %v107 = vld [vmem:[%s0 + $0x98] sm:$0xff]
  %v108 = vld [vmem:[%s0 + $0xa0] sm:$0xff]
  %v109 = vld [vmem:[%s0 + $0xa8] sm:$0xff]
  %v110 = vld [vmem:[%s0 + $0xb0] sm:$0xff]
  %v111 = vld [vmem:[%s0 + $0xb8] sm:$0xff]
  %v112 = vld [vmem:[%s0 + $0xc0] sm:$0xff]
  %v113 = vsel %vm63, 1, 0
  %v114 = vsel %vm64, 1, 0
  %v115 = vsel %vm65, 1, 0
  %v116 = vsel %vm66, 1, 0
  %v117 = vsel %vm67, 1, 0
  %v118 = vsel %vm68, 1, 0
  %v119 = vsel %vm69, 1, 0
  %v120 = vsel %vm70, 1, 0
  %v121 = vsel %vm71, 1, 0
  %v122 = vsel %vm72, 1, 0
  %v123 = vsel %vm73, 1, 0
  %v124 = vsel %vm74, 1, 0
  %v125 = vsel %vm75, 1, 0
  %v126 = vsel %vm76, 1, 0
  %v127 = vsel %vm77, 1, 0
  %v128 = vsel %vm78, 1, 0
  %v129 = vsel %vm79, 1, 0
  %v130 = vsel %vm80, 1, 0
  %v131 = vsel %vm81, 1, 0
  %v132 = vsel %vm82, 1, 0
  %v133 = vsel %vm83, 1, 0
  %v134 = vsel %vm84, 1, 0
  %v135 = vsel %vm85, 1, 0
  %v136 = vsel %vm86, 1, 0
  %v137 = vsel %vm87, 1, 0
  %vm138 = vcmp.eq.s32.totalorder %v113, 1
  %vm139 = vcmp.eq.s32.totalorder %v114, 1
  %vm140 = vcmp.eq.s32.totalorder %v115, 1
  %vm141 = vcmp.eq.s32.totalorder %v116, 1
  %vm142 = vcmp.eq.s32.totalorder %v117, 1
  %vm143 = vcmp.eq.s32.totalorder %v118, 1
  %vm144 = vcmp.eq.s32.totalorder %v119, 1
  %vm145 = vcmp.eq.s32.totalorder %v120, 1
  %vm146 = vcmp.eq.s32.totalorder %v121, 1
  %vm147 = vcmp.eq.s32.totalorder %v122, 1
  %vm148 = vcmp.eq.s32.totalorder %v123, 1
  %vm149 = vcmp.eq.s32.totalorder %v124, 1
  %vm150 = vcmp.eq.s32.totalorder %v125, 1
  %vm151 = vcmp.eq.s32.totalorder %v126, 1
  %vm152 = vcmp.eq.s32.totalorder %v127, 1
  %vm153 = vcmp.eq.s32.totalorder %v128, 1
  %vm154 = vcmp.eq.s32.totalorder %v129, 1
  %vm155 = vcmp.eq.s32.totalorder %v130, 1
  %vm156 = vcmp.eq.s32.totalorder %v131, 1
  %vm157 = vcmp.eq.s32.totalorder %v132, 1
  %vm158 = vcmp.eq.s32.totalorder %v133, 1
  %vm159 = vcmp.eq.s32.totalorder %v134, 1
  %vm160 = vcmp.eq.s32.totalorder %v135, 1
  %vm161 = vcmp.eq.s32.totalorder %v136, 1
  %vm162 = vcmp.eq.s32.totalorder %v137, 1
  %v163 = vsel %vm138, %v88, 0.0
  %v164 = vsel %vm139, %v89, 0.0
  %v165 = vsel %vm140, %v90, 0.0
  %v166 = vsel %vm141, %v91, 0.0
  %v167 = vsel %vm142, %v92, 0.0
  %v168 = vsel %vm143, %v93, 0.0
  %v169 = vsel %vm144, %v94, 0.0
  %v170 = vsel %vm145, %v95, 0.0
  %v171 = vsel %vm146, %v96, 0.0
  %v172 = vsel %vm147, %v97, 0.0
  %v173 = vsel %vm148, %v98, 0.0
  %v174 = vsel %vm149, %v99, 0.0
  %v175 = vsel %vm150, %v100, 0.0
  %v176 = vsel %vm151, %v101, 0.0
  %v177 = vsel %vm152, %v102, 0.0
  %v178 = vsel %vm153, %v103, 0.0
  %v179 = vsel %vm154, %v104, 0.0
  %v180 = vsel %vm155, %v105, 0.0
  %v181 = vsel %vm156, %v106, 0.0
  %v182 = vsel %vm157, %v107, 0.0
  %v183 = vsel %vm158, %v108, 0.0
  %v184 = vsel %vm159, %v109, 0.0
  %v185 = vsel %vm160, %v110, 0.0
  %v186 = vsel %vm161, %v111, 0.0
  %v187 = vsel %vm162, %v112, 0.0
  %vm188 = vcmask 130048
  %v189 = vsel %vm188, %v163, 0.0
  %v190 = vsel %vm188, %v164, 0.0
  %v191 = vadd.f32 %v189, %v190
  %v192 = vsel %vm188, %v165, 0.0
  %v193 = vadd.f32 %v191, %v192
  %v194 = vsel %vm188, %v166, 0.0
  %v195 = vadd.f32 %v193, %v194
  %v196 = vsel %vm188, %v167, 0.0
  %v197 = vadd.f32 %v195, %v196
  %v198 = vsel %vm188, %v168, 0.0
  %v199 = vadd.f32 %v197, %v198
  %v200 = vsel %vm188, %v169, 0.0
  %v201 = vadd.f32 %v199, %v200
  %v202 = vsel %vm188, %v170, 0.0
  %v203 = vadd.f32 %v201, %v202
  %v204 = vsel %vm188, %v171, 0.0
  %v205 = vadd.f32 %v203, %v204
  %v206 = vsel %vm188, %v172, 0.0
  %v207 = vadd.f32 %v205, %v206
  %v208 = vsel %vm188, %v173, 0.0
  %v209 = vadd.f32 %v207, %v208
  %v210 = vsel %vm188, %v174, 0.0
  %v211 = vadd.f32 %v209, %v210
  %v212 = vsel %vm188, %v175, 0.0
  %v213 = vadd.f32 %v211, %v212
  %v214 = vsel %vm188, %v176, 0.0
  %v215 = vadd.f32 %v213, %v214
  %v216 = vsel %vm188, %v177, 0.0
  %v217 = vadd.f32 %v215, %v216
  %v218 = vsel %vm188, %v178, 0.0
  %v219 = vadd.f32 %v217, %v218
  %v220 = vsel %vm188, %v179, 0.0
  %v221 = vadd.f32 %v219, %v220
  %v222 = vsel %vm188, %v180, 0.0
  %v223 = vadd.f32 %v221, %v222
  %v224 = vsel %vm188, %v181, 0.0
  %v225 = vadd.f32 %v223, %v224
  %v226 = vsel %vm188, %v182, 0.0
  %v227 = vadd.f32 %v225, %v226
  %v228 = vsel %vm188, %v183, 0.0
  %v229 = vadd.f32 %v227, %v228
  %v230 = vsel %vm188, %v184, 0.0
  %v231 = vadd.f32 %v229, %v230
  %v232 = vsel %vm188, %v185, 0.0
  %v233 = vadd.f32 %v231, %v232
  %v234 = vsel %vm188, %v186, 0.0
  %v235 = vadd.f32 %v233, %v234
  %v236 = vsel %vm188, %v187, 0.0
  %v237 = vadd.f32 %v235, %v236
  %v238 = vrot.slane %v237, 4
  %v239 = vadd.f32 %v237, %v238
  %v240 = vrot.slane %v239, 2
  %v241 = vadd.f32 %v239, %v240
  %v242 = vrot.slane %v241, 1
  %v243 = vadd.f32 %v241, %v242
  %vm244 = vcmask 122880
  %245 = vst.msk [vmem:[%s1] sm:$0x1] %vm244, %v243
  %v246 = vmul.f32 %v163, %v163
  %v247 = vmul.f32 %v164, %v164
  %v248 = vmul.f32 %v165, %v165
  %v249 = vmul.f32 %v166, %v166
  %v250 = vmul.f32 %v167, %v167
  %v251 = vmul.f32 %v168, %v168
  %v252 = vmul.f32 %v169, %v169
  %v253 = vmul.f32 %v170, %v170
  %v254 = vmul.f32 %v171, %v171
  %v255 = vmul.f32 %v172, %v172
  %v256 = vmul.f32 %v173, %v173
  %v257 = vmul.f32 %v174, %v174
  %v258 = vmul.f32 %v175, %v175
  %v259 = vmul.f32 %v176, %v176
  %v260 = vmul.f32 %v177, %v177
  %v261 = vmul.f32 %v178, %v178
  %v262 = vmul.f32 %v179, %v179
  %v263 = vmul.f32 %v180, %v180
  %v264 = vmul.f32 %v181, %v181
  %v265 = vmul.f32 %v182, %v182
  %v266 = vmul.f32 %v183, %v183
  %v267 = vmul.f32 %v184, %v184
  %v268 = vmul.f32 %v185, %v185
  %v269 = vmul.f32 %v186, %v186
  %v270 = vmul.f32 %v187, %v187
  %v271 = vsel %vm188, %v246, 0.0
  %v272 = vsel %vm188, %v247, 0.0
  %v273 = vadd.f32 %v271, %v272
  %v274 = vsel %vm188, %v248, 0.0
  %v275 = vadd.f32 %v273, %v274
  %v276 = vsel %vm188, %v249, 0.0
  %v277 = vadd.f32 %v275, %v276
  %v278 = vsel %vm188, %v250, 0.0
  %v279 = vadd.f32 %v277, %v278
  %v280 = vsel %vm188, %v251, 0.0
  %v281 = vadd.f32 %v279, %v280
  %v282 = vsel %vm188, %v252, 0.0
  %v283 = vadd.f32 %v281, %v282
  %v284 = vsel %vm188, %v253, 0.0
  %v285 = vadd.f32 %v283, %v284
  %v286 = vsel %vm188, %v254, 0.0
  %v287 = vadd.f32 %v285, %v286
  %v288 = vsel %vm188, %v255, 0.0
  %v289 = vadd.f32 %v287, %v288
  %v290 = vsel %vm188, %v256, 0.0
  %v291 = vadd.f32 %v289, %v290
  %v292 = vsel %vm188, %v257, 0.0
  %v293 = vadd.f32 %v291, %v292
  %v294 = vsel %vm188, %v258, 0.0
  %v295 = vadd.f32 %v293, %v294
  %v296 = vsel %vm188, %v259, 0.0
  %v297 = vadd.f32 %v295, %v296
  %v298 = vsel %vm188, %v260, 0.0
  %v299 = vadd.f32 %v297, %v298
  %v300 = vsel %vm188, %v261, 0.0
  %v301 = vadd.f32 %v299, %v300
  %v302 = vsel %vm188, %v262, 0.0
  %v303 = vadd.f32 %v301, %v302
  %v304 = vsel %vm188, %v263, 0.0
  %v305 = vadd.f32 %v303, %v304
  %v306 = vsel %vm188, %v264, 0.0
  %v307 = vadd.f32 %v305, %v306
  %v308 = vsel %vm188, %v265, 0.0
  %v309 = vadd.f32 %v307, %v308
  %v310 = vsel %vm188, %v266, 0.0
  %v311 = vadd.f32 %v309, %v310
  %v312 = vsel %vm188, %v267, 0.0
  %v313 = vadd.f32 %v311, %v312
  %v314 = vsel %vm188, %v268, 0.0
  %v315 = vadd.f32 %v313, %v314
  %v316 = vsel %vm188, %v269, 0.0
  %v317 = vadd.f32 %v315, %v316
  %v318 = vsel %vm188, %v270, 0.0
  %v319 = vadd.f32 %v317, %v318
  %v320 = vrot.slane %v319, 4
  %v321 = vadd.f32 %v319, %v320
  %v322 = vrot.slane %v321, 2
  %v323 = vadd.f32 %v321, %v322
  %v324 = vrot.slane %v323, 1
  %v325 = vadd.f32 %v323, %v324
  %326 = vst.msk [vmem:[%s2] sm:$0x1] %vm244, %v325
  // Predicated region
  $region6: #{densenet_forward.16} parent=0 // pred_check
    _
  $region7: #{densenet_forward.16} parent=0 // pred_check_branch
    %328 = sbr.rel (0) target = $region9
  $region8: #{densenet_forward.16} parent=0 // pred_region
    _
  $region9: #{densenet_forward.16} parent=0 // pred_fallthru
    _
  // Predicated region
  $region10: #{densenet_forward.16} parent=0 // pred_check
    _
  $region11: #{densenet_forward.16} parent=0 // pred_check_branch
    %330 = sbr.rel (0) target = $region13
  $region12: #{densenet_forward.16} parent=0 // pred_region
    _
  $region13: #{densenet_forward.16} parent=0 // pred_fallthru
    _
  // Predicated region
  $region14: #{densenet_forward.16} parent=0 // pred_check
    _
  $region15: #{densenet_forward.16} parent=0 // pred_check_branch
    %332 = sbr.rel (0) target = $region17
  $region16: #{densenet_forward.16} parent=0 // pred_region
    _
  $region17: #{densenet_forward.16} parent=0 // pred_fallthru
    _
  // Predicated region
  $region18: #{densenet_forward.16} parent=0 // pred_check
    _
  $region19: #{densenet_forward.16} parent=0 // pred_check_branch
    %334 = sbr.rel (0) target = $region21
  $region20: #{densenet_forward.16} parent=0 // pred_region
    _
  $region21: #{densenet_forward.16} parent=0 // pred_fallthru
    _

// kernel: densenet_forward.17
$region0: #{densenet_forward.17}
  #allocation0 [shape = 'u32[]', space=smem, size = 0x4, offset = 0x4, fixed_abs, tag = 'smem constant byte address 0x4 - core index']
  #allocation1 [shape = 'u32[144,128]{1,0:T(1,128)}', space=vmem, size = 0x12000, scoped, tag = 'internal scratch']
  %s0 = inlined_call_operand.vmem [shape: f32[200,16], index: 0, kind: input, shape index: {}]
  %s1 = inlined_call_operand.vmem [shape: f32[200,1], index: 1, kind: input, shape index: {}]
  %s2 = inlined_call_operand.vmem [shape: f32[1,16], index: 2, kind: input, shape index: {}]
  %s3 = inlined_call_operand.vmem [shape: f32[1,16], index: 3, kind: input, shape index: {}]
  %s4 = inlined_call_operand.vmem [shape: bf16[16,32], index: 4, kind: input, shape index: {}]
  %s5 = inlined_call_operand.vmem [shape: f32[200,32], index: 5, kind: output, shape index: {0}]
  %s6 = inlined_call_operand.vmem [shape: f32[1,1,32], index: 6, kind: output, shape index: {1}]
  %s7 = inlined_call_operand.vmem [shape: f32[1,1,32], index: 7, kind: output, shape index: {2}]
  %8 = xla_tuple %s5, %s6, %s7
  %s9 = sld [smem:[#allocation0]]
  $region46: #{densenet_forward.17} parent=0
    _
  %s11 = ssub.s32 1, %s9
  %s12 = scalar_select 0, %s11, %s9
  // Predicated region
  $region2: #{densenet_forward.17} parent=0 // pred_check
    _
  $region3: #{densenet_forward.17} parent=0 // pred_check_branch
    %14 = sbr.rel (0) target = $region5
  $region4: #{densenet_forward.17} parent=0 // pred_region
    _
  $region5: #{densenet_forward.17} parent=0 // pred_fallthru
    _
  // Predicated region
  $region6: #{densenet_forward.17} parent=0 // pred_check
    _
  $region7: #{densenet_forward.17} parent=0 // pred_check_branch
    %16 = sbr.rel (0) target = $region9
  $region8: #{densenet_forward.17} parent=0 // pred_region
    _
  $region9: #{densenet_forward.17} parent=0 // pred_fallthru
    _
  // Predicated region
  $region10: #{densenet_forward.17} parent=0 // pred_check
    _
  $region11: #{densenet_forward.17} parent=0 // pred_check_branch
    %18 = sbr.rel (0) target = $region13
  $region12: #{densenet_forward.17} parent=0 // pred_region
    _
  $region13: #{densenet_forward.17} parent=0 // pred_fallthru
    _
  // Predicated region
  $region14: #{densenet_forward.17} parent=0 // pred_check
    _
  $region15: #{densenet_forward.17} parent=0 // pred_check_branch
    %20 = sbr.rel (0) target = $region17
  $region16: #{densenet_forward.17} parent=0 // pred_region
    _
  $region17: #{densenet_forward.17} parent=0 // pred_fallthru
    _
  // Predicated region
  $region18: #{densenet_forward.17} parent=0 // pred_check
    _
  $region19: #{densenet_forward.17} parent=0 // pred_check_branch
    %22 = sbr.rel (0) target = $region21
  $region20: #{densenet_forward.17} parent=0 // pred_region
    _
  $region21: #{densenet_forward.17} parent=0 // pred_fallthru
    _
  %s24 = smul.u32 0, 200
  %v25 = vlaneseq
  %v26 = vshrl.u32 %v25, 7
  %v27 = vadd.s32 %v26, 8
  %v28 = vadd.s32 %v26, 16
  %v29 = vadd.s32 %v26, 24
  %v30 = vadd.s32 %v26, 32
  %v31 = vadd.s32 %v26, 40
  %v32 = vadd.s32 %v26, 48
  %v33 = vadd.s32 %v26, 56
  %v34 = vadd.s32 %v26, 64
  %v35 = vadd.s32 %v26, 72
  %v36 = vadd.s32 %v26, 80
  %v37 = vadd.s32 %v26, 88
  %v38 = vadd.s32 %v26, 96
  %v39 = vadd.s32 %v26, 104
  %v40 = vadd.s32 %v26, 112
  %v41 = vadd.s32 %v26, 120
  %v42 = vadd.s32 %v26, 128
  %v43 = vadd.s32 %v26, 136
  %v44 = vadd.s32 %v26, 144
  %v45 = vadd.s32 %v26, 152
  %v46 = vadd.s32 %v26, 160
  %v47 = vadd.s32 %v26, 168
  %v48 = vadd.s32 %v26, 176
  %v49 = vadd.s32 %v26, 184
  %v50 = vadd.s32 %v26, 192
  %v51 = vstv %s24
  %v52 = vadd.s32 %v51, %v26
  %v53 = vadd.s32 %v51, %v27
  %v54 = vadd.s32 %v51, %v28
  %v55 = vadd.s32 %v51, %v29
  %v56 = vadd.s32 %v51, %v30
  %v57 = vadd.s32 %v51, %v31
  %v58 = vadd.s32 %v51, %v32
  %v59 = vadd.s32 %v51, %v33
  %v60 = vadd.s32 %v51, %v34
  %v61 = vadd.s32 %v51, %v35
  %v62 = vadd.s32 %v51, %v36
  %v63 = vadd.s32 %v51, %v37
  %v64 = vadd.s32 %v51, %v38
  %v65 = vadd.s32 %v51, %v39
  %v66 = vadd.s32 %v51, %v40
  %v67 = vadd.s32 %v51, %v41
  %v68 = vadd.s32 %v51, %v42
  %v69 = vadd.s32 %v51, %v43
  %v70 = vadd.s32 %v51, %v44
  %v71 = vadd.s32 %v51, %v45
  %v72 = vadd.s32 %v51, %v46
  %v73 = vadd.s32 %v51, %v47
  %v74 = vadd.s32 %v51, %v48
  %v75 = vadd.s32 %v51, %v49
  %v76 = vadd.s32 %v51, %v50
  %vm77 = vcmp.lt.s32.totalorder %v52, 200
  %vm78 = vcmp.lt.s32.totalorder %v53, 200
  %vm79 = vcmp.lt.s32.totalorder %v54, 200
  %vm80 = vcmp.lt.s32.totalorder %v55, 200
  %vm81 = vcmp.lt.s32.totalorder %v56, 200
  %vm82 = vcmp.lt.s32.totalorder %v57, 200
  %vm83 = vcmp.lt.s32.totalorder %v58, 200
  %vm84 = vcmp.lt.s32.totalorder %v59, 200
  %vm85 = vcmp.lt.s32.totalorder %v60, 200
  %vm86 = vcmp.lt.s32.totalorder %v61, 200
  %vm87 = vcmp.lt.s32.totalorder %v62, 200
  %vm88 = vcmp.lt.s32.totalorder %v63, 200
  %vm89 = vcmp.lt.s32.totalorder %v64, 200
  %vm90 = vcmp.lt.s32.totalorder %v65, 200
  %vm91 = vcmp.lt.s32.totalorder %v66, 200
  %vm92 = vcmp.lt.s32.totalorder %v67, 200
  %vm93 = vcmp.lt.s32.totalorder %v68, 200
  %vm94 = vcmp.lt.s32.totalorder %v69, 200
  %vm95 = vcmp.lt.s32.totalorder %v70, 200
  %vm96 = vcmp.lt.s32.totalorder %v71, 200
  %vm97 = vcmp.lt.s32.totalorder %v72, 200
  %vm98 = vcmp.lt.s32.totalorder %v73, 200
  %vm99 = vcmp.lt.s32.totalorder %v74, 200
  %vm100 = vcmp.lt.s32.totalorder %v75, 200
  %vm101 = vcmp.lt.s32.totalorder %v76, 200
  %v102 = vld [vmem:[%s0] sm:$0xff]
  %v103 = vld [vmem:[%s0 + $0x8] sm:$0xff]
  %v104 = vld [vmem:[%s0 + $0x10] sm:$0xff]
  %v105 = vld [vmem:[%s0 + $0x18] sm:$0xff]
  %v106 = vld [vmem:[%s0 + $0x20] sm:$0xff]
  %v107 = vld [vmem:[%s0 + $0x28] sm:$0xff]
  %v108 = vld [vmem:[%s0 + $0x30] sm:$0xff]
  %v109 = vld [vmem:[%s0 + $0x38] sm:$0xff]
  %v110 = vld [vmem:[%s0 + $0x40] sm:$0xff]
  %v111 = vld [vmem:[%s0 + $0x48] sm:$0xff]
  %v112 = vld [vmem:[%s0 + $0x50] sm:$0xff]
  %v113 = vld [vmem:[%s0 + $0x58] sm:$0xff]
  %v114 = vld [vmem:[%s0 + $0x60] sm:$0xff]
  %v115 = vld [vmem:[%s0 + $0x68] sm:$0xff]
  %v116 = vld [vmem:[%s0 + $0x70] sm:$0xff]
  %v117 = vld [vmem:[%s0 + $0x78] sm:$0xff]
  %v118 = vld [vmem:[%s0 + $0x80] sm:$0xff]
  %v119 = vld [vmem:[%s0 + $0x88] sm:$0xff]
  %v120 = vld [vmem:[%s0 + $0x90] sm:$0xff]
  %v121 = vld [vmem:[%s0 + $0x98] sm:$0xff]
  %v122 = vld [vmem:[%s0 + $0xa0] sm:$0xff]
  %v123 = vld [vmem:[%s0 + $0xa8] sm:$0xff]
  %v124 = vld [vmem:[%s0 + $0xb0] sm:$0xff]
  %v125 = vld [vmem:[%s0 + $0xb8] sm:$0xff]
  %v126 = vld [vmem:[%s0 + $0xc0] sm:$0xff]
  %v127 = vld [vmem:[%s2] sm:$0x1]
  %v129 = vlaneseq
  %v130 = vshrl.u32 %v129, 7
  %v131 = vsub.s32 0, %v130
  %v132 = vrot.slane %v127, %v131
  %v134 = vmul.f32 %v102, %v132
  %v135 = vmul.f32 %v103, %v132
  %v136 = vmul.f32 %v104, %v132
  %v137 = vmul.f32 %v105, %v132
  %v138 = vmul.f32 %v106, %v132
  %v139 = vmul.f32 %v107, %v132
  %v140 = vmul.f32 %v108, %v132
  %v141 = vmul.f32 %v109, %v132
  %v142 = vmul.f32 %v110, %v132
  %v143 = vmul.f32 %v111, %v132
  %v144 = vmul.f32 %v112, %v132
  %v145 = vmul.f32 %v113, %v132
  %v146 = vmul.f32 %v114, %v132
  %v147 = vmul.f32 %v115, %v132
  %v148 = vmul.f32 %v116, %v132
  %v149 = vmul.f32 %v117, %v132
  %v150 = vmul.f32 %v118, %v132
  %v151 = vmul.f32 %v119, %v132
  %v152 = vmul.f32 %v120, %v132
  %v153 = vmul.f32 %v121, %v132
  %v154 = vmul.f32 %v122, %v132
  %v155 = vmul.f32 %v123, %v132
  %v156 = vmul.f32 %v124, %v132
  %v157 = vmul.f32 %v125, %v132
  %v158 = vmul.f32 %v126, %v132
  %v159 = vld [vmem:[%s3] sm:$0x1]
  %v161 = vlaneseq
  %v162 = vshrl.u32 %v161, 7
  %v163 = vsub.s32 0, %v162
  %v164 = vrot.slane %v159, %v163
  %v166 = vadd.f32 %v134, %v164
  %v167 = vadd.f32 %v135, %v164
  %v168 = vadd.f32 %v136, %v164
  %v169 = vadd.f32 %v137, %v164
  %v170 = vadd.f32 %v138, %v164
  %v171 = vadd.f32 %v139, %v164
  %v172 = vadd.f32 %v140, %v164
  %v173 = vadd.f32 %v141, %v164
  %v174 = vadd.f32 %v142, %v164
  %v175 = vadd.f32 %v143, %v164
  %v176 = vadd.f32 %v144, %v164
  %v177 = vadd.f32 %v145, %v164
  %v178 = vadd.f32 %v146, %v164
  %v179 = vadd.f32 %v147, %v164
  %v180 = vadd.f32 %v148, %v164
  %v181 = vadd.f32 %v149, %v164
  %v182 = vadd.f32 %v150, %v164
  %v183 = vadd.f32 %v151, %v164
  %v184 = vadd.f32 %v152, %v164
  %v185 = vadd.f32 %v153, %v164
  %v186 = vadd.f32 %v154, %v164
  %v187 = vadd.f32 %v155, %v164
  %v188 = vadd.f32 %v156, %v164
  %v189 = vadd.f32 %v157, %v164
  %v190 = vadd.f32 %v158, %v164
  %v191 = vmax.f32 %v166, 0.0
  %v192 = vmax.f32 %v167, 0.0
  %v193 = vmax.f32 %v168, 0.0
  %v194 = vmax.f32 %v169, 0.0
  %v195 = vmax.f32 %v170, 0.0
  %v196 = vmax.f32 %v171, 0.0
  %v197 = vmax.f32 %v172, 0.0
  %v198 = vmax.f32 %v173, 0.0
  %v199 = vmax.f32 %v174, 0.0
  %v200 = vmax.f32 %v175, 0.0
  %v201 = vmax.f32 %v176, 0.0
  %v202 = vmax.f32 %v177, 0.0
  %v203 = vmax.f32 %v178, 0.0
  %v204 = vmax.f32 %v179, 0.0
  %v205 = vmax.f32 %v180, 0.0
  %v206 = vmax.f32 %v181, 0.0
  %v207 = vmax.f32 %v182, 0.0
  %v208 = vmax.f32 %v183, 0.0
  %v209 = vmax.f32 %v184, 0.0
  %v210 = vmax.f32 %v185, 0.0
  %v211 = vmax.f32 %v186, 0.0
  %v212 = vmax.f32 %v187, 0.0
  %v213 = vmax.f32 %v188, 0.0
  %v214 = vmax.f32 %v189, 0.0
  %v215 = vmax.f32 %v190, 0.0
  %v216 = vld [vmem:[%s1] sm:$0xff]
  %v217 = vld [vmem:[%s1 + $0x8] sm:$0xff]
  %v218 = vld [vmem:[%s1 + $0x10] sm:$0xff]
  %v219 = vld [vmem:[%s1 + $0x18] sm:$0xff]
  %v220 = vld [vmem:[%s1 + $0x20] sm:$0xff]
  %v221 = vld [vmem:[%s1 + $0x28] sm:$0xff]
  %v222 = vld [vmem:[%s1 + $0x30] sm:$0xff]
  %v223 = vld [vmem:[%s1 + $0x38] sm:$0xff]
  %v224 = vld [vmem:[%s1 + $0x40] sm:$0xff]
  %v225 = vld [vmem:[%s1 + $0x48] sm:$0xff]
  %v226 = vld [vmem:[%s1 + $0x50] sm:$0xff]
  %v227 = vld [vmem:[%s1 + $0x58] sm:$0xff]
  %v228 = vld [vmem:[%s1 + $0x60] sm:$0xff]
  %v229 = vld [vmem:[%s1 + $0x68] sm:$0xff]
  %v230 = vld [vmem:[%s1 + $0x70] sm:$0xff]
  %v231 = vld [vmem:[%s1 + $0x78] sm:$0xff]
  %v232 = vld [vmem:[%s1 + $0x80] sm:$0xff]
  %v233 = vld [vmem:[%s1 + $0x88] sm:$0xff]
  %v234 = vld [vmem:[%s1 + $0x90] sm:$0xff]
  %v235 = vld [vmem:[%s1 + $0x98] sm:$0xff]
  %v236 = vld [vmem:[%s1 + $0xa0] sm:$0xff]
  %v237 = vld [vmem:[%s1 + $0xa8] sm:$0xff]
  %v238 = vld [vmem:[%s1 + $0xb0] sm:$0xff]
  %v239 = vld [vmem:[%s1 + $0xb8] sm:$0xff]
  %v240 = vld [vmem:[%s1 + $0xc0] sm:$0xff]
  %242 = vset.pattern.permute.xlu0 0
  %243 = vperm.xlu0 %242, %v216
  %v244 = vpop.permute.xlu0 %243
  %247 = vset.pattern.permute.xlu0 0
  %248 = vperm.xlu0 %247, %v217
  %v249 = vpop.permute.xlu0 %248
  %252 = vset.pattern.permute.xlu0 0
  %253 = vperm.xlu0 %252, %v218
  %v254 = vpop.permute.xlu0 %253
  %257 = vset.pattern.permute.xlu0 0
  %258 = vperm.xlu0 %257, %v219
  %v259 = vpop.permute.xlu0 %258
  %262 = vset.pattern.permute.xlu0 0
  %263 = vperm.xlu0 %262, %v220
  %v264 = vpop.permute.xlu0 %263
  %267 = vset.pattern.permute.xlu0 0
  %268 = vperm.xlu0 %267, %v221
  %v269 = vpop.permute.xlu0 %268
  %272 = vset.pattern.permute.xlu0 0
  %273 = vperm.xlu0 %272, %v222
  %v274 = vpop.permute.xlu0 %273
  %277 = vset.pattern.permute.xlu0 0
  %278 = vperm.xlu0 %277, %v223
  %v279 = vpop.permute.xlu0 %278
  %282 = vset.pattern.permute.xlu0 0
  %283 = vperm.xlu0 %282, %v224
  %v284 = vpop.permute.xlu0 %283
  %287 = vset.pattern.permute.xlu0 0
  %288 = vperm.xlu0 %287, %v225
  %v289 = vpop.permute.xlu0 %288
  %292 = vset.pattern.permute.xlu0 0
  %293 = vperm.xlu0 %292, %v226
  %v294 = vpop.permute.xlu0 %293
  %297 = vset.pattern.permute.xlu0 0
  %298 = vperm.xlu0 %297, %v227
  %v299 = vpop.permute.xlu0 %298
  %302 = vset.pattern.permute.xlu0 0
  %303 = vperm.xlu0 %302, %v228
  %v304 = vpop.permute.xlu0 %303
  %307 = vset.pattern.permute.xlu0 0
  %308 = vperm.xlu0 %307, %v229
  %v309 = vpop.permute.xlu0 %308
  %312 = vset.pattern.permute.xlu0 0
  %313 = vperm.xlu0 %312, %v230
  %v314 = vpop.permute.xlu0 %313
  %317 = vset.pattern.permute.xlu0 0
  %318 = vperm.xlu0 %317, %v231
  %v319 = vpop.permute.xlu0 %318
  %322 = vset.pattern.permute.xlu0 0
  %323 = vperm.xlu0 %322, %v232
  %v324 = vpop.permute.xlu0 %323
  %327 = vset.pattern.permute.xlu0 0
  %328 = vperm.xlu0 %327, %v233
  %v329 = vpop.permute.xlu0 %328
  %332 = vset.pattern.permute.xlu0 0
  %333 = vperm.xlu0 %332, %v234
  %v334 = vpop.permute.xlu0 %333
  %337 = vset.pattern.permute.xlu0 0
  %338 = vperm.xlu0 %337, %v235
  %v339 = vpop.permute.xlu0 %338
  %342 = vset.pattern.permute.xlu0 0
  %343 = vperm.xlu0 %342, %v236
  %v344 = vpop.permute.xlu0 %343
  %347 = vset.pattern.permute.xlu0 0
  %348 = vperm.xlu0 %347, %v237
  %v349 = vpop.permute.xlu0 %348
  %352 = vset.pattern.permute.xlu0 0
  %353 = vperm.xlu0 %352, %v238
  %v354 = vpop.permute.xlu0 %353
  %357 = vset.pattern.permute.xlu0 0
  %358 = vperm.xlu0 %357, %v239
  %v359 = vpop.permute.xlu0 %358
  %362 = vset.pattern.permute.xlu0 0
  %363 = vperm.xlu0 %362, %v240
  %v364 = vpop.permute.xlu0 %363
  %v366 = vmul.f32 %v191, %v244
  %v367 = vmul.f32 %v192, %v249
  %v368 = vmul.f32 %v193, %v254
  %v369 = vmul.f32 %v194, %v259
  %v370 = vmul.f32 %v195, %v264
  %v371 = vmul.f32 %v196, %v269
  %v372 = vmul.f32 %v197, %v274
  %v373 = vmul.f32 %v198, %v279
  %v374 = vmul.f32 %v199, %v284
  %v375 = vmul.f32 %v200, %v289
  %v376 = vmul.f32 %v201, %v294
  %v377 = vmul.f32 %v202, %v299
  %v378 = vmul.f32 %v203, %v304
  %v379 = vmul.f32 %v204, %v309
  %v380 = vmul.f32 %v205, %v314
  %v381 = vmul.f32 %v206, %v319
  %v382 = vmul.f32 %v207, %v324
  %v383 = vmul.f32 %v208, %v329
  %v384 = vmul.f32 %v209, %v334
  %v385 = vmul.f32 %v210, %v339
  %v386 = vmul.f32 %v211, %v344
  %v387 = vmul.f32 %v212, %v349
  %v388 = vmul.f32 %v213, %v354
  %v389 = vmul.f32 %v214, %v359
  %v390 = vmul.f32 %v215, %v364
  %v391 = vsel %vm77, 1, 0
  %v392 = vsel %vm78, 1, 0
  %v393 = vsel %vm79, 1, 0
  %v394 = vsel %vm80, 1, 0
  %v395 = vsel %vm81, 1, 0
  %v396 = vsel %vm82, 1, 0
  %v397 = vsel %vm83, 1, 0
  %v398 = vsel %vm84, 1, 0
  %v399 = vsel %vm85, 1, 0
  %v400 = vsel %vm86, 1, 0
  %v401 = vsel %vm87, 1, 0
  %v402 = vsel %vm88, 1, 0
  %v403 = vsel %vm89, 1, 0
  %v404 = vsel %vm90, 1, 0
  %v405 = vsel %vm91, 1, 0
  %v406 = vsel %vm92, 1, 0
  %v407 = vsel %vm93, 1, 0
  %v408 = vsel %vm94, 1, 0
  %v409 = vsel %vm95, 1, 0
  %v410 = vsel %vm96, 1, 0
  %v411 = vsel %vm97, 1, 0
  %v412 = vsel %vm98, 1, 0
  %v413 = vsel %vm99, 1, 0
  %v414 = vsel %vm100, 1, 0
  %v415 = vsel %vm101, 1, 0
  %vm416 = vcmp.eq.s32.totalorder %v391, 1
  %vm417 = vcmp.eq.s32.totalorder %v392, 1
  %vm418 = vcmp.eq.s32.totalorder %v393, 1
  %vm419 = vcmp.eq.s32.totalorder %v394, 1
  %vm420 = vcmp.eq.s32.totalorder %v395, 1
  %vm421 = vcmp.eq.s32.totalorder %v396, 1
  %vm422 = vcmp.eq.s32.totalorder %v397, 1
  %vm423 = vcmp.eq.s32.totalorder %v398, 1
  %vm424 = vcmp.eq.s32.totalorder %v399, 1
  %vm425 = vcmp.eq.s32.totalorder %v400, 1
  %vm426 = vcmp.eq.s32.totalorder %v401, 1
  %vm427 = vcmp.eq.s32.totalorder %v402, 1
  %vm428 = vcmp.eq.s32.totalorder %v403, 1
  %vm429 = vcmp.eq.s32.totalorder %v404, 1
  %vm430 = vcmp.eq.s32.totalorder %v405, 1
  %vm431 = vcmp.eq.s32.totalorder %v406, 1
  %vm432 = vcmp.eq.s32.totalorder %v407, 1
  %vm433 = vcmp.eq.s32.totalorder %v408, 1
  %vm434 = vcmp.eq.s32.totalorder %v409, 1
  %vm435 = vcmp.eq.s32.totalorder %v410, 1
  %vm436 = vcmp.eq.s32.totalorder %v411, 1
  %vm437 = vcmp.eq.s32.totalorder %v412, 1
  %vm438 = vcmp.eq.s32.totalorder %v413, 1
  %vm439 = vcmp.eq.s32.totalorder %v414, 1
  %vm440 = vcmp.eq.s32.totalorder %v415, 1
  %v441 = vsel %vm416, %v366, 0.0
  %v442 = vsel %vm417, %v367, 0.0
  %v443 = vsel %vm418, %v368, 0.0
  %v444 = vsel %vm419, %v369, 0.0
  %v445 = vsel %vm420, %v370, 0.0
  %v446 = vsel %vm421, %v371, 0.0
  %v447 = vsel %vm422, %v372, 0.0
  %v448 = vsel %vm423, %v373, 0.0
  %v449 = vsel %vm424, %v374, 0.0
  %v450 = vsel %vm425, %v375, 0.0
  %v451 = vsel %vm426, %v376, 0.0
  %v452 = vsel %vm427, %v377, 0.0
  %v453 = vsel %vm428, %v378, 0.0
  %v454 = vsel %vm429, %v379, 0.0
  %v455 = vsel %vm430, %v380, 0.0
  %v456 = vsel %vm431, %v381, 0.0
  %v457 = vsel %vm432, %v382, 0.0
  %v458 = vsel %vm433, %v383, 0.0
  %v459 = vsel %vm434, %v384, 0.0
  %v460 = vsel %vm435, %v385, 0.0
  %v461 = vsel %vm436, %v386, 0.0
  %v462 = vsel %vm437, %v387, 0.0
  %v463 = vsel %vm438, %v388, 0.0
  %v464 = vsel %vm439, %v389, 0.0
  %v465 = vsel %vm440, %v390, 0.0
  %v466 = vpack.c.bf16 %v442, %v441
  %v467 = vpack.c.bf16 %v444, %v443
  %v468 = vpack.c.bf16 %v446, %v445
  %v469 = vpack.c.bf16 %v448, %v447
  %v470 = vpack.c.bf16 %v450, %v449
  %v471 = vpack.c.bf16 %v452, %v451
  %v472 = vpack.c.bf16 %v454, %v453
  %v473 = vpack.c.bf16 %v456, %v455
  %v474 = vpack.c.bf16 %v458, %v457
  %v475 = vpack.c.bf16 %v460, %v459
  %v476 = vpack.c.bf16 %v462, %v461
  %v477 = vpack.c.bf16 %v464, %v463
  %v478 = vpack.c.bf16 %v465, %v465
  %v479 = vld [vmem:[%s4] sm:$0xf]
  %v480 = vld [vmem:[%s4 + $0x4] sm:$0xf]
  %v483 = vunpack.c.l.b16 %v479
  %v484 = vunpack.c.l.b16 %v480
  %v485 = vpack.c.b16 %v484, %v483
  %vm487 = vcmask 130048
  %v489 = vsel %vm487, %v466, 0
  %v492 = vsel %vm487, %v467, 0
  %v495 = vsel %vm487, %v468, 0
  %v498 = vsel %vm487, %v469, 0
  %v501 = vsel %vm487, %v470, 0
  %v504 = vsel %vm487, %v471, 0
  %v507 = vsel %vm487, %v472, 0
  %v510 = vsel %vm487, %v473, 0
  %v513 = vsel %vm487, %v474, 0
  %v516 = vsel %vm487, %v475, 0
  %v519 = vsel %vm487, %v476, 0
  %v522 = vsel %vm487, %v477, 0
  %v525 = vsel %vm487, %v478, 0
  %527 = vmatprep.subr.bf16.mxu0 0
  %528 = vmatpush1.bf16.msra.mxu0 %v485
  %529 = vmatprep.subr.bf16.mxu0 0
  %530 = vmatpush1.bf16.msra.mxu0 0
  %531 = vmatprep.subr.bf16.mxu0 0
  %532 = vmatpush1.bf16.msra.mxu0 0
  %533 = vmatprep.subr.bf16.mxu0 0
  %534 = vmatpush1.bf16.msra.mxu0 0
  %535 = vmatprep.subr.bf16.mxu0 0
  %536 = vmatpush1.bf16.msra.mxu0 0
  %537 = vmatprep.subr.bf16.mxu0 0
  %538 = vmatpush1.bf16.msra.mxu0 0
  %539 = vmatprep.subr.bf16.mxu0 0
  %540 = vmatpush1.bf16.msra.mxu0 0
  %541 = vmatprep.subr.bf16.mxu0 0
  %542 = vmatpush1.bf16.msra.mxu0 0
  %543 = vmatprep.subr.bf16.mxu0 0
  %544 = vmatpush1.bf16.msra.mxu0 0
  %545 = vmatprep.subr.bf16.mxu0 0
  %546 = vmatpush1.bf16.msra.mxu0 0
  %547 = vmatprep.subr.bf16.mxu0 0
  %548 = vmatpush1.bf16.msra.mxu0 0
  %549 = vmatprep.subr.bf16.mxu0 0
  %550 = vmatpush1.bf16.msra.mxu0 0
  %551 = vmatprep.subr.bf16.mxu0 0
  %552 = vmatpush1.bf16.msra.mxu0 0
  %553 = vmatprep.subr.bf16.mxu0 0
  %554 = vmatpush1.bf16.msra.mxu0 0
  %555 = vmatprep.subr.bf16.mxu0 0
  %556 = vmatpush1.bf16.msra.mxu0 0
  %557 = vmatprep.subr.bf16.mxu0 0
  %558 = vmatpush1.bf16.msra.mxu0 0
  %559 = vmatprep.mubr.bf16.mxu0 0
  %560 = vmatmul.mubr.bf16.gmra.mrb[0].mxu0 %v489
  %v561 = vpop.f32.mrb[0].mxu0
  %v562 = vadd.f32 0.0, %v561
  %v563 = vpop.f32.mrb[0].mxu0
  %v564 = vpop.f32.mrb[0].mxu0
  %v565 = vadd.f32 0.0, %v564
  %v566 = vpop.f32.mrb[0].mxu0
  %567 = vmatprep.mubr.bf16.mxu0 0
  %568 = vmatmul.mubr.bf16.gmra.mrb[0].mxu0 %v492
  %v569 = vpop.f32.mrb[0].mxu0
  %v570 = vadd.f32 0.0, %v569
  %v571 = vpop.f32.mrb[0].mxu0
  %v572 = vpop.f32.mrb[0].mxu0
  %v573 = vadd.f32 0.0, %v572
  %v574 = vpop.f32.mrb[0].mxu0
  %575 = vmatprep.mubr.bf16.mxu0 0
  %576 = vmatmul.mubr.bf16.gmra.mrb[0].mxu0 %v495
  %v577 = vpop.f32.mrb[0].mxu0
  %v578 = vadd.f32 0.0, %v577
  %v579 = vpop.f32.mrb[0].mxu0
  %v580 = vpop.f32.mrb[0].mxu0
  %v581 = vadd.f32 0.0, %v580
  %v582 = vpop.f32.mrb[0].mxu0
  %583 = vmatprep.mubr.bf16.mxu0 0
  %584 = vmatmul.mubr.bf16.gmra.mrb[0].mxu0 %v498
  %v585 = vpop.f32.mrb[0].mxu0
  %v586 = vadd.f32 0.0, %v585
  %v587 = vpop.f32.mrb[0].mxu0
  %v588 = vpop.f32.mrb[0].mxu0
  %v589 = vadd.f32 0.0, %v588
  %v590 = vpop.f32.mrb[0].mxu0
  %591 = vmatprep.mubr.bf16.mxu0 0
  %592 = vmatmul.mubr.bf16.gmra.mrb[0].mxu0 %v501
  %v593 = vpop.f32.mrb[0].mxu0
  %v594 = vadd.f32 0.0, %v593
  %v595 = vpop.f32.mrb[0].mxu0
  %v596 = vpop.f32.mrb[0].mxu0
  %v597 = vadd.f32 0.0, %v596
  %v598 = vpop.f32.mrb[0].mxu0
  %599 = vmatprep.mubr.bf16.mxu0 0
  %600 = vmatmul.mubr.bf16.gmra.mrb[0].mxu0 %v504
  %v601 = vpop.f32.mrb[0].mxu0
  %v602 = vadd.f32 0.0, %v601
  %v603 = vpop.f32.mrb[0].mxu0
  %v604 = vpop.f32.mrb[0].mxu0
  %v605 = vadd.f32 0.0, %v604
  %v606 = vpop.f32.mrb[0].mxu0
  %607 = vmatprep.mubr.bf16.mxu0 0
  %608 = vmatmul.mubr.bf16.gmra.mrb[0].mxu0 %v507
  %v609 = vpop.f32.mrb[0].mxu0
  %v610 = vadd.f32 0.0, %v609
  %v611 = vpop.f32.mrb[0].mxu0
  %v612 = vpop.f32.mrb[0].mxu0
  %v613 = vadd.f32 0.0, %v612
  %v614 = vpop.f32.mrb[0].mxu0
  %615 = vmatprep.mubr.bf16.mxu0 0
  %616 = vmatmul.mubr.bf16.gmra.mrb[0].mxu0 %v510
  %v617 = vpop.f32.mrb[0].mxu0
  %v618 = vadd.f32 0.0, %v617
  %v619 = vpop.f32.mrb[0].mxu0
  %v620 = vpop.f32.mrb[0].mxu0
  %v621 = vadd.f32 0.0, %v620
  %v622 = vpop.f32.mrb[0].mxu0
  %623 = vmatprep.mubr.bf16.mxu0 0
  %624 = vmatmul.mubr.bf16.gmra.mrb[0].mxu0 %v513
  %v625 = vpop.f32.mrb[0].mxu0
  %v626 = vadd.f32 0.0, %v625
  %v627 = vpop.f32.mrb[0].mxu0
  %v628 = vpop.f32.mrb[0].mxu0
  %v629 = vadd.f32 0.0, %v628
  %v630 = vpop.f32.mrb[0].mxu0
  %631 = vmatprep.mubr.bf16.mxu0 0
  %632 = vmatmul.mubr.bf16.gmra.mrb[0].mxu0 %v516
  %v633 = vpop.f32.mrb[0].mxu0
  %v634 = vadd.f32 0.0, %v633
  %v635 = vpop.f32.mrb[0].mxu0
  %v636 = vpop.f32.mrb[0].mxu0
  %v637 = vadd.f32 0.0, %v636
  %v638 = vpop.f32.mrb[0].mxu0
  %639 = vmatprep.mubr.bf16.mxu0 0
  %640 = vmatmul.mubr.bf16.gmra.mrb[0].mxu0 %v519
  %v641 = vpop.f32.mrb[0].mxu0
  %v642 = vadd.f32 0.0, %v641
  %v643 = vpop.f32.mrb[0].mxu0
  %v644 = vpop.f32.mrb[0].mxu0
  %v645 = vadd.f32 0.0, %v644
  %v646 = vpop.f32.mrb[0].mxu0
  %647 = vmatprep.mubr.bf16.mxu0 0
  %648 = vmatmul.mubr.bf16.gmra.mrb[0].mxu0 %v522
  %v649 = vpop.f32.mrb[0].mxu0
  %v650 = vadd.f32 0.0, %v649
  %v651 = vpop.f32.mrb[0].mxu0
  %v652 = vpop.f32.mrb[0].mxu0
  %v653 = vadd.f32 0.0, %v652
  %v654 = vpop.f32.mrb[0].mxu0
  %655 = vmatprep.mubr.bf16.mxu0 0
  %656 = vmatmul.mubr.bf16.gmra.mrb[0].mxu0 %v525
  %v657 = vpop.f32.mrb[0].mxu0
  %v658 = vadd.f32 0.0, %v657
  %v659 = vpop.f32.mrb[0].mxu0
  %v660 = vpop.f32.mrb[0].mxu0
  %v661 = vpop.f32.mrb[0].mxu0
  %662 = vdwg.mxu0
  %vm663 = vcmask 261120
  %664 = vst.msk [vmem:[%s5] sm:$0xff] %vm663, %v562
  %665 = vst.msk [vmem:[%s5 + $0x8] sm:$0xff] %vm663, %v565
  %666 = vst.msk [vmem:[%s5 + $0x10] sm:$0xff] %vm663, %v570
  %667 = vst.msk [vmem:[%s5 + $0x18] sm:$0xff] %vm663, %v573
  %668 = vst.msk [vmem:[%s5 + $0x20] sm:$0xff] %vm663, %v578
  %669 = vst.msk [vmem:[%s5 + $0x28] sm:$0xff] %vm663, %v581
  %670 = vst.msk [vmem:[%s5 + $0x30] sm:$0xff] %vm663, %v586
  %671 = vst.msk [vmem:[%s5 + $0x38] sm:$0xff] %vm663, %v589
  %672 = vst.msk [vmem:[%s5 + $0x40] sm:$0xff] %vm663, %v594
  %673 = vst.msk [vmem:[%s5 + $0x48] sm:$0xff] %vm663, %v597
  %674 = vst.msk [vmem:[%s5 + $0x50] sm:$0xff] %vm663, %v602
  %675 = vst.msk [vmem:[%s5 + $0x58] sm:$0xff] %vm663, %v605
  %676 = vst.msk [vmem:[%s5 + $0x60] sm:$0xff] %vm663, %v610
  %677 = vst.msk [vmem:[%s5 + $0x68] sm:$0xff] %vm663, %v613
  %678 = vst.msk [vmem:[%s5 + $0x70] sm:$0xff] %vm663, %v618
  %679 = vst.msk [vmem:[%s5 + $0x78] sm:$0xff] %vm663, %v621
  %680 = vst.msk [vmem:[%s5 + $0x80] sm:$0xff] %vm663, %v626
  %681 = vst.msk [vmem:[%s5 + $0x88] sm:$0xff] %vm663, %v629
  %682 = vst.msk [vmem:[%s5 + $0x90] sm:$0xff] %vm663, %v634
  %683 = vst.msk [vmem:[%s5 + $0x98] sm:$0xff] %vm663, %v637
  %684 = vst.msk [vmem:[%s5 + $0xa0] sm:$0xff] %vm663, %v642
  %685 = vst.msk [vmem:[%s5 + $0xa8] sm:$0xff] %vm663, %v645
  %686 = vst.msk [vmem:[%s5 + $0xb0] sm:$0xff] %vm663, %v650
  %687 = vst.msk [vmem:[%s5 + $0xb8] sm:$0xff] %vm663, %v653
  %688 = vst.msk [vmem:[%s5 + $0xc0] sm:$0xff] %vm663, %v658
  %v689 = vsel %vm663, %v562, 0.0
  %v690 = vsel %vm663, %v565, 0.0
  %v691 = vadd.f32 %v689, %v690
  %v692 = vsel %vm663, %v570, 0.0
  %v693 = vadd.f32 %v691, %v692
  %v694 = vsel %vm663, %v573, 0.0
  %v695 = vadd.f32 %v693, %v694
  %v696 = vsel %vm663, %v578, 0.0
  %v697 = vadd.f32 %v695, %v696
  %v698 = vsel %vm663, %v581, 0.0
  %v699 = vadd.f32 %v697, %v698
  %v700 = vsel %vm663, %v586, 0.0
  %v701 = vadd.f32 %v699, %v700
  %v702 = vsel %vm663, %v589, 0.0
  %v703 = vadd.f32 %v701, %v702
  %v704 = vsel %vm663, %v594, 0.0
  %v705 = vadd.f32 %v703, %v704
  %v706 = vsel %vm663, %v597, 0.0
  %v707 = vadd.f32 %v705, %v706
  %v708 = vsel %vm663, %v602, 0.0
  %v709 = vadd.f32 %v707, %v708
  %v710 = vsel %vm663, %v605, 0.0
  %v711 = vadd.f32 %v709, %v710
  %v712 = vsel %vm663, %v610, 0.0
  %v713 = vadd.f32 %v711, %v712
  %v714 = vsel %vm663, %v613, 0.0
  %v715 = vadd.f32 %v713, %v714
  %v716 = vsel %vm663, %v618, 0.0
  %v717 = vadd.f32 %v715, %v716
  %v718 = vsel %vm663, %v621, 0.0
  %v719 = vadd.f32 %v717, %v718
  %v720 = vsel %vm663, %v626, 0.0
  %v721 = vadd.f32 %v719, %v720
  %v722 = vsel %vm663, %v629, 0.0
  %v723 = vadd.f32 %v721, %v722
  %v724 = vsel %vm663, %v634, 0.0
  %v725 = vadd.f32 %v723, %v724
  %v726 = vsel %vm663, %v637, 0.0
  %v727 = vadd.f32 %v725, %v726
  %v728 = vsel %vm663, %v642, 0.0
  %v729 = vadd.f32 %v727, %v728
  %v730 = vsel %vm663, %v645, 0.0
  %v731 = vadd.f32 %v729, %v730
  %v732 = vsel %vm663, %v650, 0.0
  %v733 = vadd.f32 %v731, %v732
  %v734 = vsel %vm663, %v653, 0.0
  %v735 = vadd.f32 %v733, %v734
  %v736 = vsel %vm663, %v658, 0.0
  %v737 = vadd.f32 %v735, %v736
  %v738 = vrot.slane %v737, 4
  %v739 = vadd.f32 %v737, %v738
  %v740 = vrot.slane %v739, 2
  %v741 = vadd.f32 %v739, %v740
  %v742 = vrot.slane %v741, 1
  %v743 = vadd.f32 %v741, %v742
  %vm744 = vcmask 253952
  %745 = vst.msk [vmem:[%s6] sm:$0x1] %vm744, %v743
  %v746 = vmul.f32 %v562, %v562
  %v747 = vmul.f32 %v565, %v565
  %v748 = vmul.f32 %v570, %v570
  %v749 = vmul.f32 %v573, %v573
  %v750 = vmul.f32 %v578, %v578
  %v751 = vmul.f32 %v581, %v581
  %v752 = vmul.f32 %v586, %v586
  %v753 = vmul.f32 %v589, %v589
  %v754 = vmul.f32 %v594, %v594
  %v755 = vmul.f32 %v597, %v597
  %v756 = vmul.f32 %v602, %v602
  %v757 = vmul.f32 %v605, %v605
  %v758 = vmul.f32 %v610, %v610
  %v759 = vmul.f32 %v613, %v613
  %v760 = vmul.f32 %v618, %v618
  %v761 = vmul.f32 %v621, %v621
  %v762 = vmul.f32 %v626, %v626
  %v763 = vmul.f32 %v629, %v629
  %v764 = vmul.f32 %v634, %v634
  %v765 = vmul.f32 %v637, %v637
  %v766 = vmul.f32 %v642, %v642
  %v767 = vmul.f32 %v645, %v645
  %v768 = vmul.f32 %v650, %v650
  %v769 = vmul.f32 %v653, %v653
  %v770 = vmul.f32 %v658, %v658
  %v771 = vsel %vm663, %v746, 0.0
  %v772 = vsel %vm663, %v747, 0.0
  %v773 = vadd.f32 %v771, %v772
  %v774 = vsel %vm663, %v748, 0.0
  %v775 = vadd.f32 %v773, %v774
  %v776 = vsel %vm663, %v749, 0.0
  %v777 = vadd.f32 %v775, %v776
  %v778 = vsel %vm663, %v750, 0.0
  %v779 = vadd.f32 %v777, %v778
  %v780 = vsel %vm663, %v751, 0.0
  %v781 = vadd.f32 %v779, %v780
  %v782 = vsel %vm663, %v752, 0.0
  %v783 = vadd.f32 %v781, %v782
  %v784 = vsel %vm663, %v753, 0.0
  %v785 = vadd.f32 %v783, %v784
  %v786 = vsel %vm663, %v754, 0.0
  %v787 = vadd.f32 %v785, %v786
  %v788 = vsel %vm663, %v755, 0.0
  %v789 = vadd.f32 %v787, %v788
  %v790 = vsel %vm663, %v756, 0.0
  %v791 = vadd.f32 %v789, %v790
  %v792 = vsel %vm663, %v757, 0.0
  %v793 = vadd.f32 %v791, %v792
  %v794 = vsel %vm663, %v758, 0.0
  %v795 = vadd.f32 %v793, %v794
  %v796 = vsel %vm663, %v759, 0.0
  %v797 = vadd.f32 %v795, %v796
  %v798 = vsel %vm663, %v760, 0.0
  %v799 = vadd.f32 %v797, %v798
  %v800 = vsel %vm663, %v761, 0.0
  %v801 = vadd.f32 %v799, %v800
  %v802 = vsel %vm663, %v762, 0.0
  %v803 = vadd.f32 %v801, %v802
  %v804 = vsel %vm663, %v763, 0.0
  %v805 = vadd.f32 %v803, %v804
  %v806 = vsel %vm663, %v764, 0.0
  %v807 = vadd.f32 %v805, %v806
  %v808 = vsel %vm663, %v765, 0.0
  %v809 = vadd.f32 %v807, %v808
  %v810 = vsel %vm663, %v766, 0.0
  %v811 = vadd.f32 %v809, %v810
  %v812 = vsel %vm663, %v767, 0.0
  %v813 = vadd.f32 %v811, %v812
  %v814 = vsel %vm663, %v768, 0.0
  %v815 = vadd.f32 %v813, %v814
  %v816 = vsel %vm663, %v769, 0.0
  %v817 = vadd.f32 %v815, %v816
  %v818 = vsel %vm663, %v770, 0.0
  %v819 = vadd.f32 %v817, %v818
  %v820 = vrot.slane %v819, 4
  %v821 = vadd.f32 %v819, %v820
  %v822 = vrot.slane %v821, 2
  %v823 = vadd.f32 %v821, %v822
  %v824 = vrot.slane %v823, 1
  %v825 = vadd.f32 %v823, %v824
  %826 = vst.msk [vmem:[%s7] sm:$0x1] %vm744, %v825
  // Predicated region
  $region22: #{densenet_forward.17} parent=0 // pred_check
    _
  $region23: #{densenet_forward.17} parent=0 // pred_check_branch
    %828 = sbr.rel (0) target = $region25
  $region24: #{densenet_forward.17} parent=0 // pred_region
    _
  $region25: #{densenet_forward.17} parent=0 // pred_fallthru
    _
  // Predicated region
  $region26: #{densenet_forward.17} parent=0 // pred_check
    _
  $region27: #{densenet_forward.17} parent=0 // pred_check_branch
    %830 = sbr.rel (0) target = $region29
  $region28: #{densenet_forward.17} parent=0 // pred_region
    _
  $region29: #{densenet_forward.17} parent=0 // pred_fallthru
    _
  // Predicated region
  $region30: #{densenet_forward.17} parent=0 // pred_check
    _
  $region31: #{densenet_forward.17} parent=0 // pred_check_branch
    %832 = sbr.rel (0) target = $region33
  $region32: #{densenet_forward.17} parent=0 // pred_region
    _
  $region33: #{densenet_forward.17} parent=0 // pred_fallthru
    _
  // Predicated region
  $region34: #{densenet_forward.17} parent=0 // pred_check
    _
  $region35: #{densenet_forward.17} parent=0 // pred_check_branch
    %834 = sbr.rel (0) target = $region37
  $region36: #{densenet_forward.17} parent=0 // pred_region
    _
  $region37: #{densenet_forward.17} parent=0 // pred_fallthru
    _
  // Predicated region
  $region38: #{densenet_forward.17} parent=0 // pred_check
    _
  $region39: #{densenet_forward.17} parent=0 // pred_check_branch
    %836 = sbr.rel (0) target = $region41
  $region40: #{densenet_forward.17} parent=0 // pred_region
    _
  $region41: #{densenet_forward.17} parent=0 // pred_fallthru
    _
  // Predicated region
  $region42: #{densenet_forward.17} parent=0 // pred_check
    _
  $region43: #{densenet_forward.17} parent=0 // pred_check_branch
    %838 = sbr.rel (0) target = $region45
  $region44: #{densenet_forward.17} parent=0 // pred_region
    _
  $region45: #{densenet_forward.17} parent=0 // pred_fallthru
    _

// kernel: densenet_forward.19
$region0: #{densenet_forward.19}
  #allocation0 [shape = 'u32[]', space=smem, size = 0x4, offset = 0x4, fixed_abs, tag = 'smem constant byte address 0x4 - core index']
  #allocation1 [shape = 'u32[144,128]{1,0:T(1,128)}', space=vmem, size = 0x12000, scoped, tag = 'internal scratch']
  %s0 = inlined_call_operand.vmem [shape: f32[200,24], index: 0, kind: input, shape index: {}]
  %s1 = inlined_call_operand.vmem [shape: f32[200,1], index: 1, kind: input, shape index: {}]
  %s2 = inlined_call_operand.vmem [shape: f32[1,24], index: 2, kind: input, shape index: {}]
  %s3 = inlined_call_operand.vmem [shape: f32[1,24], index: 3, kind: input, shape index: {}]
  %s4 = inlined_call_operand.vmem [shape: bf16[24,32], index: 4, kind: input, shape index: {}]
  %s5 = inlined_call_operand.vmem [shape: f32[200,32], index: 5, kind: output, shape index: {0}]
  %s6 = inlined_call_operand.vmem [shape: f32[1,1,32], index: 6, kind: output, shape index: {1}]
  %s7 = inlined_call_operand.vmem [shape: f32[1,1,32], index: 7, kind: output, shape index: {2}]
  %8 = xla_tuple %s5, %s6, %s7
  %s9 = sld [smem:[#allocation0]]
  $region46: #{densenet_forward.19} parent=0
    _
  %s11 = ssub.s32 1, %s9
  %s12 = scalar_select 0, %s11, %s9
  // Predicated region
  $region2: #{densenet_forward.19} parent=0 // pred_check
    _
  $region3: #{densenet_forward.19} parent=0 // pred_check_branch
    %14 = sbr.rel (0) target = $region5
  $region4: #{densenet_forward.19} parent=0 // pred_region
    _
  $region5: #{densenet_forward.19} parent=0 // pred_fallthru
    _
  // Predicated region
  $region6: #{densenet_forward.19} parent=0 // pred_check
    _
  $region7: #{densenet_forward.19} parent=0 // pred_check_branch
    %16 = sbr.rel (0) target = $region9
  $region8: #{densenet_forward.19} parent=0 // pred_region
    _
  $region9: #{densenet_forward.19} parent=0 // pred_fallthru
    _
  // Predicated region
  $region10: #{densenet_forward.19} parent=0 // pred_check
    _
  $region11: #{densenet_forward.19} parent=0 // pred_check_branch
    %18 = sbr.rel (0) target = $region13
  $region12: #{densenet_forward.19} parent=0 // pred_region
    _
  $region13: #{densenet_forward.19} parent=0 // pred_fallthru
    _
  // Predicated region
  $region14: #{densenet_forward.19} parent=0 // pred_check
    _
  $region15: #{densenet_forward.19} parent=0 // pred_check_branch
    %20 = sbr.rel (0) target = $region17
  $region16: #{densenet_forward.19} parent=0 // pred_region
    _
  $region17: #{densenet_forward.19} parent=0 // pred_fallthru
    _
  // Predicated region
  $region18: #{densenet_forward.19} parent=0 // pred_check
    _
  $region19: #{densenet_forward.19} parent=0 // pred_check_branch
    %22 = sbr.rel (0) target = $region21
  $region20: #{densenet_forward.19} parent=0 // pred_region
    _
  $region21: #{densenet_forward.19} parent=0 // pred_fallthru
    _
  %s24 = smul.u32 0, 200
  %v25 = vlaneseq
  %v26 = vshrl.u32 %v25, 7
  %v27 = vadd.s32 %v26, 8
  %v28 = vadd.s32 %v26, 16
  %v29 = vadd.s32 %v26, 24
  %v30 = vadd.s32 %v26, 32
  %v31 = vadd.s32 %v26, 40
  %v32 = vadd.s32 %v26, 48
  %v33 = vadd.s32 %v26, 56
  %v34 = vadd.s32 %v26, 64
  %v35 = vadd.s32 %v26, 72
  %v36 = vadd.s32 %v26, 80
  %v37 = vadd.s32 %v26, 88
  %v38 = vadd.s32 %v26, 96
  %v39 = vadd.s32 %v26, 104
  %v40 = vadd.s32 %v26, 112
  %v41 = vadd.s32 %v26, 120
  %v42 = vadd.s32 %v26, 128
  %v43 = vadd.s32 %v26, 136
  %v44 = vadd.s32 %v26, 144
  %v45 = vadd.s32 %v26, 152
  %v46 = vadd.s32 %v26, 160
  %v47 = vadd.s32 %v26, 168
  %v48 = vadd.s32 %v26, 176
  %v49 = vadd.s32 %v26, 184
  %v50 = vadd.s32 %v26, 192
  %v51 = vstv %s24
  %v52 = vadd.s32 %v51, %v26
  %v53 = vadd.s32 %v51, %v27
  %v54 = vadd.s32 %v51, %v28
  %v55 = vadd.s32 %v51, %v29
  %v56 = vadd.s32 %v51, %v30
  %v57 = vadd.s32 %v51, %v31
  %v58 = vadd.s32 %v51, %v32
  %v59 = vadd.s32 %v51, %v33
  %v60 = vadd.s32 %v51, %v34
  %v61 = vadd.s32 %v51, %v35
  %v62 = vadd.s32 %v51, %v36
  %v63 = vadd.s32 %v51, %v37
  %v64 = vadd.s32 %v51, %v38
  %v65 = vadd.s32 %v51, %v39
  %v66 = vadd.s32 %v51, %v40
  %v67 = vadd.s32 %v51, %v41
  %v68 = vadd.s32 %v51, %v42
  %v69 = vadd.s32 %v51, %v43
  %v70 = vadd.s32 %v51, %v44
  %v71 = vadd.s32 %v51, %v45
  %v72 = vadd.s32 %v51, %v46
  %v73 = vadd.s32 %v51, %v47
  %v74 = vadd.s32 %v51, %v48
  %v75 = vadd.s32 %v51, %v49
  %v76 = vadd.s32 %v51, %v50
  %vm77 = vcmp.lt.s32.totalorder %v52, 200
  %vm78 = vcmp.lt.s32.totalorder %v53, 200
  %vm79 = vcmp.lt.s32.totalorder %v54, 200
  %vm80 = vcmp.lt.s32.totalorder %v55, 200
  %vm81 = vcmp.lt.s32.totalorder %v56, 200
  %vm82 = vcmp.lt.s32.totalorder %v57, 200
  %vm83 = vcmp.lt.s32.totalorder %v58, 200
  %vm84 = vcmp.lt.s32.totalorder %v59, 200
  %vm85 = vcmp.lt.s32.totalorder %v60, 200
  %vm86 = vcmp.lt.s32.totalorder %v61, 200
  %vm87 = vcmp.lt.s32.totalorder %v62, 200
  %vm88 = vcmp.lt.s32.totalorder %v63, 200
  %vm89 = vcmp.lt.s32.totalorder %v64, 200
  %vm90 = vcmp.lt.s32.totalorder %v65, 200
  %vm91 = vcmp.lt.s32.totalorder %v66, 200
  %vm92 = vcmp.lt.s32.totalorder %v67, 200
  %vm93 = vcmp.lt.s32.totalorder %v68, 200
  %vm94 = vcmp.lt.s32.totalorder %v69, 200
  %vm95 = vcmp.lt.s32.totalorder %v70, 200
  %vm96 = vcmp.lt.s32.totalorder %v71, 200
  %vm97 = vcmp.lt.s32.totalorder %v72, 200
  %vm98 = vcmp.lt.s32.totalorder %v73, 200
  %vm99 = vcmp.lt.s32.totalorder %v74, 200
  %vm100 = vcmp.lt.s32.totalorder %v75, 200
  %vm101 = vcmp.lt.s32.totalorder %v76, 200
  %v102 = vld [vmem:[%s0] sm:$0xff]
  %v103 = vld [vmem:[%s0 + $0x8] sm:$0xff]
  %v104 = vld [vmem:[%s0 + $0x10] sm:$0xff]
  %v105 = vld [vmem:[%s0 + $0x18] sm:$0xff]
  %v106 = vld [vmem:[%s0 + $0x20] sm:$0xff]
  %v107 = vld [vmem:[%s0 + $0x28] sm:$0xff]
  %v108 = vld [vmem:[%s0 + $0x30] sm:$0xff]
  %v109 = vld [vmem:[%s0 + $0x38] sm:$0xff]
  %v110 = vld [vmem:[%s0 + $0x40] sm:$0xff]
  %v111 = vld [vmem:[%s0 + $0x48] sm:$0xff]
  %v112 = vld [vmem:[%s0 + $0x50] sm:$0xff]
  %v113 = vld [vmem:[%s0 + $0x58] sm:$0xff]
  %v114 = vld [vmem:[%s0 + $0x60] sm:$0xff]
  %v115 = vld [vmem:[%s0 + $0x68] sm:$0xff]
  %v116 = vld [vmem:[%s0 + $0x70] sm:$0xff]
  %v117 = vld [vmem:[%s0 + $0x78] sm:$0xff]
  %v118 = vld [vmem:[%s0 + $0x80] sm:$0xff]
  %v119 = vld [vmem:[%s0 + $0x88] sm:$0xff]
  %v120 = vld [vmem:[%s0 + $0x90] sm:$0xff]
  %v121 = vld [vmem:[%s0 + $0x98] sm:$0xff]
  %v122 = vld [vmem:[%s0 + $0xa0] sm:$0xff]
  %v123 = vld [vmem:[%s0 + $0xa8] sm:$0xff]
  %v124 = vld [vmem:[%s0 + $0xb0] sm:$0xff]
  %v125 = vld [vmem:[%s0 + $0xb8] sm:$0xff]
  %v126 = vld [vmem:[%s0 + $0xc0] sm:$0xff]
  %v127 = vld [vmem:[%s2] sm:$0x1]
  %v129 = vlaneseq
  %v130 = vshrl.u32 %v129, 7
  %v131 = vsub.s32 0, %v130
  %v132 = vrot.slane %v127, %v131
  %v134 = vmul.f32 %v102, %v132
  %v135 = vmul.f32 %v103, %v132
  %v136 = vmul.f32 %v104, %v132
  %v137 = vmul.f32 %v105, %v132
  %v138 = vmul.f32 %v106, %v132
  %v139 = vmul.f32 %v107, %v132
  %v140 = vmul.f32 %v108, %v132
  %v141 = vmul.f32 %v109, %v132
  %v142 = vmul.f32 %v110, %v132
  %v143 = vmul.f32 %v111, %v132
  %v144 = vmul.f32 %v112, %v132
  %v145 = vmul.f32 %v113, %v132
  %v146 = vmul.f32 %v114, %v132
  %v147 = vmul.f32 %v115, %v132
  %v148 = vmul.f32 %v116, %v132
  %v149 = vmul.f32 %v117, %v132
  %v150 = vmul.f32 %v118, %v132
  %v151 = vmul.f32 %v119, %v132
  %v152 = vmul.f32 %v120, %v132
  %v153 = vmul.f32 %v121, %v132
  %v154 = vmul.f32 %v122, %v132
  %v155 = vmul.f32 %v123, %v132
  %v156 = vmul.f32 %v124, %v132
  %v157 = vmul.f32 %v125, %v132
  %v158 = vmul.f32 %v126, %v132
  %v159 = vld [vmem:[%s3] sm:$0x1]
  %v161 = vlaneseq
  %v162 = vshrl.u32 %v161, 7
  %v163 = vsub.s32 0, %v162
  %v164 = vrot.slane %v159, %v163
  %v166 = vadd.f32 %v134, %v164
  %v167 = vadd.f32 %v135, %v164
  %v168 = vadd.f32 %v136, %v164
  %v169 = vadd.f32 %v137, %v164
  %v170 = vadd.f32 %v138, %v164
  %v171 = vadd.f32 %v139, %v164
  %v172 = vadd.f32 %v140, %v164
  %v173 = vadd.f32 %v141, %v164
  %v174 = vadd.f32 %v142, %v164
  %v175 = vadd.f32 %v143, %v164
  %v176 = vadd.f32 %v144, %v164
  %v177 = vadd.f32 %v145, %v164
  %v178 = vadd.f32 %v146, %v164
  %v179 = vadd.f32 %v147, %v164
  %v180 = vadd.f32 %v148, %v164
  %v181 = vadd.f32 %v149, %v164
  %v182 = vadd.f32 %v150, %v164
  %v183 = vadd.f32 %v151, %v164
  %v184 = vadd.f32 %v152, %v164
  %v185 = vadd.f32 %v153, %v164
  %v186 = vadd.f32 %v154, %v164
  %v187 = vadd.f32 %v155, %v164
  %v188 = vadd.f32 %v156, %v164
  %v189 = vadd.f32 %v157, %v164
  %v190 = vadd.f32 %v158, %v164
  %v191 = vmax.f32 %v166, 0.0
  %v192 = vmax.f32 %v167, 0.0
  %v193 = vmax.f32 %v168, 0.0
  %v194 = vmax.f32 %v169, 0.0
  %v195 = vmax.f32 %v170, 0.0
  %v196 = vmax.f32 %v171, 0.0
  %v197 = vmax.f32 %v172, 0.0
  %v198 = vmax.f32 %v173, 0.0
  %v199 = vmax.f32 %v174, 0.0
  %v200 = vmax.f32 %v175, 0.0
  %v201 = vmax.f32 %v176, 0.0
  %v202 = vmax.f32 %v177, 0.0
  %v203 = vmax.f32 %v178, 0.0
  %v204 = vmax.f32 %v179, 0.0
  %v205 = vmax.f32 %v180, 0.0
  %v206 = vmax.f32 %v181, 0.0
  %v207 = vmax.f32 %v182, 0.0
  %v208 = vmax.f32 %v183, 0.0
  %v209 = vmax.f32 %v184, 0.0
  %v210 = vmax.f32 %v185, 0.0
  %v211 = vmax.f32 %v186, 0.0
  %v212 = vmax.f32 %v187, 0.0
  %v213 = vmax.f32 %v188, 0.0
  %v214 = vmax.f32 %v189, 0.0
  %v215 = vmax.f32 %v190, 0.0
  %v216 = vld [vmem:[%s1] sm:$0xff]
  %v217 = vld [vmem:[%s1 + $0x8] sm:$0xff]
  %v218 = vld [vmem:[%s1 + $0x10] sm:$0xff]
  %v219 = vld [vmem:[%s1 + $0x18] sm:$0xff]
  %v220 = vld [vmem:[%s1 + $0x20] sm:$0xff]
  %v221 = vld [vmem:[%s1 + $0x28] sm:$0xff]
  %v222 = vld [vmem:[%s1 + $0x30] sm:$0xff]
  %v223 = vld [vmem:[%s1 + $0x38] sm:$0xff]
  %v224 = vld [vmem:[%s1 + $0x40] sm:$0xff]
  %v225 = vld [vmem:[%s1 + $0x48] sm:$0xff]
  %v226 = vld [vmem:[%s1 + $0x50] sm:$0xff]
  %v227 = vld [vmem:[%s1 + $0x58] sm:$0xff]
  %v228 = vld [vmem:[%s1 + $0x60] sm:$0xff]
  %v229 = vld [vmem:[%s1 + $0x68] sm:$0xff]
  %v230 = vld [vmem:[%s1 + $0x70] sm:$0xff]
  %v231 = vld [vmem:[%s1 + $0x78] sm:$0xff]
  %v232 = vld [vmem:[%s1 + $0x80] sm:$0xff]
  %v233 = vld [vmem:[%s1 + $0x88] sm:$0xff]
  %v234 = vld [vmem:[%s1 + $0x90] sm:$0xff]
  %v235 = vld [vmem:[%s1 + $0x98] sm:$0xff]
  %v236 = vld [vmem:[%s1 + $0xa0] sm:$0xff]
  %v237 = vld [vmem:[%s1 + $0xa8] sm:$0xff]
  %v238 = vld [vmem:[%s1 + $0xb0] sm:$0xff]
  %v239 = vld [vmem:[%s1 + $0xb8] sm:$0xff]
  %v240 = vld [vmem:[%s1 + $0xc0] sm:$0xff]
  %242 = vset.pattern.permute.xlu0 0
  %243 = vperm.xlu0 %242, %v216
  %v244 = vpop.permute.xlu0 %243
  %247 = vset.pattern.permute.xlu0 0
  %248 = vperm.xlu0 %247, %v217
  %v249 = vpop.permute.xlu0 %248
  %252 = vset.pattern.permute.xlu0 0
  %253 = vperm.xlu0 %252, %v218
  %v254 = vpop.permute.xlu0 %253
  %257 = vset.pattern.permute.xlu0 0
  %258 = vperm.xlu0 %257, %v219
  %v259 = vpop.permute.xlu0 %258
  %262 = vset.pattern.permute.xlu0 0
  %263 = vperm.xlu0 %262, %v220
  %v264 = vpop.permute.xlu0 %263
  %267 = vset.pattern.permute.xlu0 0
  %268 = vperm.xlu0 %267, %v221
  %v269 = vpop.permute.xlu0 %268
  %272 = vset.pattern.permute.xlu0 0
  %273 = vperm.xlu0 %272, %v222
  %v274 = vpop.permute.xlu0 %273
  %277 = vset.pattern.permute.xlu0 0
  %278 = vperm.xlu0 %277, %v223
  %v279 = vpop.permute.xlu0 %278
  %282 = vset.pattern.permute.xlu0 0
  %283 = vperm.xlu0 %282, %v224
  %v284 = vpop.permute.xlu0 %283
  %287 = vset.pattern.permute.xlu0 0
  %288 = vperm.xlu0 %287, %v225
  %v289 = vpop.permute.xlu0 %288
  %292 = vset.pattern.permute.xlu0 0
  %293 = vperm.xlu0 %292, %v226
  %v294 = vpop.permute.xlu0 %293
  %297 = vset.pattern.permute.xlu0 0
  %298 = vperm.xlu0 %297, %v227
  %v299 = vpop.permute.xlu0 %298
  %302 = vset.pattern.permute.xlu0 0
  %303 = vperm.xlu0 %302, %v228
  %v304 = vpop.permute.xlu0 %303
  %307 = vset.pattern.permute.xlu0 0
  %308 = vperm.xlu0 %307, %v229
  %v309 = vpop.permute.xlu0 %308
  %312 = vset.pattern.permute.xlu0 0
  %313 = vperm.xlu0 %312, %v230
  %v314 = vpop.permute.xlu0 %313
  %317 = vset.pattern.permute.xlu0 0
  %318 = vperm.xlu0 %317, %v231
  %v319 = vpop.permute.xlu0 %318
  %322 = vset.pattern.permute.xlu0 0
  %323 = vperm.xlu0 %322, %v232
  %v324 = vpop.permute.xlu0 %323
  %327 = vset.pattern.permute.xlu0 0
  %328 = vperm.xlu0 %327, %v233
  %v329 = vpop.permute.xlu0 %328
  %332 = vset.pattern.permute.xlu0 0
  %333 = vperm.xlu0 %332, %v234
  %v334 = vpop.permute.xlu0 %333
  %337 = vset.pattern.permute.xlu0 0
  %338 = vperm.xlu0 %337, %v235
  %v339 = vpop.permute.xlu0 %338
  %342 = vset.pattern.permute.xlu0 0
  %343 = vperm.xlu0 %342, %v236
  %v344 = vpop.permute.xlu0 %343
  %347 = vset.pattern.permute.xlu0 0
  %348 = vperm.xlu0 %347, %v237
  %v349 = vpop.permute.xlu0 %348
  %352 = vset.pattern.permute.xlu0 0
  %353 = vperm.xlu0 %352, %v238
  %v354 = vpop.permute.xlu0 %353
  %357 = vset.pattern.permute.xlu0 0
  %358 = vperm.xlu0 %357, %v239
  %v359 = vpop.permute.xlu0 %358
  %362 = vset.pattern.permute.xlu0 0
  %363 = vperm.xlu0 %362, %v240
  %v364 = vpop.permute.xlu0 %363
  %v366 = vmul.f32 %v191, %v244
  %v367 = vmul.f32 %v192, %v249
  %v368 = vmul.f32 %v193, %v254
  %v369 = vmul.f32 %v194, %v259
  %v370 = vmul.f32 %v195, %v264
  %v371 = vmul.f32 %v196, %v269
  %v372 = vmul.f32 %v197, %v274
  %v373 = vmul.f32 %v198, %v279
  %v374 = vmul.f32 %v199, %v284
  %v375 = vmul.f32 %v200, %v289
  %v376 = vmul.f32 %v201, %v294
  %v377 = vmul.f32 %v202, %v299
  %v378 = vmul.f32 %v203, %v304
  %v379 = vmul.f32 %v204, %v309
  %v380 = vmul.f32 %v205, %v314
  %v381 = vmul.f32 %v206, %v319
  %v382 = vmul.f32 %v207, %v324
  %v383 = vmul.f32 %v208, %v329
  %v384 = vmul.f32 %v209, %v334
  %v385 = vmul.f32 %v210, %v339
  %v386 = vmul.f32 %v211, %v344
  %v387 = vmul.f32 %v212, %v349
  %v388 = vmul.f32 %v213, %v354
  %v389 = vmul.f32 %v214, %v359
  %v390 = vmul.f32 %v215, %v364
  %v391 = vsel %vm77, 1, 0
  %v392 = vsel %vm78, 1, 0
  %v393 = vsel %vm79, 1, 0
  %v394 = vsel %vm80, 1, 0
  %v395 = vsel %vm81, 1, 0
  %v396 = vsel %vm82, 1, 0
  %v397 = vsel %vm83, 1, 0
  %v398 = vsel %vm84, 1, 0
  %v399 = vsel %vm85, 1, 0
  %v400 = vsel %vm86, 1, 0
  %v401 = vsel %vm87, 1, 0
  %v402 = vsel %vm88, 1, 0
  %v403 = vsel %vm89, 1, 0
  %v404 = vsel %vm90, 1, 0
  %v405 = vsel %vm91, 1, 0
  %v406 = vsel %vm92, 1, 0
  %v407 = vsel %vm93, 1, 0
  %v408 = vsel %vm94, 1, 0
  %v409 = vsel %vm95, 1, 0
  %v410 = vsel %vm96, 1, 0
  %v411 = vsel %vm97, 1, 0
  %v412 = vsel %vm98, 1, 0
  %v413 = vsel %vm99, 1, 0
  %v414 = vsel %vm100, 1, 0
  %v415 = vsel %vm101, 1, 0
  %vm416 = vcmp.eq.s32.totalorder %v391, 1
  %vm417 = vcmp.eq.s32.totalorder %v392, 1
  %vm418 = vcmp.eq.s32.totalorder %v393, 1
  %vm419 = vcmp.eq.s32.totalorder %v394, 1
  %vm420 = vcmp.eq.s32.totalorder %v395, 1
  %vm421 = vcmp.eq.s32.totalorder %v396, 1
  %vm422 = vcmp.eq.s32.totalorder %v397, 1
  %vm423 = vcmp.eq.s32.totalorder %v398, 1
  %vm424 = vcmp.eq.s32.totalorder %v399, 1
  %vm425 = vcmp.eq.s32.totalorder %v400, 1
  %vm426 = vcmp.eq.s32.totalorder %v401, 1
  %vm427 = vcmp.eq.s32.totalorder %v402, 1
  %vm428 = vcmp.eq.s32.totalorder %v403, 1
  %vm429 = vcmp.eq.s32.totalorder %v404, 1
  %vm430 = vcmp.eq.s32.totalorder %v405, 1
  %vm431 = vcmp.eq.s32.totalorder %v406, 1
  %vm432 = vcmp.eq.s32.totalorder %v407, 1
  %vm433 = vcmp.eq.s32.totalorder %v408, 1
  %vm434 = vcmp.eq.s32.totalorder %v409, 1
  %vm435 = vcmp.eq.s32.totalorder %v410, 1
  %vm436 = vcmp.eq.s32.totalorder %v411, 1
  %vm437 = vcmp.eq.s32.totalorder %v412, 1
  %vm438 = vcmp.eq.s32.totalorder %v413, 1
  %vm439 = vcmp.eq.s32.totalorder %v414, 1
  %vm440 = vcmp.eq.s32.totalorder %v415, 1
  %v441 = vsel %vm416, %v366, 0.0
  %v442 = vsel %vm417, %v367, 0.0
  %v443 = vsel %vm418, %v368, 0.0
  %v444 = vsel %vm419, %v369, 0.0
  %v445 = vsel %vm420, %v370, 0.0
  %v446 = vsel %vm421, %v371, 0.0
  %v447 = vsel %vm422, %v372, 0.0
  %v448 = vsel %vm423, %v373, 0.0
  %v449 = vsel %vm424, %v374, 0.0
  %v450 = vsel %vm425, %v375, 0.0
  %v451 = vsel %vm426, %v376, 0.0
  %v452 = vsel %vm427, %v377, 0.0
  %v453 = vsel %vm428, %v378, 0.0
  %v454 = vsel %vm429, %v379, 0.0
  %v455 = vsel %vm430, %v380, 0.0
  %v456 = vsel %vm431, %v381, 0.0
  %v457 = vsel %vm432, %v382, 0.0
  %v458 = vsel %vm433, %v383, 0.0
  %v459 = vsel %vm434, %v384, 0.0
  %v460 = vsel %vm435, %v385, 0.0
  %v461 = vsel %vm436, %v386, 0.0
  %v462 = vsel %vm437, %v387, 0.0
  %v463 = vsel %vm438, %v388, 0.0
  %v464 = vsel %vm439, %v389, 0.0
  %v465 = vsel %vm440, %v390, 0.0
  %v466 = vpack.c.bf16 %v442, %v441
  %v467 = vpack.c.bf16 %v444, %v443
  %v468 = vpack.c.bf16 %v446, %v445
  %v469 = vpack.c.bf16 %v448, %v447
  %v470 = vpack.c.bf16 %v450, %v449
  %v471 = vpack.c.bf16 %v452, %v451
  %v472 = vpack.c.bf16 %v454, %v453
  %v473 = vpack.c.bf16 %v456, %v455
  %v474 = vpack.c.bf16 %v458, %v457
  %v475 = vpack.c.bf16 %v460, %v459
  %v476 = vpack.c.bf16 %v462, %v461
  %v477 = vpack.c.bf16 %v464, %v463
  %v478 = vpack.c.bf16 %v465, %v465
  %v479 = vld [vmem:[%s4] sm:$0xf]
  %v480 = vld [vmem:[%s4 + $0x4] sm:$0xf]
  %v481 = vld [vmem:[%s4 + $0x8] sm:$0xf]
  %v485 = vunpack.c.l.b16 %v479
  %v486 = vunpack.c.l.b16 %v480
  %v487 = vunpack.c.l.b16 %v481
  %v488 = vpack.c.b16 %v486, %v485
  %v489 = vpack.c.b16 %v487, %v487
  %vm491 = vcmask 195584
  %v493 = vsel %vm491, %v466, 0
  %v496 = vsel %vm491, %v467, 0
  %v499 = vsel %vm491, %v468, 0
  %v502 = vsel %vm491, %v469, 0
  %v505 = vsel %vm491, %v470, 0
  %v508 = vsel %vm491, %v471, 0
  %v511 = vsel %vm491, %v472, 0
  %v514 = vsel %vm491, %v473, 0
  %v517 = vsel %vm491, %v474, 0
  %v520 = vsel %vm491, %v475, 0
  %v523 = vsel %vm491, %v476, 0
  %v526 = vsel %vm491, %v477, 0
  %v529 = vsel %vm491, %v478, 0
  %vm531 = vcmask 1043456
  %v533 = vsel %vm531, %v489, 0
  %535 = vmatprep.subr.bf16.mxu0 0
  %536 = vmatpush1.bf16.msra.mxu0 %v488
  %537 = vmatprep.subr.bf16.mxu0 0
  %538 = vmatpush1.bf16.msra.mxu0 %v533
  %539 = vmatprep.subr.bf16.mxu0 0
  %540 = vmatpush1.bf16.msra.mxu0 0
  %541 = vmatprep.subr.bf16.mxu0 0
  %542 = vmatpush1.bf16.msra.mxu0 0
  %543 = vmatprep.subr.bf16.mxu0 0
  %544 = vmatpush1.bf16.msra.mxu0 0
  %545 = vmatprep.subr.bf16.mxu0 0
  %546 = vmatpush1.bf16.msra.mxu0 0
  %547 = vmatprep.subr.bf16.mxu0 0
  %548 = vmatpush1.bf16.msra.mxu0 0
  %549 = vmatprep.subr.bf16.mxu0 0
  %550 = vmatpush1.bf16.msra.mxu0 0
  %551 = vmatprep.subr.bf16.mxu0 0
  %552 = vmatpush1.bf16.msra.mxu0 0
  %553 = vmatprep.subr.bf16.mxu0 0
  %554 = vmatpush1.bf16.msra.mxu0 0
  %555 = vmatprep.subr.bf16.mxu0 0
  %556 = vmatpush1.bf16.msra.mxu0 0
  %557 = vmatprep.subr.bf16.mxu0 0
  %558 = vmatpush1.bf16.msra.mxu0 0
  %559 = vmatprep.subr.bf16.mxu0 0
  %560 = vmatpush1.bf16.msra.mxu0 0
  %561 = vmatprep.subr.bf16.mxu0 0
  %562 = vmatpush1.bf16.msra.mxu0 0
  %563 = vmatprep.subr.bf16.mxu0 0
  %564 = vmatpush1.bf16.msra.mxu0 0
  %565 = vmatprep.subr.bf16.mxu0 0
  %566 = vmatpush1.bf16.msra.mxu0 0
  %567 = vmatprep.mubr.bf16.mxu0 0
  %568 = vmatmul.mubr.bf16.gmra.mrb[0].mxu0 %v493
  %v569 = vpop.f32.mrb[0].mxu0
  %v570 = vadd.f32 0.0, %v569
  %v571 = vpop.f32.mrb[0].mxu0
  %v572 = vpop.f32.mrb[0].mxu0
  %v573 = vadd.f32 0.0, %v572
  %v574 = vpop.f32.mrb[0].mxu0
  %575 = vmatprep.mubr.bf16.mxu0 0
  %576 = vmatmul.mubr.bf16.gmra.mrb[0].mxu0 %v496
  %v577 = vpop.f32.mrb[0].mxu0
  %v578 = vadd.f32 0.0, %v577
  %v579 = vpop.f32.mrb[0].mxu0
  %v580 = vpop.f32.mrb[0].mxu0
  %v581 = vadd.f32 0.0, %v580
  %v582 = vpop.f32.mrb[0].mxu0
  %583 = vmatprep.mubr.bf16.mxu0 0
  %584 = vmatmul.mubr.bf16.gmra.mrb[0].mxu0 %v499
  %v585 = vpop.f32.mrb[0].mxu0
  %v586 = vadd.f32 0.0, %v585
  %v587 = vpop.f32.mrb[0].mxu0
  %v588 = vpop.f32.mrb[0].mxu0
  %v589 = vadd.f32 0.0, %v588
  %v590 = vpop.f32.mrb[0].mxu0
  %591 = vmatprep.mubr.bf16.mxu0 0
  %592 = vmatmul.mubr.bf16.gmra.mrb[0].mxu0 %v502
  %v593 = vpop.f32.mrb[0].mxu0
  %v594 = vadd.f32 0.0, %v593
  %v595 = vpop.f32.mrb[0].mxu0
  %v596 = vpop.f32.mrb[0].mxu0
  %v597 = vadd.f32 0.0, %v596
  %v598 = vpop.f32.mrb[0].mxu0
  %599 = vmatprep.mubr.bf16.mxu0 0
  %600 = vmatmul.mubr.bf16.gmra.mrb[0].mxu0 %v505
  %v601 = vpop.f32.mrb[0].mxu0
  %v602 = vadd.f32 0.0, %v601
  %v603 = vpop.f32.mrb[0].mxu0
  %v604 = vpop.f32.mrb[0].mxu0
  %v605 = vadd.f32 0.0, %v604
  %v606 = vpop.f32.mrb[0].mxu0
  %607 = vmatprep.mubr.bf16.mxu0 0
  %608 = vmatmul.mubr.bf16.gmra.mrb[0].mxu0 %v508
  %v609 = vpop.f32.mrb[0].mxu0
  %v610 = vadd.f32 0.0, %v609
  %v611 = vpop.f32.mrb[0].mxu0
  %v612 = vpop.f32.mrb[0].mxu0
  %v613 = vadd.f32 0.0, %v612
  %v614 = vpop.f32.mrb[0].mxu0
  %615 = vmatprep.mubr.bf16.mxu0 0
  %616 = vmatmul.mubr.bf16.gmra.mrb[0].mxu0 %v511
  %v617 = vpop.f32.mrb[0].mxu0
  %v618 = vadd.f32 0.0, %v617
  %v619 = vpop.f32.mrb[0].mxu0
  %v620 = vpop.f32.mrb[0].mxu0
  %v621 = vadd.f32 0.0, %v620
  %v622 = vpop.f32.mrb[0].mxu0
  %623 = vmatprep.mubr.bf16.mxu0 0
  %624 = vmatmul.mubr.bf16.gmra.mrb[0].mxu0 %v514
  %v625 = vpop.f32.mrb[0].mxu0
  %v626 = vadd.f32 0.0, %v625
  %v627 = vpop.f32.mrb[0].mxu0
  %v628 = vpop.f32.mrb[0].mxu0
  %v629 = vadd.f32 0.0, %v628
  %v630 = vpop.f32.mrb[0].mxu0
  %631 = vmatprep.mubr.bf16.mxu0 0
  %632 = vmatmul.mubr.bf16.gmra.mrb[0].mxu0 %v517
  %v633 = vpop.f32.mrb[0].mxu0
  %v634 = vadd.f32 0.0, %v633
  %v635 = vpop.f32.mrb[0].mxu0
  %v636 = vpop.f32.mrb[0].mxu0
  %v637 = vadd.f32 0.0, %v636
  %v638 = vpop.f32.mrb[0].mxu0
  %639 = vmatprep.mubr.bf16.mxu0 0
  %640 = vmatmul.mubr.bf16.gmra.mrb[0].mxu0 %v520
  %v641 = vpop.f32.mrb[0].mxu0
  %v642 = vadd.f32 0.0, %v641
  %v643 = vpop.f32.mrb[0].mxu0
  %v644 = vpop.f32.mrb[0].mxu0
  %v645 = vadd.f32 0.0, %v644
  %v646 = vpop.f32.mrb[0].mxu0
  %647 = vmatprep.mubr.bf16.mxu0 0
  %648 = vmatmul.mubr.bf16.gmra.mrb[0].mxu0 %v523
  %v649 = vpop.f32.mrb[0].mxu0
  %v650 = vadd.f32 0.0, %v649
  %v651 = vpop.f32.mrb[0].mxu0
  %v652 = vpop.f32.mrb[0].mxu0
  %v653 = vadd.f32 0.0, %v652
  %v654 = vpop.f32.mrb[0].mxu0
  %655 = vmatprep.mubr.bf16.mxu0 0
  %656 = vmatmul.mubr.bf16.gmra.mrb[0].mxu0 %v526
  %v657 = vpop.f32.mrb[0].mxu0
  %v658 = vadd.f32 0.0, %v657
  %v659 = vpop.f32.mrb[0].mxu0
  %v660 = vpop.f32.mrb[0].mxu0
  %v661 = vadd.f32 0.0, %v660
  %v662 = vpop.f32.mrb[0].mxu0
  %663 = vmatprep.mubr.bf16.mxu0 0
  %664 = vmatmul.mubr.bf16.gmra.mrb[0].mxu0 %v529
  %v665 = vpop.f32.mrb[0].mxu0
  %v666 = vadd.f32 0.0, %v665
  %v667 = vpop.f32.mrb[0].mxu0
  %v668 = vpop.f32.mrb[0].mxu0
  %v669 = vpop.f32.mrb[0].mxu0
  %670 = vdwg.mxu0
  %vm671 = vcmask 261120
  %672 = vst.msk [vmem:[%s5] sm:$0xff] %vm671, %v570
  %673 = vst.msk [vmem:[%s5 + $0x8] sm:$0xff] %vm671, %v573
  %674 = vst.msk [vmem:[%s5 + $0x10] sm:$0xff] %vm671, %v578
  %675 = vst.msk [vmem:[%s5 + $0x18] sm:$0xff] %vm671, %v581
  %676 = vst.msk [vmem:[%s5 + $0x20] sm:$0xff] %vm671, %v586
  %677 = vst.msk [vmem:[%s5 + $0x28] sm:$0xff] %vm671, %v589
  %678 = vst.msk [vmem:[%s5 + $0x30] sm:$0xff] %vm671, %v594
  %679 = vst.msk [vmem:[%s5 + $0x38] sm:$0xff] %vm671, %v597
  %680 = vst.msk [vmem:[%s5 + $0x40] sm:$0xff] %vm671, %v602
  %681 = vst.msk [vmem:[%s5 + $0x48] sm:$0xff] %vm671, %v605
  %682 = vst.msk [vmem:[%s5 + $0x50] sm:$0xff] %vm671, %v610
  %683 = vst.msk [vmem:[%s5 + $0x58] sm:$0xff] %vm671, %v613
  %684 = vst.msk [vmem:[%s5 + $0x60] sm:$0xff] %vm671, %v618
  %685 = vst.msk [vmem:[%s5 + $0x68] sm:$0xff] %vm671, %v621
  %686 = vst.msk [vmem:[%s5 + $0x70] sm:$0xff] %vm671, %v626
  %687 = vst.msk [vmem:[%s5 + $0x78] sm:$0xff] %vm671, %v629
  %688 = vst.msk [vmem:[%s5 + $0x80] sm:$0xff] %vm671, %v634
  %689 = vst.msk [vmem:[%s5 + $0x88] sm:$0xff] %vm671, %v637
  %690 = vst.msk [vmem:[%s5 + $0x90] sm:$0xff] %vm671, %v642
  %691 = vst.msk [vmem:[%s5 + $0x98] sm:$0xff] %vm671, %v645
  %692 = vst.msk [vmem:[%s5 + $0xa0] sm:$0xff] %vm671, %v650
  %693 = vst.msk [vmem:[%s5 + $0xa8] sm:$0xff] %vm671, %v653
  %694 = vst.msk [vmem:[%s5 + $0xb0] sm:$0xff] %vm671, %v658
  %695 = vst.msk [vmem:[%s5 + $0xb8] sm:$0xff] %vm671, %v661
  %696 = vst.msk [vmem:[%s5 + $0xc0] sm:$0xff] %vm671, %v666
  %v697 = vsel %vm671, %v570, 0.0
  %v698 = vsel %vm671, %v573, 0.0
  %v699 = vadd.f32 %v697, %v698
  %v700 = vsel %vm671, %v578, 0.0
  %v701 = vadd.f32 %v699, %v700
  %v702 = vsel %vm671, %v581, 0.0
  %v703 = vadd.f32 %v701, %v702
  %v704 = vsel %vm671, %v586, 0.0
  %v705 = vadd.f32 %v703, %v704
  %v706 = vsel %vm671, %v589, 0.0
  %v707 = vadd.f32 %v705, %v706
  %v708 = vsel %vm671, %v594, 0.0
  %v709 = vadd.f32 %v707, %v708
  %v710 = vsel %vm671, %v597, 0.0
  %v711 = vadd.f32 %v709, %v710
  %v712 = vsel %vm671, %v602, 0.0
  %v713 = vadd.f32 %v711, %v712
  %v714 = vsel %vm671, %v605, 0.0
  %v715 = vadd.f32 %v713, %v714
  %v716 = vsel %vm671, %v610, 0.0
  %v717 = vadd.f32 %v715, %v716
  %v718 = vsel %vm671, %v613, 0.0
  %v719 = vadd.f32 %v717, %v718
  %v720 = vsel %vm671, %v618, 0.0
  %v721 = vadd.f32 %v719, %v720
  %v722 = vsel %vm671, %v621, 0.0
  %v723 = vadd.f32 %v721, %v722
  %v724 = vsel %vm671, %v626, 0.0
  %v725 = vadd.f32 %v723, %v724
  %v726 = vsel %vm671, %v629, 0.0
  %v727 = vadd.f32 %v725, %v726
  %v728 = vsel %vm671, %v634, 0.0
  %v729 = vadd.f32 %v727, %v728
  %v730 = vsel %vm671, %v637, 0.0
  %v731 = vadd.f32 %v729, %v730
  %v732 = vsel %vm671, %v642, 0.0
  %v733 = vadd.f32 %v731, %v732
  %v734 = vsel %vm671, %v645, 0.0
  %v735 = vadd.f32 %v733, %v734
  %v736 = vsel %vm671, %v650, 0.0
  %v737 = vadd.f32 %v735, %v736
  %v738 = vsel %vm671, %v653, 0.0
  %v739 = vadd.f32 %v737, %v738
  %v740 = vsel %vm671, %v658, 0.0
  %v741 = vadd.f32 %v739, %v740
  %v742 = vsel %vm671, %v661, 0.0
  %v743 = vadd.f32 %v741, %v742
  %v744 = vsel %vm671, %v666, 0.0
  %v745 = vadd.f32 %v743, %v744
  %v746 = vrot.slane %v745, 4
  %v747 = vadd.f32 %v745, %v746
  %v748 = vrot.slane %v747, 2
  %v749 = vadd.f32 %v747, %v748
  %v750 = vrot.slane %v749, 1
  %v751 = vadd.f32 %v749, %v750
  %vm752 = vcmask 253952
  %753 = vst.msk [vmem:[%s6] sm:$0x1] %vm752, %v751
  %v754 = vmul.f32 %v570, %v570
  %v755 = vmul.f32 %v573, %v573
  %v756 = vmul.f32 %v578, %v578
  %v757 = vmul.f32 %v581, %v581
  %v758 = vmul.f32 %v586, %v586
  %v759 = vmul.f32 %v589, %v589
  %v760 = vmul.f32 %v594, %v594
  %v761 = vmul.f32 %v597, %v597
  %v762 = vmul.f32 %v602, %v602
  %v763 = vmul.f32 %v605, %v605
  %v764 = vmul.f32 %v610, %v610
  %v765 = vmul.f32 %v613, %v613
  %v766 = vmul.f32 %v618, %v618
  %v767 = vmul.f32 %v621, %v621
  %v768 = vmul.f32 %v626, %v626
  %v769 = vmul.f32 %v629, %v629
  %v770 = vmul.f32 %v634, %v634
  %v771 = vmul.f32 %v637, %v637
  %v772 = vmul.f32 %v642, %v642
  %v773 = vmul.f32 %v645, %v645
  %v774 = vmul.f32 %v650, %v650
  %v775 = vmul.f32 %v653, %v653
  %v776 = vmul.f32 %v658, %v658
  %v777 = vmul.f32 %v661, %v661
  %v778 = vmul.f32 %v666, %v666
  %v779 = vsel %vm671, %v754, 0.0
  %v780 = vsel %vm671, %v755, 0.0
  %v781 = vadd.f32 %v779, %v780
  %v782 = vsel %vm671, %v756, 0.0
  %v783 = vadd.f32 %v781, %v782
  %v784 = vsel %vm671, %v757, 0.0
  %v785 = vadd.f32 %v783, %v784
  %v786 = vsel %vm671, %v758, 0.0
  %v787 = vadd.f32 %v785, %v786
  %v788 = vsel %vm671, %v759, 0.0
  %v789 = vadd.f32 %v787, %v788
  %v790 = vsel %vm671, %v760, 0.0
  %v791 = vadd.f32 %v789, %v790
  %v792 = vsel %vm671, %v761, 0.0
  %v793 = vadd.f32 %v791, %v792
  %v794 = vsel %vm671, %v762, 0.0
  %v795 = vadd.f32 %v793, %v794
  %v796 = vsel %vm671, %v763, 0.0
  %v797 = vadd.f32 %v795, %v796
  %v798 = vsel %vm671, %v764, 0.0
  %v799 = vadd.f32 %v797, %v798
  %v800 = vsel %vm671, %v765, 0.0
  %v801 = vadd.f32 %v799, %v800
  %v802 = vsel %vm671, %v766, 0.0
  %v803 = vadd.f32 %v801, %v802
  %v804 = vsel %vm671, %v767, 0.0
  %v805 = vadd.f32 %v803, %v804
  %v806 = vsel %vm671, %v768, 0.0
  %v807 = vadd.f32 %v805, %v806
  %v808 = vsel %vm671, %v769, 0.0
  %v809 = vadd.f32 %v807, %v808
  %v810 = vsel %vm671, %v770, 0.0
  %v811 = vadd.f32 %v809, %v810
  %v812 = vsel %vm671, %v771, 0.0
  %v813 = vadd.f32 %v811, %v812
  %v814 = vsel %vm671, %v772, 0.0
  %v815 = vadd.f32 %v813, %v814
  %v816 = vsel %vm671, %v773, 0.0
  %v817 = vadd.f32 %v815, %v816
  %v818 = vsel %vm671, %v774, 0.0
  %v819 = vadd.f32 %v817, %v818
  %v820 = vsel %vm671, %v775, 0.0
  %v821 = vadd.f32 %v819, %v820
  %v822 = vsel %vm671, %v776, 0.0
  %v823 = vadd.f32 %v821, %v822
  %v824 = vsel %vm671, %v777, 0.0
  %v825 = vadd.f32 %v823, %v824
  %v826 = vsel %vm671, %v778, 0.0
  %v827 = vadd.f32 %v825, %v826
  %v828 = vrot.slane %v827, 4
  %v829 = vadd.f32 %v827, %v828
  %v830 = vrot.slane %v829, 2
  %v831 = vadd.f32 %v829, %v830
  %v832 = vrot.slane %v831, 1
  %v833 = vadd.f32 %v831, %v832
  %834 = vst.msk [vmem:[%s7] sm:$0x1] %vm752, %v833
  // Predicated region
  $region22: #{densenet_forward.19} parent=0 // pred_check
    _
  $region23: #{densenet_forward.19} parent=0 // pred_check_branch
    %836 = sbr.rel (0) target = $region25
  $region24: #{densenet_forward.19} parent=0 // pred_region
    _
  $region25: #{densenet_forward.19} parent=0 // pred_fallthru
    _
  // Predicated region
  $region26: #{densenet_forward.19} parent=0 // pred_check
    _
  $region27: #{densenet_forward.19} parent=0 // pred_check_branch
    %838 = sbr.rel (0) target = $region29
  $region28: #{densenet_forward.19} parent=0 // pred_region
    _
  $region29: #{densenet_forward.19} parent=0 // pred_fallthru
    _
  // Predicated region
  $region30: #{densenet_forward.19} parent=0 // pred_check
    _
  $region31: #{densenet_forward.19} parent=0 // pred_check_branch
    %840 = sbr.rel (0) target = $region33
  $region32: #{densenet_forward.19} parent=0 // pred_region
    _
  $region33: #{densenet_forward.19} parent=0 // pred_fallthru
    _
  // Predicated region
  $region34: #{densenet_forward.19} parent=0 // pred_check
    _
  $region35: #{densenet_forward.19} parent=0 // pred_check_branch
    %842 = sbr.rel (0) target = $region37
  $region36: #{densenet_forward.19} parent=0 // pred_region
    _
  $region37: #{densenet_forward.19} parent=0 // pred_fallthru
    _
  // Predicated region
  $region38: #{densenet_forward.19} parent=0 // pred_check
    _
  $region39: #{densenet_forward.19} parent=0 // pred_check_branch
    %844 = sbr.rel (0) target = $region41
  $region40: #{densenet_forward.19} parent=0 // pred_region
    _
  $region41: #{densenet_forward.19} parent=0 // pred_fallthru
    _
  // Predicated region
  $region42: #{densenet_forward.19} parent=0 // pred_check
    _
  $region43: #{densenet_forward.19} parent=0 // pred_check_branch
    %846 = sbr.rel (0) target = $region45
  $region44: #{densenet_forward.19} parent=0 // pred_region
    _
  $region45: #{densenet_forward.19} parent=0 // pred_fallthru
    _

// kernel: densenet_forward.18
$region0: #{densenet_forward.18}
  #allocation0 [shape = 'u32[]', space=smem, size = 0x4, offset = 0x4, fixed_abs, tag = 'smem constant byte address 0x4 - core index']
  #allocation1 [shape = 'u32[144,128]{1,0:T(1,128)}', space=vmem, size = 0x12000, scoped, tag = 'internal scratch']
  #allocation2 [shape = 'f32[122,32]{1,0:T(8,128)}', space=vmem, size = 0x10000, scoped, tag = 'scratch operand']
  %s0 = inlined_call_operand.vmem [shape: f32[2,100,32], index: 0, kind: input, shape index: {}]
  %s1 = inlined_call_operand.vmem [shape: f32[100,1], index: 1, kind: input, shape index: {}]
  %s2 = inlined_call_operand.vmem [shape: f32[1,32], index: 2, kind: input, shape index: {}]
  %s3 = inlined_call_operand.vmem [shape: f32[1,32], index: 3, kind: input, shape index: {}]
  %s4 = inlined_call_operand.vmem [shape: bf16[9,32,8], index: 4, kind: input, shape index: {}]
  %s5 = inlined_call_operand.vmem [shape: f32[2,100,8], index: 5, kind: output, shape index: {0}]
  %s6 = inlined_call_operand.vmem [shape: f32[2,1,8], index: 6, kind: output, shape index: {1}]
  %s7 = inlined_call_operand.vmem [shape: f32[2,1,8], index: 7, kind: output, shape index: {2}]
  %8 = xla_tuple %s5, %s6, %s7
  %s9 = sld [smem:[#allocation0]]
  $region69: #{densenet_forward.18} parent=0
    _
  %s11 = ssub.s32 1, %s9
  %s12 = scalar_select 0, %s11, %s9
  loop: start=0, step=1, limit=4
  $region2: #{densenet_forward.18} parent=0 // loop_pre_header
    _
  $region3: #{densenet_forward.18} parent=0 // loop_header
    %s14 = sphi 0, %s18
    %p15 = scmp.ge.s32.totalorder %s14, 4
    %s24 = sphi 0, %s26
    %s27 = sphi 0, %s24
    %s28 = sphi 0, %s27
    %s44 = sphi 0, %s28
    %s48 = sphi 0, %s48
    %s50 = sphi 0, %s48
    %s51 = sphi 0, %s50
    %s65 = sphi 0, %s51
    %s69 = sphi 0, %s69
    %s71 = sphi 0, %s69
    %s72 = sphi 0, %s71
    %s86 = sphi 0, %s72
    %s90 = sphi 0, %s90
    %s92 = sphi 0, %s90
    %s93 = sphi 0, %s92
    %s107 = sphi 0, %s93
    %s111 = sphi 0, %s111
    %s113 = sphi 0, %s111
    %s114 = sphi 0, %s113
    %s128 = sphi 0, %s114
    %s134 = sphi 0, %s136
    %s137 = sphi 0, %s134
    %s138 = sphi 0, %s137
    %s154 = sphi 0, %s138
    %s160 = sphi 0, %s162
    %s163 = sphi 0, %s160
    %s164 = sphi 0, %s163
    %s180 = sphi 0, %s164
    %s186 = sphi 0, %s188
    %s189 = sphi 0, %s186
    %s190 = sphi 0, %s189
    %s206 = sphi 0, %s190
  $region4: #{densenet_forward.18} parent=0 // loop_header_branch
    %17 = sbr.rel (%p15) target = $region8
  $region5: #{densenet_forward.18} parent=0 // loop_body
    %s19 = ssub.s32 %s14, 1
    %s20 = ssub.s32 %s14, 2
    %s21 = sadd.s32 %s14, 1
    %s22 = ssub.s32 %s14, %s21
    %p23 = scmp.eq.s32.totalorder %s22, 0
    %s25 = sadd.s32 %s24, 1
    %s26 = scalar_select %p23, %s24, %s25
    %p29 = pneg %p23
    %p30 = scmp.eq.s32.totalorder %s14, 1
    %p31 = por %p29, %p30
    %p32 = scmp.ne.s32.totalorder %s24, %s27
    %p33 = scmp.eq.s32.totalorder %s14, 0
    %p34 = por %p32, %p33
    %p35 = scmp.ne.s32.totalorder %s24, %s27
    %p36 = scmp.eq.s32.totalorder %s19, 1
    %p37 = por %p35, %p36
    %p38 = scmp.ne.s32.totalorder %s27, %s28
    %p39 = scmp.eq.s32.totalorder %s19, 0
    %p40 = por %p38, %p39
    %p41 = scmp.ne.s32.totalorder %s27, %s28
    %p42 = scmp.eq.s32.totalorder %s20, 1
    %p43 = por %p41, %p42
    %p45 = scmp.ne.s32.totalorder %s28, %s44
    %p46 = scmp.eq.s32.totalorder %s20, 0
    %p47 = por %p45, %p46
    %s49 = sadd.s32 %s48, 1
    %p52 = scmp.eq.s32.totalorder %s14, 1
    %p53 = scmp.ne.s32.totalorder %s48, %s50
    %p54 = scmp.eq.s32.totalorder %s14, 0
    %p55 = por %p53, %p54
    %p56 = scmp.ne.s32.totalorder %s48, %s50
    %p57 = scmp.eq.s32.totalorder %s19, 1
    %p58 = por %p56, %p57
    %p59 = scmp.ne.s32.totalorder %s50, %s51
    %p60 = scmp.eq.s32.totalorder %s19, 0
    %p61 = por %p59, %p60
    %p62 = scmp.ne.s32.totalorder %s50, %s51
    %p63 = scmp.eq.s32.totalorder %s20, 1
    %p64 = por %p62, %p63
    %p66 = scmp.ne.s32.totalorder %s51, %s65
    %p67 = scmp.eq.s32.totalorder %s20, 0
    %p68 = por %p66, %p67
    %s70 = sadd.s32 %s69, 1
    %p73 = scmp.eq.s32.totalorder %s14, 1
    %p74 = scmp.ne.s32.totalorder %s69, %s71
    %p75 = scmp.eq.s32.totalorder %s14, 0
    %p76 = por %p74, %p75
    %p77 = scmp.ne.s32.totalorder %s69, %s71
    %p78 = scmp.eq.s32.totalorder %s19, 1
    %p79 = por %p77, %p78
    %p80 = scmp.ne.s32.totalorder %s71, %s72
    %p81 = scmp.eq.s32.totalorder %s19, 0
    %p82 = por %p80, %p81
    %p83 = scmp.ne.s32.totalorder %s71, %s72
    %p84 = scmp.eq.s32.totalorder %s20, 1
    %p85 = por %p83, %p84
    %p87 = scmp.ne.s32.totalorder %s72, %s86
    %p88 = scmp.eq.s32.totalorder %s20, 0
    %p89 = por %p87, %p88
    %s91 = sadd.s32 %s90, 1
    %p94 = scmp.eq.s32.totalorder %s14, 1
    %p95 = scmp.ne.s32.totalorder %s90, %s92
    %p96 = scmp.eq.s32.totalorder %s14, 0
    %p97 = por %p95, %p96
    %p98 = scmp.ne.s32.totalorder %s90, %s92
    %p99 = scmp.eq.s32.totalorder %s19, 1
    %p100 = por %p98, %p99
    %p101 = scmp.ne.s32.totalorder %s92, %s93
    %p102 = scmp.eq.s32.totalorder %s19, 0
    %p103 = por %p101, %p102
    %p104 = scmp.ne.s32.totalorder %s92, %s93
    %p105 = scmp.eq.s32.totalorder %s20, 1
    %p106 = por %p104, %p105
    %p108 = scmp.ne.s32.totalorder %s93, %s107
    %p109 = scmp.eq.s32.totalorder %s20, 0
    %p110 = por %p108, %p109
    %s112 = sadd.s32 %s111, 1
    %p115 = scmp.eq.s32.totalorder %s14, 1
    %p116 = scmp.ne.s32.totalorder %s111, %s113
    %p117 = scmp.eq.s32.totalorder %s14, 0
    %p118 = por %p116, %p117
    %p119 = scmp.ne.s32.totalorder %s111, %s113
    %p120 = scmp.eq.s32.totalorder %s19, 1
    %p121 = por %p119, %p120
    %p122 = scmp.ne.s32.totalorder %s113, %s114
    %p123 = scmp.eq.s32.totalorder %s19, 0
    %p124 = por %p122, %p123
    %p125 = scmp.ne.s32.totalorder %s113, %s114
    %p126 = scmp.eq.s32.totalorder %s20, 1
    %p127 = por %p125, %p126
    %p129 = scmp.ne.s32.totalorder %s114, %s128
    %p130 = scmp.eq.s32.totalorder %s20, 0
    %p131 = por %p129, %p130
    %s132 = ssub.s32 %s14, %s21
    %p133 = scmp.eq.s32.totalorder %s132, 0
    %s135 = sadd.s32 %s134, 1
    %s136 = scalar_select %p133, %s134, %s135
    %p139 = pneg %p133
    %p140 = scmp.eq.s32.totalorder %s14, 1
    %p141 = por %p139, %p140
    %p142 = scmp.ne.s32.totalorder %s134, %s137
    %p143 = scmp.eq.s32.totalorder %s14, 0
    %p144 = por %p142, %p143
    %p145 = scmp.ne.s32.totalorder %s134, %s137
    %p146 = scmp.eq.s32.totalorder %s19, 1
    %p147 = por %p145, %p146
    %p148 = scmp.ne.s32.totalorder %s137, %s138
    %p149 = scmp.eq.s32.totalorder %s19, 0
    %p150 = por %p148, %p149
    %p151 = scmp.ne.s32.totalorder %s137, %s138
    %p152 = scmp.eq.s32.totalorder %s20, 1
    %p153 = por %p151, %p152
    %p155 = scmp.ne.s32.totalorder %s138, %s154
    %p156 = scmp.eq.s32.totalorder %s20, 0
    %p157 = por %p155, %p156
    %s158 = ssub.s32 %s14, %s21
    %p159 = scmp.eq.s32.totalorder %s158, 0
    %s161 = sadd.s32 %s160, 1
    %s162 = scalar_select %p159, %s160, %s161
    %p165 = pneg %p159
    %p166 = scmp.eq.s32.totalorder %s14, 1
    %p167 = por %p165, %p166
    %p168 = scmp.ne.s32.totalorder %s160, %s163
    %p169 = scmp.eq.s32.totalorder %s14, 0
    %p170 = por %p168, %p169
    %p171 = scmp.ne.s32.totalorder %s160, %s163
    %p172 = scmp.eq.s32.totalorder %s19, 1
    %p173 = por %p171, %p172
    %p174 = scmp.ne.s32.totalorder %s163, %s164
    %p175 = scmp.eq.s32.totalorder %s19, 0
    %p176 = por %p174, %p175
    %p177 = scmp.ne.s32.totalorder %s163, %s164
    %p178 = scmp.eq.s32.totalorder %s20, 1
    %p179 = por %p177, %p178
    %p181 = scmp.ne.s32.totalorder %s164, %s180
    %p182 = scmp.eq.s32.totalorder %s20, 0
    %p183 = por %p181, %p182
    %s184 = ssub.s32 %s14, %s21
    %p185 = scmp.eq.s32.totalorder %s184, 0
    %s187 = sadd.s32 %s186, 1
    %s188 = scalar_select %p185, %s186, %s187
    %p191 = pneg %p185
    %p192 = scmp.eq.s32.totalorder %s14, 1
    %p193 = por %p191, %p192
    %p194 = scmp.ne.s32.totalorder %s186, %s189
    %p195 = scmp.eq.s32.totalorder %s14, 0
    %p196 = por %p194, %p195
    %p197 = scmp.ne.s32.totalorder %s186, %s189
    %p198 = scmp.eq.s32.totalorder %s19, 1
    %p199 = por %p197, %p198
    %p200 = scmp.ne.s32.totalorder %s189, %s190
    %p201 = scmp.eq.s32.totalorder %s19, 0
    %p202 = por %p200, %p201
    %p203 = scmp.ne.s32.totalorder %s189, %s190
    %p204 = scmp.eq.s32.totalorder %s20, 1
    %p205 = por %p203, %p204
    %p207 = scmp.ne.s32.totalorder %s190, %s206
    %p208 = scmp.eq.s32.totalorder %s20, 0
    %p209 = por %p207, %p208
    %p210 = scmp.le.s32.totalorder 1, %s14
    %p211 = scmp.lt.s32.totalorder %s14, 3
    %p212 = pnand %p210, %p211
    %p213 = pneg %p212
    // Predicated region
    $region9: #{densenet_forward.18} parent=5 // pred_check
      _
    $region10: #{densenet_forward.18} parent=5 // pred_check_branch
      %215 = sbr.rel (%p212) target = $region12
    $region11: #{densenet_forward.18} parent=5 // pred_region
      %s216 = ssub.s32 %s14, 1
      // Predicated region
      $region13: #{densenet_forward.18} parent=11 // pred_check
        %p217 = pneg %p61
      $region14: #{densenet_forward.18} parent=11 // pred_check_branch
        %219 = sbr.rel (%p217) target = $region16
      $region15: #{densenet_forward.18} parent=11 // pred_region
        _
      $region16: #{densenet_forward.18} parent=11 // pred_fallthru
        _
      // Predicated region
      $region17: #{densenet_forward.18} parent=11 // pred_check
        %p220 = pneg %p82
      $region18: #{densenet_forward.18} parent=11 // pred_check_branch
        %222 = sbr.rel (%p220) target = $region20
      $region19: #{densenet_forward.18} parent=11 // pred_region
        _
      $region20: #{densenet_forward.18} parent=11 // pred_fallthru
        _
      // Predicated region
      $region21: #{densenet_forward.18} parent=11 // pred_check
        %p223 = pneg %p103
      $region22: #{densenet_forward.18} parent=11 // pred_check_branch
        %225 = sbr.rel (%p223) target = $region24
      $region23: #{densenet_forward.18} parent=11 // pred_region
        _
      $region24: #{densenet_forward.18} parent=11 // pred_fallthru
        _
      // Predicated region
      $region25: #{densenet_forward.18} parent=11 // pred_check
        %p226 = pneg %p124
      $region26: #{densenet_forward.18} parent=11 // pred_check_branch
        %228 = sbr.rel (%p226) target = $region28
      $region27: #{densenet_forward.18} parent=11 // pred_region
        _
      $region28: #{densenet_forward.18} parent=11 // pred_fallthru
        _
    $region12: #{densenet_forward.18} parent=5 // pred_fallthru
      _
    %p229 = scmp.lt.s32.totalorder %s14, 2
    // Predicated region
    $region29: #{densenet_forward.18} parent=5 // pred_check
      %p230 = pneg %p229
    $region30: #{densenet_forward.18} parent=5 // pred_check_branch
      %232 = sbr.rel (%p230) target = $region32
    $region31: #{densenet_forward.18} parent=5 // pred_region
      // Predicated region
      $region33: #{densenet_forward.18} parent=31 // pred_check
        %p233 = pneg %p34
      $region34: #{densenet_forward.18} parent=31 // pred_check_branch
        %235 = sbr.rel (%p233) target = $region36
      $region35: #{densenet_forward.18} parent=31 // pred_region
        %p236 = scmp.lt.s32.totalorder %s14, 1
        %s237 = scalar_select %p236, %s14, 1
        %s238 = smul.addr %s237, 13
        %s239 = smul.addr %s238, 8
        %s240 = scalar_lea.vmem %s0, %s239
      $region36: #{densenet_forward.18} parent=31 // pred_fallthru
        _
    $region32: #{densenet_forward.18} parent=5 // pred_fallthru
      _
    %p241 = scmp.le.s32.totalorder 1, %s14
    %p242 = scmp.lt.s32.totalorder %s14, 3
    %p243 = pnand %p241, %p242
    %p244 = pneg %p243
    // Predicated region
    $region37: #{densenet_forward.18} parent=5 // pred_check
      _
    $region38: #{densenet_forward.18} parent=5 // pred_check_branch
      %246 = sbr.rel (%p243) target = $region40
    $region39: #{densenet_forward.18} parent=5 // pred_region
      %s247 = ssub.s32 %s14, 1
      %p248 = scmp.lt.s32.totalorder %s19, 1
      %s249 = scalar_select %p248, %s19, 1
      %s250 = smul.addr %s249, 13
      %s251 = smul.addr %s250, 8
      %s252 = scalar_lea.vmem %s0, %s251
      %p253 = pneg %p40
      %p254 = pneg %p37
      %p255 = pneg %p61
      %p256 = pneg %p58
      %p257 = pneg %p82
      %p258 = pneg %p79
      %p259 = pneg %p103
      %p260 = pneg %p100
      %p261 = pneg %p124
      %p262 = pneg %p121
      %p263 = pneg %p150
      %p264 = pneg %p147
      %p265 = scmp.lt.s32.totalorder %s19, 1
      %s266 = scalar_select %p265, %s19, 1
      %s267 = smul.addr %s266, 13
      %s268 = smul.addr %s267, 8
      %s269 = scalar_lea.vmem %s5, %s268
      %p270 = pneg %p176
      %p271 = pneg %p173
      %p272 = scmp.lt.s32.totalorder %s19, 1
      %s273 = scalar_select %p272, %s19, 1
      %s274 = scalar_lea.vmem %s6, %s273
      %p275 = pneg %p202
      %p276 = pneg %p199
      %p277 = scmp.lt.s32.totalorder %s19, 1
      %s278 = scalar_select %p277, %s19, 1
      %s279 = scalar_lea.vmem %s7, %s278
      %p280 = scmp.lt.s32.totalorder %s19, 1
      %s281 = scalar_select %p280, %s19, 1
      %s282 = smul.addr %s281, 13
      %s283 = smul.addr %s282, 8
      %s284 = scalar_lea.vmem %s0, %s283
      %p285 = scmp.lt.s32.totalorder %s19, 1
      %s286 = scalar_select %p285, %s19, 1
      %s287 = smul.addr %s286, 13
      %s288 = smul.addr %s287, 8
      %s289 = scalar_lea.vmem %s5, %s288
      %p290 = scmp.lt.s32.totalorder %s19, 1
      %s291 = scalar_select %p290, %s19, 1
      %s292 = scalar_lea.vmem %s6, %s291
      %p293 = scmp.lt.s32.totalorder %s19, 1
      %s294 = scalar_select %p293, %s19, 1
      %s295 = scalar_lea.vmem %s7, %s294
      %v297 = vld [vmem:[%s284] sm:$0xff]
      %v298 = vld [vmem:[%s284 + $0x8] sm:$0xff]
      %v299 = vld [vmem:[%s284 + $0x10] sm:$0xff]
      %v300 = vld [vmem:[%s284 + $0x18] sm:$0xff]
      %v301 = vld [vmem:[%s284 + $0x20] sm:$0xff]
      %v302 = vld [vmem:[%s284 + $0x28] sm:$0xff]
      %v303 = vld [vmem:[%s284 + $0x30] sm:$0xff]
      %v304 = vld [vmem:[%s284 + $0x38] sm:$0xff]
      %v305 = vld [vmem:[%s284 + $0x40] sm:$0xff]
      %v306 = vld [vmem:[%s284 + $0x48] sm:$0xff]
      %v307 = vld [vmem:[%s284 + $0x50] sm:$0xff]
      %v308 = vld [vmem:[%s284 + $0x58] sm:$0xff]
      %v309 = vld [vmem:[%s284 + $0x60] sm:$0xf]
      %v310 = vld [vmem:[%s2] sm:$0x1]
      %v312 = vlaneseq
      %v313 = vshrl.u32 %v312, 7
      %v314 = vsub.s32 0, %v313
      %v315 = vrot.slane %v310, %v314
      %v317 = vmul.f32 %v297, %v315
      %v318 = vmul.f32 %v298, %v315
      %v319 = vmul.f32 %v299, %v315
      %v320 = vmul.f32 %v300, %v315
      %v321 = vmul.f32 %v301, %v315
      %v322 = vmul.f32 %v302, %v315
      %v323 = vmul.f32 %v303, %v315
      %v324 = vmul.f32 %v304, %v315
      %v325 = vmul.f32 %v305, %v315
      %v326 = vmul.f32 %v306, %v315
      %v327 = vmul.f32 %v307, %v315
      %v328 = vmul.f32 %v308, %v315
      %v329 = vmul.f32 %v309, %v315
      %v330 = vld [vmem:[%s3] sm:$0x1]
      %v332 = vlaneseq
      %v333 = vshrl.u32 %v332, 7
      %v334 = vsub.s32 0, %v333
      %v335 = vrot.slane %v330, %v334
      %v337 = vadd.f32 %v317, %v335
      %v338 = vadd.f32 %v318, %v335
      %v339 = vadd.f32 %v319, %v335
      %v340 = vadd.f32 %v320, %v335
      %v341 = vadd.f32 %v321, %v335
      %v342 = vadd.f32 %v322, %v335
      %v343 = vadd.f32 %v323, %v335
      %v344 = vadd.f32 %v324, %v335
      %v345 = vadd.f32 %v325, %v335
      %v346 = vadd.f32 %v326, %v335
      %v347 = vadd.f32 %v327, %v335
      %v348 = vadd.f32 %v328, %v335
      %v349 = vadd.f32 %v329, %v335
      %v350 = vmax.f32 %v337, 0.0
      %v351 = vmax.f32 %v338, 0.0
      %v352 = vmax.f32 %v339, 0.0
      %v353 = vmax.f32 %v340, 0.0
      %v354 = vmax.f32 %v341, 0.0
      %v355 = vmax.f32 %v342, 0.0
      %v356 = vmax.f32 %v343, 0.0
      %v357 = vmax.f32 %v344, 0.0
      %v358 = vmax.f32 %v345, 0.0
      %v359 = vmax.f32 %v346, 0.0
      %v360 = vmax.f32 %v347, 0.0
      %v361 = vmax.f32 %v348, 0.0
      %v362 = vmax.f32 %v349, 0.0
      %v363 = vld [vmem:[%s1] sm:$0xff]
      %v364 = vld [vmem:[%s1 + $0x8] sm:$0xff]
      %v365 = vld [vmem:[%s1 + $0x10] sm:$0xff]
      %v366 = vld [vmem:[%s1 + $0x18] sm:$0xff]
      %v367 = vld [vmem:[%s1 + $0x20] sm:$0xff]
      %v368 = vld [vmem:[%s1 + $0x28] sm:$0xff]
      %v369 = vld [vmem:[%s1 + $0x30] sm:$0xff]
      %v370 = vld [vmem:[%s1 + $0x38] sm:$0xff]
      %v371 = vld [vmem:[%s1 + $0x40] sm:$0xff]
      %v372 = vld [vmem:[%s1 + $0x48] sm:$0xff]
      %v373 = vld [vmem:[%s1 + $0x50] sm:$0xff]
      %v374 = vld [vmem:[%s1 + $0x58] sm:$0xff]
      %v375 = vld [vmem:[%s1 + $0x60] sm:$0xf]
      %377 = vset.pattern.permute.xlu0 0
      %378 = vperm.xlu0 %377, %v363
      %v379 = vpop.permute.xlu0 %378
      %382 = vset.pattern.permute.xlu0 0
      %383 = vperm.xlu0 %382, %v364
      %v384 = vpop.permute.xlu0 %383
      %387 = vset.pattern.permute.xlu0 0
      %388 = vperm.xlu0 %387, %v365
      %v389 = vpop.permute.xlu0 %388
      %392 = vset.pattern.permute.xlu0 0
      %393 = vperm.xlu0 %392, %v366
      %v394 = vpop.permute.xlu0 %393
      %397 = vset.pattern.permute.xlu0 0
      %398 = vperm.xlu0 %397, %v367
      %v399 = vpop.permute.xlu0 %398
      %402 = vset.pattern.permute.xlu0 0
      %403 = vperm.xlu0 %402, %v368
      %v404 = vpop.permute.xlu0 %403
      %407 = vset.pattern.permute.xlu0 0
      %408 = vperm.xlu0 %407, %v369
      %v409 = vpop.permute.xlu0 %408
      %412 = vset.pattern.permute.xlu0 0
      %413 = vperm.xlu0 %412, %v370
      %v414 = vpop.permute.xlu0 %413
      %417 = vset.pattern.permute.xlu0 0
      %418 = vperm.xlu0 %417, %v371
      %v419 = vpop.permute.xlu0 %418
      %422 = vset.pattern.permute.xlu0 0
      %423 = vperm.xlu0 %422, %v372
      %v424 = vpop.permute.xlu0 %423
      %427 = vset.pattern.permute.xlu0 0
      %428 = vperm.xlu0 %427, %v373
      %v429 = vpop.permute.xlu0 %428
      %432 = vset.pattern.permute.xlu0 0
      %433 = vperm.xlu0 %432, %v374
      %v434 = vpop.permute.xlu0 %433
      %437 = vset.pattern.permute.xlu0 0
      %438 = vperm.xlu0 %437, %v375
      %v439 = vpop.permute.xlu0 %438
      %v441 = vmul.f32 %v350, %v379
      %v442 = vmul.f32 %v351, %v384
      %v443 = vmul.f32 %v352, %v389
      %v444 = vmul.f32 %v353, %v394
      %v445 = vmul.f32 %v354, %v399
      %v446 = vmul.f32 %v355, %v404
      %v447 = vmul.f32 %v356, %v409
      %v448 = vmul.f32 %v357, %v414
      %v449 = vmul.f32 %v358, %v419
      %v450 = vmul.f32 %v359, %v424
      %v451 = vmul.f32 %v360, %v429
      %v452 = vmul.f32 %v361, %v434
      %v453 = vmul.f32 %v362, %v439
      %vm454 = vcmask 261120
      %455 = vst.msk [vmem:[#allocation2] sm:$0xff] %vm454, 0.0
      %456 = vst.msk [vmem:[#allocation2 + $0x8] sm:$0xff] %vm454, 0.0
      %457 = vst.msk [vmem:[#allocation2 + $0x10] sm:$0xff] %vm454, 0.0
      %458 = vst.msk [vmem:[#allocation2 + $0x18] sm:$0xff] %vm454, 0.0
      %459 = vst.msk [vmem:[#allocation2 + $0x20] sm:$0xff] %vm454, 0.0
      %460 = vst.msk [vmem:[#allocation2 + $0x28] sm:$0xff] %vm454, 0.0
      %461 = vst.msk [vmem:[#allocation2 + $0x30] sm:$0xff] %vm454, 0.0
      %462 = vst.msk [vmem:[#allocation2 + $0x38] sm:$0xff] %vm454, 0.0
      %463 = vst.msk [vmem:[#allocation2 + $0x40] sm:$0xff] %vm454, 0.0
      %464 = vst.msk [vmem:[#allocation2 + $0x48] sm:$0xff] %vm454, 0.0
      %465 = vst.msk [vmem:[#allocation2 + $0x50] sm:$0xff] %vm454, 0.0
      %466 = vst.msk [vmem:[#allocation2 + $0x58] sm:$0xff] %vm454, 0.0
      %467 = vst.msk [vmem:[#allocation2 + $0x60] sm:$0xff] %vm454, 0.0
      %468 = vst.msk [vmem:[#allocation2 + $0x68] sm:$0xff] %vm454, 0.0
      %469 = vst.msk [vmem:[#allocation2 + $0x70] sm:$0xff] %vm454, 0.0
      %vm470 = vcmask 254976
      %471 = vst.msk [vmem:[#allocation2 + $0x78] sm:$0x3] %vm470, 0.0
      %472 = vst.msk [vmem:[#allocation2 + $0xb] sm:$0xff] %vm454, %v441
      %473 = vst.msk [vmem:[#allocation2 + $0x13] sm:$0xff] %vm454, %v442
      %474 = vst.msk [vmem:[#allocation2 + $0x1b] sm:$0xff] %vm454, %v443
      %475 = vst.msk [vmem:[#allocation2 + $0x23] sm:$0xff] %vm454, %v444
      %476 = vst.msk [vmem:[#allocation2 + $0x2b] sm:$0xff] %vm454, %v445
      %477 = vst.msk [vmem:[#allocation2 + $0x33] sm:$0xff] %vm454, %v446
      %478 = vst.msk [vmem:[#allocation2 + $0x3b] sm:$0xff] %vm454, %v447
      %479 = vst.msk [vmem:[#allocation2 + $0x43] sm:$0xff] %vm454, %v448
      %480 = vst.msk [vmem:[#allocation2 + $0x4b] sm:$0xff] %vm454, %v449
      %481 = vst.msk [vmem:[#allocation2 + $0x53] sm:$0xff] %vm454, %v450
      %482 = vst.msk [vmem:[#allocation2 + $0x5b] sm:$0xff] %vm454, %v451
      %483 = vst.msk [vmem:[#allocation2 + $0x63] sm:$0xff] %vm454, %v452
      %vm484 = vcmask 257024
      %485 = vst.msk [vmem:[#allocation2 + $0x6b] sm:$0xf] %vm484, %v453
      %v486 = vld [vmem:[#allocation2] sm:$0xff]
      %v487 = vld [vmem:[#allocation2 + $0x8] sm:$0xff]
      %v488 = vld [vmem:[#allocation2 + $0x10] sm:$0xff]
      %v489 = vld [vmem:[#allocation2 + $0x18] sm:$0xff]
      %v490 = vld [vmem:[#allocation2 + $0x20] sm:$0xff]
      %v491 = vld [vmem:[#allocation2 + $0x28] sm:$0xff]
      %v492 = vld [vmem:[#allocation2 + $0x30] sm:$0xff]
      %v493 = vld [vmem:[#allocation2 + $0x38] sm:$0xff]
      %v494 = vld [vmem:[#allocation2 + $0x40] sm:$0xff]
      %v495 = vld [vmem:[#allocation2 + $0x48] sm:$0xff]
      %v496 = vld [vmem:[#allocation2 + $0x50] sm:$0xff]
      %v497 = vld [vmem:[#allocation2 + $0x58] sm:$0xff]
      %v498 = vld [vmem:[#allocation2 + $0x60] sm:$0xf]
      %v499 = vpack.c.bf16 %v487, %v486
      %v500 = vpack.c.bf16 %v489, %v488
      %v501 = vpack.c.bf16 %v491, %v490
      %v502 = vpack.c.bf16 %v493, %v492
      %v503 = vpack.c.bf16 %v495, %v494
      %v504 = vpack.c.bf16 %v497, %v496
      %v505 = vpack.c.bf16 %v498, %v498
      %v506 = vld [vmem:[%s4] sm:$0xf]
      %v507 = vld [vmem:[%s4 + $0x4] sm:$0xf]
      %v508 = vld [vmem:[%s4 + $0x8] sm:$0xf]
      %v509 = vld [vmem:[%s4 + $0xc] sm:$0xf]
      %v510 = vld [vmem:[#allocation2 + $0x1] sm:$0xff]
      %v511 = vld [vmem:[#allocation2 + $0x9] sm:$0xff]
      %v512 = vld [vmem:[#allocation2 + $0x11] sm:$0xff]
      %v513 = vld [vmem:[#allocation2 + $0x19] sm:$0xff]
      %v514 = vld [vmem:[#allocation2 + $0x21] sm:$0xff]
      %v515 = vld [vmem:[#allocation2 + $0x29] sm:$0xff]
      %v516 = vld [vmem:[#allocation2 + $0x31] sm:$0xff]
      %v517 = vld [vmem:[#allocation2 + $0x39] sm:$0xff]
      %v518 = vld [vmem:[#allocation2 + $0x41] sm:$0xff]
      %v519 = vld [vmem:[#allocation2 + $0x49] sm:$0xff]
      %v520 = vld [vmem:[#allocation2 + $0x51] sm:$0xff]
      %v521 = vld [vmem:[#allocation2 + $0x59] sm:$0xff]
      %v522 = vld [vmem:[#allocation2 + $0x61] sm:$0xf]
      %v523 = vpack.c.bf16 %v511, %v510
      %v524 = vpack.c.bf16 %v513, %v512
      %v525 = vpack.c.bf16 %v515, %v514
      %v526 = vpack.c.bf16 %v517, %v516
      %v527 = vpack.c.bf16 %v519, %v518
      %v528 = vpack.c.bf16 %v521, %v520
      %v529 = vpack.c.bf16 %v522, %v522
      %s530 = scalar_lea.vmem %s4, 16
      %v531 = vld [vmem:[%s530] sm:$0xf]
      %v532 = vld [vmem:[%s530 + $0x4] sm:$0xf]
      %v533 = vld [vmem:[%s530 + $0x8] sm:$0xf]
      %v534 = vld [vmem:[%s530 + $0xc] sm:$0xf]
      %v539 = vunpack.c.l.b16 %v531
      %v540 = vunpack.c.l.b16 %v532
      %v541 = vunpack.c.l.b16 %v533
      %v542 = vunpack.c.l.b16 %v534
      %v543 = vpack.c.b16 %v540, %v539
      %v544 = vpack.c.b16 %v542, %v541
      %v548 = vsel %vm454, %v523, 0
      %v551 = vsel %vm454, %v524, 0
      %v554 = vsel %vm454, %v525, 0
      %v557 = vsel %vm454, %v526, 0
      %v560 = vsel %vm454, %v527, 0
      %v563 = vsel %vm454, %v528, 0
      %v566 = vsel %vm454, %v529, 0
      %568 = vmatprep.subr.bf16.mxu0 0
      %569 = vmatpush1.bf16.msra.mxu0 %v543
      %570 = vmatprep.subr.bf16.mxu0 0
      %571 = vmatpush1.bf16.msra.mxu0 %v544
      %572 = vmatprep.subr.bf16.mxu0 0
      %573 = vmatpush1.bf16.msra.mxu0 0
      %574 = vmatprep.subr.bf16.mxu0 0
      %575 = vmatpush1.bf16.msra.mxu0 0
      %576 = vmatprep.subr.bf16.mxu0 0
      %577 = vmatpush1.bf16.msra.mxu0 0
      %578 = vmatprep.subr.bf16.mxu0 0
      %579 = vmatpush1.bf16.msra.mxu0 0
      %580 = vmatprep.subr.bf16.mxu0 0
      %581 = vmatpush1.bf16.msra.mxu0 0
      %582 = vmatprep.subr.bf16.mxu0 0
      %583 = vmatpush1.bf16.msra.mxu0 0
      %584 = vmatprep.subr.bf16.mxu0 0
      %585 = vmatpush1.bf16.msra.mxu0 0
      %586 = vmatprep.subr.bf16.mxu0 0
      %587 = vmatpush1.bf16.msra.mxu0 0
      %588 = vmatprep.subr.bf16.mxu0 0
      %589 = vmatpush1.bf16.msra.mxu0 0
      %590 = vmatprep.subr.bf16.mxu0 0
      %591 = vmatpush1.bf16.msra.mxu0 0
      %592 = vmatprep.subr.bf16.mxu0 0
      %593 = vmatpush1.bf16.msra.mxu0 0
      %594 = vmatprep.subr.bf16.mxu0 0
      %595 = vmatpush1.bf16.msra.mxu0 0
      %596 = vmatprep.subr.bf16.mxu0 0
      %597 = vmatpush1.bf16.msra.mxu0 0
      %598 = vmatprep.subr.bf16.mxu0 0
      %599 = vmatpush1.bf16.msra.mxu0 0
      %600 = vmatprep.mubr.bf16.mxu0 0
      %601 = vmatmul.mubr.bf16.gmra.mrb[0].mxu0 %v548
      %v602 = vpop.f32.mrb[0].mxu0
      %v603 = vadd.f32 0.0, %v602
      %v604 = vpop.f32.mrb[0].mxu0
      %v605 = vpop.f32.mrb[0].mxu0
      %v606 = vadd.f32 0.0, %v605
      %v607 = vpop.f32.mrb[0].mxu0
      %608 = vmatprep.mubr.bf16.mxu0 0
      %609 = vmatmul.mubr.bf16.gmra.mrb[0].mxu0 %v551
      %v610 = vpop.f32.mrb[0].mxu0
      %v611 = vadd.f32 0.0, %v610
      %v612 = vpop.f32.mrb[0].mxu0
      %v613 = vpop.f32.mrb[0].mxu0
      %v614 = vadd.f32 0.0, %v613
      %v615 = vpop.f32.mrb[0].mxu0
      %616 = vmatprep.mubr.bf16.mxu0 0
      %617 = vmatmul.mubr.bf16.gmra.mrb[0].mxu0 %v554
      %v618 = vpop.f32.mrb[0].mxu0
      %v619 = vadd.f32 0.0, %v618
      %v620 = vpop.f32.mrb[0].mxu0
      %v621 = vpop.f32.mrb[0].mxu0
      %v622 = vadd.f32 0.0, %v621
      %v623 = vpop.f32.mrb[0].mxu0
      %624 = vmatprep.mubr.bf16.mxu0 0
      %625 = vmatmul.mubr.bf16.gmra.mrb[0].mxu0 %v557
      %v626 = vpop.f32.mrb[0].mxu0
      %v627 = vadd.f32 0.0, %v626
      %v628 = vpop.f32.mrb[0].mxu0
      %v629 = vpop.f32.mrb[0].mxu0
      %v630 = vadd.f32 0.0, %v629
      %v631 = vpop.f32.mrb[0].mxu0
      %632 = vmatprep.mubr.bf16.mxu0 0
      %633 = vmatmul.mubr.bf16.gmra.mrb[0].mxu0 %v560
      %v634 = vpop.f32.mrb[0].mxu0
      %v635 = vadd.f32 0.0, %v634
      %v636 = vpop.f32.mrb[0].mxu0
      %v637 = vpop.f32.mrb[0].mxu0
      %v638 = vadd.f32 0.0, %v637
      %v639 = vpop.f32.mrb[0].mxu0
      %640 = vmatprep.mubr.bf16.mxu0 0
      %641 = vmatmul.mubr.bf16.gmra.mrb[0].mxu0 %v563
      %v642 = vpop.f32.mrb[0].mxu0
      %v643 = vadd.f32 0.0, %v642
      %v644 = vpop.f32.mrb[0].mxu0
      %v645 = vpop.f32.mrb[0].mxu0
      %v646 = vadd.f32 0.0, %v645
      %v647 = vpop.f32.mrb[0].mxu0
      %648 = vmatprep.mubr.bf16.mxu0 0
      %649 = vmatmul.mubr.bf16.gmra.mrb[0].mxu0 %v566
      %v650 = vpop.f32.mrb[0].mxu0
      %v651 = vadd.f32 0.0, %v650
      %v652 = vpop.f32.mrb[0].mxu0
      %v653 = vpop.f32.mrb[0].mxu0
      %v654 = vpop.f32.mrb[0].mxu0
      %655 = vdwg.mxu0
      %v660 = vunpack.c.l.b16 %v506
      %v661 = vunpack.c.l.b16 %v507
      %v662 = vunpack.c.l.b16 %v508
      %v663 = vunpack.c.l.b16 %v509
      %v664 = vpack.c.b16 %v661, %v660
      %v665 = vpack.c.b16 %v663, %v662
      %v669 = vsel %vm454, %v499, 0
      %v672 = vsel %vm454, %v500, 0
      %v675 = vsel %vm454, %v501, 0
      %v678 = vsel %vm454, %v502, 0
      %v681 = vsel %vm454, %v503, 0
      %v684 = vsel %vm454, %v504, 0
      %v687 = vsel %vm454, %v505, 0
      %689 = vmatprep.subr.bf16.mxu0 0
      %690 = vmatpush1.bf16.msra.mxu0 %v664
      %691 = vmatprep.subr.bf16.mxu0 0
      %692 = vmatpush1.bf16.msra.mxu0 %v665
      %693 = vmatprep.subr.bf16.mxu0 0
      %694 = vmatpush1.bf16.msra.mxu0 0
      %695 = vmatprep.subr.bf16.mxu0 0
      %696 = vmatpush1.bf16.msra.mxu0 0
      %697 = vmatprep.subr.bf16.mxu0 0
      %698 = vmatpush1.bf16.msra.mxu0 0
      %699 = vmatprep.subr.bf16.mxu0 0
      %700 = vmatpush1.bf16.msra.mxu0 0
      %701 = vmatprep.subr.bf16.mxu0 0
      %702 = vmatpush1.bf16.msra.mxu0 0
      %703 = vmatprep.subr.bf16.mxu0 0
      %704 = vmatpush1.bf16.msra.mxu0 0
      %705 = vmatprep.subr.bf16.mxu0 0
      %706 = vmatpush1.bf16.msra.mxu0 0
      %707 = vmatprep.subr.bf16.mxu0 0
      %708 = vmatpush1.bf16.msra.mxu0 0
      %709 = vmatprep.subr.bf16.mxu0 0
      %710 = vmatpush1.bf16.msra.mxu0 0
      %711 = vmatprep.subr.bf16.mxu0 0
      %712 = vmatpush1.bf16.msra.mxu0 0
      %713 = vmatprep.subr.bf16.mxu0 0
      %714 = vmatpush1.bf16.msra.mxu0 0
      %715 = vmatprep.subr.bf16.mxu0 0
      %716 = vmatpush1.bf16.msra.mxu0 0
      %717 = vmatprep.subr.bf16.mxu0 0
      %718 = vmatpush1.bf16.msra.mxu0 0
      %719 = vmatprep.subr.bf16.mxu0 0
      %720 = vmatpush1.bf16.msra.mxu0 0
      %721 = vmatprep.mubr.bf16.mxu0 0
      %722 = vmatmul.mubr.bf16.gmra.mrb[0].mxu0 %v669
      %v723 = vpop.f32.mrb[0].mxu0
      %v724 = vadd.f32 %v603, %v723
      %v725 = vpop.f32.mrb[0].mxu0
      %v726 = vpop.f32.mrb[0].mxu0
      %v727 = vadd.f32 %v606, %v726
      %v728 = vpop.f32.mrb[0].mxu0
      %729 = vmatprep.mubr.bf16.mxu0 0
      %730 = vmatmul.mubr.bf16.gmra.mrb[0].mxu0 %v672
      %v731 = vpop.f32.mrb[0].mxu0
      %v732 = vadd.f32 %v611, %v731
      %v733 = vpop.f32.mrb[0].mxu0
      %v734 = vpop.f32.mrb[0].mxu0
      %v735 = vadd.f32 %v614, %v734
      %v736 = vpop.f32.mrb[0].mxu0
      %737 = vmatprep.mubr.bf16.mxu0 0
      %738 = vmatmul.mubr.bf16.gmra.mrb[0].mxu0 %v675
      %v739 = vpop.f32.mrb[0].mxu0
      %v740 = vadd.f32 %v619, %v739
      %v741 = vpop.f32.mrb[0].mxu0
      %v742 = vpop.f32.mrb[0].mxu0
      %v743 = vadd.f32 %v622, %v742
      %v744 = vpop.f32.mrb[0].mxu0
      %745 = vmatprep.mubr.bf16.mxu0 0
      %746 = vmatmul.mubr.bf16.gmra.mrb[0].mxu0 %v678
      %v747 = vpop.f32.mrb[0].mxu0
      %v748 = vadd.f32 %v627, %v747
      %v749 = vpop.f32.mrb[0].mxu0
      %v750 = vpop.f32.mrb[0].mxu0
      %v751 = vadd.f32 %v630, %v750
      %v752 = vpop.f32.mrb[0].mxu0
      %753 = vmatprep.mubr.bf16.mxu0 0
      %754 = vmatmul.mubr.bf16.gmra.mrb[0].mxu0 %v681
      %v755 = vpop.f32.mrb[0].mxu0
      %v756 = vadd.f32 %v635, %v755
      %v757 = vpop.f32.mrb[0].mxu0
      %v758 = vpop.f32.mrb[0].mxu0
      %v759 = vadd.f32 %v638, %v758
      %v760 = vpop.f32.mrb[0].mxu0
      %761 = vmatprep.mubr.bf16.mxu0 0
      %762 = vmatmul.mubr.bf16.gmra.mrb[0].mxu0 %v684
      %v763 = vpop.f32.mrb[0].mxu0
      %v764 = vadd.f32 %v643, %v763
      %v765 = vpop.f32.mrb[0].mxu0
      %v766 = vpop.f32.mrb[0].mxu0
      %v767 = vadd.f32 %v646, %v766
      %v768 = vpop.f32.mrb[0].mxu0
      %769 = vmatprep.mubr.bf16.mxu0 0
      %770 = vmatmul.mubr.bf16.gmra.mrb[0].mxu0 %v687
      %v771 = vpop.f32.mrb[0].mxu0
      %v772 = vadd.f32 %v651, %v771
      %v773 = vpop.f32.mrb[0].mxu0
      %v774 = vpop.f32.mrb[0].mxu0
      %v775 = vpop.f32.mrb[0].mxu0
      %776 = vdwg.mxu0
      %v777 = vld [vmem:[#allocation2 + $0x2] sm:$0xff]
      %v778 = vld [vmem:[#allocation2 + $0xa] sm:$0xff]
      %v779 = vld [vmem:[#allocation2 + $0x12] sm:$0xff]
      %v780 = vld [vmem:[#allocation2 + $0x1a] sm:$0xff]
      %v781 = vld [vmem:[#allocation2 + $0x22] sm:$0xff]
      %v782 = vld [vmem:[#allocation2 + $0x2a] sm:$0xff]
      %v783 = vld [vmem:[#allocation2 + $0x32] sm:$0xff]
      %v784 = vld [vmem:[#allocation2 + $0x3a] sm:$0xff]
      %v785 = vld [vmem:[#allocation2 + $0x42] sm:$0xff]
      %v786 = vld [vmem:[#allocation2 + $0x4a] sm:$0xff]
      %v787 = vld [vmem:[#allocation2 + $0x52] sm:$0xff]
      %v788 = vld [vmem:[#allocation2 + $0x5a] sm:$0xff]
      %v789 = vld [vmem:[#allocation2 + $0x62] sm:$0xf]
      %v790 = vpack.c.bf16 %v778, %v777
      %v791 = vpack.c.bf16 %v780, %v779
      %v792 = vpack.c.bf16 %v782, %v781
      %v793 = vpack.c.bf16 %v784, %v783
      %v794 = vpack.c.bf16 %v786, %v785
      %v795 = vpack.c.bf16 %v788, %v787
      %v796 = vpack.c.bf16 %v789, %v789
      %s797 = scalar_lea.vmem %s4, 32
      %v798 = vld [vmem:[%s797] sm:$0xf]
      %v799 = vld [vmem:[%s797 + $0x4] sm:$0xf]
      %v800 = vld [vmem:[%s797 + $0x8] sm:$0xf]
      %v801 = vld [vmem:[%s797 + $0xc] sm:$0xf]
      %v806 = vunpack.c.l.b16 %v798
      %v807 = vunpack.c.l.b16 %v799
      %v808 = vunpack.c.l.b16 %v800
      %v809 = vunpack.c.l.b16 %v801
      %v810 = vpack.c.b16 %v807, %v806
      %v811 = vpack.c.b16 %v809, %v808
      %v815 = vsel %vm454, %v790, 0
      %v818 = vsel %vm454, %v791, 0
      %v821 = vsel %vm454, %v792, 0
      %v824 = vsel %vm454, %v793, 0
      %v827 = vsel %vm454, %v794, 0
      %v830 = vsel %vm454, %v795, 0
      %v833 = vsel %vm454, %v796, 0
      %835 = vmatprep.subr.bf16.mxu0 0
      %836 = vmatpush1.bf16.msra.mxu0 %v810
      %837 = vmatprep.subr.bf16.mxu0 0
      %838 = vmatpush1.bf16.msra.mxu0 %v811
      %839 = vmatprep.subr.bf16.mxu0 0
      %840 = vmatpush1.bf16.msra.mxu0 0
      %841 = vmatprep.subr.bf16.mxu0 0
      %842 = vmatpush1.bf16.msra.mxu0 0
      %843 = vmatprep.subr.bf16.mxu0 0
      %844 = vmatpush1.bf16.msra.mxu0 0
      %845 = vmatprep.subr.bf16.mxu0 0
      %846 = vmatpush1.bf16.msra.mxu0 0
      %847 = vmatprep.subr.bf16.mxu0 0
      %848 = vmatpush1.bf16.msra.mxu0 0
      %849 = vmatprep.subr.bf16.mxu0 0
      %850 = vmatpush1.bf16.msra.mxu0 0
      %851 = vmatprep.subr.bf16.mxu0 0
      %852 = vmatpush1.bf16.msra.mxu0 0
      %853 = vmatprep.subr.bf16.mxu0 0
      %854 = vmatpush1.bf16.msra.mxu0 0
      %855 = vmatprep.subr.bf16.mxu0 0
      %856 = vmatpush1.bf16.msra.mxu0 0
      %857 = vmatprep.subr.bf16.mxu0 0
      %858 = vmatpush1.bf16.msra.mxu0 0
      %859 = vmatprep.subr.bf16.mxu0 0
      %860 = vmatpush1.bf16.msra.mxu0 0
      %861 = vmatprep.subr.bf16.mxu0 0
      %862 = vmatpush1.bf16.msra.mxu0 0
      %863 = vmatprep.subr.bf16.mxu0 0
      %864 = vmatpush1.bf16.msra.mxu0 0
      %865 = vmatprep.subr.bf16.mxu0 0
      %866 = vmatpush1.bf16.msra.mxu0 0
      %867 = vmatprep.mubr.bf16.mxu0 0
      %868 = vmatmul.mubr.bf16.gmra.mrb[0].mxu0 %v815
      %v869 = vpop.f32.mrb[0].mxu0
      %v870 = vadd.f32 0.0, %v869
      %v871 = vpop.f32.mrb[0].mxu0
      %v872 = vpop.f32.mrb[0].mxu0
      %v873 = vadd.f32 0.0, %v872
      %v874 = vpop.f32.mrb[0].mxu0
      %875 = vmatprep.mubr.bf16.mxu0 0
      %876 = vmatmul.mubr.bf16.gmra.mrb[0].mxu0 %v818
      %v877 = vpop.f32.mrb[0].mxu0
      %v878 = vadd.f32 0.0, %v877
      %v879 = vpop.f32.mrb[0].mxu0
      %v880 = vpop.f32.mrb[0].mxu0
      %v881 = vadd.f32 0.0, %v880
      %v882 = vpop.f32.mrb[0].mxu0
      %883 = vmatprep.mubr.bf16.mxu0 0
      %884 = vmatmul.mubr.bf16.gmra.mrb[0].mxu0 %v821
      %v885 = vpop.f32.mrb[0].mxu0
      %v886 = vadd.f32 0.0, %v885
      %v887 = vpop.f32.mrb[0].mxu0
      %v888 = vpop.f32.mrb[0].mxu0
      %v889 = vadd.f32 0.0, %v888
      %v890 = vpop.f32.mrb[0].mxu0
      %891 = vmatprep.mubr.bf16.mxu0 0
      %892 = vmatmul.mubr.bf16.gmra.mrb[0].mxu0 %v824
      %v893 = vpop.f32.mrb[0].mxu0
      %v894 = vadd.f32 0.0, %v893
      %v895 = vpop.f32.mrb[0].mxu0
      %v896 = vpop.f32.mrb[0].mxu0
      %v897 = vadd.f32 0.0, %v896
      %v898 = vpop.f32.mrb[0].mxu0
      %899 = vmatprep.mubr.bf16.mxu0 0
      %900 = vmatmul.mubr.bf16.gmra.mrb[0].mxu0 %v827
      %v901 = vpop.f32.mrb[0].mxu0
      %v902 = vadd.f32 0.0, %v901
      %v903 = vpop.f32.mrb[0].mxu0
      %v904 = vpop.f32.mrb[0].mxu0
      %v905 = vadd.f32 0.0, %v904
      %v906 = vpop.f32.mrb[0].mxu0
      %907 = vmatprep.mubr.bf16.mxu0 0
      %908 = vmatmul.mubr.bf16.gmra.mrb[0].mxu0 %v830
      %v909 = vpop.f32.mrb[0].mxu0
      %v910 = vadd.f32 0.0, %v909
      %v911 = vpop.f32.mrb[0].mxu0
      %v912 = vpop.f32.mrb[0].mxu0
      %v913 = vadd.f32 0.0, %v912
      %v914 = vpop.f32.mrb[0].mxu0
      %915 = vmatprep.mubr.bf16.mxu0 0
      %916 = vmatmul.mubr.bf16.gmra.mrb[0].mxu0 %v833
      %v917 = vpop.f32.mrb[0].mxu0
      %v918 = vadd.f32 0.0, %v917
      %v919 = vpop.f32.mrb[0].mxu0
      %v920 = vpop.f32.mrb[0].mxu0
      %v921 = vpop.f32.mrb[0].mxu0
      %922 = vdwg.mxu0
      %v923 = vadd.f32 %v724, %v870
      %v924 = vadd.f32 %v727, %v873
      %v925 = vadd.f32 %v732, %v878
      %v926 = vadd.f32 %v735, %v881
      %v927 = vadd.f32 %v740, %v886
      %v928 = vadd.f32 %v743, %v889
      %v929 = vadd.f32 %v748, %v894
      %v930 = vadd.f32 %v751, %v897
      %v931 = vadd.f32 %v756, %v902
      %v932 = vadd.f32 %v759, %v905
      %v933 = vadd.f32 %v764, %v910
      %v934 = vadd.f32 %v767, %v913
      %v935 = vadd.f32 %v772, %v918
      %v936 = vld [vmem:[#allocation2 + $0xa] sm:$0xff]
      %v937 = vld [vmem:[#allocation2 + $0x12] sm:$0xff]
      %v938 = vld [vmem:[#allocation2 + $0x1a] sm:$0xff]
      %v939 = vld [vmem:[#allocation2 + $0x22] sm:$0xff]
      %v940 = vld [vmem:[#allocation2 + $0x2a] sm:$0xff]
      %v941 = vld [vmem:[#allocation2 + $0x32] sm:$0xff]
      %v942 = vld [vmem:[#allocation2 + $0x3a] sm:$0xff]
      %v943 = vld [vmem:[#allocation2 + $0x42] sm:$0xff]
      %v944 = vld [vmem:[#allocation2 + $0x4a] sm:$0xff]
      %v945 = vld [vmem:[#allocation2 + $0x52] sm:$0xff]
      %v946 = vld [vmem:[#allocation2 + $0x5a] sm:$0xff]
      %v947 = vld [vmem:[#allocation2 + $0x62] sm:$0xff]
      %v948 = vld [vmem:[#allocation2 + $0x6a] sm:$0xf]
      %v949 = vpack.c.bf16 %v937, %v936
      %v950 = vpack.c.bf16 %v939, %v938
      %v951 = vpack.c.bf16 %v941, %v940
      %v952 = vpack.c.bf16 %v943, %v942
      %v953 = vpack.c.bf16 %v945, %v944
      %v954 = vpack.c.bf16 %v947, %v946
      %v955 = vpack.c.bf16 %v948, %v948
      %s956 = scalar_lea.vmem %s4, 48
      %v957 = vld [vmem:[%s956] sm:$0xf]
      %v958 = vld [vmem:[%s956 + $0x4] sm:$0xf]
      %v959 = vld [vmem:[%s956 + $0x8] sm:$0xf]
      %v960 = vld [vmem:[%s956 + $0xc] sm:$0xf]
      %v965 = vunpack.c.l.b16 %v957
      %v966 = vunpack.c.l.b16 %v958
      %v967 = vunpack.c.l.b16 %v959
      %v968 = vunpack.c.l.b16 %v960
      %v969 = vpack.c.b16 %v966, %v965
      %v970 = vpack.c.b16 %v968, %v967
      %v974 = vsel %vm454, %v949, 0
      %v977 = vsel %vm454, %v950, 0
      %v980 = vsel %vm454, %v951, 0
      %v983 = vsel %vm454, %v952, 0
      %v986 = vsel %vm454, %v953, 0
      %v989 = vsel %vm454, %v954, 0
      %v992 = vsel %vm454, %v955, 0
      %994 = vmatprep.subr.bf16.mxu0 0
      %995 = vmatpush1.bf16.msra.mxu0 %v969
      %996 = vmatprep.subr.bf16.mxu0 0
      %997 = vmatpush1.bf16.msra.mxu0 %v970
      %998 = vmatprep.subr.bf16.mxu0 0
      %999 = vmatpush1.bf16.msra.mxu0 0
      %1000 = vmatprep.subr.bf16.mxu0 0
      %1001 = vmatpush1.bf16.msra.mxu0 0
      %1002 = vmatprep.subr.bf16.mxu0 0
      %1003 = vmatpush1.bf16.msra.mxu0 0
      %1004 = vmatprep.subr.bf16.mxu0 0
      %1005 = vmatpush1.bf16.msra.mxu0 0
      %1006 = vmatprep.subr.bf16.mxu0 0
      %1007 = vmatpush1.bf16.msra.mxu0 0
      %1008 = vmatprep.subr.bf16.mxu0 0
      %1009 = vmatpush1.bf16.msra.mxu0 0
      %1010 = vmatprep.subr.bf16.mxu0 0
      %1011 = vmatpush1.bf16.msra.mxu0 0
      %1012 = vmatprep.subr.bf16.mxu0 0
      %1013 = vmatpush1.bf16.msra.mxu0 0
      %1014 = vmatprep.subr.bf16.mxu0 0
      %1015 = vmatpush1.bf16.msra.mxu0 0
      %1016 = vmatprep.subr.bf16.mxu0 0
      %1017 = vmatpush1.bf16.msra.mxu0 0
      %1018 = vmatprep.subr.bf16.mxu0 0
      %1019 = vmatpush1.bf16.msra.mxu0 0
      %1020 = vmatprep.subr.bf16.mxu0 0
      %1021 = vmatpush1.bf16.msra.mxu0 0
      %1022 = vmatprep.subr.bf16.mxu0 0
      %1023 = vmatpush1.bf16.msra.mxu0 0
      %1024 = vmatprep.subr.bf16.mxu0 0
      %1025 = vmatpush1.bf16.msra.mxu0 0
      %1026 = vmatprep.mubr.bf16.mxu0 0
      %1027 = vmatmul.mubr.bf16.gmra.mrb[0].mxu0 %v974
      %v1028 = vpop.f32.mrb[0].mxu0
      %v1029 = vadd.f32 0.0, %v1028
      %v1030 = vpop.f32.mrb[0].mxu0
      %v1031 = vpop.f32.mrb[0].mxu0
      %v1032 = vadd.f32 0.0, %v1031
      %v1033 = vpop.f32.mrb[0].mxu0
      %1034 = vmatprep.mubr.bf16.mxu0 0
      %1035 = vmatmul.mubr.bf16.gmra.mrb[0].mxu0 %v977
      %v1036 = vpop.f32.mrb[0].mxu0
      %v1037 = vadd.f32 0.0, %v1036
      %v1038 = vpop.f32.mrb[0].mxu0
      %v1039 = vpop.f32.mrb[0].mxu0
      %v1040 = vadd.f32 0.0, %v1039
      %v1041 = vpop.f32.mrb[0].mxu0
      %1042 = vmatprep.mubr.bf16.mxu0 0
      %1043 = vmatmul.mubr.bf16.gmra.mrb[0].mxu0 %v980
      %v1044 = vpop.f32.mrb[0].mxu0
      %v1045 = vadd.f32 0.0, %v1044
      %v1046 = vpop.f32.mrb[0].mxu0
      %v1047 = vpop.f32.mrb[0].mxu0
      %v1048 = vadd.f32 0.0, %v1047
      %v1049 = vpop.f32.mrb[0].mxu0
      %1050 = vmatprep.mubr.bf16.mxu0 0
      %1051 = vmatmul.mubr.bf16.gmra.mrb[0].mxu0 %v983
      %v1052 = vpop.f32.mrb[0].mxu0
      %v1053 = vadd.f32 0.0, %v1052
      %v1054 = vpop.f32.mrb[0].mxu0
      %v1055 = vpop.f32.mrb[0].mxu0
      %v1056 = vadd.f32 0.0, %v1055
      %v1057 = vpop.f32.mrb[0].mxu0
      %1058 = vmatprep.mubr.bf16.mxu0 0
      %1059 = vmatmul.mubr.bf16.gmra.mrb[0].mxu0 %v986
      %v1060 = vpop.f32.mrb[0].mxu0
      %v1061 = vadd.f32 0.0, %v1060
      %v1062 = vpop.f32.mrb[0].mxu0
      %v1063 = vpop.f32.mrb[0].mxu0
      %v1064 = vadd.f32 0.0, %v1063
      %v1065 = vpop.f32.mrb[0].mxu0
      %1066 = vmatprep.mubr.bf16.mxu0 0
      %1067 = vmatmul.mubr.bf16.gmra.mrb[0].mxu0 %v989
      %v1068 = vpop.f32.mrb[0].mxu0
      %v1069 = vadd.f32 0.0, %v1068
      %v1070 = vpop.f32.mrb[0].mxu0
      %v1071 = vpop.f32.mrb[0].mxu0
      %v1072 = vadd.f32 0.0, %v1071
      %v1073 = vpop.f32.mrb[0].mxu0
      %1074 = vmatprep.mubr.bf16.mxu0 0
      %1075 = vmatmul.mubr.bf16.gmra.mrb[0].mxu0 %v992
      %v1076 = vpop.f32.mrb[0].mxu0
      %v1077 = vadd.f32 0.0, %v1076
      %v1078 = vpop.f32.mrb[0].mxu0
      %v1079 = vpop.f32.mrb[0].mxu0
      %v1080 = vpop.f32.mrb[0].mxu0
      %1081 = vdwg.mxu0
      %v1082 = vadd.f32 %v923, %v1029
      %v1083 = vadd.f32 %v924, %v1032
      %v1084 = vadd.f32 %v925, %v1037
      %v1085 = vadd.f32 %v926, %v1040
      %v1086 = vadd.f32 %v927, %v1045
      %v1087 = vadd.f32 %v928, %v1048
      %v1088 = vadd.f32 %v929, %v1053
      %v1089 = vadd.f32 %v930, %v1056
      %v1090 = vadd.f32 %v931, %v1061
      %v1091 = vadd.f32 %v932, %v1064
      %v1092 = vadd.f32 %v933, %v1069
      %v1093 = vadd.f32 %v934, %v1072
      %v1094 = vadd.f32 %v935, %v1077
      %v1095 = vld [vmem:[#allocation2 + $0xb] sm:$0xff]
      %v1096 = vld [vmem:[#allocation2 + $0x13] sm:$0xff]
      %v1097 = vld [vmem:[#allocation2 + $0x1b] sm:$0xff]
      %v1098 = vld [vmem:[#allocation2 + $0x23] sm:$0xff]
      %v1099 = vld [vmem:[#allocation2 + $0x2b] sm:$0xff]
      %v1100 = vld [vmem:[#allocation2 + $0x33] sm:$0xff]
      %v1101 = vld [vmem:[#allocation2 + $0x3b] sm:$0xff]
      %v1102 = vld [vmem:[#allocation2 + $0x43] sm:$0xff]
      %v1103 = vld [vmem:[#allocation2 + $0x4b] sm:$0xff]
      %v1104 = vld [vmem:[#allocation2 + $0x53] sm:$0xff]
      %v1105 = vld [vmem:[#allocation2 + $0x5b] sm:$0xff]
      %v1106 = vld [vmem:[#allocation2 + $0x63] sm:$0xff]
      %v1107 = vld [vmem:[#allocation2 + $0x6b] sm:$0xf]
      %v1108 = vpack.c.bf16 %v1096, %v1095
      %v1109 = vpack.c.bf16 %v1098, %v1097
      %v1110 = vpack.c.bf16 %v1100, %v1099
      %v1111 = vpack.c.bf16 %v1102, %v1101
      %v1112 = vpack.c.bf16 %v1104, %v1103
      %v1113 = vpack.c.bf16 %v1106, %v1105
      %v1114 = vpack.c.bf16 %v1107, %v1107
      %s1115 = scalar_lea.vmem %s4, 64
      %v1116 = vld [vmem:[%s1115] sm:$0xf]
      %v1117 = vld [vmem:[%s1115 + $0x4] sm:$0xf]
      %v1118 = vld [vmem:[%s1115 + $0x8] sm:$0xf]
      %v1119 = vld [vmem:[%s1115 + $0xc] sm:$0xf]
      %v1124 = vunpack.c.l.b16 %v1116
      %v1125 = vunpack.c.l.b16 %v1117
      %v1126 = vunpack.c.l.b16 %v1118
      %v1127 = vunpack.c.l.b16 %v1119
      %v1128 = vpack.c.b16 %v1125, %v1124
      %v1129 = vpack.c.b16 %v1127, %v1126
      %v1133 = vsel %vm454, %v1108, 0
      %v1136 = vsel %vm454, %v1109, 0
      %v1139 = vsel %vm454, %v1110, 0
      %v1142 = vsel %vm454, %v1111, 0
      %v1145 = vsel %vm454, %v1112, 0
      %v1148 = vsel %vm454, %v1113, 0
      %v1151 = vsel %vm454, %v1114, 0
      %1153 = vmatprep.subr.bf16.mxu0 0
      %1154 = vmatpush1.bf16.msra.mxu0 %v1128
      %1155 = vmatprep.subr.bf16.mxu0 0
      %1156 = vmatpush1.bf16.msra.mxu0 %v1129
      %1157 = vmatprep.subr.bf16.mxu0 0
      %1158 = vmatpush1.bf16.msra.mxu0 0
      %1159 = vmatprep.subr.bf16.mxu0 0
      %1160 = vmatpush1.bf16.msra.mxu0 0
      %1161 = vmatprep.subr.bf16.mxu0 0
      %1162 = vmatpush1.bf16.msra.mxu0 0
      %1163 = vmatprep.subr.bf16.mxu0 0
      %1164 = vmatpush1.bf16.msra.mxu0 0
      %1165 = vmatprep.subr.bf16.mxu0 0
      %1166 = vmatpush1.bf16.msra.mxu0 0
      %1167 = vmatprep.subr.bf16.mxu0 0
      %1168 = vmatpush1.bf16.msra.mxu0 0
      %1169 = vmatprep.subr.bf16.mxu0 0
      %1170 = vmatpush1.bf16.msra.mxu0 0
      %1171 = vmatprep.subr.bf16.mxu0 0
      %1172 = vmatpush1.bf16.msra.mxu0 0
      %1173 = vmatprep.subr.bf16.mxu0 0
      %1174 = vmatpush1.bf16.msra.mxu0 0
      %1175 = vmatprep.subr.bf16.mxu0 0
      %1176 = vmatpush1.bf16.msra.mxu0 0
      %1177 = vmatprep.subr.bf16.mxu0 0
      %1178 = vmatpush1.bf16.msra.mxu0 0
      %1179 = vmatprep.subr.bf16.mxu0 0
      %1180 = vmatpush1.bf16.msra.mxu0 0
      %1181 = vmatprep.subr.bf16.mxu0 0
      %1182 = vmatpush1.bf16.msra.mxu0 0
      %1183 = vmatprep.subr.bf16.mxu0 0
      %1184 = vmatpush1.bf16.msra.mxu0 0
      %1185 = vmatprep.mubr.bf16.mxu0 0
      %1186 = vmatmul.mubr.bf16.gmra.mrb[0].mxu0 %v1133
      %v1187 = vpop.f32.mrb[0].mxu0
      %v1188 = vadd.f32 0.0, %v1187
      %v1189 = vpop.f32.mrb[0].mxu0
      %v1190 = vpop.f32.mrb[0].mxu0
      %v1191 = vadd.f32 0.0, %v1190
      %v1192 = vpop.f32.mrb[0].mxu0
      %1193 = vmatprep.mubr.bf16.mxu0 0
      %1194 = vmatmul.mubr.bf16.gmra.mrb[0].mxu0 %v1136
      %v1195 = vpop.f32.mrb[0].mxu0
      %v1196 = vadd.f32 0.0, %v1195
      %v1197 = vpop.f32.mrb[0].mxu0
      %v1198 = vpop.f32.mrb[0].mxu0
      %v1199 = vadd.f32 0.0, %v1198
      %v1200 = vpop.f32.mrb[0].mxu0
      %1201 = vmatprep.mubr.bf16.mxu0 0
      %1202 = vmatmul.mubr.bf16.gmra.mrb[0].mxu0 %v1139
      %v1203 = vpop.f32.mrb[0].mxu0
      %v1204 = vadd.f32 0.0, %v1203
      %v1205 = vpop.f32.mrb[0].mxu0
      %v1206 = vpop.f32.mrb[0].mxu0
      %v1207 = vadd.f32 0.0, %v1206
      %v1208 = vpop.f32.mrb[0].mxu0
      %1209 = vmatprep.mubr.bf16.mxu0 0
      %1210 = vmatmul.mubr.bf16.gmra.mrb[0].mxu0 %v1142
      %v1211 = vpop.f32.mrb[0].mxu0
      %v1212 = vadd.f32 0.0, %v1211
      %v1213 = vpop.f32.mrb[0].mxu0
      %v1214 = vpop.f32.mrb[0].mxu0
      %v1215 = vadd.f32 0.0, %v1214
      %v1216 = vpop.f32.mrb[0].mxu0
      %1217 = vmatprep.mubr.bf16.mxu0 0
      %1218 = vmatmul.mubr.bf16.gmra.mrb[0].mxu0 %v1145
      %v1219 = vpop.f32.mrb[0].mxu0
      %v1220 = vadd.f32 0.0, %v1219
      %v1221 = vpop.f32.mrb[0].mxu0
      %v1222 = vpop.f32.mrb[0].mxu0
      %v1223 = vadd.f32 0.0, %v1222
      %v1224 = vpop.f32.mrb[0].mxu0
      %1225 = vmatprep.mubr.bf16.mxu0 0
      %1226 = vmatmul.mubr.bf16.gmra.mrb[0].mxu0 %v1148
      %v1227 = vpop.f32.mrb[0].mxu0
      %v1228 = vadd.f32 0.0, %v1227
      %v1229 = vpop.f32.mrb[0].mxu0
      %v1230 = vpop.f32.mrb[0].mxu0
      %v1231 = vadd.f32 0.0, %v1230
      %v1232 = vpop.f32.mrb[0].mxu0
      %1233 = vmatprep.mubr.bf16.mxu0 0
      %1234 = vmatmul.mubr.bf16.gmra.mrb[0].mxu0 %v1151
      %v1235 = vpop.f32.mrb[0].mxu0
      %v1236 = vadd.f32 0.0, %v1235
      %v1237 = vpop.f32.mrb[0].mxu0
      %v1238 = vpop.f32.mrb[0].mxu0
      %v1239 = vpop.f32.mrb[0].mxu0
      %1240 = vdwg.mxu0
      %v1241 = vadd.f32 %v1082, %v1188
      %v1242 = vadd.f32 %v1083, %v1191
      %v1243 = vadd.f32 %v1084, %v1196
      %v1244 = vadd.f32 %v1085, %v1199
      %v1245 = vadd.f32 %v1086, %v1204
      %v1246 = vadd.f32 %v1087, %v1207
      %v1247 = vadd.f32 %v1088, %v1212
      %v1248 = vadd.f32 %v1089, %v1215
      %v1249 = vadd.f32 %v1090, %v1220
      %v1250 = vadd.f32 %v1091, %v1223
      %v1251 = vadd.f32 %v1092, %v1228
      %v1252 = vadd.f32 %v1093, %v1231
      %v1253 = vadd.f32 %v1094, %v1236
      %v1254 = vld [vmem:[#allocation2 + $0xc] sm:$0xff]
      %v1255 = vld [vmem:[#allocation2 + $0x14] sm:$0xff]
      %v1256 = vld [vmem:[#allocation2 + $0x1c] sm:$0xff]
      %v1257 = vld [vmem:[#allocation2 + $0x24] sm:$0xff]
      %v1258 = vld [vmem:[#allocation2 + $0x2c] sm:$0xff]
      %v1259 = vld [vmem:[#allocation2 + $0x34] sm:$0xff]
      %v1260 = vld [vmem:[#allocation2 + $0x3c] sm:$0xff]
      %v1261 = vld [vmem:[#allocation2 + $0x44] sm:$0xff]
      %v1262 = vld [vmem:[#allocation2 + $0x4c] sm:$0xff]
      %v1263 = vld [vmem:[#allocation2 + $0x54] sm:$0xff]
      %v1264 = vld [vmem:[#allocation2 + $0x5c] sm:$0xff]
      %v1265 = vld [vmem:[#allocation2 + $0x64] sm:$0xff]
      %v1266 = vld [vmem:[#allocation2 + $0x6c] sm:$0xf]
      %v1267 = vpack.c.bf16 %v1255, %v1254
      %v1268 = vpack.c.bf16 %v1257, %v1256
      %v1269 = vpack.c.bf16 %v1259, %v1258
      %v1270 = vpack.c.bf16 %v1261, %v1260
      %v1271 = vpack.c.bf16 %v1263, %v1262
      %v1272 = vpack.c.bf16 %v1265, %v1264
      %v1273 = vpack.c.bf16 %v1266, %v1266
      %s1274 = scalar_lea.vmem %s4, 80
      %v1275 = vld [vmem:[%s1274] sm:$0xf]
      %v1276 = vld [vmem:[%s1274 + $0x4] sm:$0xf]
      %v1277 = vld [vmem:[%s1274 + $0x8] sm:$0xf]
      %v1278 = vld [vmem:[%s1274 + $0xc] sm:$0xf]
      %v1283 = vunpack.c.l.b16 %v1275
      %v1284 = vunpack.c.l.b16 %v1276
      %v1285 = vunpack.c.l.b16 %v1277
      %v1286 = vunpack.c.l.b16 %v1278
      %v1287 = vpack.c.b16 %v1284, %v1283
      %v1288 = vpack.c.b16 %v1286, %v1285
      %v1292 = vsel %vm454, %v1267, 0
      %v1295 = vsel %vm454, %v1268, 0
      %v1298 = vsel %vm454, %v1269, 0
      %v1301 = vsel %vm454, %v1270, 0
      %v1304 = vsel %vm454, %v1271, 0
      %v1307 = vsel %vm454, %v1272, 0
      %v1310 = vsel %vm454, %v1273, 0
      %1312 = vmatprep.subr.bf16.mxu0 0
      %1313 = vmatpush1.bf16.msra.mxu0 %v1287
      %1314 = vmatprep.subr.bf16.mxu0 0
      %1315 = vmatpush1.bf16.msra.mxu0 %v1288
      %1316 = vmatprep.subr.bf16.mxu0 0
      %1317 = vmatpush1.bf16.msra.mxu0 0
      %1318 = vmatprep.subr.bf16.mxu0 0
      %1319 = vmatpush1.bf16.msra.mxu0 0
      %1320 = vmatprep.subr.bf16.mxu0 0
      %1321 = vmatpush1.bf16.msra.mxu0 0
      %1322 = vmatprep.subr.bf16.mxu0 0
      %1323 = vmatpush1.bf16.msra.mxu0 0
      %1324 = vmatprep.subr.bf16.mxu0 0
      %1325 = vmatpush1.bf16.msra.mxu0 0
      %1326 = vmatprep.subr.bf16.mxu0 0
      %1327 = vmatpush1.bf16.msra.mxu0 0
      %1328 = vmatprep.subr.bf16.mxu0 0
      %1329 = vmatpush1.bf16.msra.mxu0 0
      %1330 = vmatprep.subr.bf16.mxu0 0
      %1331 = vmatpush1.bf16.msra.mxu0 0
      %1332 = vmatprep.subr.bf16.mxu0 0
      %1333 = vmatpush1.bf16.msra.mxu0 0
      %1334 = vmatprep.subr.bf16.mxu0 0
      %1335 = vmatpush1.bf16.msra.mxu0 0
      %1336 = vmatprep.subr.bf16.mxu0 0
      %1337 = vmatpush1.bf16.msra.mxu0 0
      %1338 = vmatprep.subr.bf16.mxu0 0
      %1339 = vmatpush1.bf16.msra.mxu0 0
      %1340 = vmatprep.subr.bf16.mxu0 0
      %1341 = vmatpush1.bf16.msra.mxu0 0
      %1342 = vmatprep.subr.bf16.mxu0 0
      %1343 = vmatpush1.bf16.msra.mxu0 0
      %1344 = vmatprep.mubr.bf16.mxu0 0
      %1345 = vmatmul.mubr.bf16.gmra.mrb[0].mxu0 %v1292
      %v1346 = vpop.f32.mrb[0].mxu0
      %v1347 = vadd.f32 0.0, %v1346
      %v1348 = vpop.f32.mrb[0].mxu0
      %v1349 = vpop.f32.mrb[0].mxu0
      %v1350 = vadd.f32 0.0, %v1349
      %v1351 = vpop.f32.mrb[0].mxu0
      %1352 = vmatprep.mubr.bf16.mxu0 0
      %1353 = vmatmul.mubr.bf16.gmra.mrb[0].mxu0 %v1295
      %v1354 = vpop.f32.mrb[0].mxu0
      %v1355 = vadd.f32 0.0, %v1354
      %v1356 = vpop.f32.mrb[0].mxu0
      %v1357 = vpop.f32.mrb[0].mxu0
      %v1358 = vadd.f32 0.0, %v1357
      %v1359 = vpop.f32.mrb[0].mxu0
      %1360 = vmatprep.mubr.bf16.mxu0 0
      %1361 = vmatmul.mubr.bf16.gmra.mrb[0].mxu0 %v1298
      %v1362 = vpop.f32.mrb[0].mxu0
      %v1363 = vadd.f32 0.0, %v1362
      %v1364 = vpop.f32.mrb[0].mxu0
      %v1365 = vpop.f32.mrb[0].mxu0
      %v1366 = vadd.f32 0.0, %v1365
      %v1367 = vpop.f32.mrb[0].mxu0
      %1368 = vmatprep.mubr.bf16.mxu0 0
      %1369 = vmatmul.mubr.bf16.gmra.mrb[0].mxu0 %v1301
      %v1370 = vpop.f32.mrb[0].mxu0
      %v1371 = vadd.f32 0.0, %v1370
      %v1372 = vpop.f32.mrb[0].mxu0
      %v1373 = vpop.f32.mrb[0].mxu0
      %v1374 = vadd.f32 0.0, %v1373
      %v1375 = vpop.f32.mrb[0].mxu0
      %1376 = vmatprep.mubr.bf16.mxu0 0
      %1377 = vmatmul.mubr.bf16.gmra.mrb[0].mxu0 %v1304
      %v1378 = vpop.f32.mrb[0].mxu0
      %v1379 = vadd.f32 0.0, %v1378
      %v1380 = vpop.f32.mrb[0].mxu0
      %v1381 = vpop.f32.mrb[0].mxu0
      %v1382 = vadd.f32 0.0, %v1381
      %v1383 = vpop.f32.mrb[0].mxu0
      %1384 = vmatprep.mubr.bf16.mxu0 0
      %1385 = vmatmul.mubr.bf16.gmra.mrb[0].mxu0 %v1307
      %v1386 = vpop.f32.mrb[0].mxu0
      %v1387 = vadd.f32 0.0, %v1386
      %v1388 = vpop.f32.mrb[0].mxu0
      %v1389 = vpop.f32.mrb[0].mxu0
      %v1390 = vadd.f32 0.0, %v1389
      %v1391 = vpop.f32.mrb[0].mxu0
      %1392 = vmatprep.mubr.bf16.mxu0 0
      %1393 = vmatmul.mubr.bf16.gmra.mrb[0].mxu0 %v1310
      %v1394 = vpop.f32.mrb[0].mxu0
      %v1395 = vadd.f32 0.0, %v1394
      %v1396 = vpop.f32.mrb[0].mxu0
      %v1397 = vpop.f32.mrb[0].mxu0
      %v1398 = vpop.f32.mrb[0].mxu0
      %1399 = vdwg.mxu0
      %v1400 = vadd.f32 %v1241, %v1347
      %v1401 = vadd.f32 %v1242, %v1350
      %v1402 = vadd.f32 %v1243, %v1355
      %v1403 = vadd.f32 %v1244, %v1358
      %v1404 = vadd.f32 %v1245, %v1363
      %v1405 = vadd.f32 %v1246, %v1366
      %v1406 = vadd.f32 %v1247, %v1371
      %v1407 = vadd.f32 %v1248, %v1374
      %v1408 = vadd.f32 %v1249, %v1379
      %v1409 = vadd.f32 %v1250, %v1382
      %v1410 = vadd.f32 %v1251, %v1387
      %v1411 = vadd.f32 %v1252, %v1390
      %v1412 = vadd.f32 %v1253, %v1395
      %v1413 = vld [vmem:[#allocation2 + $0x14] sm:$0xff]
      %v1414 = vld [vmem:[#allocation2 + $0x1c] sm:$0xff]
      %v1415 = vld [vmem:[#allocation2 + $0x24] sm:$0xff]
      %v1416 = vld [vmem:[#allocation2 + $0x2c] sm:$0xff]
      %v1417 = vld [vmem:[#allocation2 + $0x34] sm:$0xff]
      %v1418 = vld [vmem:[#allocation2 + $0x3c] sm:$0xff]
      %v1419 = vld [vmem:[#allocation2 + $0x44] sm:$0xff]
      %v1420 = vld [vmem:[#allocation2 + $0x4c] sm:$0xff]
      %v1421 = vld [vmem:[#allocation2 + $0x54] sm:$0xff]
      %v1422 = vld [vmem:[#allocation2 + $0x5c] sm:$0xff]
      %v1423 = vld [vmem:[#allocation2 + $0x64] sm:$0xff]
      %v1424 = vld [vmem:[#allocation2 + $0x6c] sm:$0xff]
      %v1425 = vld [vmem:[#allocation2 + $0x74] sm:$0xf]
      %v1426 = vpack.c.bf16 %v1414, %v1413
      %v1427 = vpack.c.bf16 %v1416, %v1415
      %v1428 = vpack.c.bf16 %v1418, %v1417
      %v1429 = vpack.c.bf16 %v1420, %v1419
      %v1430 = vpack.c.bf16 %v1422, %v1421
      %v1431 = vpack.c.bf16 %v1424, %v1423
      %v1432 = vpack.c.bf16 %v1425, %v1425
      %s1433 = scalar_lea.vmem %s4, 96
      %v1434 = vld [vmem:[%s1433] sm:$0xf]
      %v1435 = vld [vmem:[%s1433 + $0x4] sm:$0xf]
      %v1436 = vld [vmem:[%s1433 + $0x8] sm:$0xf]
      %v1437 = vld [vmem:[%s1433 + $0xc] sm:$0xf]
      %v1442 = vunpack.c.l.b16 %v1434
      %v1443 = vunpack.c.l.b16 %v1435
      %v1444 = vunpack.c.l.b16 %v1436
      %v1445 = vunpack.c.l.b16 %v1437
      %v1446 = vpack.c.b16 %v1443, %v1442
      %v1447 = vpack.c.b16 %v1445, %v1444
      %v1451 = vsel %vm454, %v1426, 0
      %v1454 = vsel %vm454, %v1427, 0
      %v1457 = vsel %vm454, %v1428, 0
      %v1460 = vsel %vm454, %v1429, 0
      %v1463 = vsel %vm454, %v1430, 0
      %v1466 = vsel %vm454, %v1431, 0
      %v1469 = vsel %vm454, %v1432, 0
      %1471 = vmatprep.subr.bf16.mxu0 0
      %1472 = vmatpush1.bf16.msra.mxu0 %v1446
      %1473 = vmatprep.subr.bf16.mxu0 0
      %1474 = vmatpush1.bf16.msra.mxu0 %v1447
      %1475 = vmatprep.subr.bf16.mxu0 0
      %1476 = vmatpush1.bf16.msra.mxu0 0
      %1477 = vmatprep.subr.bf16.mxu0 0
      %1478 = vmatpush1.bf16.msra.mxu0 0
      %1479 = vmatprep.subr.bf16.mxu0 0
      %1480 = vmatpush1.bf16.msra.mxu0 0
      %1481 = vmatprep.subr.bf16.mxu0 0
      %1482 = vmatpush1.bf16.msra.mxu0 0
      %1483 = vmatprep.subr.bf16.mxu0 0
      %1484 = vmatpush1.bf16.msra.mxu0 0
      %1485 = vmatprep.subr.bf16.mxu0 0
      %1486 = vmatpush1.bf16.msra.mxu0 0
      %1487 = vmatprep.subr.bf16.mxu0 0
      %1488 = vmatpush1.bf16.msra.mxu0 0
      %1489 = vmatprep.subr.bf16.mxu0 0
      %1490 = vmatpush1.bf16.msra.mxu0 0
      %1491 = vmatprep.subr.bf16.mxu0 0
      %1492 = vmatpush1.bf16.msra.mxu0 0
      %1493 = vmatprep.subr.bf16.mxu0 0
      %1494 = vmatpush1.bf16.msra.mxu0 0
      %1495 = vmatprep.subr.bf16.mxu0 0
      %1496 = vmatpush1.bf16.msra.mxu0 0
      %1497 = vmatprep.subr.bf16.mxu0 0
      %1498 = vmatpush1.bf16.msra.mxu0 0
      %1499 = vmatprep.subr.bf16.mxu0 0
      %1500 = vmatpush1.bf16.msra.mxu0 0
      %1501 = vmatprep.subr.bf16.mxu0 0
      %1502 = vmatpush1.bf16.msra.mxu0 0
      %1503 = vmatprep.mubr.bf16.mxu0 0
      %1504 = vmatmul.mubr.bf16.gmra.mrb[0].mxu0 %v1451
      %v1505 = vpop.f32.mrb[0].mxu0
      %v1506 = vadd.f32 0.0, %v1505
      %v1507 = vpop.f32.mrb[0].mxu0
      %v1508 = vpop.f32.mrb[0].mxu0
      %v1509 = vadd.f32 0.0, %v1508
      %v1510 = vpop.f32.mrb[0].mxu0
      %1511 = vmatprep.mubr.bf16.mxu0 0
      %1512 = vmatmul.mubr.bf16.gmra.mrb[0].mxu0 %v1454
      %v1513 = vpop.f32.mrb[0].mxu0
      %v1514 = vadd.f32 0.0, %v1513
      %v1515 = vpop.f32.mrb[0].mxu0
      %v1516 = vpop.f32.mrb[0].mxu0
      %v1517 = vadd.f32 0.0, %v1516
      %v1518 = vpop.f32.mrb[0].mxu0
      %1519 = vmatprep.mubr.bf16.mxu0 0
      %1520 = vmatmul.mubr.bf16.gmra.mrb[0].mxu0 %v1457
      %v1521 = vpop.f32.mrb[0].mxu0
      %v1522 = vadd.f32 0.0, %v1521
      %v1523 = vpop.f32.mrb[0].mxu0
      %v1524 = vpop.f32.mrb[0].mxu0
      %v1525 = vadd.f32 0.0, %v1524
      %v1526 = vpop.f32.mrb[0].mxu0
      %1527 = vmatprep.mubr.bf16.mxu0 0
      %1528 = vmatmul.mubr.bf16.gmra.mrb[0].mxu0 %v1460
      %v1529 = vpop.f32.mrb[0].mxu0
      %v1530 = vadd.f32 0.0, %v1529
      %v1531 = vpop.f32.mrb[0].mxu0
      %v1532 = vpop.f32.mrb[0].mxu0
      %v1533 = vadd.f32 0.0, %v1532
      %v1534 = vpop.f32.mrb[0].mxu0
      %1535 = vmatprep.mubr.bf16.mxu0 0
      %1536 = vmatmul.mubr.bf16.gmra.mrb[0].mxu0 %v1463
      %v1537 = vpop.f32.mrb[0].mxu0
      %v1538 = vadd.f32 0.0, %v1537
      %v1539 = vpop.f32.mrb[0].mxu0
      %v1540 = vpop.f32.mrb[0].mxu0
      %v1541 = vadd.f32 0.0, %v1540
      %v1542 = vpop.f32.mrb[0].mxu0
      %1543 = vmatprep.mubr.bf16.mxu0 0
      %1544 = vmatmul.mubr.bf16.gmra.mrb[0].mxu0 %v1466
      %v1545 = vpop.f32.mrb[0].mxu0
      %v1546 = vadd.f32 0.0, %v1545
      %v1547 = vpop.f32.mrb[0].mxu0
      %v1548 = vpop.f32.mrb[0].mxu0
      %v1549 = vadd.f32 0.0, %v1548
      %v1550 = vpop.f32.mrb[0].mxu0
      %1551 = vmatprep.mubr.bf16.mxu0 0
      %1552 = vmatmul.mubr.bf16.gmra.mrb[0].mxu0 %v1469
      %v1553 = vpop.f32.mrb[0].mxu0
      %v1554 = vadd.f32 0.0, %v1553
      %v1555 = vpop.f32.mrb[0].mxu0
      %v1556 = vpop.f32.mrb[0].mxu0
      %v1557 = vpop.f32.mrb[0].mxu0
      %1558 = vdwg.mxu0
      %v1559 = vadd.f32 %v1400, %v1506
      %v1560 = vadd.f32 %v1401, %v1509
      %v1561 = vadd.f32 %v1402, %v1514
      %v1562 = vadd.f32 %v1403, %v1517
      %v1563 = vadd.f32 %v1404, %v1522
      %v1564 = vadd.f32 %v1405, %v1525
      %v1565 = vadd.f32 %v1406, %v1530
      %v1566 = vadd.f32 %v1407, %v1533
      %v1567 = vadd.f32 %v1408, %v1538
      %v1568 = vadd.f32 %v1409, %v1541
      %v1569 = vadd.f32 %v1410, %v1546
      %v1570 = vadd.f32 %v1411, %v1549
      %v1571 = vadd.f32 %v1412, %v1554
      %v1572 = vld [vmem:[#allocation2 + $0x15] sm:$0xff]
      %v1573 = vld [vmem:[#allocation2 + $0x1d] sm:$0xff]
      %v1574 = vld [vmem:[#allocation2 + $0x25] sm:$0xff]
      %v1575 = vld [vmem:[#allocation2 + $0x2d] sm:$0xff]
      %v1576 = vld [vmem:[#allocation2 + $0x35] sm:$0xff]
      %v1577 = vld [vmem:[#allocation2 + $0x3d] sm:$0xff]
      %v1578 = vld [vmem:[#allocation2 + $0x45] sm:$0xff]
      %v1579 = vld [vmem:[#allocation2 + $0x4d] sm:$0xff]
      %v1580 = vld [vmem:[#allocation2 + $0x55] sm:$0xff]
      %v1581 = vld [vmem:[#allocation2 + $0x5d] sm:$0xff]
      %v1582 = vld [vmem:[#allocation2 + $0x65] sm:$0xff]
      %v1583 = vld [vmem:[#allocation2 + $0x6d] sm:$0xff]
      %v1584 = vld [vmem:[#allocation2 + $0x75] sm:$0xf]
      %v1585 = vpack.c.bf16 %v1573, %v1572
      %v1586 = vpack.c.bf16 %v1575, %v1574
      %v1587 = vpack.c.bf16 %v1577, %v1576
      %v1588 = vpack.c.bf16 %v1579, %v1578
      %v1589 = vpack.c.bf16 %v1581, %v1580
      %v1590 = vpack.c.bf16 %v1583, %v1582
      %v1591 = vpack.c.bf16 %v1584, %v1584
      %s1592 = scalar_lea.vmem %s4, 112
      %v1593 = vld [vmem:[%s1592] sm:$0xf]
      %v1594 = vld [vmem:[%s1592 + $0x4] sm:$0xf]
      %v1595 = vld [vmem:[%s1592 + $0x8] sm:$0xf]
      %v1596 = vld [vmem:[%s1592 + $0xc] sm:$0xf]
      %v1601 = vunpack.c.l.b16 %v1593
      %v1602 = vunpack.c.l.b16 %v1594
      %v1603 = vunpack.c.l.b16 %v1595
      %v1604 = vunpack.c.l.b16 %v1596
      %v1605 = vpack.c.b16 %v1602, %v1601
      %v1606 = vpack.c.b16 %v1604, %v1603
      %v1610 = vsel %vm454, %v1585, 0
      %v1613 = vsel %vm454, %v1586, 0
      %v1616 = vsel %vm454, %v1587, 0
      %v1619 = vsel %vm454, %v1588, 0
      %v1622 = vsel %vm454, %v1589, 0
      %v1625 = vsel %vm454, %v1590, 0
      %v1628 = vsel %vm454, %v1591, 0
      %1630 = vmatprep.subr.bf16.mxu0 0
      %1631 = vmatpush1.bf16.msra.mxu0 %v1605
      %1632 = vmatprep.subr.bf16.mxu0 0
      %1633 = vmatpush1.bf16.msra.mxu0 %v1606
      %1634 = vmatprep.subr.bf16.mxu0 0
      %1635 = vmatpush1.bf16.msra.mxu0 0
      %1636 = vmatprep.subr.bf16.mxu0 0
      %1637 = vmatpush1.bf16.msra.mxu0 0
      %1638 = vmatprep.subr.bf16.mxu0 0
      %1639 = vmatpush1.bf16.msra.mxu0 0
      %1640 = vmatprep.subr.bf16.mxu0 0
      %1641 = vmatpush1.bf16.msra.mxu0 0
      %1642 = vmatprep.subr.bf16.mxu0 0
      %1643 = vmatpush1.bf16.msra.mxu0 0
      %1644 = vmatprep.subr.bf16.mxu0 0
      %1645 = vmatpush1.bf16.msra.mxu0 0
      %1646 = vmatprep.subr.bf16.mxu0 0
      %1647 = vmatpush1.bf16.msra.mxu0 0
      %1648 = vmatprep.subr.bf16.mxu0 0
      %1649 = vmatpush1.bf16.msra.mxu0 0
      %1650 = vmatprep.subr.bf16.mxu0 0
      %1651 = vmatpush1.bf16.msra.mxu0 0
      %1652 = vmatprep.subr.bf16.mxu0 0
      %1653 = vmatpush1.bf16.msra.mxu0 0
      %1654 = vmatprep.subr.bf16.mxu0 0
      %1655 = vmatpush1.bf16.msra.mxu0 0
      %1656 = vmatprep.subr.bf16.mxu0 0
      %1657 = vmatpush1.bf16.msra.mxu0 0
      %1658 = vmatprep.subr.bf16.mxu0 0
      %1659 = vmatpush1.bf16.msra.mxu0 0
      %1660 = vmatprep.subr.bf16.mxu0 0
      %1661 = vmatpush1.bf16.msra.mxu0 0
      %1662 = vmatprep.mubr.bf16.mxu0 0
      %1663 = vmatmul.mubr.bf16.gmra.mrb[0].mxu0 %v1610
      %v1664 = vpop.f32.mrb[0].mxu0
      %v1665 = vadd.f32 0.0, %v1664
      %v1666 = vpop.f32.mrb[0].mxu0
      %v1667 = vpop.f32.mrb[0].mxu0
      %v1668 = vadd.f32 0.0, %v1667
      %v1669 = vpop.f32.mrb[0].mxu0
      %1670 = vmatprep.mubr.bf16.mxu0 0
      %1671 = vmatmul.mubr.bf16.gmra.mrb[0].mxu0 %v1613
      %v1672 = vpop.f32.mrb[0].mxu0
      %v1673 = vadd.f32 0.0, %v1672
      %v1674 = vpop.f32.mrb[0].mxu0
      %v1675 = vpop.f32.mrb[0].mxu0
      %v1676 = vadd.f32 0.0, %v1675
      %v1677 = vpop.f32.mrb[0].mxu0
      %1678 = vmatprep.mubr.bf16.mxu0 0
      %1679 = vmatmul.mubr.bf16.gmra.mrb[0].mxu0 %v1616
      %v1680 = vpop.f32.mrb[0].mxu0
      %v1681 = vadd.f32 0.0, %v1680
      %v1682 = vpop.f32.mrb[0].mxu0
      %v1683 = vpop.f32.mrb[0].mxu0
      %v1684 = vadd.f32 0.0, %v1683
      %v1685 = vpop.f32.mrb[0].mxu0
      %1686 = vmatprep.mubr.bf16.mxu0 0
      %1687 = vmatmul.mubr.bf16.gmra.mrb[0].mxu0 %v1619
      %v1688 = vpop.f32.mrb[0].mxu0
      %v1689 = vadd.f32 0.0, %v1688
      %v1690 = vpop.f32.mrb[0].mxu0
      %v1691 = vpop.f32.mrb[0].mxu0
      %v1692 = vadd.f32 0.0, %v1691
      %v1693 = vpop.f32.mrb[0].mxu0
      %1694 = vmatprep.mubr.bf16.mxu0 0
      %1695 = vmatmul.mubr.bf16.gmra.mrb[0].mxu0 %v1622
      %v1696 = vpop.f32.mrb[0].mxu0
      %v1697 = vadd.f32 0.0, %v1696
      %v1698 = vpop.f32.mrb[0].mxu0
      %v1699 = vpop.f32.mrb[0].mxu0
      %v1700 = vadd.f32 0.0, %v1699
      %v1701 = vpop.f32.mrb[0].mxu0
      %1702 = vmatprep.mubr.bf16.mxu0 0
      %1703 = vmatmul.mubr.bf16.gmra.mrb[0].mxu0 %v1625
      %v1704 = vpop.f32.mrb[0].mxu0
      %v1705 = vadd.f32 0.0, %v1704
      %v1706 = vpop.f32.mrb[0].mxu0
      %v1707 = vpop.f32.mrb[0].mxu0
      %v1708 = vadd.f32 0.0, %v1707
      %v1709 = vpop.f32.mrb[0].mxu0
      %1710 = vmatprep.mubr.bf16.mxu0 0
      %1711 = vmatmul.mubr.bf16.gmra.mrb[0].mxu0 %v1628
      %v1712 = vpop.f32.mrb[0].mxu0
      %v1713 = vadd.f32 0.0, %v1712
      %v1714 = vpop.f32.mrb[0].mxu0
      %v1715 = vpop.f32.mrb[0].mxu0
      %v1716 = vpop.f32.mrb[0].mxu0
      %1717 = vdwg.mxu0
      %v1718 = vadd.f32 %v1559, %v1665
      %v1719 = vadd.f32 %v1560, %v1668
      %v1720 = vadd.f32 %v1561, %v1673
      %v1721 = vadd.f32 %v1562, %v1676
      %v1722 = vadd.f32 %v1563, %v1681
      %v1723 = vadd.f32 %v1564, %v1684
      %v1724 = vadd.f32 %v1565, %v1689
      %v1725 = vadd.f32 %v1566, %v1692
      %v1726 = vadd.f32 %v1567, %v1697
      %v1727 = vadd.f32 %v1568, %v1700
      %v1728 = vadd.f32 %v1569, %v1705
      %v1729 = vadd.f32 %v1570, %v1708
      %v1730 = vadd.f32 %v1571, %v1713
      %v1731 = vld [vmem:[#allocation2 + $0x16] sm:$0xff]
      %v1732 = vld [vmem:[#allocation2 + $0x1e] sm:$0xff]
      %v1733 = vld [vmem:[#allocation2 + $0x26] sm:$0xff]
      %v1734 = vld [vmem:[#allocation2 + $0x2e] sm:$0xff]
      %v1735 = vld [vmem:[#allocation2 + $0x36] sm:$0xff]
      %v1736 = vld [vmem:[#allocation2 + $0x3e] sm:$0xff]
      %v1737 = vld [vmem:[#allocation2 + $0x46] sm:$0xff]
      %v1738 = vld [vmem:[#allocation2 + $0x4e] sm:$0xff]
      %v1739 = vld [vmem:[#allocation2 + $0x56] sm:$0xff]
      %v1740 = vld [vmem:[#allocation2 + $0x5e] sm:$0xff]
      %v1741 = vld [vmem:[#allocation2 + $0x66] sm:$0xff]
      %v1742 = vld [vmem:[#allocation2 + $0x6e] sm:$0xff]
      %v1743 = vld [vmem:[#allocation2 + $0x76] sm:$0xf]
      %v1744 = vpack.c.bf16 %v1732, %v1731
      %v1745 = vpack.c.bf16 %v1734, %v1733
      %v1746 = vpack.c.bf16 %v1736, %v1735
      %v1747 = vpack.c.bf16 %v1738, %v1737
      %v1748 = vpack.c.bf16 %v1740, %v1739
      %v1749 = vpack.c.bf16 %v1742, %v1741
      %v1750 = vpack.c.bf16 %v1743, %v1743
      %s1751 = scalar_lea.vmem %s4, 128
      %v1752 = vld [vmem:[%s1751] sm:$0xf]
      %v1753 = vld [vmem:[%s1751 + $0x4] sm:$0xf]
      %v1754 = vld [vmem:[%s1751 + $0x8] sm:$0xf]
      %v1755 = vld [vmem:[%s1751 + $0xc] sm:$0xf]
      %v1760 = vunpack.c.l.b16 %v1752
      %v1761 = vunpack.c.l.b16 %v1753
      %v1762 = vunpack.c.l.b16 %v1754
      %v1763 = vunpack.c.l.b16 %v1755
      %v1764 = vpack.c.b16 %v1761, %v1760
      %v1765 = vpack.c.b16 %v1763, %v1762
      %v1769 = vsel %vm454, %v1744, 0
      %v1772 = vsel %vm454, %v1745, 0
      %v1775 = vsel %vm454, %v1746, 0
      %v1778 = vsel %vm454, %v1747, 0
      %v1781 = vsel %vm454, %v1748, 0
      %v1784 = vsel %vm454, %v1749, 0
      %v1787 = vsel %vm454, %v1750, 0
      %1789 = vmatprep.subr.bf16.mxu0 0
      %1790 = vmatpush1.bf16.msra.mxu0 %v1764
      %1791 = vmatprep.subr.bf16.mxu0 0
      %1792 = vmatpush1.bf16.msra.mxu0 %v1765
      %1793 = vmatprep.subr.bf16.mxu0 0
      %1794 = vmatpush1.bf16.msra.mxu0 0
      %1795 = vmatprep.subr.bf16.mxu0 0
      %1796 = vmatpush1.bf16.msra.mxu0 0
      %1797 = vmatprep.subr.bf16.mxu0 0
      %1798 = vmatpush1.bf16.msra.mxu0 0
      %1799 = vmatprep.subr.bf16.mxu0 0
      %1800 = vmatpush1.bf16.msra.mxu0 0
      %1801 = vmatprep.subr.bf16.mxu0 0
      %1802 = vmatpush1.bf16.msra.mxu0 0
      %1803 = vmatprep.subr.bf16.mxu0 0
      %1804 = vmatpush1.bf16.msra.mxu0 0
      %1805 = vmatprep.subr.bf16.mxu0 0
      %1806 = vmatpush1.bf16.msra.mxu0 0
      %1807 = vmatprep.subr.bf16.mxu0 0
      %1808 = vmatpush1.bf16.msra.mxu0 0
      %1809 = vmatprep.subr.bf16.mxu0 0
      %1810 = vmatpush1.bf16.msra.mxu0 0
      %1811 = vmatprep.subr.bf16.mxu0 0
      %1812 = vmatpush1.bf16.msra.mxu0 0
      %1813 = vmatprep.subr.bf16.mxu0 0
      %1814 = vmatpush1.bf16.msra.mxu0 0
      %1815 = vmatprep.subr.bf16.mxu0 0
      %1816 = vmatpush1.bf16.msra.mxu0 0
      %1817 = vmatprep.subr.bf16.mxu0 0
      %1818 = vmatpush1.bf16.msra.mxu0 0
      %1819 = vmatprep.subr.bf16.mxu0 0
      %1820 = vmatpush1.bf16.msra.mxu0 0
      %1821 = vmatprep.mubr.bf16.mxu0 0
      %1822 = vmatmul.mubr.bf16.gmra.mrb[0].mxu0 %v1769
      %v1823 = vpop.f32.mrb[0].mxu0
      %v1824 = vadd.f32 0.0, %v1823
      %v1825 = vpop.f32.mrb[0].mxu0
      %v1826 = vpop.f32.mrb[0].mxu0
      %v1827 = vadd.f32 0.0, %v1826
      %v1828 = vpop.f32.mrb[0].mxu0
      %1829 = vmatprep.mubr.bf16.mxu0 0
      %1830 = vmatmul.mubr.bf16.gmra.mrb[0].mxu0 %v1772
      %v1831 = vpop.f32.mrb[0].mxu0
      %v1832 = vadd.f32 0.0, %v1831
      %v1833 = vpop.f32.mrb[0].mxu0
      %v1834 = vpop.f32.mrb[0].mxu0
      %v1835 = vadd.f32 0.0, %v1834
      %v1836 = vpop.f32.mrb[0].mxu0
      %1837 = vmatprep.mubr.bf16.mxu0 0
      %1838 = vmatmul.mubr.bf16.gmra.mrb[0].mxu0 %v1775
      %v1839 = vpop.f32.mrb[0].mxu0
      %v1840 = vadd.f32 0.0, %v1839
      %v1841 = vpop.f32.mrb[0].mxu0
      %v1842 = vpop.f32.mrb[0].mxu0
      %v1843 = vadd.f32 0.0, %v1842
      %v1844 = vpop.f32.mrb[0].mxu0
      %1845 = vmatprep.mubr.bf16.mxu0 0
      %1846 = vmatmul.mubr.bf16.gmra.mrb[0].mxu0 %v1778
      %v1847 = vpop.f32.mrb[0].mxu0
      %v1848 = vadd.f32 0.0, %v1847
      %v1849 = vpop.f32.mrb[0].mxu0
      %v1850 = vpop.f32.mrb[0].mxu0
      %v1851 = vadd.f32 0.0, %v1850
      %v1852 = vpop.f32.mrb[0].mxu0
      %1853 = vmatprep.mubr.bf16.mxu0 0
      %1854 = vmatmul.mubr.bf16.gmra.mrb[0].mxu0 %v1781
      %v1855 = vpop.f32.mrb[0].mxu0
      %v1856 = vadd.f32 0.0, %v1855
      %v1857 = vpop.f32.mrb[0].mxu0
      %v1858 = vpop.f32.mrb[0].mxu0
      %v1859 = vadd.f32 0.0, %v1858
      %v1860 = vpop.f32.mrb[0].mxu0
      %1861 = vmatprep.mubr.bf16.mxu0 0
      %1862 = vmatmul.mubr.bf16.gmra.mrb[0].mxu0 %v1784
      %v1863 = vpop.f32.mrb[0].mxu0
      %v1864 = vadd.f32 0.0, %v1863
      %v1865 = vpop.f32.mrb[0].mxu0
      %v1866 = vpop.f32.mrb[0].mxu0
      %v1867 = vadd.f32 0.0, %v1866
      %v1868 = vpop.f32.mrb[0].mxu0
      %1869 = vmatprep.mubr.bf16.mxu0 0
      %1870 = vmatmul.mubr.bf16.gmra.mrb[0].mxu0 %v1787
      %v1871 = vpop.f32.mrb[0].mxu0
      %v1872 = vadd.f32 0.0, %v1871
      %v1873 = vpop.f32.mrb[0].mxu0
      %v1874 = vpop.f32.mrb[0].mxu0
      %v1875 = vpop.f32.mrb[0].mxu0
      %1876 = vdwg.mxu0
      %v1877 = vadd.f32 %v1718, %v1824
      %v1878 = vadd.f32 %v1719, %v1827
      %v1879 = vadd.f32 %v1720, %v1832
      %v1880 = vadd.f32 %v1721, %v1835
      %v1881 = vadd.f32 %v1722, %v1840
      %v1882 = vadd.f32 %v1723, %v1843
      %v1883 = vadd.f32 %v1724, %v1848
      %v1884 = vadd.f32 %v1725, %v1851
      %v1885 = vadd.f32 %v1726, %v1856
      %v1886 = vadd.f32 %v1727, %v1859
      %v1887 = vadd.f32 %v1728, %v1864
      %v1888 = vadd.f32 %v1729, %v1867
      %v1889 = vadd.f32 %v1730, %v1872
      %v1890 = vld [vmem:[%s1] sm:$0xff]
      %v1891 = vld [vmem:[%s1 + $0x8] sm:$0xff]
      %v1892 = vld [vmem:[%s1 + $0x10] sm:$0xff]
      %v1893 = vld [vmem:[%s1 + $0x18] sm:$0xff]
      %v1894 = vld [vmem:[%s1 + $0x20] sm:$0xff]
      %v1895 = vld [vmem:[%s1 + $0x28] sm:$0xff]
      %v1896 = vld [vmem:[%s1 + $0x30] sm:$0xff]
      %v1897 = vld [vmem:[%s1 + $0x38] sm:$0xff]
      %v1898 = vld [vmem:[%s1 + $0x40] sm:$0xff]
      %v1899 = vld [vmem:[%s1 + $0x48] sm:$0xff]
      %v1900 = vld [vmem:[%s1 + $0x50] sm:$0xff]
      %v1901 = vld [vmem:[%s1 + $0x58] sm:$0xff]
      %v1902 = vld [vmem:[%s1 + $0x60] sm:$0xf]
      %1904 = vset.pattern.permute.xlu0 0
      %1905 = vperm.xlu0 %1904, %v1890
      %v1906 = vpop.permute.xlu0 %1905
      %1909 = vset.pattern.permute.xlu0 0
      %1910 = vperm.xlu0 %1909, %v1891
      %v1911 = vpop.permute.xlu0 %1910
      %1914 = vset.pattern.permute.xlu0 0
      %1915 = vperm.xlu0 %1914, %v1892
      %v1916 = vpop.permute.xlu0 %1915
      %1919 = vset.pattern.permute.xlu0 0
      %1920 = vperm.xlu0 %1919, %v1893
      %v1921 = vpop.permute.xlu0 %1920
      %1924 = vset.pattern.permute.xlu0 0
      %1925 = vperm.xlu0 %1924, %v1894
      %v1926 = vpop.permute.xlu0 %1925
      %1929 = vset.pattern.permute.xlu0 0
      %1930 = vperm.xlu0 %1929, %v1895
      %v1931 = vpop.permute.xlu0 %1930
      %1934 = vset.pattern.permute.xlu0 0
      %1935 = vperm.xlu0 %1934, %v1896
      %v1936 = vpop.permute.xlu0 %1935
      %1939 = vset.pattern.permute.xlu0 0
      %1940 = vperm.xlu0 %1939, %v1897
      %v1941 = vpop.permute.xlu0 %1940
      %1944 = vset.pattern.permute.xlu0 0
      %1945 = vperm.xlu0 %1944, %v1898
      %v1946 = vpop.permute.xlu0 %1945
      %1949 = vset.pattern.permute.xlu0 0
      %1950 = vperm.xlu0 %1949, %v1899
      %v1951 = vpop.permute.xlu0 %1950
      %1954 = vset.pattern.permute.xlu0 0
      %1955 = vperm.xlu0 %1954, %v1900
      %v1956 = vpop.permute.xlu0 %1955
      %1959 = vset.pattern.permute.xlu0 0
      %1960 = vperm.xlu0 %1959, %v1901
      %v1961 = vpop.permute.xlu0 %1960
      %1964 = vset.pattern.permute.xlu0 0
      %1965 = vperm.xlu0 %1964, %v1902
      %v1966 = vpop.permute.xlu0 %1965
      %v1968 = vmul.f32 %v1877, %v1906
      %v1969 = vmul.f32 %v1878, %v1911
      %v1970 = vmul.f32 %v1879, %v1916
      %v1971 = vmul.f32 %v1880, %v1921
      %v1972 = vmul.f32 %v1881, %v1926
      %v1973 = vmul.f32 %v1882, %v1931
      %v1974 = vmul.f32 %v1883, %v1936
      %v1975 = vmul.f32 %v1884, %v1941
      %v1976 = vmul.f32 %v1885, %v1946
      %v1977 = vmul.f32 %v1886, %v1951
      %v1978 = vmul.f32 %v1887, %v1956
      %v1979 = vmul.f32 %v1888, %v1961
      %v1980 = vmul.f32 %v1889, %v1966
      %vm1981 = vcmask 64512
      %1982 = vst.msk [vmem:[%s289] sm:$0xff] %vm1981, %v1968
      %1983 = vst.msk [vmem:[%s289 + $0x8] sm:$0xff] %vm1981, %v1969
      %1984 = vst.msk [vmem:[%s289 + $0x10] sm:$0xff] %vm1981, %v1970
      %1985 = vst.msk [vmem:[%s289 + $0x18] sm:$0xff] %vm1981, %v1971
      %1986 = vst.msk [vmem:[%s289 + $0x20] sm:$0xff] %vm1981, %v1972
      %1987 = vst.msk [vmem:[%s289 + $0x28] sm:$0xff] %vm1981, %v1973
      %1988 = vst.msk [vmem:[%s289 + $0x30] sm:$0xff] %vm1981, %v1974
      %1989 = vst.msk [vmem:[%s289 + $0x38] sm:$0xff] %vm1981, %v1975
      %1990 = vst.msk [vmem:[%s289 + $0x40] sm:$0xff] %vm1981, %v1976
      %1991 = vst.msk [vmem:[%s289 + $0x48] sm:$0xff] %vm1981, %v1977
      %1992 = vst.msk [vmem:[%s289 + $0x50] sm:$0xff] %vm1981, %v1978
      %1993 = vst.msk [vmem:[%s289 + $0x58] sm:$0xff] %vm1981, %v1979
      %vm1994 = vcmask 60416
      %1995 = vst.msk [vmem:[%s289 + $0x60] sm:$0xf] %vm1994, %v1980
      %v1996 = vsel %vm1981, %v1968, 0.0
      %v1997 = vsel %vm1981, %v1969, 0.0
      %v1998 = vadd.f32 %v1996, %v1997
      %v1999 = vsel %vm1981, %v1970, 0.0
      %v2000 = vadd.f32 %v1998, %v1999
      %v2001 = vsel %vm1981, %v1971, 0.0
      %v2002 = vadd.f32 %v2000, %v2001
      %v2003 = vsel %vm1981, %v1972, 0.0
      %v2004 = vadd.f32 %v2002, %v2003
      %v2005 = vsel %vm1981, %v1973, 0.0
      %v2006 = vadd.f32 %v2004, %v2005
      %v2007 = vsel %vm1981, %v1974, 0.0
      %v2008 = vadd.f32 %v2006, %v2007
      %v2009 = vsel %vm1981, %v1975, 0.0
      %v2010 = vadd.f32 %v2008, %v2009
      %v2011 = vsel %vm1981, %v1976, 0.0
      %v2012 = vadd.f32 %v2010, %v2011
      %v2013 = vsel %vm1981, %v1977, 0.0
      %v2014 = vadd.f32 %v2012, %v2013
      %v2015 = vsel %vm1981, %v1978, 0.0
      %v2016 = vadd.f32 %v2014, %v2015
      %v2017 = vsel %vm1981, %v1979, 0.0
      %v2018 = vadd.f32 %v2016, %v2017
      %v2019 = vsel %vm1994, %v1980, 0.0
      %v2020 = vadd.f32 %v2018, %v2019
      %v2021 = vrot.slane %v2020, 4
      %v2022 = vadd.f32 %v2020, %v2021
      %v2023 = vrot.slane %v2022, 2
      %v2024 = vadd.f32 %v2022, %v2023
      %v2025 = vrot.slane %v2024, 1
      %v2026 = vadd.f32 %v2024, %v2025
      %vm2027 = vcmask 57344
      %2028 = vst.msk [vmem:[%s292] sm:$0x1] %vm2027, %v2026
      %v2029 = vmul.f32 %v1968, %v1968
      %v2030 = vmul.f32 %v1969, %v1969
      %v2031 = vmul.f32 %v1970, %v1970
      %v2032 = vmul.f32 %v1971, %v1971
      %v2033 = vmul.f32 %v1972, %v1972
      %v2034 = vmul.f32 %v1973, %v1973
      %v2035 = vmul.f32 %v1974, %v1974
      %v2036 = vmul.f32 %v1975, %v1975
      %v2037 = vmul.f32 %v1976, %v1976
      %v2038 = vmul.f32 %v1977, %v1977
      %v2039 = vmul.f32 %v1978, %v1978
      %v2040 = vmul.f32 %v1979, %v1979
      %v2041 = vmul.f32 %v1980, %v1980
      %v2042 = vsel %vm1981, %v2029, 0.0
      %v2043 = vsel %vm1981, %v2030, 0.0
      %v2044 = vadd.f32 %v2042, %v2043
      %v2045 = vsel %vm1981, %v2031, 0.0
      %v2046 = vadd.f32 %v2044, %v2045
      %v2047 = vsel %vm1981, %v2032, 0.0
      %v2048 = vadd.f32 %v2046, %v2047
      %v2049 = vsel %vm1981, %v2033, 0.0
      %v2050 = vadd.f32 %v2048, %v2049
      %v2051 = vsel %vm1981, %v2034, 0.0
      %v2052 = vadd.f32 %v2050, %v2051
      %v2053 = vsel %vm1981, %v2035, 0.0
      %v2054 = vadd.f32 %v2052, %v2053
      %v2055 = vsel %vm1981, %v2036, 0.0
      %v2056 = vadd.f32 %v2054, %v2055
      %v2057 = vsel %vm1981, %v2037, 0.0
      %v2058 = vadd.f32 %v2056, %v2057
      %v2059 = vsel %vm1981, %v2038, 0.0
      %v2060 = vadd.f32 %v2058, %v2059
      %v2061 = vsel %vm1981, %v2039, 0.0
      %v2062 = vadd.f32 %v2060, %v2061
      %v2063 = vsel %vm1981, %v2040, 0.0
      %v2064 = vadd.f32 %v2062, %v2063
      %v2065 = vsel %vm1994, %v2041, 0.0
      %v2066 = vadd.f32 %v2064, %v2065
      %v2067 = vrot.slane %v2066, 4
      %v2068 = vadd.f32 %v2066, %v2067
      %v2069 = vrot.slane %v2068, 2
      %v2070 = vadd.f32 %v2068, %v2069
      %v2071 = vrot.slane %v2070, 1
      %v2072 = vadd.f32 %v2070, %v2071
      %2073 = vst.msk [vmem:[%s295] sm:$0x1] %vm2027, %v2072
      %p2074 = scmp.lt.s32.totalorder %s19, 1
      %s2075 = scalar_select %p2074, %s19, 1
      %s2076 = smul.addr %s2075, 13
      %s2077 = smul.addr %s2076, 8
      %s2078 = scalar_lea.vmem %s5, %s2077
      %p2079 = scmp.lt.s32.totalorder %s19, 1
      %s2080 = scalar_select %p2079, %s19, 1
      %s2081 = scalar_lea.vmem %s6, %s2080
      %p2082 = scmp.lt.s32.totalorder %s19, 1
      %s2083 = scalar_select %p2082, %s19, 1
      %s2084 = scalar_lea.vmem %s7, %s2083
      // Predicated region
      $region41: #{densenet_forward.18} parent=39 // pred_check
        %p2085 = pneg %p147
      $region42: #{densenet_forward.18} parent=39 // pred_check_branch
        %2087 = sbr.rel (%p2085) target = $region44
      $region43: #{densenet_forward.18} parent=39 // pred_region
        _
      $region44: #{densenet_forward.18} parent=39 // pred_fallthru
        _
      // Predicated region
      $region45: #{densenet_forward.18} parent=39 // pred_check
        %p2088 = pneg %p173
      $region46: #{densenet_forward.18} parent=39 // pred_check_branch
        %2090 = sbr.rel (%p2088) target = $region48
      $region47: #{densenet_forward.18} parent=39 // pred_region
        _
      $region48: #{densenet_forward.18} parent=39 // pred_fallthru
        _
      // Predicated region
      $region49: #{densenet_forward.18} parent=39 // pred_check
        %p2091 = pneg %p199
      $region50: #{densenet_forward.18} parent=39 // pred_check_branch
        %2093 = sbr.rel (%p2091) target = $region52
      $region51: #{densenet_forward.18} parent=39 // pred_region
        _
      $region52: #{densenet_forward.18} parent=39 // pred_fallthru
        _
    $region40: #{densenet_forward.18} parent=5 // pred_fallthru
      _
    %p2094 = scmp.le.s32.totalorder 2, %s14
    // Predicated region
    $region53: #{densenet_forward.18} parent=5 // pred_check
      %p2095 = pneg %p2094
    $region54: #{densenet_forward.18} parent=5 // pred_check_branch
      %2097 = sbr.rel (%p2095) target = $region56
    $region55: #{densenet_forward.18} parent=5 // pred_region
      %s2098 = ssub.s32 %s14, 2
      // Predicated region
      $region57: #{densenet_forward.18} parent=55 // pred_check
        %p2099 = pneg %p153
      $region58: #{densenet_forward.18} parent=55 // pred_check_branch
        %2101 = sbr.rel (%p2099) target = $region60
      $region59: #{densenet_forward.18} parent=55 // pred_region
        %p2102 = scmp.lt.s32.totalorder %s20, 1
        %s2103 = scalar_select %p2102, %s20, 1
        %s2104 = smul.addr %s2103, 13
        %s2105 = smul.addr %s2104, 8
        %s2106 = scalar_lea.vmem %s5, %s2105
      $region60: #{densenet_forward.18} parent=55 // pred_fallthru
        _
      // Predicated region
      $region61: #{densenet_forward.18} parent=55 // pred_check
        %p2107 = pneg %p179
      $region62: #{densenet_forward.18} parent=55 // pred_check_branch
        %2109 = sbr.rel (%p2107) target = $region64
      $region63: #{densenet_forward.18} parent=55 // pred_region
        %p2110 = scmp.lt.s32.totalorder %s20, 1
        %s2111 = scalar_select %p2110, %s20, 1
        %s2112 = scalar_lea.vmem %s6, %s2111
      $region64: #{densenet_forward.18} parent=55 // pred_fallthru
        _
      // Predicated region
      $region65: #{densenet_forward.18} parent=55 // pred_check
        %p2113 = pneg %p205
      $region66: #{densenet_forward.18} parent=55 // pred_check_branch
        %2115 = sbr.rel (%p2113) target = $region68
      $region67: #{densenet_forward.18} parent=55 // pred_region
        %p2116 = scmp.lt.s32.totalorder %s20, 1
        %s2117 = scalar_select %p2116, %s20, 1
        %s2118 = scalar_lea.vmem %s7, %s2117
      $region68: #{densenet_forward.18} parent=55 // pred_fallthru
        _
    $region56: #{densenet_forward.18} parent=5 // pred_fallthru
      _
  $region6: #{densenet_forward.18} parent=0 // loop_footer
    %s18 = sadd.s32 1, %s14
  $region7: #{densenet_forward.18} parent=0 // loop_footer_branch
    %13 = sbr.rel target = $region3
  $region8: #{densenet_forward.18} parent=0 // loop_exit
    _

// kernel: densenet_forward.21
$region0: #{densenet_forward.21}
  #allocation0 [shape = 'u32[]', space=smem, size = 0x4, offset = 0x4, fixed_abs, tag = 'smem constant byte address 0x4 - core index']
  #allocation1 [shape = 'u32[144,128]{1,0:T(1,128)}', space=vmem, size = 0x12000, scoped, tag = 'internal scratch']
  %s0 = inlined_call_operand.vmem [shape: f32[200,32], index: 0, kind: input, shape index: {}]
  %s1 = inlined_call_operand.vmem [shape: f32[200,1], index: 1, kind: input, shape index: {}]
  %s2 = inlined_call_operand.vmem [shape: f32[1,32], index: 2, kind: input, shape index: {}]
  %s3 = inlined_call_operand.vmem [shape: f32[1,32], index: 3, kind: input, shape index: {}]
  %s4 = inlined_call_operand.vmem [shape: bf16[32,16], index: 4, kind: input, shape index: {}]
  %s5 = inlined_call_operand.vmem [shape: f32[200,16], index: 5, kind: output, shape index: {0}]
  %s6 = inlined_call_operand.hbm [shape: f32[1,1,16], index: 6, kind: output, shape index: {1}]
  %s7 = inlined_call_operand.hbm [shape: f32[1,1,16], index: 7, kind: output, shape index: {2}]
  %8 = xla_tuple %s5, %s6, %s7
  %s9 = sld [smem:[#allocation0]]
  $region46: #{densenet_forward.21} parent=0
    _
  %s11 = ssub.s32 1, %s9
  %s12 = scalar_select 0, %s11, %s9
  $region1: #{densenet_forward.21} parent=0
    #allocation2 [shape = 'u8[512]{0}', space=vmem, size = 0x400, scoped, tag = 'output window, operand 1, single buffered']
    #allocation3 [shape = 's32[1]{0}', space=sflag, size = 0x4, scoped, tag = 'scoped memory for densenet_forward.21']
    #allocation4 [shape = 'u8[512]{0}', space=vmem, size = 0x400, scoped, tag = 'output window, operand 2, single buffered']
    #allocation5 [shape = 's32[1]{0}', space=sflag, size = 0x4, scoped, tag = 'scoped memory for densenet_forward.21']
    %13 = vsyncpa [#allocation3], 0
    %14 = vsyncpa [#allocation5], 0
    // Predicated region
    $region2: #{densenet_forward.21} parent=1 // pred_check
      _
    $region3: #{densenet_forward.21} parent=1 // pred_check_branch
      %16 = sbr.rel (0) target = $region5
    $region4: #{densenet_forward.21} parent=1 // pred_region
      _
    $region5: #{densenet_forward.21} parent=1 // pred_fallthru
      _
    // Predicated region
    $region6: #{densenet_forward.21} parent=1 // pred_check
      _
    $region7: #{densenet_forward.21} parent=1 // pred_check_branch
      %18 = sbr.rel (0) target = $region9
    $region8: #{densenet_forward.21} parent=1 // pred_region
      _
    $region9: #{densenet_forward.21} parent=1 // pred_fallthru
      _
    // Predicated region
    $region10: #{densenet_forward.21} parent=1 // pred_check
      _
    $region11: #{densenet_forward.21} parent=1 // pred_check_branch
      %20 = sbr.rel (0) target = $region13
    $region12: #{densenet_forward.21} parent=1 // pred_region
      _
    $region13: #{densenet_forward.21} parent=1 // pred_fallthru
      _
    // Predicated region
    $region14: #{densenet_forward.21} parent=1 // pred_check
      _
    $region15: #{densenet_forward.21} parent=1 // pred_check_branch
      %22 = sbr.rel (0) target = $region17
    $region16: #{densenet_forward.21} parent=1 // pred_region
      _
    $region17: #{densenet_forward.21} parent=1 // pred_fallthru
      _
    // Predicated region
    $region18: #{densenet_forward.21} parent=1 // pred_check
      _
    $region19: #{densenet_forward.21} parent=1 // pred_check_branch
      %24 = sbr.rel (0) target = $region21
    $region20: #{densenet_forward.21} parent=1 // pred_region
      _
    $region21: #{densenet_forward.21} parent=1 // pred_fallthru
      _
    %s26 = smul.u32 0, 200
    %v27 = vlaneseq
    %v28 = vshrl.u32 %v27, 7
    %v29 = vadd.s32 %v28, 8
    %v30 = vadd.s32 %v28, 16
    %v31 = vadd.s32 %v28, 24
    %v32 = vadd.s32 %v28, 32
    %v33 = vadd.s32 %v28, 40
    %v34 = vadd.s32 %v28, 48
    %v35 = vadd.s32 %v28, 56
    %v36 = vadd.s32 %v28, 64
    %v37 = vadd.s32 %v28, 72
    %v38 = vadd.s32 %v28, 80
    %v39 = vadd.s32 %v28, 88
    %v40 = vadd.s32 %v28, 96
    %v41 = vadd.s32 %v28, 104
    %v42 = vadd.s32 %v28, 112
    %v43 = vadd.s32 %v28, 120
    %v44 = vadd.s32 %v28, 128
    %v45 = vadd.s32 %v28, 136
    %v46 = vadd.s32 %v28, 144
    %v47 = vadd.s32 %v28, 152
    %v48 = vadd.s32 %v28, 160
    %v49 = vadd.s32 %v28, 168
    %v50 = vadd.s32 %v28, 176
    %v51 = vadd.s32 %v28, 184
    %v52 = vadd.s32 %v28, 192
    %v53 = vstv %s26
    %v54 = vadd.s32 %v53, %v28
    %v55 = vadd.s32 %v53, %v29
    %v56 = vadd.s32 %v53, %v30
    %v57 = vadd.s32 %v53, %v31
    %v58 = vadd.s32 %v53, %v32
    %v59 = vadd.s32 %v53, %v33
    %v60 = vadd.s32 %v53, %v34
    %v61 = vadd.s32 %v53, %v35
    %v62 = vadd.s32 %v53, %v36
    %v63 = vadd.s32 %v53, %v37
    %v64 = vadd.s32 %v53, %v38
    %v65 = vadd.s32 %v53, %v39
    %v66 = vadd.s32 %v53, %v40
    %v67 = vadd.s32 %v53, %v41
    %v68 = vadd.s32 %v53, %v42
    %v69 = vadd.s32 %v53, %v43
    %v70 = vadd.s32 %v53, %v44
    %v71 = vadd.s32 %v53, %v45
    %v72 = vadd.s32 %v53, %v46
    %v73 = vadd.s32 %v53, %v47
    %v74 = vadd.s32 %v53, %v48
    %v75 = vadd.s32 %v53, %v49
    %v76 = vadd.s32 %v53, %v50
    %v77 = vadd.s32 %v53, %v51
    %v78 = vadd.s32 %v53, %v52
    %vm79 = vcmp.lt.s32.totalorder %v54, 200
    %vm80 = vcmp.lt.s32.totalorder %v55, 200
    %vm81 = vcmp.lt.s32.totalorder %v56, 200
    %vm82 = vcmp.lt.s32.totalorder %v57, 200
    %vm83 = vcmp.lt.s32.totalorder %v58, 200
    %vm84 = vcmp.lt.s32.totalorder %v59, 200
    %vm85 = vcmp.lt.s32.totalorder %v60, 200
    %vm86 = vcmp.lt.s32.totalorder %v61, 200
    %vm87 = vcmp.lt.s32.totalorder %v62, 200
    %vm88 = vcmp.lt.s32.totalorder %v63, 200
    %vm89 = vcmp.lt.s32.totalorder %v64, 200
    %vm90 = vcmp.lt.s32.totalorder %v65, 200
    %vm91 = vcmp.lt.s32.totalorder %v66, 200
    %vm92 = vcmp.lt.s32.totalorder %v67, 200
    %vm93 = vcmp.lt.s32.totalorder %v68, 200
    %vm94 = vcmp.lt.s32.totalorder %v69, 200
    %vm95 = vcmp.lt.s32.totalorder %v70, 200
    %vm96 = vcmp.lt.s32.totalorder %v71, 200
    %vm97 = vcmp.lt.s32.totalorder %v72, 200
    %vm98 = vcmp.lt.s32.totalorder %v73, 200
    %vm99 = vcmp.lt.s32.totalorder %v74, 200
    %vm100 = vcmp.lt.s32.totalorder %v75, 200
    %vm101 = vcmp.lt.s32.totalorder %v76, 200
    %vm102 = vcmp.lt.s32.totalorder %v77, 200
    %vm103 = vcmp.lt.s32.totalorder %v78, 200
    %v104 = vld [vmem:[%s0] sm:$0xff]
    %v105 = vld [vmem:[%s0 + $0x8] sm:$0xff]
    %v106 = vld [vmem:[%s0 + $0x10] sm:$0xff]
    %v107 = vld [vmem:[%s0 + $0x18] sm:$0xff]
    %v108 = vld [vmem:[%s0 + $0x20] sm:$0xff]
    %v109 = vld [vmem:[%s0 + $0x28] sm:$0xff]
    %v110 = vld [vmem:[%s0 + $0x30] sm:$0xff]
    %v111 = vld [vmem:[%s0 + $0x38] sm:$0xff]
    %v112 = vld [vmem:[%s0 + $0x40] sm:$0xff]
    %v113 = vld [vmem:[%s0 + $0x48] sm:$0xff]
    %v114 = vld [vmem:[%s0 + $0x50] sm:$0xff]
    %v115 = vld [vmem:[%s0 + $0x58] sm:$0xff]
    %v116 = vld [vmem:[%s0 + $0x60] sm:$0xff]
    %v117 = vld [vmem:[%s0 + $0x68] sm:$0xff]
    %v118 = vld [vmem:[%s0 + $0x70] sm:$0xff]
    %v119 = vld [vmem:[%s0 + $0x78] sm:$0xff]
    %v120 = vld [vmem:[%s0 + $0x80] sm:$0xff]
    %v121 = vld [vmem:[%s0 + $0x88] sm:$0xff]
    %v122 = vld [vmem:[%s0 + $0x90] sm:$0xff]
    %v123 = vld [vmem:[%s0 + $0x98] sm:$0xff]
    %v124 = vld [vmem:[%s0 + $0xa0] sm:$0xff]
    %v125 = vld [vmem:[%s0 + $0xa8] sm:$0xff]
    %v126 = vld [vmem:[%s0 + $0xb0] sm:$0xff]
    %v127 = vld [vmem:[%s0 + $0xb8] sm:$0xff]
    %v128 = vld [vmem:[%s0 + $0xc0] sm:$0xff]
    %v129 = vld [vmem:[%s2] sm:$0x1]
    %v131 = vlaneseq
    %v132 = vshrl.u32 %v131, 7
    %v133 = vsub.s32 0, %v132
    %v134 = vrot.slane %v129, %v133
    %v136 = vmul.f32 %v104, %v134
    %v137 = vmul.f32 %v105, %v134
    %v138 = vmul.f32 %v106, %v134
    %v139 = vmul.f32 %v107, %v134
    %v140 = vmul.f32 %v108, %v134
    %v141 = vmul.f32 %v109, %v134
    %v142 = vmul.f32 %v110, %v134
    %v143 = vmul.f32 %v111, %v134
    %v144 = vmul.f32 %v112, %v134
    %v145 = vmul.f32 %v113, %v134
    %v146 = vmul.f32 %v114, %v134
    %v147 = vmul.f32 %v115, %v134
    %v148 = vmul.f32 %v116, %v134
    %v149 = vmul.f32 %v117, %v134
    %v150 = vmul.f32 %v118, %v134
    %v151 = vmul.f32 %v119, %v134
    %v152 = vmul.f32 %v120, %v134
    %v153 = vmul.f32 %v121, %v134
    %v154 = vmul.f32 %v122, %v134
    %v155 = vmul.f32 %v123, %v134
    %v156 = vmul.f32 %v124, %v134
    %v157 = vmul.f32 %v125, %v134
    %v158 = vmul.f32 %v126, %v134
    %v159 = vmul.f32 %v127, %v134
    %v160 = vmul.f32 %v128, %v134
    %v161 = vld [vmem:[%s3] sm:$0x1]
    %v163 = vlaneseq
    %v164 = vshrl.u32 %v163, 7
    %v165 = vsub.s32 0, %v164
    %v166 = vrot.slane %v161, %v165
    %v168 = vadd.f32 %v136, %v166
    %v169 = vadd.f32 %v137, %v166
    %v170 = vadd.f32 %v138, %v166
    %v171 = vadd.f32 %v139, %v166
    %v172 = vadd.f32 %v140, %v166
    %v173 = vadd.f32 %v141, %v166
    %v174 = vadd.f32 %v142, %v166
    %v175 = vadd.f32 %v143, %v166
    %v176 = vadd.f32 %v144, %v166
    %v177 = vadd.f32 %v145, %v166
    %v178 = vadd.f32 %v146, %v166
    %v179 = vadd.f32 %v147, %v166
    %v180 = vadd.f32 %v148, %v166
    %v181 = vadd.f32 %v149, %v166
    %v182 = vadd.f32 %v150, %v166
    %v183 = vadd.f32 %v151, %v166
    %v184 = vadd.f32 %v152, %v166
    %v185 = vadd.f32 %v153, %v166
    %v186 = vadd.f32 %v154, %v166
    %v187 = vadd.f32 %v155, %v166
    %v188 = vadd.f32 %v156, %v166
    %v189 = vadd.f32 %v157, %v166
    %v190 = vadd.f32 %v158, %v166
    %v191 = vadd.f32 %v159, %v166
    %v192 = vadd.f32 %v160, %v166
    %v193 = vmax.f32 %v168, 0.0
    %v194 = vmax.f32 %v169, 0.0
    %v195 = vmax.f32 %v170, 0.0
    %v196 = vmax.f32 %v171, 0.0
    %v197 = vmax.f32 %v172, 0.0
    %v198 = vmax.f32 %v173, 0.0
    %v199 = vmax.f32 %v174, 0.0
    %v200 = vmax.f32 %v175, 0.0
    %v201 = vmax.f32 %v176, 0.0
    %v202 = vmax.f32 %v177, 0.0
    %v203 = vmax.f32 %v178, 0.0
    %v204 = vmax.f32 %v179, 0.0
    %v205 = vmax.f32 %v180, 0.0
    %v206 = vmax.f32 %v181, 0.0
    %v207 = vmax.f32 %v182, 0.0
    %v208 = vmax.f32 %v183, 0.0
    %v209 = vmax.f32 %v184, 0.0
    %v210 = vmax.f32 %v185, 0.0
    %v211 = vmax.f32 %v186, 0.0
    %v212 = vmax.f32 %v187, 0.0
    %v213 = vmax.f32 %v188, 0.0
    %v214 = vmax.f32 %v189, 0.0
    %v215 = vmax.f32 %v190, 0.0
    %v216 = vmax.f32 %v191, 0.0
    %v217 = vmax.f32 %v192, 0.0
    %v218 = vld [vmem:[%s1] sm:$0xff]
    %v219 = vld [vmem:[%s1 + $0x8] sm:$0xff]
    %v220 = vld [vmem:[%s1 + $0x10] sm:$0xff]
    %v221 = vld [vmem:[%s1 + $0x18] sm:$0xff]
    %v222 = vld [vmem:[%s1 + $0x20] sm:$0xff]
    %v223 = vld [vmem:[%s1 + $0x28] sm:$0xff]
    %v224 = vld [vmem:[%s1 + $0x30] sm:$0xff]
    %v225 = vld [vmem:[%s1 + $0x38] sm:$0xff]
    %v226 = vld [vmem:[%s1 + $0x40] sm:$0xff]
    %v227 = vld [vmem:[%s1 + $0x48] sm:$0xff]
    %v228 = vld [vmem:[%s1 + $0x50] sm:$0xff]
    %v229 = vld [vmem:[%s1 + $0x58] sm:$0xff]
    %v230 = vld [vmem:[%s1 + $0x60] sm:$0xff]
    %v231 = vld [vmem:[%s1 + $0x68] sm:$0xff]
    %v232 = vld [vmem:[%s1 + $0x70] sm:$0xff]
    %v233 = vld [vmem:[%s1 + $0x78] sm:$0xff]
    %v234 = vld [vmem:[%s1 + $0x80] sm:$0xff]
    %v235 = vld [vmem:[%s1 + $0x88] sm:$0xff]
    %v236 = vld [vmem:[%s1 + $0x90] sm:$0xff]
    %v237 = vld [vmem:[%s1 + $0x98] sm:$0xff]
    %v238 = vld [vmem:[%s1 + $0xa0] sm:$0xff]
    %v239 = vld [vmem:[%s1 + $0xa8] sm:$0xff]
    %v240 = vld [vmem:[%s1 + $0xb0] sm:$0xff]
    %v241 = vld [vmem:[%s1 + $0xb8] sm:$0xff]
    %v242 = vld [vmem:[%s1 + $0xc0] sm:$0xff]
    %244 = vset.pattern.permute.xlu0 0
    %245 = vperm.xlu0 %244, %v218
    %v246 = vpop.permute.xlu0 %245
    %249 = vset.pattern.permute.xlu0 0
    %250 = vperm.xlu0 %249, %v219
    %v251 = vpop.permute.xlu0 %250
    %254 = vset.pattern.permute.xlu0 0
    %255 = vperm.xlu0 %254, %v220
    %v256 = vpop.permute.xlu0 %255
    %259 = vset.pattern.permute.xlu0 0
    %260 = vperm.xlu0 %259, %v221
    %v261 = vpop.permute.xlu0 %260
    %264 = vset.pattern.permute.xlu0 0
    %265 = vperm.xlu0 %264, %v222
    %v266 = vpop.permute.xlu0 %265
    %269 = vset.pattern.permute.xlu0 0
    %270 = vperm.xlu0 %269, %v223
    %v271 = vpop.permute.xlu0 %270
    %274 = vset.pattern.permute.xlu0 0
    %275 = vperm.xlu0 %274, %v224
    %v276 = vpop.permute.xlu0 %275
    %279 = vset.pattern.permute.xlu0 0
    %280 = vperm.xlu0 %279, %v225
    %v281 = vpop.permute.xlu0 %280
    %284 = vset.pattern.permute.xlu0 0
    %285 = vperm.xlu0 %284, %v226
    %v286 = vpop.permute.xlu0 %285
    %289 = vset.pattern.permute.xlu0 0
    %290 = vperm.xlu0 %289, %v227
    %v291 = vpop.permute.xlu0 %290
    %294 = vset.pattern.permute.xlu0 0
    %295 = vperm.xlu0 %294, %v228
    %v296 = vpop.permute.xlu0 %295
    %299 = vset.pattern.permute.xlu0 0
    %300 = vperm.xlu0 %299, %v229
    %v301 = vpop.permute.xlu0 %300
    %304 = vset.pattern.permute.xlu0 0
    %305 = vperm.xlu0 %304, %v230
    %v306 = vpop.permute.xlu0 %305
    %309 = vset.pattern.permute.xlu0 0
    %310 = vperm.xlu0 %309, %v231
    %v311 = vpop.permute.xlu0 %310
    %314 = vset.pattern.permute.xlu0 0
    %315 = vperm.xlu0 %314, %v232
    %v316 = vpop.permute.xlu0 %315
    %319 = vset.pattern.permute.xlu0 0
    %320 = vperm.xlu0 %319, %v233
    %v321 = vpop.permute.xlu0 %320
    %324 = vset.pattern.permute.xlu0 0
    %325 = vperm.xlu0 %324, %v234
    %v326 = vpop.permute.xlu0 %325
    %329 = vset.pattern.permute.xlu0 0
    %330 = vperm.xlu0 %329, %v235
    %v331 = vpop.permute.xlu0 %330
    %334 = vset.pattern.permute.xlu0 0
    %335 = vperm.xlu0 %334, %v236
    %v336 = vpop.permute.xlu0 %335
    %339 = vset.pattern.permute.xlu0 0
    %340 = vperm.xlu0 %339, %v237
    %v341 = vpop.permute.xlu0 %340
    %344 = vset.pattern.permute.xlu0 0
    %345 = vperm.xlu0 %344, %v238
    %v346 = vpop.permute.xlu0 %345
    %349 = vset.pattern.permute.xlu0 0
    %350 = vperm.xlu0 %349, %v239
    %v351 = vpop.permute.xlu0 %350
    %354 = vset.pattern.permute.xlu0 0
    %355 = vperm.xlu0 %354, %v240
    %v356 = vpop.permute.xlu0 %355
    %359 = vset.pattern.permute.xlu0 0
    %360 = vperm.xlu0 %359, %v241
    %v361 = vpop.permute.xlu0 %360
    %364 = vset.pattern.permute.xlu0 0
    %365 = vperm.xlu0 %364, %v242
    %v366 = vpop.permute.xlu0 %365
    %v368 = vmul.f32 %v193, %v246
    %v369 = vmul.f32 %v194, %v251
    %v370 = vmul.f32 %v195, %v256
    %v371 = vmul.f32 %v196, %v261
    %v372 = vmul.f32 %v197, %v266
    %v373 = vmul.f32 %v198, %v271
    %v374 = vmul.f32 %v199, %v276
    %v375 = vmul.f32 %v200, %v281
    %v376 = vmul.f32 %v201, %v286
    %v377 = vmul.f32 %v202, %v291
    %v378 = vmul.f32 %v203, %v296
    %v379 = vmul.f32 %v204, %v301
    %v380 = vmul.f32 %v205, %v306
    %v381 = vmul.f32 %v206, %v311
    %v382 = vmul.f32 %v207, %v316
    %v383 = vmul.f32 %v208, %v321
    %v384 = vmul.f32 %v209, %v326
    %v385 = vmul.f32 %v210, %v331
    %v386 = vmul.f32 %v211, %v336
    %v387 = vmul.f32 %v212, %v341
    %v388 = vmul.f32 %v213, %v346
    %v389 = vmul.f32 %v214, %v351
    %v390 = vmul.f32 %v215, %v356
    %v391 = vmul.f32 %v216, %v361
    %v392 = vmul.f32 %v217, %v366
    %v393 = vsel %vm79, 1, 0
    %v394 = vsel %vm80, 1, 0
    %v395 = vsel %vm81, 1, 0
    %v396 = vsel %vm82, 1, 0
    %v397 = vsel %vm83, 1, 0
    %v398 = vsel %vm84, 1, 0
    %v399 = vsel %vm85, 1, 0
    %v400 = vsel %vm86, 1, 0
    %v401 = vsel %vm87, 1, 0
    %v402 = vsel %vm88, 1, 0
    %v403 = vsel %vm89, 1, 0
    %v404 = vsel %vm90, 1, 0
    %v405 = vsel %vm91, 1, 0
    %v406 = vsel %vm92, 1, 0
    %v407 = vsel %vm93, 1, 0
    %v408 = vsel %vm94, 1, 0
    %v409 = vsel %vm95, 1, 0
    %v410 = vsel %vm96, 1, 0
    %v411 = vsel %vm97, 1, 0
    %v412 = vsel %vm98, 1, 0
    %v413 = vsel %vm99, 1, 0
    %v414 = vsel %vm100, 1, 0
    %v415 = vsel %vm101, 1, 0
    %v416 = vsel %vm102, 1, 0
    %v417 = vsel %vm103, 1, 0
    %vm418 = vcmp.eq.s32.totalorder %v393, 1
    %vm419 = vcmp.eq.s32.totalorder %v394, 1
    %vm420 = vcmp.eq.s32.totalorder %v395, 1
    %vm421 = vcmp.eq.s32.totalorder %v396, 1
    %vm422 = vcmp.eq.s32.totalorder %v397, 1
    %vm423 = vcmp.eq.s32.totalorder %v398, 1
    %vm424 = vcmp.eq.s32.totalorder %v399, 1
    %vm425 = vcmp.eq.s32.totalorder %v400, 1
    %vm426 = vcmp.eq.s32.totalorder %v401, 1
    %vm427 = vcmp.eq.s32.totalorder %v402, 1
    %vm428 = vcmp.eq.s32.totalorder %v403, 1
    %vm429 = vcmp.eq.s32.totalorder %v404, 1
    %vm430 = vcmp.eq.s32.totalorder %v405, 1
    %vm431 = vcmp.eq.s32.totalorder %v406, 1
    %vm432 = vcmp.eq.s32.totalorder %v407, 1
    %vm433 = vcmp.eq.s32.totalorder %v408, 1
    %vm434 = vcmp.eq.s32.totalorder %v409, 1
    %vm435 = vcmp.eq.s32.totalorder %v410, 1
    %vm436 = vcmp.eq.s32.totalorder %v411, 1
    %vm437 = vcmp.eq.s32.totalorder %v412, 1
    %vm438 = vcmp.eq.s32.totalorder %v413, 1
    %vm439 = vcmp.eq.s32.totalorder %v414, 1
    %vm440 = vcmp.eq.s32.totalorder %v415, 1
    %vm441 = vcmp.eq.s32.totalorder %v416, 1
    %vm442 = vcmp.eq.s32.totalorder %v417, 1
    %v443 = vsel %vm418, %v368, 0.0
    %v444 = vsel %vm419, %v369, 0.0
    %v445 = vsel %vm420, %v370, 0.0
    %v446 = vsel %vm421, %v371, 0.0
    %v447 = vsel %vm422, %v372, 0.0
    %v448 = vsel %vm423, %v373, 0.0
    %v449 = vsel %vm424, %v374, 0.0
    %v450 = vsel %vm425, %v375, 0.0
    %v451 = vsel %vm426, %v376, 0.0
    %v452 = vsel %vm427, %v377, 0.0
    %v453 = vsel %vm428, %v378, 0.0
    %v454 = vsel %vm429, %v379, 0.0
    %v455 = vsel %vm430, %v380, 0.0
    %v456 = vsel %vm431, %v381, 0.0
    %v457 = vsel %vm432, %v382, 0.0
    %v458 = vsel %vm433, %v383, 0.0
    %v459 = vsel %vm434, %v384, 0.0
    %v460 = vsel %vm435, %v385, 0.0
    %v461 = vsel %vm436, %v386, 0.0
    %v462 = vsel %vm437, %v387, 0.0
    %v463 = vsel %vm438, %v388, 0.0
    %v464 = vsel %vm439, %v389, 0.0
    %v465 = vsel %vm440, %v390, 0.0
    %v466 = vsel %vm441, %v391, 0.0
    %v467 = vsel %vm442, %v392, 0.0
    %v468 = vpack.c.bf16 %v444, %v443
    %v469 = vpack.c.bf16 %v446, %v445
    %v470 = vpack.c.bf16 %v448, %v447
    %v471 = vpack.c.bf16 %v450, %v449
    %v472 = vpack.c.bf16 %v452, %v451
    %v473 = vpack.c.bf16 %v454, %v453
    %v474 = vpack.c.bf16 %v456, %v455
    %v475 = vpack.c.bf16 %v458, %v457
    %v476 = vpack.c.bf16 %v460, %v459
    %v477 = vpack.c.bf16 %v462, %v461
    %v478 = vpack.c.bf16 %v464, %v463
    %v479 = vpack.c.bf16 %v466, %v465
    %v480 = vpack.c.bf16 %v467, %v467
    %v481 = vld [vmem:[%s4] sm:$0xf]
    %v482 = vld [vmem:[%s4 + $0x4] sm:$0xf]
    %v483 = vld [vmem:[%s4 + $0x8] sm:$0xf]
    %v484 = vld [vmem:[%s4 + $0xc] sm:$0xf]
    %v489 = vunpack.c.l.b16 %v481
    %v490 = vunpack.c.l.b16 %v482
    %v491 = vunpack.c.l.b16 %v483
    %v492 = vunpack.c.l.b16 %v484
    %v493 = vpack.c.b16 %v490, %v489
    %v494 = vpack.c.b16 %v492, %v491
    %vm497 = vcmask 261120
    %v499 = vsel %vm497, %v468, 0
    %v502 = vsel %vm497, %v469, 0
    %v505 = vsel %vm497, %v470, 0
    %v508 = vsel %vm497, %v471, 0
    %v511 = vsel %vm497, %v472, 0
    %v514 = vsel %vm497, %v473, 0
    %v517 = vsel %vm497, %v474, 0
    %v520 = vsel %vm497, %v475, 0
    %v523 = vsel %vm497, %v476, 0
    %v526 = vsel %vm497, %v477, 0
    %v529 = vsel %vm497, %v478, 0
    %v532 = vsel %vm497, %v479, 0
    %v535 = vsel %vm497, %v480, 0
    %537 = vmatprep.subr.bf16.mxu0 0
    %538 = vmatpush1.bf16.msra.mxu0 %v493
    %539 = vmatprep.subr.bf16.mxu0 0
    %540 = vmatpush1.bf16.msra.mxu0 %v494
    %541 = vmatprep.subr.bf16.mxu0 0
    %542 = vmatpush1.bf16.msra.mxu0 0
    %543 = vmatprep.subr.bf16.mxu0 0
    %544 = vmatpush1.bf16.msra.mxu0 0
    %545 = vmatprep.subr.bf16.mxu0 0
    %546 = vmatpush1.bf16.msra.mxu0 0
    %547 = vmatprep.subr.bf16.mxu0 0
    %548 = vmatpush1.bf16.msra.mxu0 0
    %549 = vmatprep.subr.bf16.mxu0 0
    %550 = vmatpush1.bf16.msra.mxu0 0
    %551 = vmatprep.subr.bf16.mxu0 0
    %552 = vmatpush1.bf16.msra.mxu0 0
    %553 = vmatprep.subr.bf16.mxu0 0
    %554 = vmatpush1.bf16.msra.mxu0 0
    %555 = vmatprep.subr.bf16.mxu0 0
    %556 = vmatpush1.bf16.msra.mxu0 0
    %557 = vmatprep.subr.bf16.mxu0 0
    %558 = vmatpush1.bf16.msra.mxu0 0
    %559 = vmatprep.subr.bf16.mxu0 0
    %560 = vmatpush1.bf16.msra.mxu0 0
    %561 = vmatprep.subr.bf16.mxu0 0
    %562 = vmatpush1.bf16.msra.mxu0 0
    %563 = vmatprep.subr.bf16.mxu0 0
    %564 = vmatpush1.bf16.msra.mxu0 0
    %565 = vmatprep.subr.bf16.mxu0 0
    %566 = vmatpush1.bf16.msra.mxu0 0
    %567 = vmatprep.subr.bf16.mxu0 0
    %568 = vmatpush1.bf16.msra.mxu0 0
    %569 = vmatprep.mubr.bf16.mxu0 0
    %570 = vmatmul.mubr.bf16.gmra.mrb[0].mxu0 %v499
    %v571 = vpop.f32.mrb[0].mxu0
    %v572 = vadd.f32 0.0, %v571
    %v573 = vpop.f32.mrb[0].mxu0
    %v574 = vpop.f32.mrb[0].mxu0
    %v575 = vadd.f32 0.0, %v574
    %v576 = vpop.f32.mrb[0].mxu0
    %577 = vmatprep.mubr.bf16.mxu0 0
    %578 = vmatmul.mubr.bf16.gmra.mrb[0].mxu0 %v502
    %v579 = vpop.f32.mrb[0].mxu0
    %v580 = vadd.f32 0.0, %v579
    %v581 = vpop.f32.mrb[0].mxu0
    %v582 = vpop.f32.mrb[0].mxu0
    %v583 = vadd.f32 0.0, %v582
    %v584 = vpop.f32.mrb[0].mxu0
    %585 = vmatprep.mubr.bf16.mxu0 0
    %586 = vmatmul.mubr.bf16.gmra.mrb[0].mxu0 %v505
    %v587 = vpop.f32.mrb[0].mxu0
    %v588 = vadd.f32 0.0, %v587
    %v589 = vpop.f32.mrb[0].mxu0
    %v590 = vpop.f32.mrb[0].mxu0
    %v591 = vadd.f32 0.0, %v590
    %v592 = vpop.f32.mrb[0].mxu0
    %593 = vmatprep.mubr.bf16.mxu0 0
    %594 = vmatmul.mubr.bf16.gmra.mrb[0].mxu0 %v508
    %v595 = vpop.f32.mrb[0].mxu0
    %v596 = vadd.f32 0.0, %v595
    %v597 = vpop.f32.mrb[0].mxu0
    %v598 = vpop.f32.mrb[0].mxu0
    %v599 = vadd.f32 0.0, %v598
    %v600 = vpop.f32.mrb[0].mxu0
    %601 = vmatprep.mubr.bf16.mxu0 0
    %602 = vmatmul.mubr.bf16.gmra.mrb[0].mxu0 %v511
    %v603 = vpop.f32.mrb[0].mxu0
    %v604 = vadd.f32 0.0, %v603
    %v605 = vpop.f32.mrb[0].mxu0
    %v606 = vpop.f32.mrb[0].mxu0
    %v607 = vadd.f32 0.0, %v606
    %v608 = vpop.f32.mrb[0].mxu0
    %609 = vmatprep.mubr.bf16.mxu0 0
    %610 = vmatmul.mubr.bf16.gmra.mrb[0].mxu0 %v514
    %v611 = vpop.f32.mrb[0].mxu0
    %v612 = vadd.f32 0.0, %v611
    %v613 = vpop.f32.mrb[0].mxu0
    %v614 = vpop.f32.mrb[0].mxu0
    %v615 = vadd.f32 0.0, %v614
    %v616 = vpop.f32.mrb[0].mxu0
    %617 = vmatprep.mubr.bf16.mxu0 0
    %618 = vmatmul.mubr.bf16.gmra.mrb[0].mxu0 %v517
    %v619 = vpop.f32.mrb[0].mxu0
    %v620 = vadd.f32 0.0, %v619
    %v621 = vpop.f32.mrb[0].mxu0
    %v622 = vpop.f32.mrb[0].mxu0
    %v623 = vadd.f32 0.0, %v622
    %v624 = vpop.f32.mrb[0].mxu0
    %625 = vmatprep.mubr.bf16.mxu0 0
    %626 = vmatmul.mubr.bf16.gmra.mrb[0].mxu0 %v520
    %v627 = vpop.f32.mrb[0].mxu0
    %v628 = vadd.f32 0.0, %v627
    %v629 = vpop.f32.mrb[0].mxu0
    %v630 = vpop.f32.mrb[0].mxu0
    %v631 = vadd.f32 0.0, %v630
    %v632 = vpop.f32.mrb[0].mxu0
    %633 = vmatprep.mubr.bf16.mxu0 0
    %634 = vmatmul.mubr.bf16.gmra.mrb[0].mxu0 %v523
    %v635 = vpop.f32.mrb[0].mxu0
    %v636 = vadd.f32 0.0, %v635
    %v637 = vpop.f32.mrb[0].mxu0
    %v638 = vpop.f32.mrb[0].mxu0
    %v639 = vadd.f32 0.0, %v638
    %v640 = vpop.f32.mrb[0].mxu0
    %641 = vmatprep.mubr.bf16.mxu0 0
    %642 = vmatmul.mubr.bf16.gmra.mrb[0].mxu0 %v526
    %v643 = vpop.f32.mrb[0].mxu0
    %v644 = vadd.f32 0.0, %v643
    %v645 = vpop.f32.mrb[0].mxu0
    %v646 = vpop.f32.mrb[0].mxu0
    %v647 = vadd.f32 0.0, %v646
    %v648 = vpop.f32.mrb[0].mxu0
    %649 = vmatprep.mubr.bf16.mxu0 0
    %650 = vmatmul.mubr.bf16.gmra.mrb[0].mxu0 %v529
    %v651 = vpop.f32.mrb[0].mxu0
    %v652 = vadd.f32 0.0, %v651
    %v653 = vpop.f32.mrb[0].mxu0
    %v654 = vpop.f32.mrb[0].mxu0
    %v655 = vadd.f32 0.0, %v654
    %v656 = vpop.f32.mrb[0].mxu0
    %657 = vmatprep.mubr.bf16.mxu0 0
    %658 = vmatmul.mubr.bf16.gmra.mrb[0].mxu0 %v532
    %v659 = vpop.f32.mrb[0].mxu0
    %v660 = vadd.f32 0.0, %v659
    %v661 = vpop.f32.mrb[0].mxu0
    %v662 = vpop.f32.mrb[0].mxu0
    %v663 = vadd.f32 0.0, %v662
    %v664 = vpop.f32.mrb[0].mxu0
    %665 = vmatprep.mubr.bf16.mxu0 0
    %666 = vmatmul.mubr.bf16.gmra.mrb[0].mxu0 %v535
    %v667 = vpop.f32.mrb[0].mxu0
    %v668 = vadd.f32 0.0, %v667
    %v669 = vpop.f32.mrb[0].mxu0
    %v670 = vpop.f32.mrb[0].mxu0
    %v671 = vpop.f32.mrb[0].mxu0
    %672 = vdwg.mxu0
    %vm673 = vcmask 130048
    %674 = vst.msk [vmem:[%s5] sm:$0xff] %vm673, %v572
    %675 = vst.msk [vmem:[%s5 + $0x8] sm:$0xff] %vm673, %v575
    %676 = vst.msk [vmem:[%s5 + $0x10] sm:$0xff] %vm673, %v580
    %677 = vst.msk [vmem:[%s5 + $0x18] sm:$0xff] %vm673, %v583
    %678 = vst.msk [vmem:[%s5 + $0x20] sm:$0xff] %vm673, %v588
    %679 = vst.msk [vmem:[%s5 + $0x28] sm:$0xff] %vm673, %v591
    %680 = vst.msk [vmem:[%s5 + $0x30] sm:$0xff] %vm673, %v596
    %681 = vst.msk [vmem:[%s5 + $0x38] sm:$0xff] %vm673, %v599
    %682 = vst.msk [vmem:[%s5 + $0x40] sm:$0xff] %vm673, %v604
    %683 = vst.msk [vmem:[%s5 + $0x48] sm:$0xff] %vm673, %v607
    %684 = vst.msk [vmem:[%s5 + $0x50] sm:$0xff] %vm673, %v612
    %685 = vst.msk [vmem:[%s5 + $0x58] sm:$0xff] %vm673, %v615
    %686 = vst.msk [vmem:[%s5 + $0x60] sm:$0xff] %vm673, %v620
    %687 = vst.msk [vmem:[%s5 + $0x68] sm:$0xff] %vm673, %v623
    %688 = vst.msk [vmem:[%s5 + $0x70] sm:$0xff] %vm673, %v628
    %689 = vst.msk [vmem:[%s5 + $0x78] sm:$0xff] %vm673, %v631
    %690 = vst.msk [vmem:[%s5 + $0x80] sm:$0xff] %vm673, %v636
    %691 = vst.msk [vmem:[%s5 + $0x88] sm:$0xff] %vm673, %v639
    %692 = vst.msk [vmem:[%s5 + $0x90] sm:$0xff] %vm673, %v644
    %693 = vst.msk [vmem:[%s5 + $0x98] sm:$0xff] %vm673, %v647
    %694 = vst.msk [vmem:[%s5 + $0xa0] sm:$0xff] %vm673, %v652
    %695 = vst.msk [vmem:[%s5 + $0xa8] sm:$0xff] %vm673, %v655
    %696 = vst.msk [vmem:[%s5 + $0xb0] sm:$0xff] %vm673, %v660
    %697 = vst.msk [vmem:[%s5 + $0xb8] sm:$0xff] %vm673, %v663
    %698 = vst.msk [vmem:[%s5 + $0xc0] sm:$0xff] %vm673, %v668
    %v699 = vsel %vm673, %v572, 0.0
    %v700 = vsel %vm673, %v575, 0.0
    %v701 = vadd.f32 %v699, %v700
    %v702 = vsel %vm673, %v580, 0.0
    %v703 = vadd.f32 %v701, %v702
    %v704 = vsel %vm673, %v583, 0.0
    %v705 = vadd.f32 %v703, %v704
    %v706 = vsel %vm673, %v588, 0.0
    %v707 = vadd.f32 %v705, %v706
    %v708 = vsel %vm673, %v591, 0.0
    %v709 = vadd.f32 %v707, %v708
    %v710 = vsel %vm673, %v596, 0.0
    %v711 = vadd.f32 %v709, %v710
    %v712 = vsel %vm673, %v599, 0.0
    %v713 = vadd.f32 %v711, %v712
    %v714 = vsel %vm673, %v604, 0.0
    %v715 = vadd.f32 %v713, %v714
    %v716 = vsel %vm673, %v607, 0.0
    %v717 = vadd.f32 %v715, %v716
    %v718 = vsel %vm673, %v612, 0.0
    %v719 = vadd.f32 %v717, %v718
    %v720 = vsel %vm673, %v615, 0.0
    %v721 = vadd.f32 %v719, %v720
    %v722 = vsel %vm673, %v620, 0.0
    %v723 = vadd.f32 %v721, %v722
    %v724 = vsel %vm673, %v623, 0.0
    %v725 = vadd.f32 %v723, %v724
    %v726 = vsel %vm673, %v628, 0.0
    %v727 = vadd.f32 %v725, %v726
    %v728 = vsel %vm673, %v631, 0.0
    %v729 = vadd.f32 %v727, %v728
    %v730 = vsel %vm673, %v636, 0.0
    %v731 = vadd.f32 %v729, %v730
    %v732 = vsel %vm673, %v639, 0.0
    %v733 = vadd.f32 %v731, %v732
    %v734 = vsel %vm673, %v644, 0.0
    %v735 = vadd.f32 %v733, %v734
    %v736 = vsel %vm673, %v647, 0.0
    %v737 = vadd.f32 %v735, %v736
    %v738 = vsel %vm673, %v652, 0.0
    %v739 = vadd.f32 %v737, %v738
    %v740 = vsel %vm673, %v655, 0.0
    %v741 = vadd.f32 %v739, %v740
    %v742 = vsel %vm673, %v660, 0.0
    %v743 = vadd.f32 %v741, %v742
    %v744 = vsel %vm673, %v663, 0.0
    %v745 = vadd.f32 %v743, %v744
    %v746 = vsel %vm673, %v668, 0.0
    %v747 = vadd.f32 %v745, %v746
    %v748 = vrot.slane %v747, 4
    %v749 = vadd.f32 %v747, %v748
    %v750 = vrot.slane %v749, 2
    %v751 = vadd.f32 %v749, %v750
    %v752 = vrot.slane %v751, 1
    %v753 = vadd.f32 %v751, %v752
    %vm754 = vcmask 122880
    %755 = vst.msk [vmem:[#allocation2] sm:$0x1] %vm754, %v753
    %v756 = vmul.f32 %v572, %v572
    %v757 = vmul.f32 %v575, %v575
    %v758 = vmul.f32 %v580, %v580
    %v759 = vmul.f32 %v583, %v583
    %v760 = vmul.f32 %v588, %v588
    %v761 = vmul.f32 %v591, %v591
    %v762 = vmul.f32 %v596, %v596
    %v763 = vmul.f32 %v599, %v599
    %v764 = vmul.f32 %v604, %v604
    %v765 = vmul.f32 %v607, %v607
    %v766 = vmul.f32 %v612, %v612
    %v767 = vmul.f32 %v615, %v615
    %v768 = vmul.f32 %v620, %v620
    %v769 = vmul.f32 %v623, %v623
    %v770 = vmul.f32 %v628, %v628
    %v771 = vmul.f32 %v631, %v631
    %v772 = vmul.f32 %v636, %v636
    %v773 = vmul.f32 %v639, %v639
    %v774 = vmul.f32 %v644, %v644
    %v775 = vmul.f32 %v647, %v647
    %v776 = vmul.f32 %v652, %v652
    %v777 = vmul.f32 %v655, %v655
    %v778 = vmul.f32 %v660, %v660
    %v779 = vmul.f32 %v663, %v663
    %v780 = vmul.f32 %v668, %v668
    %v781 = vsel %vm673, %v756, 0.0
    %v782 = vsel %vm673, %v757, 0.0
    %v783 = vadd.f32 %v781, %v782
    %v784 = vsel %vm673, %v758, 0.0
    %v785 = vadd.f32 %v783, %v784
    %v786 = vsel %vm673, %v759, 0.0
    %v787 = vadd.f32 %v785, %v786
    %v788 = vsel %vm673, %v760, 0.0
    %v789 = vadd.f32 %v787, %v788
    %v790 = vsel %vm673, %v761, 0.0
    %v791 = vadd.f32 %v789, %v790
    %v792 = vsel %vm673, %v762, 0.0
    %v793 = vadd.f32 %v791, %v792
    %v794 = vsel %vm673, %v763, 0.0
    %v795 = vadd.f32 %v793, %v794
    %v796 = vsel %vm673, %v764, 0.0
    %v797 = vadd.f32 %v795, %v796
    %v798 = vsel %vm673, %v765, 0.0
    %v799 = vadd.f32 %v797, %v798
    %v800 = vsel %vm673, %v766, 0.0
    %v801 = vadd.f32 %v799, %v800
    %v802 = vsel %vm673, %v767, 0.0
    %v803 = vadd.f32 %v801, %v802
    %v804 = vsel %vm673, %v768, 0.0
    %v805 = vadd.f32 %v803, %v804
    %v806 = vsel %vm673, %v769, 0.0
    %v807 = vadd.f32 %v805, %v806
    %v808 = vsel %vm673, %v770, 0.0
    %v809 = vadd.f32 %v807, %v808
    %v810 = vsel %vm673, %v771, 0.0
    %v811 = vadd.f32 %v809, %v810
    %v812 = vsel %vm673, %v772, 0.0
    %v813 = vadd.f32 %v811, %v812
    %v814 = vsel %vm673, %v773, 0.0
    %v815 = vadd.f32 %v813, %v814
    %v816 = vsel %vm673, %v774, 0.0
    %v817 = vadd.f32 %v815, %v816
    %v818 = vsel %vm673, %v775, 0.0
    %v819 = vadd.f32 %v817, %v818
    %v820 = vsel %vm673, %v776, 0.0
    %v821 = vadd.f32 %v819, %v820
    %v822 = vsel %vm673, %v777, 0.0
    %v823 = vadd.f32 %v821, %v822
    %v824 = vsel %vm673, %v778, 0.0
    %v825 = vadd.f32 %v823, %v824
    %v826 = vsel %vm673, %v779, 0.0
    %v827 = vadd.f32 %v825, %v826
    %v828 = vsel %vm673, %v780, 0.0
    %v829 = vadd.f32 %v827, %v828
    %v830 = vrot.slane %v829, 4
    %v831 = vadd.f32 %v829, %v830
    %v832 = vrot.slane %v831, 2
    %v833 = vadd.f32 %v831, %v832
    %v834 = vrot.slane %v833, 1
    %v835 = vadd.f32 %v833, %v834
    %836 = vst.msk [vmem:[#allocation4] sm:$0x1] %vm754, %v835
    // Predicated region
    $region22: #{densenet_forward.21} parent=1 // pred_check
      _
    $region23: #{densenet_forward.21} parent=1 // pred_check_branch
      %838 = sbr.rel (0) target = $region25
    $region24: #{densenet_forward.21} parent=1 // pred_region
      _
    $region25: #{densenet_forward.21} parent=1 // pred_fallthru
      _
    // Predicated region
    $region26: #{densenet_forward.21} parent=1 // pred_check
      _
    $region27: #{densenet_forward.21} parent=1 // pred_check_branch
      %840 = sbr.rel (0) target = $region29
    $region28: #{densenet_forward.21} parent=1 // pred_region
      %s842 = ssub.s32 16, 16
      %843 = vsyncadd [#allocation3], %s842
      %s845 = sshll.u32 [#allocation2], 4
      %s846 = int_to_ptr.vmem [resolvable:$true] %s845
      %848 = dma.vmem_to_hbm [thread:$0]  %s846, 16, %s6, [#allocation3]
    $region29: #{densenet_forward.21} parent=1 // pred_fallthru
      _
    // Predicated region
    $region30: #{densenet_forward.21} parent=1 // pred_check
      _
    $region31: #{densenet_forward.21} parent=1 // pred_check_branch
      %850 = sbr.rel (0) target = $region33
    $region32: #{densenet_forward.21} parent=1 // pred_region
      %s852 = ssub.s32 16, 16
      %853 = vsyncadd [#allocation5], %s852
      %s855 = sshll.u32 [#allocation4], 4
      %s856 = int_to_ptr.vmem [resolvable:$true] %s855
      %858 = dma.vmem_to_hbm [thread:$0]  %s856, 16, %s7, [#allocation5]
    $region33: #{densenet_forward.21} parent=1 // pred_fallthru
      _
    // Predicated region
    $region34: #{densenet_forward.21} parent=1 // pred_check
      _
    $region35: #{densenet_forward.21} parent=1 // pred_check_branch
      %860 = sbr.rel (0) target = $region37
    $region36: #{densenet_forward.21} parent=1 // pred_region
      _
    $region37: #{densenet_forward.21} parent=1 // pred_fallthru
      _
    // Predicated region
    $region38: #{densenet_forward.21} parent=1 // pred_check
      _
    $region39: #{densenet_forward.21} parent=1 // pred_check_branch
      %862 = sbr.rel (0) target = $region41
    $region40: #{densenet_forward.21} parent=1 // pred_region
      %863 = dma.done [#allocation3], 16
    $region41: #{densenet_forward.21} parent=1 // pred_fallthru
      _
    // Predicated region
    $region42: #{densenet_forward.21} parent=1 // pred_check
      _
    $region43: #{densenet_forward.21} parent=1 // pred_check_branch
      %865 = sbr.rel (0) target = $region45
    $region44: #{densenet_forward.21} parent=1 // pred_region
      %866 = dma.done [#allocation5], 16
    $region45: #{densenet_forward.21} parent=1 // pred_fallthru
      _
    %867 = vsyncpa [#allocation3], 1
    %868 = vsyncpa [#allocation5], 1

// kernel: densenet_forward.22
$region0: #{densenet_forward.22}
  #allocation0 [shape = 'u32[]', space=smem, size = 0x4, offset = 0x4, fixed_abs, tag = 'smem constant byte address 0x4 - core index']
  #allocation1 [shape = 'u32[144,128]{1,0:T(1,128)}', space=vmem, size = 0x12000, scoped, tag = 'internal scratch']
  %s0 = inlined_call_operand.vmem [shape: f32[72,16], index: 0, kind: input, shape index: {}]
  %s1 = inlined_call_operand.vmem [shape: f32[1,1,16], index: 1, kind: output, shape index: {0}]
  %s2 = inlined_call_operand.vmem [shape: f32[1,1,16], index: 2, kind: output, shape index: {1}]
  %3 = xla_tuple %s1, %s2
  %s4 = sld [smem:[#allocation0]]
  $region22: #{densenet_forward.22} parent=0
    _
  %s6 = ssub.s32 1, %s4
  %s7 = scalar_select 0, %s6, %s4
  // Predicated region
  $region2: #{densenet_forward.22} parent=0 // pred_check
    _
  $region3: #{densenet_forward.22} parent=0 // pred_check_branch
    %9 = sbr.rel (0) target = $region5
  $region4: #{densenet_forward.22} parent=0 // pred_region
    _
  $region5: #{densenet_forward.22} parent=0 // pred_fallthru
    _
  %s10 = smul.u32 0, 72
  %v11 = vlaneseq
  %v12 = vshrl.u32 %v11, 7
  %v13 = vadd.s32 %v12, 8
  %v14 = vadd.s32 %v12, 16
  %v15 = vadd.s32 %v12, 24
  %v16 = vadd.s32 %v12, 32
  %v17 = vadd.s32 %v12, 40
  %v18 = vadd.s32 %v12, 48
  %v19 = vadd.s32 %v12, 56
  %v20 = vadd.s32 %v12, 64
  %v21 = vstv %s10
  %v22 = vadd.s32 %v21, %v12
  %v23 = vadd.s32 %v21, %v13
  %v24 = vadd.s32 %v21, %v14
  %v25 = vadd.s32 %v21, %v15
  %v26 = vadd.s32 %v21, %v16
  %v27 = vadd.s32 %v21, %v17
  %v28 = vadd.s32 %v21, %v18
  %v29 = vadd.s32 %v21, %v19
  %v30 = vadd.s32 %v21, %v20
  %vm31 = vcmp.lt.s32.totalorder %v22, 72
  %vm32 = vcmp.lt.s32.totalorder %v23, 72
  %vm33 = vcmp.lt.s32.totalorder %v24, 72
  %vm34 = vcmp.lt.s32.totalorder %v25, 72
  %vm35 = vcmp.lt.s32.totalorder %v26, 72
  %vm36 = vcmp.lt.s32.totalorder %v27, 72
  %vm37 = vcmp.lt.s32.totalorder %v28, 72
  %vm38 = vcmp.lt.s32.totalorder %v29, 72
  %vm39 = vcmp.lt.s32.totalorder %v30, 72
  %v40 = vld [vmem:[%s0] sm:$0xff]
  %v41 = vld [vmem:[%s0 + $0x8] sm:$0xff]
  %v42 = vld [vmem:[%s0 + $0x10] sm:$0xff]
  %v43 = vld [vmem:[%s0 + $0x18] sm:$0xff]
  %v44 = vld [vmem:[%s0 + $0x20] sm:$0xff]
  %v45 = vld [vmem:[%s0 + $0x28] sm:$0xff]
  %v46 = vld [vmem:[%s0 + $0x30] sm:$0xff]
  %v47 = vld [vmem:[%s0 + $0x38] sm:$0xff]
  %v48 = vld [vmem:[%s0 + $0x40] sm:$0xff]
  %v49 = vsel %vm31, 1, 0
  %v50 = vsel %vm32, 1, 0
  %v51 = vsel %vm33, 1, 0
  %v52 = vsel %vm34, 1, 0
  %v53 = vsel %vm35, 1, 0
  %v54 = vsel %vm36, 1, 0
  %v55 = vsel %vm37, 1, 0
  %v56 = vsel %vm38, 1, 0
  %v57 = vsel %vm39, 1, 0
  %vm58 = vcmp.eq.s32.totalorder %v49, 1
  %vm59 = vcmp.eq.s32.totalorder %v50, 1
  %vm60 = vcmp.eq.s32.totalorder %v51, 1
  %vm61 = vcmp.eq.s32.totalorder %v52, 1
  %vm62 = vcmp.eq.s32.totalorder %v53, 1
  %vm63 = vcmp.eq.s32.totalorder %v54, 1
  %vm64 = vcmp.eq.s32.totalorder %v55, 1
  %vm65 = vcmp.eq.s32.totalorder %v56, 1
  %vm66 = vcmp.eq.s32.totalorder %v57, 1
  %v67 = vsel %vm58, %v40, 0.0
  %v68 = vsel %vm59, %v41, 0.0
  %v69 = vsel %vm60, %v42, 0.0
  %v70 = vsel %vm61, %v43, 0.0
  %v71 = vsel %vm62, %v44, 0.0
  %v72 = vsel %vm63, %v45, 0.0
  %v73 = vsel %vm64, %v46, 0.0
  %v74 = vsel %vm65, %v47, 0.0
  %v75 = vsel %vm66, %v48, 0.0
  %vm76 = vcmask 130048
  %v77 = vsel %vm76, %v67, 0.0
  %v78 = vsel %vm76, %v68, 0.0
  %v79 = vadd.f32 %v77, %v78
  %v80 = vsel %vm76, %v69, 0.0
  %v81 = vadd.f32 %v79, %v80
  %v82 = vsel %vm76, %v70, 0.0
  %v83 = vadd.f32 %v81, %v82
  %v84 = vsel %vm76, %v71, 0.0
  %v85 = vadd.f32 %v83, %v84
  %v86 = vsel %vm76, %v72, 0.0
  %v87 = vadd.f32 %v85, %v86
  %v88 = vsel %vm76, %v73, 0.0
  %v89 = vadd.f32 %v87, %v88
  %v90 = vsel %vm76, %v74, 0.0
  %v91 = vadd.f32 %v89, %v90
  %v92 = vsel %vm76, %v75, 0.0
  %v93 = vadd.f32 %v91, %v92
  %v94 = vrot.slane %v93, 4
  %v95 = vadd.f32 %v93, %v94
  %v96 = vrot.slane %v95, 2
  %v97 = vadd.f32 %v95, %v96
  %v98 = vrot.slane %v97, 1
  %v99 = vadd.f32 %v97, %v98
  %vm100 = vcmask 122880
  %101 = vst.msk [vmem:[%s1] sm:$0x1] %vm100, %v99
  %v102 = vmul.f32 %v67, %v67
  %v103 = vmul.f32 %v68, %v68
  %v104 = vmul.f32 %v69, %v69
  %v105 = vmul.f32 %v70, %v70
  %v106 = vmul.f32 %v71, %v71
  %v107 = vmul.f32 %v72, %v72
  %v108 = vmul.f32 %v73, %v73
  %v109 = vmul.f32 %v74, %v74
  %v110 = vmul.f32 %v75, %v75
  %v111 = vsel %vm76, %v102, 0.0
  %v112 = vsel %vm76, %v103, 0.0
  %v113 = vadd.f32 %v111, %v112
  %v114 = vsel %vm76, %v104, 0.0
  %v115 = vadd.f32 %v113, %v114
  %v116 = vsel %vm76, %v105, 0.0
  %v117 = vadd.f32 %v115, %v116
  %v118 = vsel %vm76, %v106, 0.0
  %v119 = vadd.f32 %v117, %v118
  %v120 = vsel %vm76, %v107, 0.0
  %v121 = vadd.f32 %v119, %v120
  %v122 = vsel %vm76, %v108, 0.0
  %v123 = vadd.f32 %v121, %v122
  %v124 = vsel %vm76, %v109, 0.0
  %v125 = vadd.f32 %v123, %v124
  %v126 = vsel %vm76, %v110, 0.0
  %v127 = vadd.f32 %v125, %v126
  %v128 = vrot.slane %v127, 4
  %v129 = vadd.f32 %v127, %v128
  %v130 = vrot.slane %v129, 2
  %v131 = vadd.f32 %v129, %v130
  %v132 = vrot.slane %v131, 1
  %v133 = vadd.f32 %v131, %v132
  %134 = vst.msk [vmem:[%s2] sm:$0x1] %vm100, %v133
  // Predicated region
  $region6: #{densenet_forward.22} parent=0 // pred_check
    _
  $region7: #{densenet_forward.22} parent=0 // pred_check_branch
    %136 = sbr.rel (0) target = $region9
  $region8: #{densenet_forward.22} parent=0 // pred_region
    _
  $region9: #{densenet_forward.22} parent=0 // pred_fallthru
    _
  // Predicated region
  $region10: #{densenet_forward.22} parent=0 // pred_check
    _
  $region11: #{densenet_forward.22} parent=0 // pred_check_branch
    %138 = sbr.rel (0) target = $region13
  $region12: #{densenet_forward.22} parent=0 // pred_region
    _
  $region13: #{densenet_forward.22} parent=0 // pred_fallthru
    _
  // Predicated region
  $region14: #{densenet_forward.22} parent=0 // pred_check
    _
  $region15: #{densenet_forward.22} parent=0 // pred_check_branch
    %140 = sbr.rel (0) target = $region17
  $region16: #{densenet_forward.22} parent=0 // pred_region
    _
  $region17: #{densenet_forward.22} parent=0 // pred_fallthru
    _
  // Predicated region
  $region18: #{densenet_forward.22} parent=0 // pred_check
    _
  $region19: #{densenet_forward.22} parent=0 // pred_check_branch
    %142 = sbr.rel (0) target = $region21
  $region20: #{densenet_forward.22} parent=0 // pred_region
    _
  $region21: #{densenet_forward.22} parent=0 // pred_fallthru
    _

// kernel: densenet_forward.23
$region0: #{densenet_forward.23}
  #allocation0 [shape = 'u32[]', space=smem, size = 0x4, offset = 0x4, fixed_abs, tag = 'smem constant byte address 0x4 - core index']
  #allocation1 [shape = 'u32[144,128]{1,0:T(1,128)}', space=vmem, size = 0x12000, scoped, tag = 'internal scratch']
  %s0 = inlined_call_operand.vmem [shape: f32[72,16], index: 0, kind: input, shape index: {}]
  %s1 = inlined_call_operand.vmem [shape: f32[72,1], index: 1, kind: input, shape index: {}]
  %s2 = inlined_call_operand.vmem [shape: f32[1,16], index: 2, kind: input, shape index: {}]
  %s3 = inlined_call_operand.vmem [shape: f32[1,16], index: 3, kind: input, shape index: {}]
  %s4 = inlined_call_operand.vmem [shape: bf16[16,32], index: 4, kind: input, shape index: {}]
  %s5 = inlined_call_operand.vmem [shape: f32[72,32], index: 5, kind: output, shape index: {0}]
  %s6 = inlined_call_operand.vmem [shape: f32[1,1,32], index: 6, kind: output, shape index: {1}]
  %s7 = inlined_call_operand.vmem [shape: f32[1,1,32], index: 7, kind: output, shape index: {2}]
  %8 = xla_tuple %s5, %s6, %s7
  %s9 = sld [smem:[#allocation0]]
  $region46: #{densenet_forward.23} parent=0
    _
  %s11 = ssub.s32 1, %s9
  %s12 = scalar_select 0, %s11, %s9
  // Predicated region
  $region2: #{densenet_forward.23} parent=0 // pred_check
    _
  $region3: #{densenet_forward.23} parent=0 // pred_check_branch
    %14 = sbr.rel (0) target = $region5
  $region4: #{densenet_forward.23} parent=0 // pred_region
    _
  $region5: #{densenet_forward.23} parent=0 // pred_fallthru
    _
  // Predicated region
  $region6: #{densenet_forward.23} parent=0 // pred_check
    _
  $region7: #{densenet_forward.23} parent=0 // pred_check_branch
    %16 = sbr.rel (0) target = $region9
  $region8: #{densenet_forward.23} parent=0 // pred_region
    _
  $region9: #{densenet_forward.23} parent=0 // pred_fallthru
    _
  // Predicated region
  $region10: #{densenet_forward.23} parent=0 // pred_check
    _
  $region11: #{densenet_forward.23} parent=0 // pred_check_branch
    %18 = sbr.rel (0) target = $region13
  $region12: #{densenet_forward.23} parent=0 // pred_region
    _
  $region13: #{densenet_forward.23} parent=0 // pred_fallthru
    _
  // Predicated region
  $region14: #{densenet_forward.23} parent=0 // pred_check
    _
  $region15: #{densenet_forward.23} parent=0 // pred_check_branch
    %20 = sbr.rel (0) target = $region17
  $region16: #{densenet_forward.23} parent=0 // pred_region
    _
  $region17: #{densenet_forward.23} parent=0 // pred_fallthru
    _
  // Predicated region
  $region18: #{densenet_forward.23} parent=0 // pred_check
    _
  $region19: #{densenet_forward.23} parent=0 // pred_check_branch
    %22 = sbr.rel (0) target = $region21
  $region20: #{densenet_forward.23} parent=0 // pred_region
    _
  $region21: #{densenet_forward.23} parent=0 // pred_fallthru
    _
  %s24 = smul.u32 0, 72
  %v25 = vlaneseq
  %v26 = vshrl.u32 %v25, 7
  %v27 = vadd.s32 %v26, 8
  %v28 = vadd.s32 %v26, 16
  %v29 = vadd.s32 %v26, 24
  %v30 = vadd.s32 %v26, 32
  %v31 = vadd.s32 %v26, 40
  %v32 = vadd.s32 %v26, 48
  %v33 = vadd.s32 %v26, 56
  %v34 = vadd.s32 %v26, 64
  %v35 = vstv %s24
  %v36 = vadd.s32 %v35, %v26
  %v37 = vadd.s32 %v35, %v27
  %v38 = vadd.s32 %v35, %v28
  %v39 = vadd.s32 %v35, %v29
  %v40 = vadd.s32 %v35, %v30
  %v41 = vadd.s32 %v35, %v31
  %v42 = vadd.s32 %v35, %v32
  %v43 = vadd.s32 %v35, %v33
  %v44 = vadd.s32 %v35, %v34
  %vm45 = vcmp.lt.s32.totalorder %v36, 72
  %vm46 = vcmp.lt.s32.totalorder %v37, 72
  %vm47 = vcmp.lt.s32.totalorder %v38, 72
  %vm48 = vcmp.lt.s32.totalorder %v39, 72
  %vm49 = vcmp.lt.s32.totalorder %v40, 72
  %vm50 = vcmp.lt.s32.totalorder %v41, 72
  %vm51 = vcmp.lt.s32.totalorder %v42, 72
  %vm52 = vcmp.lt.s32.totalorder %v43, 72
  %vm53 = vcmp.lt.s32.totalorder %v44, 72
  %v54 = vld [vmem:[%s0] sm:$0xff]
  %v55 = vld [vmem:[%s0 + $0x8] sm:$0xff]
  %v56 = vld [vmem:[%s0 + $0x10] sm:$0xff]
  %v57 = vld [vmem:[%s0 + $0x18] sm:$0xff]
  %v58 = vld [vmem:[%s0 + $0x20] sm:$0xff]
  %v59 = vld [vmem:[%s0 + $0x28] sm:$0xff]
  %v60 = vld [vmem:[%s0 + $0x30] sm:$0xff]
  %v61 = vld [vmem:[%s0 + $0x38] sm:$0xff]
  %v62 = vld [vmem:[%s0 + $0x40] sm:$0xff]
  %v63 = vld [vmem:[%s2] sm:$0x1]
  %v65 = vlaneseq
  %v66 = vshrl.u32 %v65, 7
  %v67 = vsub.s32 0, %v66
  %v68 = vrot.slane %v63, %v67
  %v70 = vmul.f32 %v54, %v68
  %v71 = vmul.f32 %v55, %v68
  %v72 = vmul.f32 %v56, %v68
  %v73 = vmul.f32 %v57, %v68
  %v74 = vmul.f32 %v58, %v68
  %v75 = vmul.f32 %v59, %v68
  %v76 = vmul.f32 %v60, %v68
  %v77 = vmul.f32 %v61, %v68
  %v78 = vmul.f32 %v62, %v68
  %v79 = vld [vmem:[%s3] sm:$0x1]
  %v81 = vlaneseq
  %v82 = vshrl.u32 %v81, 7
  %v83 = vsub.s32 0, %v82
  %v84 = vrot.slane %v79, %v83
  %v86 = vadd.f32 %v70, %v84
  %v87 = vadd.f32 %v71, %v84
  %v88 = vadd.f32 %v72, %v84
  %v89 = vadd.f32 %v73, %v84
  %v90 = vadd.f32 %v74, %v84
  %v91 = vadd.f32 %v75, %v84
  %v92 = vadd.f32 %v76, %v84
  %v93 = vadd.f32 %v77, %v84
  %v94 = vadd.f32 %v78, %v84
  %v95 = vmax.f32 %v86, 0.0
  %v96 = vmax.f32 %v87, 0.0
  %v97 = vmax.f32 %v88, 0.0
  %v98 = vmax.f32 %v89, 0.0
  %v99 = vmax.f32 %v90, 0.0
  %v100 = vmax.f32 %v91, 0.0
  %v101 = vmax.f32 %v92, 0.0
  %v102 = vmax.f32 %v93, 0.0
  %v103 = vmax.f32 %v94, 0.0
  %v104 = vld [vmem:[%s1] sm:$0xff]
  %v105 = vld [vmem:[%s1 + $0x8] sm:$0xff]
  %v106 = vld [vmem:[%s1 + $0x10] sm:$0xff]
  %v107 = vld [vmem:[%s1 + $0x18] sm:$0xff]
  %v108 = vld [vmem:[%s1 + $0x20] sm:$0xff]
  %v109 = vld [vmem:[%s1 + $0x28] sm:$0xff]
  %v110 = vld [vmem:[%s1 + $0x30] sm:$0xff]
  %v111 = vld [vmem:[%s1 + $0x38] sm:$0xff]
  %v112 = vld [vmem:[%s1 + $0x40] sm:$0xff]
  %114 = vset.pattern.permute.xlu0 0
  %115 = vperm.xlu0 %114, %v104
  %v116 = vpop.permute.xlu0 %115
  %119 = vset.pattern.permute.xlu0 0
  %120 = vperm.xlu0 %119, %v105
  %v121 = vpop.permute.xlu0 %120
  %124 = vset.pattern.permute.xlu0 0
  %125 = vperm.xlu0 %124, %v106
  %v126 = vpop.permute.xlu0 %125
  %129 = vset.pattern.permute.xlu0 0
  %130 = vperm.xlu0 %129, %v107
  %v131 = vpop.permute.xlu0 %130
  %134 = vset.pattern.permute.xlu0 0
  %135 = vperm.xlu0 %134, %v108
  %v136 = vpop.permute.xlu0 %135
  %139 = vset.pattern.permute.xlu0 0
  %140 = vperm.xlu0 %139, %v109
  %v141 = vpop.permute.xlu0 %140
  %144 = vset.pattern.permute.xlu0 0
  %145 = vperm.xlu0 %144, %v110
  %v146 = vpop.permute.xlu0 %145
  %149 = vset.pattern.permute.xlu0 0
  %150 = vperm.xlu0 %149, %v111
  %v151 = vpop.permute.xlu0 %150
  %154 = vset.pattern.permute.xlu0 0
  %155 = vperm.xlu0 %154, %v112
  %v156 = vpop.permute.xlu0 %155
  %v158 = vmul.f32 %v95, %v116
  %v159 = vmul.f32 %v96, %v121
  %v160 = vmul.f32 %v97, %v126
  %v161 = vmul.f32 %v98, %v131
  %v162 = vmul.f32 %v99, %v136
  %v163 = vmul.f32 %v100, %v141
  %v164 = vmul.f32 %v101, %v146
  %v165 = vmul.f32 %v102, %v151
  %v166 = vmul.f32 %v103, %v156
  %v167 = vsel %vm45, 1, 0
  %v168 = vsel %vm46, 1, 0
  %v169 = vsel %vm47, 1, 0
  %v170 = vsel %vm48, 1, 0
  %v171 = vsel %vm49, 1, 0
  %v172 = vsel %vm50, 1, 0
  %v173 = vsel %vm51, 1, 0
  %v174 = vsel %vm52, 1, 0
  %v175 = vsel %vm53, 1, 0
  %vm176 = vcmp.eq.s32.totalorder %v167, 1
  %vm177 = vcmp.eq.s32.totalorder %v168, 1
  %vm178 = vcmp.eq.s32.totalorder %v169, 1
  %vm179 = vcmp.eq.s32.totalorder %v170, 1
  %vm180 = vcmp.eq.s32.totalorder %v171, 1
  %vm181 = vcmp.eq.s32.totalorder %v172, 1
  %vm182 = vcmp.eq.s32.totalorder %v173, 1
  %vm183 = vcmp.eq.s32.totalorder %v174, 1
  %vm184 = vcmp.eq.s32.totalorder %v175, 1
  %v185 = vsel %vm176, %v158, 0.0
  %v186 = vsel %vm177, %v159, 0.0
  %v187 = vsel %vm178, %v160, 0.0
  %v188 = vsel %vm179, %v161, 0.0
  %v189 = vsel %vm180, %v162, 0.0
  %v190 = vsel %vm181, %v163, 0.0
  %v191 = vsel %vm182, %v164, 0.0
  %v192 = vsel %vm183, %v165, 0.0
  %v193 = vsel %vm184, %v166, 0.0
  %v194 = vpack.c.bf16 %v186, %v185
  %v195 = vpack.c.bf16 %v188, %v187
  %v196 = vpack.c.bf16 %v190, %v189
  %v197 = vpack.c.bf16 %v192, %v191
  %v198 = vpack.c.bf16 %v193, %v193
  %v199 = vld [vmem:[%s4] sm:$0xf]
  %v200 = vld [vmem:[%s4 + $0x4] sm:$0xf]
  %v203 = vunpack.c.l.b16 %v199
  %v204 = vunpack.c.l.b16 %v200
  %v205 = vpack.c.b16 %v204, %v203
  %vm207 = vcmask 130048
  %v209 = vsel %vm207, %v194, 0
  %v212 = vsel %vm207, %v195, 0
  %v215 = vsel %vm207, %v196, 0
  %v218 = vsel %vm207, %v197, 0
  %v221 = vsel %vm207, %v198, 0
  %223 = vmatprep.subr.bf16.mxu0 0
  %224 = vmatpush1.bf16.msra.mxu0 %v205
  %225 = vmatprep.subr.bf16.mxu0 0
  %226 = vmatpush1.bf16.msra.mxu0 0
  %227 = vmatprep.subr.bf16.mxu0 0
  %228 = vmatpush1.bf16.msra.mxu0 0
  %229 = vmatprep.subr.bf16.mxu0 0
  %230 = vmatpush1.bf16.msra.mxu0 0
  %231 = vmatprep.subr.bf16.mxu0 0
  %232 = vmatpush1.bf16.msra.mxu0 0
  %233 = vmatprep.subr.bf16.mxu0 0
  %234 = vmatpush1.bf16.msra.mxu0 0
  %235 = vmatprep.subr.bf16.mxu0 0
  %236 = vmatpush1.bf16.msra.mxu0 0
  %237 = vmatprep.subr.bf16.mxu0 0
  %238 = vmatpush1.bf16.msra.mxu0 0
  %239 = vmatprep.subr.bf16.mxu0 0
  %240 = vmatpush1.bf16.msra.mxu0 0
  %241 = vmatprep.subr.bf16.mxu0 0
  %242 = vmatpush1.bf16.msra.mxu0 0
  %243 = vmatprep.subr.bf16.mxu0 0
  %244 = vmatpush1.bf16.msra.mxu0 0
  %245 = vmatprep.subr.bf16.mxu0 0
  %246 = vmatpush1.bf16.msra.mxu0 0
  %247 = vmatprep.subr.bf16.mxu0 0
  %248 = vmatpush1.bf16.msra.mxu0 0
  %249 = vmatprep.subr.bf16.mxu0 0
  %250 = vmatpush1.bf16.msra.mxu0 0
  %251 = vmatprep.subr.bf16.mxu0 0
  %252 = vmatpush1.bf16.msra.mxu0 0
  %253 = vmatprep.subr.bf16.mxu0 0
  %254 = vmatpush1.bf16.msra.mxu0 0
  %255 = vmatprep.mubr.bf16.mxu0 0
  %256 = vmatmul.mubr.bf16.gmra.mrb[0].mxu0 %v209
  %v257 = vpop.f32.mrb[0].mxu0
  %v258 = vadd.f32 0.0, %v257
  %v259 = vpop.f32.mrb[0].mxu0
  %v260 = vpop.f32.mrb[0].mxu0
  %v261 = vadd.f32 0.0, %v260
  %v262 = vpop.f32.mrb[0].mxu0
  %263 = vmatprep.mubr.bf16.mxu0 0
  %264 = vmatmul.mubr.bf16.gmra.mrb[0].mxu0 %v212
  %v265 = vpop.f32.mrb[0].mxu0
  %v266 = vadd.f32 0.0, %v265
  %v267 = vpop.f32.mrb[0].mxu0
  %v268 = vpop.f32.mrb[0].mxu0
  %v269 = vadd.f32 0.0, %v268
  %v270 = vpop.f32.mrb[0].mxu0
  %271 = vmatprep.mubr.bf16.mxu0 0
  %272 = vmatmul.mubr.bf16.gmra.mrb[0].mxu0 %v215
  %v273 = vpop.f32.mrb[0].mxu0
  %v274 = vadd.f32 0.0, %v273
  %v275 = vpop.f32.mrb[0].mxu0
  %v276 = vpop.f32.mrb[0].mxu0
  %v277 = vadd.f32 0.0, %v276
  %v278 = vpop.f32.mrb[0].mxu0
  %279 = vmatprep.mubr.bf16.mxu0 0
  %280 = vmatmul.mubr.bf16.gmra.mrb[0].mxu0 %v218
  %v281 = vpop.f32.mrb[0].mxu0
  %v282 = vadd.f32 0.0, %v281
  %v283 = vpop.f32.mrb[0].mxu0
  %v284 = vpop.f32.mrb[0].mxu0
  %v285 = vadd.f32 0.0, %v284
  %v286 = vpop.f32.mrb[0].mxu0
  %287 = vmatprep.mubr.bf16.mxu0 0
  %288 = vmatmul.mubr.bf16.gmra.mrb[0].mxu0 %v221
  %v289 = vpop.f32.mrb[0].mxu0
  %v290 = vadd.f32 0.0, %v289
  %v291 = vpop.f32.mrb[0].mxu0
  %v292 = vpop.f32.mrb[0].mxu0
  %v293 = vpop.f32.mrb[0].mxu0
  %294 = vdwg.mxu0
  %vm295 = vcmask 261120
  %296 = vst.msk [vmem:[%s5] sm:$0xff] %vm295, %v258
  %297 = vst.msk [vmem:[%s5 + $0x8] sm:$0xff] %vm295, %v261
  %298 = vst.msk [vmem:[%s5 + $0x10] sm:$0xff] %vm295, %v266
  %299 = vst.msk [vmem:[%s5 + $0x18] sm:$0xff] %vm295, %v269
  %300 = vst.msk [vmem:[%s5 + $0x20] sm:$0xff] %vm295, %v274
  %301 = vst.msk [vmem:[%s5 + $0x28] sm:$0xff] %vm295, %v277
  %302 = vst.msk [vmem:[%s5 + $0x30] sm:$0xff] %vm295, %v282
  %303 = vst.msk [vmem:[%s5 + $0x38] sm:$0xff] %vm295, %v285
  %304 = vst.msk [vmem:[%s5 + $0x40] sm:$0xff] %vm295, %v290
  %v305 = vsel %vm295, %v258, 0.0
  %v306 = vsel %vm295, %v261, 0.0
  %v307 = vadd.f32 %v305, %v306
  %v308 = vsel %vm295, %v266, 0.0
  %v309 = vadd.f32 %v307, %v308
  %v310 = vsel %vm295, %v269, 0.0
  %v311 = vadd.f32 %v309, %v310
  %v312 = vsel %vm295, %v274, 0.0
  %v313 = vadd.f32 %v311, %v312
  %v314 = vsel %vm295, %v277, 0.0
  %v315 = vadd.f32 %v313, %v314
  %v316 = vsel %vm295, %v282, 0.0
  %v317 = vadd.f32 %v315, %v316
  %v318 = vsel %vm295, %v285, 0.0
  %v319 = vadd.f32 %v317, %v318
  %v320 = vsel %vm295, %v290, 0.0
  %v321 = vadd.f32 %v319, %v320
  %v322 = vrot.slane %v321, 4
  %v323 = vadd.f32 %v321, %v322
  %v324 = vrot.slane %v323, 2
  %v325 = vadd.f32 %v323, %v324
  %v326 = vrot.slane %v325, 1
  %v327 = vadd.f32 %v325, %v326
  %vm328 = vcmask 253952
  %329 = vst.msk [vmem:[%s6] sm:$0x1] %vm328, %v327
  %v330 = vmul.f32 %v258, %v258
  %v331 = vmul.f32 %v261, %v261
  %v332 = vmul.f32 %v266, %v266
  %v333 = vmul.f32 %v269, %v269
  %v334 = vmul.f32 %v274, %v274
  %v335 = vmul.f32 %v277, %v277
  %v336 = vmul.f32 %v282, %v282
  %v337 = vmul.f32 %v285, %v285
  %v338 = vmul.f32 %v290, %v290
  %v339 = vsel %vm295, %v330, 0.0
  %v340 = vsel %vm295, %v331, 0.0
  %v341 = vadd.f32 %v339, %v340
  %v342 = vsel %vm295, %v332, 0.0
  %v343 = vadd.f32 %v341, %v342
  %v344 = vsel %vm295, %v333, 0.0
  %v345 = vadd.f32 %v343, %v344
  %v346 = vsel %vm295, %v334, 0.0
  %v347 = vadd.f32 %v345, %v346
  %v348 = vsel %vm295, %v335, 0.0
  %v349 = vadd.f32 %v347, %v348
  %v350 = vsel %vm295, %v336, 0.0
  %v351 = vadd.f32 %v349, %v350
  %v352 = vsel %vm295, %v337, 0.0
  %v353 = vadd.f32 %v351, %v352
  %v354 = vsel %vm295, %v338, 0.0
  %v355 = vadd.f32 %v353, %v354
  %v356 = vrot.slane %v355, 4
  %v357 = vadd.f32 %v355, %v356
  %v358 = vrot.slane %v357, 2
  %v359 = vadd.f32 %v357, %v358
  %v360 = vrot.slane %v359, 1
  %v361 = vadd.f32 %v359, %v360
  %362 = vst.msk [vmem:[%s7] sm:$0x1] %vm328, %v361
  // Predicated region
  $region22: #{densenet_forward.23} parent=0 // pred_check
    _
  $region23: #{densenet_forward.23} parent=0 // pred_check_branch
    %364 = sbr.rel (0) target = $region25
  $region24: #{densenet_forward.23} parent=0 // pred_region
    _
  $region25: #{densenet_forward.23} parent=0 // pred_fallthru
    _
  // Predicated region
  $region26: #{densenet_forward.23} parent=0 // pred_check
    _
  $region27: #{densenet_forward.23} parent=0 // pred_check_branch
    %366 = sbr.rel (0) target = $region29
  $region28: #{densenet_forward.23} parent=0 // pred_region
    _
  $region29: #{densenet_forward.23} parent=0 // pred_fallthru
    _
  // Predicated region
  $region30: #{densenet_forward.23} parent=0 // pred_check
    _
  $region31: #{densenet_forward.23} parent=0 // pred_check_branch
    %368 = sbr.rel (0) target = $region33
  $region32: #{densenet_forward.23} parent=0 // pred_region
    _
  $region33: #{densenet_forward.23} parent=0 // pred_fallthru
    _
  // Predicated region
  $region34: #{densenet_forward.23} parent=0 // pred_check
    _
  $region35: #{densenet_forward.23} parent=0 // pred_check_branch
    %370 = sbr.rel (0) target = $region37
  $region36: #{densenet_forward.23} parent=0 // pred_region
    _
  $region37: #{densenet_forward.23} parent=0 // pred_fallthru
    _
  // Predicated region
  $region38: #{densenet_forward.23} parent=0 // pred_check
    _
  $region39: #{densenet_forward.23} parent=0 // pred_check_branch
    %372 = sbr.rel (0) target = $region41
  $region40: #{densenet_forward.23} parent=0 // pred_region
    _
  $region41: #{densenet_forward.23} parent=0 // pred_fallthru
    _
  // Predicated region
  $region42: #{densenet_forward.23} parent=0 // pred_check
    _
  $region43: #{densenet_forward.23} parent=0 // pred_check_branch
    %374 = sbr.rel (0) target = $region45
  $region44: #{densenet_forward.23} parent=0 // pred_region
    _
  $region45: #{densenet_forward.23} parent=0 // pred_fallthru
    _

// kernel: densenet_forward.24
$region0: #{densenet_forward.24}
  #allocation0 [shape = 'u32[]', space=smem, size = 0x4, offset = 0x4, fixed_abs, tag = 'smem constant byte address 0x4 - core index']
  #allocation1 [shape = 'u32[144,128]{1,0:T(1,128)}', space=vmem, size = 0x12000, scoped, tag = 'internal scratch']
  #allocation2 [shape = 'f32[50,32]{1,0:T(8,128)}', space=vmem, size = 0x7000, scoped, tag = 'scratch operand']
  %s0 = inlined_call_operand.vmem [shape: f32[2,36,32], index: 0, kind: input, shape index: {}]
  %s1 = inlined_call_operand.vmem [shape: f32[36,1], index: 1, kind: input, shape index: {}]
  %s2 = inlined_call_operand.vmem [shape: f32[1,32], index: 2, kind: input, shape index: {}]
  %s3 = inlined_call_operand.vmem [shape: f32[1,32], index: 3, kind: input, shape index: {}]
  %s4 = inlined_call_operand.vmem [shape: bf16[9,32,8], index: 4, kind: input, shape index: {}]
  %s5 = inlined_call_operand.vmem [shape: f32[2,36,8], index: 5, kind: output, shape index: {0}]
  %s6 = inlined_call_operand.vmem [shape: f32[2,1,8], index: 6, kind: output, shape index: {1}]
  %s7 = inlined_call_operand.vmem [shape: f32[2,1,8], index: 7, kind: output, shape index: {2}]
  %8 = xla_tuple %s5, %s6, %s7
  %s9 = sld [smem:[#allocation0]]
  $region69: #{densenet_forward.24} parent=0
    _
  %s11 = ssub.s32 1, %s9
  %s12 = scalar_select 0, %s11, %s9
  loop: start=0, step=1, limit=4
  $region2: #{densenet_forward.24} parent=0 // loop_pre_header
    _
  $region3: #{densenet_forward.24} parent=0 // loop_header
    %s14 = sphi 0, %s18
    %p15 = scmp.ge.s32.totalorder %s14, 4
    %s24 = sphi 0, %s26
    %s27 = sphi 0, %s24
    %s28 = sphi 0, %s27
    %s44 = sphi 0, %s28
    %s48 = sphi 0, %s48
    %s50 = sphi 0, %s48
    %s51 = sphi 0, %s50
    %s65 = sphi 0, %s51
    %s69 = sphi 0, %s69
    %s71 = sphi 0, %s69
    %s72 = sphi 0, %s71
    %s86 = sphi 0, %s72
    %s90 = sphi 0, %s90
    %s92 = sphi 0, %s90
    %s93 = sphi 0, %s92
    %s107 = sphi 0, %s93
    %s111 = sphi 0, %s111
    %s113 = sphi 0, %s111
    %s114 = sphi 0, %s113
    %s128 = sphi 0, %s114
    %s134 = sphi 0, %s136
    %s137 = sphi 0, %s134
    %s138 = sphi 0, %s137
    %s154 = sphi 0, %s138
    %s160 = sphi 0, %s162
    %s163 = sphi 0, %s160
    %s164 = sphi 0, %s163
    %s180 = sphi 0, %s164
    %s186 = sphi 0, %s188
    %s189 = sphi 0, %s186
    %s190 = sphi 0, %s189
    %s206 = sphi 0, %s190
  $region4: #{densenet_forward.24} parent=0 // loop_header_branch
    %17 = sbr.rel (%p15) target = $region8
  $region5: #{densenet_forward.24} parent=0 // loop_body
    %s19 = ssub.s32 %s14, 1
    %s20 = ssub.s32 %s14, 2
    %s21 = sadd.s32 %s14, 1
    %s22 = ssub.s32 %s14, %s21
    %p23 = scmp.eq.s32.totalorder %s22, 0
    %s25 = sadd.s32 %s24, 1
    %s26 = scalar_select %p23, %s24, %s25
    %p29 = pneg %p23
    %p30 = scmp.eq.s32.totalorder %s14, 1
    %p31 = por %p29, %p30
    %p32 = scmp.ne.s32.totalorder %s24, %s27
    %p33 = scmp.eq.s32.totalorder %s14, 0
    %p34 = por %p32, %p33
    %p35 = scmp.ne.s32.totalorder %s24, %s27
    %p36 = scmp.eq.s32.totalorder %s19, 1
    %p37 = por %p35, %p36
    %p38 = scmp.ne.s32.totalorder %s27, %s28
    %p39 = scmp.eq.s32.totalorder %s19, 0
    %p40 = por %p38, %p39
    %p41 = scmp.ne.s32.totalorder %s27, %s28
    %p42 = scmp.eq.s32.totalorder %s20, 1
    %p43 = por %p41, %p42
    %p45 = scmp.ne.s32.totalorder %s28, %s44
    %p46 = scmp.eq.s32.totalorder %s20, 0
    %p47 = por %p45, %p46
    %s49 = sadd.s32 %s48, 1
    %p52 = scmp.eq.s32.totalorder %s14, 1
    %p53 = scmp.ne.s32.totalorder %s48, %s50
    %p54 = scmp.eq.s32.totalorder %s14, 0
    %p55 = por %p53, %p54
    %p56 = scmp.ne.s32.totalorder %s48, %s50
    %p57 = scmp.eq.s32.totalorder %s19, 1
    %p58 = por %p56, %p57
    %p59 = scmp.ne.s32.totalorder %s50, %s51
    %p60 = scmp.eq.s32.totalorder %s19, 0
    %p61 = por %p59, %p60
    %p62 = scmp.ne.s32.totalorder %s50, %s51
    %p63 = scmp.eq.s32.totalorder %s20, 1
    %p64 = por %p62, %p63
    %p66 = scmp.ne.s32.totalorder %s51, %s65
    %p67 = scmp.eq.s32.totalorder %s20, 0
    %p68 = por %p66, %p67
    %s70 = sadd.s32 %s69, 1
    %p73 = scmp.eq.s32.totalorder %s14, 1
    %p74 = scmp.ne.s32.totalorder %s69, %s71
    %p75 = scmp.eq.s32.totalorder %s14, 0
    %p76 = por %p74, %p75
    %p77 = scmp.ne.s32.totalorder %s69, %s71
    %p78 = scmp.eq.s32.totalorder %s19, 1
    %p79 = por %p77, %p78
    %p80 = scmp.ne.s32.totalorder %s71, %s72
    %p81 = scmp.eq.s32.totalorder %s19, 0
    %p82 = por %p80, %p81
    %p83 = scmp.ne.s32.totalorder %s71, %s72
    %p84 = scmp.eq.s32.totalorder %s20, 1
    %p85 = por %p83, %p84
    %p87 = scmp.ne.s32.totalorder %s72, %s86
    %p88 = scmp.eq.s32.totalorder %s20, 0
    %p89 = por %p87, %p88
    %s91 = sadd.s32 %s90, 1
    %p94 = scmp.eq.s32.totalorder %s14, 1
    %p95 = scmp.ne.s32.totalorder %s90, %s92
    %p96 = scmp.eq.s32.totalorder %s14, 0
    %p97 = por %p95, %p96
    %p98 = scmp.ne.s32.totalorder %s90, %s92
    %p99 = scmp.eq.s32.totalorder %s19, 1
    %p100 = por %p98, %p99
    %p101 = scmp.ne.s32.totalorder %s92, %s93
    %p102 = scmp.eq.s32.totalorder %s19, 0
    %p103 = por %p101, %p102
    %p104 = scmp.ne.s32.totalorder %s92, %s93
    %p105 = scmp.eq.s32.totalorder %s20, 1
    %p106 = por %p104, %p105
    %p108 = scmp.ne.s32.totalorder %s93, %s107
    %p109 = scmp.eq.s32.totalorder %s20, 0
    %p110 = por %p108, %p109
    %s112 = sadd.s32 %s111, 1
    %p115 = scmp.eq.s32.totalorder %s14, 1
    %p116 = scmp.ne.s32.totalorder %s111, %s113
    %p117 = scmp.eq.s32.totalorder %s14, 0
    %p118 = por %p116, %p117
    %p119 = scmp.ne.s32.totalorder %s111, %s113
    %p120 = scmp.eq.s32.totalorder %s19, 1
    %p121 = por %p119, %p120
    %p122 = scmp.ne.s32.totalorder %s113, %s114
    %p123 = scmp.eq.s32.totalorder %s19, 0
    %p124 = por %p122, %p123
    %p125 = scmp.ne.s32.totalorder %s113, %s114
    %p126 = scmp.eq.s32.totalorder %s20, 1
    %p127 = por %p125, %p126
    %p129 = scmp.ne.s32.totalorder %s114, %s128
    %p130 = scmp.eq.s32.totalorder %s20, 0
    %p131 = por %p129, %p130
    %s132 = ssub.s32 %s14, %s21
    %p133 = scmp.eq.s32.totalorder %s132, 0
    %s135 = sadd.s32 %s134, 1
    %s136 = scalar_select %p133, %s134, %s135
    %p139 = pneg %p133
    %p140 = scmp.eq.s32.totalorder %s14, 1
    %p141 = por %p139, %p140
    %p142 = scmp.ne.s32.totalorder %s134, %s137
    %p143 = scmp.eq.s32.totalorder %s14, 0
    %p144 = por %p142, %p143
    %p145 = scmp.ne.s32.totalorder %s134, %s137
    %p146 = scmp.eq.s32.totalorder %s19, 1
    %p147 = por %p145, %p146
    %p148 = scmp.ne.s32.totalorder %s137, %s138
    %p149 = scmp.eq.s32.totalorder %s19, 0
    %p150 = por %p148, %p149
    %p151 = scmp.ne.s32.totalorder %s137, %s138
    %p152 = scmp.eq.s32.totalorder %s20, 1
    %p153 = por %p151, %p152
    %p155 = scmp.ne.s32.totalorder %s138, %s154
    %p156 = scmp.eq.s32.totalorder %s20, 0
    %p157 = por %p155, %p156
    %s158 = ssub.s32 %s14, %s21
    %p159 = scmp.eq.s32.totalorder %s158, 0
    %s161 = sadd.s32 %s160, 1
    %s162 = scalar_select %p159, %s160, %s161
    %p165 = pneg %p159
    %p166 = scmp.eq.s32.totalorder %s14, 1
    %p167 = por %p165, %p166
    %p168 = scmp.ne.s32.totalorder %s160, %s163
    %p169 = scmp.eq.s32.totalorder %s14, 0
    %p170 = por %p168, %p169
    %p171 = scmp.ne.s32.totalorder %s160, %s163
    %p172 = scmp.eq.s32.totalorder %s19, 1
    %p173 = por %p171, %p172
    %p174 = scmp.ne.s32.totalorder %s163, %s164
    %p175 = scmp.eq.s32.totalorder %s19, 0
    %p176 = por %p174, %p175
    %p177 = scmp.ne.s32.totalorder %s163, %s164
    %p178 = scmp.eq.s32.totalorder %s20, 1
    %p179 = por %p177, %p178
    %p181 = scmp.ne.s32.totalorder %s164, %s180
    %p182 = scmp.eq.s32.totalorder %s20, 0
    %p183 = por %p181, %p182
    %s184 = ssub.s32 %s14, %s21
    %p185 = scmp.eq.s32.totalorder %s184, 0
    %s187 = sadd.s32 %s186, 1
    %s188 = scalar_select %p185, %s186, %s187
    %p191 = pneg %p185
    %p192 = scmp.eq.s32.totalorder %s14, 1
    %p193 = por %p191, %p192
    %p194 = scmp.ne.s32.totalorder %s186, %s189
    %p195 = scmp.eq.s32.totalorder %s14, 0
    %p196 = por %p194, %p195
    %p197 = scmp.ne.s32.totalorder %s186, %s189
    %p198 = scmp.eq.s32.totalorder %s19, 1
    %p199 = por %p197, %p198
    %p200 = scmp.ne.s32.totalorder %s189, %s190
    %p201 = scmp.eq.s32.totalorder %s19, 0
    %p202 = por %p200, %p201
    %p203 = scmp.ne.s32.totalorder %s189, %s190
    %p204 = scmp.eq.s32.totalorder %s20, 1
    %p205 = por %p203, %p204
    %p207 = scmp.ne.s32.totalorder %s190, %s206
    %p208 = scmp.eq.s32.totalorder %s20, 0
    %p209 = por %p207, %p208
    %p210 = scmp.le.s32.totalorder 1, %s14
    %p211 = scmp.lt.s32.totalorder %s14, 3
    %p212 = pnand %p210, %p211
    %p213 = pneg %p212
    // Predicated region
    $region9: #{densenet_forward.24} parent=5 // pred_check
      _
    $region10: #{densenet_forward.24} parent=5 // pred_check_branch
      %215 = sbr.rel (%p212) target = $region12
    $region11: #{densenet_forward.24} parent=5 // pred_region
      %s216 = ssub.s32 %s14, 1
      // Predicated region
      $region13: #{densenet_forward.24} parent=11 // pred_check
        %p217 = pneg %p61
      $region14: #{densenet_forward.24} parent=11 // pred_check_branch
        %219 = sbr.rel (%p217) target = $region16
      $region15: #{densenet_forward.24} parent=11 // pred_region
        _
      $region16: #{densenet_forward.24} parent=11 // pred_fallthru
        _
      // Predicated region
      $region17: #{densenet_forward.24} parent=11 // pred_check
        %p220 = pneg %p82
      $region18: #{densenet_forward.24} parent=11 // pred_check_branch
        %222 = sbr.rel (%p220) target = $region20
      $region19: #{densenet_forward.24} parent=11 // pred_region
        _
      $region20: #{densenet_forward.24} parent=11 // pred_fallthru
        _
      // Predicated region
      $region21: #{densenet_forward.24} parent=11 // pred_check
        %p223 = pneg %p103
      $region22: #{densenet_forward.24} parent=11 // pred_check_branch
        %225 = sbr.rel (%p223) target = $region24
      $region23: #{densenet_forward.24} parent=11 // pred_region
        _
      $region24: #{densenet_forward.24} parent=11 // pred_fallthru
        _
      // Predicated region
      $region25: #{densenet_forward.24} parent=11 // pred_check
        %p226 = pneg %p124
      $region26: #{densenet_forward.24} parent=11 // pred_check_branch
        %228 = sbr.rel (%p226) target = $region28
      $region27: #{densenet_forward.24} parent=11 // pred_region
        _
      $region28: #{densenet_forward.24} parent=11 // pred_fallthru
        _
    $region12: #{densenet_forward.24} parent=5 // pred_fallthru
      _
    %p229 = scmp.lt.s32.totalorder %s14, 2
    // Predicated region
    $region29: #{densenet_forward.24} parent=5 // pred_check
      %p230 = pneg %p229
    $region30: #{densenet_forward.24} parent=5 // pred_check_branch
      %232 = sbr.rel (%p230) target = $region32
    $region31: #{densenet_forward.24} parent=5 // pred_region
      // Predicated region
      $region33: #{densenet_forward.24} parent=31 // pred_check
        %p233 = pneg %p34
      $region34: #{densenet_forward.24} parent=31 // pred_check_branch
        %235 = sbr.rel (%p233) target = $region36
      $region35: #{densenet_forward.24} parent=31 // pred_region
        %p236 = scmp.lt.s32.totalorder %s14, 1
        %s237 = scalar_select %p236, %s14, 1
        %s238 = smul.addr %s237, 5
        %s239 = smul.addr %s238, 8
        %s240 = scalar_lea.vmem %s0, %s239
      $region36: #{densenet_forward.24} parent=31 // pred_fallthru
        _
    $region32: #{densenet_forward.24} parent=5 // pred_fallthru
      _
    %p241 = scmp.le.s32.totalorder 1, %s14
    %p242 = scmp.lt.s32.totalorder %s14, 3
    %p243 = pnand %p241, %p242
    %p244 = pneg %p243
    // Predicated region
    $region37: #{densenet_forward.24} parent=5 // pred_check
      _
    $region38: #{densenet_forward.24} parent=5 // pred_check_branch
      %246 = sbr.rel (%p243) target = $region40
    $region39: #{densenet_forward.24} parent=5 // pred_region
      %s247 = ssub.s32 %s14, 1
      %p248 = scmp.lt.s32.totalorder %s19, 1
      %s249 = scalar_select %p248, %s19, 1
      %s250 = smul.addr %s249, 5
      %s251 = smul.addr %s250, 8
      %s252 = scalar_lea.vmem %s0, %s251
      %p253 = pneg %p40
      %p254 = pneg %p37
      %p255 = pneg %p61
      %p256 = pneg %p58
      %p257 = pneg %p82
      %p258 = pneg %p79
      %p259 = pneg %p103
      %p260 = pneg %p100
      %p261 = pneg %p124
      %p262 = pneg %p121
      %p263 = pneg %p150
      %p264 = pneg %p147
      %p265 = scmp.lt.s32.totalorder %s19, 1
      %s266 = scalar_select %p265, %s19, 1
      %s267 = smul.addr %s266, 5
      %s268 = smul.addr %s267, 8
      %s269 = scalar_lea.vmem %s5, %s268
      %p270 = pneg %p176
      %p271 = pneg %p173
      %p272 = scmp.lt.s32.totalorder %s19, 1
      %s273 = scalar_select %p272, %s19, 1
      %s274 = scalar_lea.vmem %s6, %s273
      %p275 = pneg %p202
      %p276 = pneg %p199
      %p277 = scmp.lt.s32.totalorder %s19, 1
      %s278 = scalar_select %p277, %s19, 1
      %s279 = scalar_lea.vmem %s7, %s278
      %p280 = scmp.lt.s32.totalorder %s19, 1
      %s281 = scalar_select %p280, %s19, 1
      %s282 = smul.addr %s281, 5
      %s283 = smul.addr %s282, 8
      %s284 = scalar_lea.vmem %s0, %s283
      %p285 = scmp.lt.s32.totalorder %s19, 1
      %s286 = scalar_select %p285, %s19, 1
      %s287 = smul.addr %s286, 5
      %s288 = smul.addr %s287, 8
      %s289 = scalar_lea.vmem %s5, %s288
      %p290 = scmp.lt.s32.totalorder %s19, 1
      %s291 = scalar_select %p290, %s19, 1
      %s292 = scalar_lea.vmem %s6, %s291
      %p293 = scmp.lt.s32.totalorder %s19, 1
      %s294 = scalar_select %p293, %s19, 1
      %s295 = scalar_lea.vmem %s7, %s294
      %v297 = vld [vmem:[%s284] sm:$0xff]
      %v298 = vld [vmem:[%s284 + $0x8] sm:$0xff]
      %v299 = vld [vmem:[%s284 + $0x10] sm:$0xff]
      %v300 = vld [vmem:[%s284 + $0x18] sm:$0xff]
      %v301 = vld [vmem:[%s284 + $0x20] sm:$0xf]
      %v302 = vld [vmem:[%s2] sm:$0x1]
      %v304 = vlaneseq
      %v305 = vshrl.u32 %v304, 7
      %v306 = vsub.s32 0, %v305
      %v307 = vrot.slane %v302, %v306
      %v309 = vmul.f32 %v297, %v307
      %v310 = vmul.f32 %v298, %v307
      %v311 = vmul.f32 %v299, %v307
      %v312 = vmul.f32 %v300, %v307
      %v313 = vmul.f32 %v301, %v307
      %v314 = vld [vmem:[%s3] sm:$0x1]
      %v316 = vlaneseq
      %v317 = vshrl.u32 %v316, 7
      %v318 = vsub.s32 0, %v317
      %v319 = vrot.slane %v314, %v318
      %v321 = vadd.f32 %v309, %v319
      %v322 = vadd.f32 %v310, %v319
      %v323 = vadd.f32 %v311, %v319
      %v324 = vadd.f32 %v312, %v319
      %v325 = vadd.f32 %v313, %v319
      %v326 = vmax.f32 %v321, 0.0
      %v327 = vmax.f32 %v322, 0.0
      %v328 = vmax.f32 %v323, 0.0
      %v329 = vmax.f32 %v324, 0.0
      %v330 = vmax.f32 %v325, 0.0
      %v331 = vld [vmem:[%s1] sm:$0xff]
      %v332 = vld [vmem:[%s1 + $0x8] sm:$0xff]
      %v333 = vld [vmem:[%s1 + $0x10] sm:$0xff]
      %v334 = vld [vmem:[%s1 + $0x18] sm:$0xff]
      %v335 = vld [vmem:[%s1 + $0x20] sm:$0xf]
      %337 = vset.pattern.permute.xlu0 0
      %338 = vperm.xlu0 %337, %v331
      %v339 = vpop.permute.xlu0 %338
      %342 = vset.pattern.permute.xlu0 0
      %343 = vperm.xlu0 %342, %v332
      %v344 = vpop.permute.xlu0 %343
      %347 = vset.pattern.permute.xlu0 0
      %348 = vperm.xlu0 %347, %v333
      %v349 = vpop.permute.xlu0 %348
      %352 = vset.pattern.permute.xlu0 0
      %353 = vperm.xlu0 %352, %v334
      %v354 = vpop.permute.xlu0 %353
      %357 = vset.pattern.permute.xlu0 0
      %358 = vperm.xlu0 %357, %v335
      %v359 = vpop.permute.xlu0 %358
      %v361 = vmul.f32 %v326, %v339
      %v362 = vmul.f32 %v327, %v344
      %v363 = vmul.f32 %v328, %v349
      %v364 = vmul.f32 %v329, %v354
      %v365 = vmul.f32 %v330, %v359
      %vm366 = vcmask 261120
      %367 = vst.msk [vmem:[#allocation2] sm:$0xff] %vm366, 0.0
      %368 = vst.msk [vmem:[#allocation2 + $0x8] sm:$0xff] %vm366, 0.0
      %369 = vst.msk [vmem:[#allocation2 + $0x10] sm:$0xff] %vm366, 0.0
      %370 = vst.msk [vmem:[#allocation2 + $0x18] sm:$0xff] %vm366, 0.0
      %371 = vst.msk [vmem:[#allocation2 + $0x20] sm:$0xff] %vm366, 0.0
      %372 = vst.msk [vmem:[#allocation2 + $0x28] sm:$0xff] %vm366, 0.0
      %vm373 = vcmask 254976
      %374 = vst.msk [vmem:[#allocation2 + $0x30] sm:$0x3] %vm373, 0.0
      %375 = vst.msk [vmem:[#allocation2 + $0x7] sm:$0xff] %vm366, %v361
      %376 = vst.msk [vmem:[#allocation2 + $0xf] sm:$0xff] %vm366, %v362
      %377 = vst.msk [vmem:[#allocation2 + $0x17] sm:$0xff] %vm366, %v363
      %378 = vst.msk [vmem:[#allocation2 + $0x1f] sm:$0xff] %vm366, %v364
      %vm379 = vcmask 257024
      %380 = vst.msk [vmem:[#allocation2 + $0x27] sm:$0xf] %vm379, %v365
      %v381 = vld [vmem:[#allocation2] sm:$0xff]
      %v382 = vld [vmem:[#allocation2 + $0x8] sm:$0xff]
      %v383 = vld [vmem:[#allocation2 + $0x10] sm:$0xff]
      %v384 = vld [vmem:[#allocation2 + $0x18] sm:$0xff]
      %v385 = vld [vmem:[#allocation2 + $0x20] sm:$0xf]
      %v386 = vpack.c.bf16 %v382, %v381
      %v387 = vpack.c.bf16 %v384, %v383
      %v388 = vpack.c.bf16 %v385, %v385
      %v389 = vld [vmem:[%s4] sm:$0xf]
      %v390 = vld [vmem:[%s4 + $0x4] sm:$0xf]
      %v391 = vld [vmem:[%s4 + $0x8] sm:$0xf]
      %v392 = vld [vmem:[%s4 + $0xc] sm:$0xf]
      %v393 = vld [vmem:[#allocation2 + $0x1] sm:$0xff]
      %v394 = vld [vmem:[#allocation2 + $0x9] sm:$0xff]
      %v395 = vld [vmem:[#allocation2 + $0x11] sm:$0xff]
      %v396 = vld [vmem:[#allocation2 + $0x19] sm:$0xff]
      %v397 = vld [vmem:[#allocation2 + $0x21] sm:$0xf]
      %v398 = vpack.c.bf16 %v394, %v393
      %v399 = vpack.c.bf16 %v396, %v395
      %v400 = vpack.c.bf16 %v397, %v397
      %s401 = scalar_lea.vmem %s4, 16
      %v402 = vld [vmem:[%s401] sm:$0xf]
      %v403 = vld [vmem:[%s401 + $0x4] sm:$0xf]
      %v404 = vld [vmem:[%s401 + $0x8] sm:$0xf]
      %v405 = vld [vmem:[%s401 + $0xc] sm:$0xf]
      %v410 = vunpack.c.l.b16 %v402
      %v411 = vunpack.c.l.b16 %v403
      %v412 = vunpack.c.l.b16 %v404
      %v413 = vunpack.c.l.b16 %v405
      %v414 = vpack.c.b16 %v411, %v410
      %v415 = vpack.c.b16 %v413, %v412
      %v419 = vsel %vm366, %v398, 0
      %v422 = vsel %vm366, %v399, 0
      %v425 = vsel %vm366, %v400, 0
      %427 = vmatprep.subr.bf16.mxu0 0
      %428 = vmatpush1.bf16.msra.mxu0 %v414
      %429 = vmatprep.subr.bf16.mxu0 0
      %430 = vmatpush1.bf16.msra.mxu0 %v415
      %431 = vmatprep.subr.bf16.mxu0 0
      %432 = vmatpush1.bf16.msra.mxu0 0
      %433 = vmatprep.subr.bf16.mxu0 0
      %434 = vmatpush1.bf16.msra.mxu0 0
      %435 = vmatprep.subr.bf16.mxu0 0
      %436 = vmatpush1.bf16.msra.mxu0 0
      %437 = vmatprep.subr.bf16.mxu0 0
      %438 = vmatpush1.bf16.msra.mxu0 0
      %439 = vmatprep.subr.bf16.mxu0 0
      %440 = vmatpush1.bf16.msra.mxu0 0
      %441 = vmatprep.subr.bf16.mxu0 0
      %442 = vmatpush1.bf16.msra.mxu0 0
      %443 = vmatprep.subr.bf16.mxu0 0
      %444 = vmatpush1.bf16.msra.mxu0 0
      %445 = vmatprep.subr.bf16.mxu0 0
      %446 = vmatpush1.bf16.msra.mxu0 0
      %447 = vmatprep.subr.bf16.mxu0 0
      %448 = vmatpush1.bf16.msra.mxu0 0
      %449 = vmatprep.subr.bf16.mxu0 0
      %450 = vmatpush1.bf16.msra.mxu0 0
      %451 = vmatprep.subr.bf16.mxu0 0
      %452 = vmatpush1.bf16.msra.mxu0 0
      %453 = vmatprep.subr.bf16.mxu0 0
      %454 = vmatpush1.bf16.msra.mxu0 0
      %455 = vmatprep.subr.bf16.mxu0 0
      %456 = vmatpush1.bf16.msra.mxu0 0
      %457 = vmatprep.subr.bf16.mxu0 0
      %458 = vmatpush1.bf16.msra.mxu0 0
      %459 = vmatprep.mubr.bf16.mxu0 0
      %460 = vmatmul.mubr.bf16.gmra.mrb[0].mxu0 %v419
      %v461 = vpop.f32.mrb[0].mxu0
      %v462 = vadd.f32 0.0, %v461
      %v463 = vpop.f32.mrb[0].mxu0
      %v464 = vpop.f32.mrb[0].mxu0
      %v465 = vadd.f32 0.0, %v464
      %v466 = vpop.f32.mrb[0].mxu0
      %467 = vmatprep.mubr.bf16.mxu0 0
      %468 = vmatmul.mubr.bf16.gmra.mrb[0].mxu0 %v422
      %v469 = vpop.f32.mrb[0].mxu0
      %v470 = vadd.f32 0.0, %v469
      %v471 = vpop.f32.mrb[0].mxu0
      %v472 = vpop.f32.mrb[0].mxu0
      %v473 = vadd.f32 0.0, %v472
      %v474 = vpop.f32.mrb[0].mxu0
      %475 = vmatprep.mubr.bf16.mxu0 0
      %476 = vmatmul.mubr.bf16.gmra.mrb[0].mxu0 %v425
      %v477 = vpop.f32.mrb[0].mxu0
      %v478 = vadd.f32 0.0, %v477
      %v479 = vpop.f32.mrb[0].mxu0
      %v480 = vpop.f32.mrb[0].mxu0
      %v481 = vpop.f32.mrb[0].mxu0
      %482 = vdwg.mxu0
      %v487 = vunpack.c.l.b16 %v389
      %v488 = vunpack.c.l.b16 %v390
      %v489 = vunpack.c.l.b16 %v391
      %v490 = vunpack.c.l.b16 %v392
      %v491 = vpack.c.b16 %v488, %v487
      %v492 = vpack.c.b16 %v490, %v489
      %v496 = vsel %vm366, %v386, 0
      %v499 = vsel %vm366, %v387, 0
      %v502 = vsel %vm366, %v388, 0
      %504 = vmatprep.subr.bf16.mxu0 0
      %505 = vmatpush1.bf16.msra.mxu0 %v491
      %506 = vmatprep.subr.bf16.mxu0 0
      %507 = vmatpush1.bf16.msra.mxu0 %v492
      %508 = vmatprep.subr.bf16.mxu0 0
      %509 = vmatpush1.bf16.msra.mxu0 0
      %510 = vmatprep.subr.bf16.mxu0 0
      %511 = vmatpush1.bf16.msra.mxu0 0
      %512 = vmatprep.subr.bf16.mxu0 0
      %513 = vmatpush1.bf16.msra.mxu0 0
      %514 = vmatprep.subr.bf16.mxu0 0
      %515 = vmatpush1.bf16.msra.mxu0 0
      %516 = vmatprep.subr.bf16.mxu0 0
      %517 = vmatpush1.bf16.msra.mxu0 0
      %518 = vmatprep.subr.bf16.mxu0 0
      %519 = vmatpush1.bf16.msra.mxu0 0
      %520 = vmatprep.subr.bf16.mxu0 0
      %521 = vmatpush1.bf16.msra.mxu0 0
      %522 = vmatprep.subr.bf16.mxu0 0
      %523 = vmatpush1.bf16.msra.mxu0 0
      %524 = vmatprep.subr.bf16.mxu0 0
      %525 = vmatpush1.bf16.msra.mxu0 0
      %526 = vmatprep.subr.bf16.mxu0 0
      %527 = vmatpush1.bf16.msra.mxu0 0
      %528 = vmatprep.subr.bf16.mxu0 0
      %529 = vmatpush1.bf16.msra.mxu0 0
      %530 = vmatprep.subr.bf16.mxu0 0
      %531 = vmatpush1.bf16.msra.mxu0 0
      %532 = vmatprep.subr.bf16.mxu0 0
      %533 = vmatpush1.bf16.msra.mxu0 0
      %534 = vmatprep.subr.bf16.mxu0 0
      %535 = vmatpush1.bf16.msra.mxu0 0
      %536 = vmatprep.mubr.bf16.mxu0 0
      %537 = vmatmul.mubr.bf16.gmra.mrb[0].mxu0 %v496
      %v538 = vpop.f32.mrb[0].mxu0
      %v539 = vadd.f32 %v462, %v538
      %v540 = vpop.f32.mrb[0].mxu0
      %v541 = vpop.f32.mrb[0].mxu0
      %v542 = vadd.f32 %v465, %v541
      %v543 = vpop.f32.mrb[0].mxu0
      %544 = vmatprep.mubr.bf16.mxu0 0
      %545 = vmatmul.mubr.bf16.gmra.mrb[0].mxu0 %v499
      %v546 = vpop.f32.mrb[0].mxu0
      %v547 = vadd.f32 %v470, %v546
      %v548 = vpop.f32.mrb[0].mxu0
      %v549 = vpop.f32.mrb[0].mxu0
      %v550 = vadd.f32 %v473, %v549
      %v551 = vpop.f32.mrb[0].mxu0
      %552 = vmatprep.mubr.bf16.mxu0 0
      %553 = vmatmul.mubr.bf16.gmra.mrb[0].mxu0 %v502
      %v554 = vpop.f32.mrb[0].mxu0
      %v555 = vadd.f32 %v478, %v554
      %v556 = vpop.f32.mrb[0].mxu0
      %v557 = vpop.f32.mrb[0].mxu0
      %v558 = vpop.f32.mrb[0].mxu0
      %559 = vdwg.mxu0
      %v560 = vld [vmem:[#allocation2 + $0x2] sm:$0xff]
      %v561 = vld [vmem:[#allocation2 + $0xa] sm:$0xff]
      %v562 = vld [vmem:[#allocation2 + $0x12] sm:$0xff]
      %v563 = vld [vmem:[#allocation2 + $0x1a] sm:$0xff]
      %v564 = vld [vmem:[#allocation2 + $0x22] sm:$0xf]
      %v565 = vpack.c.bf16 %v561, %v560
      %v566 = vpack.c.bf16 %v563, %v562
      %v567 = vpack.c.bf16 %v564, %v564
      %s568 = scalar_lea.vmem %s4, 32
      %v569 = vld [vmem:[%s568] sm:$0xf]
      %v570 = vld [vmem:[%s568 + $0x4] sm:$0xf]
      %v571 = vld [vmem:[%s568 + $0x8] sm:$0xf]
      %v572 = vld [vmem:[%s568 + $0xc] sm:$0xf]
      %v577 = vunpack.c.l.b16 %v569
      %v578 = vunpack.c.l.b16 %v570
      %v579 = vunpack.c.l.b16 %v571
      %v580 = vunpack.c.l.b16 %v572
      %v581 = vpack.c.b16 %v578, %v577
      %v582 = vpack.c.b16 %v580, %v579
      %v586 = vsel %vm366, %v565, 0
      %v589 = vsel %vm366, %v566, 0
      %v592 = vsel %vm366, %v567, 0
      %594 = vmatprep.subr.bf16.mxu0 0
      %595 = vmatpush1.bf16.msra.mxu0 %v581
      %596 = vmatprep.subr.bf16.mxu0 0
      %597 = vmatpush1.bf16.msra.mxu0 %v582
      %598 = vmatprep.subr.bf16.mxu0 0
      %599 = vmatpush1.bf16.msra.mxu0 0
      %600 = vmatprep.subr.bf16.mxu0 0
      %601 = vmatpush1.bf16.msra.mxu0 0
      %602 = vmatprep.subr.bf16.mxu0 0
      %603 = vmatpush1.bf16.msra.mxu0 0
      %604 = vmatprep.subr.bf16.mxu0 0
      %605 = vmatpush1.bf16.msra.mxu0 0
      %606 = vmatprep.subr.bf16.mxu0 0
      %607 = vmatpush1.bf16.msra.mxu0 0
      %608 = vmatprep.subr.bf16.mxu0 0
      %609 = vmatpush1.bf16.msra.mxu0 0
      %610 = vmatprep.subr.bf16.mxu0 0
      %611 = vmatpush1.bf16.msra.mxu0 0
      %612 = vmatprep.subr.bf16.mxu0 0
      %613 = vmatpush1.bf16.msra.mxu0 0
      %614 = vmatprep.subr.bf16.mxu0 0
      %615 = vmatpush1.bf16.msra.mxu0 0
      %616 = vmatprep.subr.bf16.mxu0 0
      %617 = vmatpush1.bf16.msra.mxu0 0
      %618 = vmatprep.subr.bf16.mxu0 0
      %619 = vmatpush1.bf16.msra.mxu0 0
      %620 = vmatprep.subr.bf16.mxu0 0
      %621 = vmatpush1.bf16.msra.mxu0 0
      %622 = vmatprep.subr.bf16.mxu0 0
      %623 = vmatpush1.bf16.msra.mxu0 0
      %624 = vmatprep.subr.bf16.mxu0 0
      %625 = vmatpush1.bf16.msra.mxu0 0
      %626 = vmatprep.mubr.bf16.mxu0 0
      %627 = vmatmul.mubr.bf16.gmra.mrb[0].mxu0 %v586
      %v628 = vpop.f32.mrb[0].mxu0
      %v629 = vadd.f32 0.0, %v628
      %v630 = vpop.f32.mrb[0].mxu0
      %v631 = vpop.f32.mrb[0].mxu0
      %v632 = vadd.f32 0.0, %v631
      %v633 = vpop.f32.mrb[0].mxu0
      %634 = vmatprep.mubr.bf16.mxu0 0
      %635 = vmatmul.mubr.bf16.gmra.mrb[0].mxu0 %v589
      %v636 = vpop.f32.mrb[0].mxu0
      %v637 = vadd.f32 0.0, %v636
      %v638 = vpop.f32.mrb[0].mxu0
      %v639 = vpop.f32.mrb[0].mxu0
      %v640 = vadd.f32 0.0, %v639
      %v641 = vpop.f32.mrb[0].mxu0
      %642 = vmatprep.mubr.bf16.mxu0 0
      %643 = vmatmul.mubr.bf16.gmra.mrb[0].mxu0 %v592
      %v644 = vpop.f32.mrb[0].mxu0
      %v645 = vadd.f32 0.0, %v644
      %v646 = vpop.f32.mrb[0].mxu0
      %v647 = vpop.f32.mrb[0].mxu0
      %v648 = vpop.f32.mrb[0].mxu0
      %649 = vdwg.mxu0
      %v650 = vadd.f32 %v539, %v629
      %v651 = vadd.f32 %v542, %v632
      %v652 = vadd.f32 %v547, %v637
      %v653 = vadd.f32 %v550, %v640
      %v654 = vadd.f32 %v555, %v645
      %v655 = vld [vmem:[#allocation2 + $0x6] sm:$0xff]
      %v656 = vld [vmem:[#allocation2 + $0xe] sm:$0xff]
      %v657 = vld [vmem:[#allocation2 + $0x16] sm:$0xff]
      %v658 = vld [vmem:[#allocation2 + $0x1e] sm:$0xff]
      %v659 = vld [vmem:[#allocation2 + $0x26] sm:$0xf]
      %v660 = vpack.c.bf16 %v656, %v655
      %v661 = vpack.c.bf16 %v658, %v657
      %v662 = vpack.c.bf16 %v659, %v659
      %s663 = scalar_lea.vmem %s4, 48
      %v664 = vld [vmem:[%s663] sm:$0xf]
      %v665 = vld [vmem:[%s663 + $0x4] sm:$0xf]
      %v666 = vld [vmem:[%s663 + $0x8] sm:$0xf]
      %v667 = vld [vmem:[%s663 + $0xc] sm:$0xf]
      %v672 = vunpack.c.l.b16 %v664
      %v673 = vunpack.c.l.b16 %v665
      %v674 = vunpack.c.l.b16 %v666
      %v675 = vunpack.c.l.b16 %v667
      %v676 = vpack.c.b16 %v673, %v672
      %v677 = vpack.c.b16 %v675, %v674
      %v681 = vsel %vm366, %v660, 0
      %v684 = vsel %vm366, %v661, 0
      %v687 = vsel %vm366, %v662, 0
      %689 = vmatprep.subr.bf16.mxu0 0
      %690 = vmatpush1.bf16.msra.mxu0 %v676
      %691 = vmatprep.subr.bf16.mxu0 0
      %692 = vmatpush1.bf16.msra.mxu0 %v677
      %693 = vmatprep.subr.bf16.mxu0 0
      %694 = vmatpush1.bf16.msra.mxu0 0
      %695 = vmatprep.subr.bf16.mxu0 0
      %696 = vmatpush1.bf16.msra.mxu0 0
      %697 = vmatprep.subr.bf16.mxu0 0
      %698 = vmatpush1.bf16.msra.mxu0 0
      %699 = vmatprep.subr.bf16.mxu0 0
      %700 = vmatpush1.bf16.msra.mxu0 0
      %701 = vmatprep.subr.bf16.mxu0 0
      %702 = vmatpush1.bf16.msra.mxu0 0
      %703 = vmatprep.subr.bf16.mxu0 0
      %704 = vmatpush1.bf16.msra.mxu0 0
      %705 = vmatprep.subr.bf16.mxu0 0
      %706 = vmatpush1.bf16.msra.mxu0 0
      %707 = vmatprep.subr.bf16.mxu0 0
      %708 = vmatpush1.bf16.msra.mxu0 0
      %709 = vmatprep.subr.bf16.mxu0 0
      %710 = vmatpush1.bf16.msra.mxu0 0
      %711 = vmatprep.subr.bf16.mxu0 0
      %712 = vmatpush1.bf16.msra.mxu0 0
      %713 = vmatprep.subr.bf16.mxu0 0
      %714 = vmatpush1.bf16.msra.mxu0 0
      %715 = vmatprep.subr.bf16.mxu0 0
      %716 = vmatpush1.bf16.msra.mxu0 0
      %717 = vmatprep.subr.bf16.mxu0 0
      %718 = vmatpush1.bf16.msra.mxu0 0
      %719 = vmatprep.subr.bf16.mxu0 0
      %720 = vmatpush1.bf16.msra.mxu0 0
      %721 = vmatprep.mubr.bf16.mxu0 0
      %722 = vmatmul.mubr.bf16.gmra.mrb[0].mxu0 %v681
      %v723 = vpop.f32.mrb[0].mxu0
      %v724 = vadd.f32 0.0, %v723
      %v725 = vpop.f32.mrb[0].mxu0
      %v726 = vpop.f32.mrb[0].mxu0
      %v727 = vadd.f32 0.0, %v726
      %v728 = vpop.f32.mrb[0].mxu0
      %729 = vmatprep.mubr.bf16.mxu0 0
      %730 = vmatmul.mubr.bf16.gmra.mrb[0].mxu0 %v684
      %v731 = vpop.f32.mrb[0].mxu0
      %v732 = vadd.f32 0.0, %v731
      %v733 = vpop.f32.mrb[0].mxu0
      %v734 = vpop.f32.mrb[0].mxu0
      %v735 = vadd.f32 0.0, %v734
      %v736 = vpop.f32.mrb[0].mxu0
      %737 = vmatprep.mubr.bf16.mxu0 0
      %738 = vmatmul.mubr.bf16.gmra.mrb[0].mxu0 %v687
      %v739 = vpop.f32.mrb[0].mxu0
      %v740 = vadd.f32 0.0, %v739
      %v741 = vpop.f32.mrb[0].mxu0
      %v742 = vpop.f32.mrb[0].mxu0
      %v743 = vpop.f32.mrb[0].mxu0
      %744 = vdwg.mxu0
      %v745 = vadd.f32 %v650, %v724
      %v746 = vadd.f32 %v651, %v727
      %v747 = vadd.f32 %v652, %v732
      %v748 = vadd.f32 %v653, %v735
      %v749 = vadd.f32 %v654, %v740
      %v750 = vld [vmem:[#allocation2 + $0x7] sm:$0xff]
      %v751 = vld [vmem:[#allocation2 + $0xf] sm:$0xff]
      %v752 = vld [vmem:[#allocation2 + $0x17] sm:$0xff]
      %v753 = vld [vmem:[#allocation2 + $0x1f] sm:$0xff]
      %v754 = vld [vmem:[#allocation2 + $0x27] sm:$0xf]
      %v755 = vpack.c.bf16 %v751, %v750
      %v756 = vpack.c.bf16 %v753, %v752
      %v757 = vpack.c.bf16 %v754, %v754
      %s758 = scalar_lea.vmem %s4, 64
      %v759 = vld [vmem:[%s758] sm:$0xf]
      %v760 = vld [vmem:[%s758 + $0x4] sm:$0xf]
      %v761 = vld [vmem:[%s758 + $0x8] sm:$0xf]
      %v762 = vld [vmem:[%s758 + $0xc] sm:$0xf]
      %v767 = vunpack.c.l.b16 %v759
      %v768 = vunpack.c.l.b16 %v760
      %v769 = vunpack.c.l.b16 %v761
      %v770 = vunpack.c.l.b16 %v762
      %v771 = vpack.c.b16 %v768, %v767
      %v772 = vpack.c.b16 %v770, %v769
      %v776 = vsel %vm366, %v755, 0
      %v779 = vsel %vm366, %v756, 0
      %v782 = vsel %vm366, %v757, 0
      %784 = vmatprep.subr.bf16.mxu0 0
      %785 = vmatpush1.bf16.msra.mxu0 %v771
      %786 = vmatprep.subr.bf16.mxu0 0
      %787 = vmatpush1.bf16.msra.mxu0 %v772
      %788 = vmatprep.subr.bf16.mxu0 0
      %789 = vmatpush1.bf16.msra.mxu0 0
      %790 = vmatprep.subr.bf16.mxu0 0
      %791 = vmatpush1.bf16.msra.mxu0 0
      %792 = vmatprep.subr.bf16.mxu0 0
      %793 = vmatpush1.bf16.msra.mxu0 0
      %794 = vmatprep.subr.bf16.mxu0 0
      %795 = vmatpush1.bf16.msra.mxu0 0
      %796 = vmatprep.subr.bf16.mxu0 0
      %797 = vmatpush1.bf16.msra.mxu0 0
      %798 = vmatprep.subr.bf16.mxu0 0
      %799 = vmatpush1.bf16.msra.mxu0 0
      %800 = vmatprep.subr.bf16.mxu0 0
      %801 = vmatpush1.bf16.msra.mxu0 0
      %802 = vmatprep.subr.bf16.mxu0 0
      %803 = vmatpush1.bf16.msra.mxu0 0
      %804 = vmatprep.subr.bf16.mxu0 0
      %805 = vmatpush1.bf16.msra.mxu0 0
      %806 = vmatprep.subr.bf16.mxu0 0
      %807 = vmatpush1.bf16.msra.mxu0 0
      %808 = vmatprep.subr.bf16.mxu0 0
      %809 = vmatpush1.bf16.msra.mxu0 0
      %810 = vmatprep.subr.bf16.mxu0 0
      %811 = vmatpush1.bf16.msra.mxu0 0
      %812 = vmatprep.subr.bf16.mxu0 0
      %813 = vmatpush1.bf16.msra.mxu0 0
      %814 = vmatprep.subr.bf16.mxu0 0
      %815 = vmatpush1.bf16.msra.mxu0 0
      %816 = vmatprep.mubr.bf16.mxu0 0
      %817 = vmatmul.mubr.bf16.gmra.mrb[0].mxu0 %v776
      %v818 = vpop.f32.mrb[0].mxu0
      %v819 = vadd.f32 0.0, %v818
      %v820 = vpop.f32.mrb[0].mxu0
      %v821 = vpop.f32.mrb[0].mxu0
      %v822 = vadd.f32 0.0, %v821
      %v823 = vpop.f32.mrb[0].mxu0
      %824 = vmatprep.mubr.bf16.mxu0 0
      %825 = vmatmul.mubr.bf16.gmra.mrb[0].mxu0 %v779
      %v826 = vpop.f32.mrb[0].mxu0
      %v827 = vadd.f32 0.0, %v826
      %v828 = vpop.f32.mrb[0].mxu0
      %v829 = vpop.f32.mrb[0].mxu0
      %v830 = vadd.f32 0.0, %v829
      %v831 = vpop.f32.mrb[0].mxu0
      %832 = vmatprep.mubr.bf16.mxu0 0
      %833 = vmatmul.mubr.bf16.gmra.mrb[0].mxu0 %v782
      %v834 = vpop.f32.mrb[0].mxu0
      %v835 = vadd.f32 0.0, %v834
      %v836 = vpop.f32.mrb[0].mxu0
      %v837 = vpop.f32.mrb[0].mxu0
      %v838 = vpop.f32.mrb[0].mxu0
      %839 = vdwg.mxu0
      %v840 = vadd.f32 %v745, %v819
      %v841 = vadd.f32 %v746, %v822
      %v842 = vadd.f32 %v747, %v827
      %v843 = vadd.f32 %v748, %v830
      %v844 = vadd.f32 %v749, %v835
      %v845 = vld [vmem:[#allocation2 + $0x8] sm:$0xff]
      %v846 = vld [vmem:[#allocation2 + $0x10] sm:$0xff]
      %v847 = vld [vmem:[#allocation2 + $0x18] sm:$0xff]
      %v848 = vld [vmem:[#allocation2 + $0x20] sm:$0xff]
      %v849 = vld [vmem:[#allocation2 + $0x28] sm:$0xf]
      %v850 = vpack.c.bf16 %v846, %v845
      %v851 = vpack.c.bf16 %v848, %v847
      %v852 = vpack.c.bf16 %v849, %v849
      %s853 = scalar_lea.vmem %s4, 80
      %v854 = vld [vmem:[%s853] sm:$0xf]
      %v855 = vld [vmem:[%s853 + $0x4] sm:$0xf]
      %v856 = vld [vmem:[%s853 + $0x8] sm:$0xf]
      %v857 = vld [vmem:[%s853 + $0xc] sm:$0xf]
      %v862 = vunpack.c.l.b16 %v854
      %v863 = vunpack.c.l.b16 %v855
      %v864 = vunpack.c.l.b16 %v856
      %v865 = vunpack.c.l.b16 %v857
      %v866 = vpack.c.b16 %v863, %v862
      %v867 = vpack.c.b16 %v865, %v864
      %v871 = vsel %vm366, %v850, 0
      %v874 = vsel %vm366, %v851, 0
      %v877 = vsel %vm366, %v852, 0
      %879 = vmatprep.subr.bf16.mxu0 0
      %880 = vmatpush1.bf16.msra.mxu0 %v866
      %881 = vmatprep.subr.bf16.mxu0 0
      %882 = vmatpush1.bf16.msra.mxu0 %v867
      %883 = vmatprep.subr.bf16.mxu0 0
      %884 = vmatpush1.bf16.msra.mxu0 0
      %885 = vmatprep.subr.bf16.mxu0 0
      %886 = vmatpush1.bf16.msra.mxu0 0
      %887 = vmatprep.subr.bf16.mxu0 0
      %888 = vmatpush1.bf16.msra.mxu0 0
      %889 = vmatprep.subr.bf16.mxu0 0
      %890 = vmatpush1.bf16.msra.mxu0 0
      %891 = vmatprep.subr.bf16.mxu0 0
      %892 = vmatpush1.bf16.msra.mxu0 0
      %893 = vmatprep.subr.bf16.mxu0 0
      %894 = vmatpush1.bf16.msra.mxu0 0
      %895 = vmatprep.subr.bf16.mxu0 0
      %896 = vmatpush1.bf16.msra.mxu0 0
      %897 = vmatprep.subr.bf16.mxu0 0
      %898 = vmatpush1.bf16.msra.mxu0 0
      %899 = vmatprep.subr.bf16.mxu0 0
      %900 = vmatpush1.bf16.msra.mxu0 0
      %901 = vmatprep.subr.bf16.mxu0 0
      %902 = vmatpush1.bf16.msra.mxu0 0
      %903 = vmatprep.subr.bf16.mxu0 0
      %904 = vmatpush1.bf16.msra.mxu0 0
      %905 = vmatprep.subr.bf16.mxu0 0
      %906 = vmatpush1.bf16.msra.mxu0 0
      %907 = vmatprep.subr.bf16.mxu0 0
      %908 = vmatpush1.bf16.msra.mxu0 0
      %909 = vmatprep.subr.bf16.mxu0 0
      %910 = vmatpush1.bf16.msra.mxu0 0
      %911 = vmatprep.mubr.bf16.mxu0 0
      %912 = vmatmul.mubr.bf16.gmra.mrb[0].mxu0 %v871
      %v913 = vpop.f32.mrb[0].mxu0
      %v914 = vadd.f32 0.0, %v913
      %v915 = vpop.f32.mrb[0].mxu0
      %v916 = vpop.f32.mrb[0].mxu0
      %v917 = vadd.f32 0.0, %v916
      %v918 = vpop.f32.mrb[0].mxu0
      %919 = vmatprep.mubr.bf16.mxu0 0
      %920 = vmatmul.mubr.bf16.gmra.mrb[0].mxu0 %v874
      %v921 = vpop.f32.mrb[0].mxu0
      %v922 = vadd.f32 0.0, %v921
      %v923 = vpop.f32.mrb[0].mxu0
      %v924 = vpop.f32.mrb[0].mxu0
      %v925 = vadd.f32 0.0, %v924
      %v926 = vpop.f32.mrb[0].mxu0
      %927 = vmatprep.mubr.bf16.mxu0 0
      %928 = vmatmul.mubr.bf16.gmra.mrb[0].mxu0 %v877
      %v929 = vpop.f32.mrb[0].mxu0
      %v930 = vadd.f32 0.0, %v929
      %v931 = vpop.f32.mrb[0].mxu0
      %v932 = vpop.f32.mrb[0].mxu0
      %v933 = vpop.f32.mrb[0].mxu0
      %934 = vdwg.mxu0
      %v935 = vadd.f32 %v840, %v914
      %v936 = vadd.f32 %v841, %v917
      %v937 = vadd.f32 %v842, %v922
      %v938 = vadd.f32 %v843, %v925
      %v939 = vadd.f32 %v844, %v930
      %v940 = vld [vmem:[#allocation2 + $0xc] sm:$0xff]
      %v941 = vld [vmem:[#allocation2 + $0x14] sm:$0xff]
      %v942 = vld [vmem:[#allocation2 + $0x1c] sm:$0xff]
      %v943 = vld [vmem:[#allocation2 + $0x24] sm:$0xff]
      %v944 = vld [vmem:[#allocation2 + $0x2c] sm:$0xf]
      %v945 = vpack.c.bf16 %v941, %v940
      %v946 = vpack.c.bf16 %v943, %v942
      %v947 = vpack.c.bf16 %v944, %v944
      %s948 = scalar_lea.vmem %s4, 96
      %v949 = vld [vmem:[%s948] sm:$0xf]
      %v950 = vld [vmem:[%s948 + $0x4] sm:$0xf]
      %v951 = vld [vmem:[%s948 + $0x8] sm:$0xf]
      %v952 = vld [vmem:[%s948 + $0xc] sm:$0xf]
      %v957 = vunpack.c.l.b16 %v949
      %v958 = vunpack.c.l.b16 %v950
      %v959 = vunpack.c.l.b16 %v951
      %v960 = vunpack.c.l.b16 %v952
      %v961 = vpack.c.b16 %v958, %v957
      %v962 = vpack.c.b16 %v960, %v959
      %v966 = vsel %vm366, %v945, 0
      %v969 = vsel %vm366, %v946, 0
      %v972 = vsel %vm366, %v947, 0
      %974 = vmatprep.subr.bf16.mxu0 0
      %975 = vmatpush1.bf16.msra.mxu0 %v961
      %976 = vmatprep.subr.bf16.mxu0 0
      %977 = vmatpush1.bf16.msra.mxu0 %v962
      %978 = vmatprep.subr.bf16.mxu0 0
      %979 = vmatpush1.bf16.msra.mxu0 0
      %980 = vmatprep.subr.bf16.mxu0 0
      %981 = vmatpush1.bf16.msra.mxu0 0
      %982 = vmatprep.subr.bf16.mxu0 0
      %983 = vmatpush1.bf16.msra.mxu0 0
      %984 = vmatprep.subr.bf16.mxu0 0
      %985 = vmatpush1.bf16.msra.mxu0 0
      %986 = vmatprep.subr.bf16.mxu0 0
      %987 = vmatpush1.bf16.msra.mxu0 0
      %988 = vmatprep.subr.bf16.mxu0 0
      %989 = vmatpush1.bf16.msra.mxu0 0
      %990 = vmatprep.subr.bf16.mxu0 0
      %991 = vmatpush1.bf16.msra.mxu0 0
      %992 = vmatprep.subr.bf16.mxu0 0
      %993 = vmatpush1.bf16.msra.mxu0 0
      %994 = vmatprep.subr.bf16.mxu0 0
      %995 = vmatpush1.bf16.msra.mxu0 0
      %996 = vmatprep.subr.bf16.mxu0 0
      %997 = vmatpush1.bf16.msra.mxu0 0
      %998 = vmatprep.subr.bf16.mxu0 0
      %999 = vmatpush1.bf16.msra.mxu0 0
      %1000 = vmatprep.subr.bf16.mxu0 0
      %1001 = vmatpush1.bf16.msra.mxu0 0
      %1002 = vmatprep.subr.bf16.mxu0 0
      %1003 = vmatpush1.bf16.msra.mxu0 0
      %1004 = vmatprep.subr.bf16.mxu0 0
      %1005 = vmatpush1.bf16.msra.mxu0 0
      %1006 = vmatprep.mubr.bf16.mxu0 0
      %1007 = vmatmul.mubr.bf16.gmra.mrb[0].mxu0 %v966
      %v1008 = vpop.f32.mrb[0].mxu0
      %v1009 = vadd.f32 0.0, %v1008
      %v1010 = vpop.f32.mrb[0].mxu0
      %v1011 = vpop.f32.mrb[0].mxu0
      %v1012 = vadd.f32 0.0, %v1011
      %v1013 = vpop.f32.mrb[0].mxu0
      %1014 = vmatprep.mubr.bf16.mxu0 0
      %1015 = vmatmul.mubr.bf16.gmra.mrb[0].mxu0 %v969
      %v1016 = vpop.f32.mrb[0].mxu0
      %v1017 = vadd.f32 0.0, %v1016
      %v1018 = vpop.f32.mrb[0].mxu0
      %v1019 = vpop.f32.mrb[0].mxu0
      %v1020 = vadd.f32 0.0, %v1019
      %v1021 = vpop.f32.mrb[0].mxu0
      %1022 = vmatprep.mubr.bf16.mxu0 0
      %1023 = vmatmul.mubr.bf16.gmra.mrb[0].mxu0 %v972
      %v1024 = vpop.f32.mrb[0].mxu0
      %v1025 = vadd.f32 0.0, %v1024
      %v1026 = vpop.f32.mrb[0].mxu0
      %v1027 = vpop.f32.mrb[0].mxu0
      %v1028 = vpop.f32.mrb[0].mxu0
      %1029 = vdwg.mxu0
      %v1030 = vadd.f32 %v935, %v1009
      %v1031 = vadd.f32 %v936, %v1012
      %v1032 = vadd.f32 %v937, %v1017
      %v1033 = vadd.f32 %v938, %v1020
      %v1034 = vadd.f32 %v939, %v1025
      %v1035 = vld [vmem:[#allocation2 + $0xd] sm:$0xff]
      %v1036 = vld [vmem:[#allocation2 + $0x15] sm:$0xff]
      %v1037 = vld [vmem:[#allocation2 + $0x1d] sm:$0xff]
      %v1038 = vld [vmem:[#allocation2 + $0x25] sm:$0xff]
      %v1039 = vld [vmem:[#allocation2 + $0x2d] sm:$0xf]
      %v1040 = vpack.c.bf16 %v1036, %v1035
      %v1041 = vpack.c.bf16 %v1038, %v1037
      %v1042 = vpack.c.bf16 %v1039, %v1039
      %s1043 = scalar_lea.vmem %s4, 112
      %v1044 = vld [vmem:[%s1043] sm:$0xf]
      %v1045 = vld [vmem:[%s1043 + $0x4] sm:$0xf]
      %v1046 = vld [vmem:[%s1043 + $0x8] sm:$0xf]
      %v1047 = vld [vmem:[%s1043 + $0xc] sm:$0xf]
      %v1052 = vunpack.c.l.b16 %v1044
      %v1053 = vunpack.c.l.b16 %v1045
      %v1054 = vunpack.c.l.b16 %v1046
      %v1055 = vunpack.c.l.b16 %v1047
      %v1056 = vpack.c.b16 %v1053, %v1052
      %v1057 = vpack.c.b16 %v1055, %v1054
      %v1061 = vsel %vm366, %v1040, 0
      %v1064 = vsel %vm366, %v1041, 0
      %v1067 = vsel %vm366, %v1042, 0
      %1069 = vmatprep.subr.bf16.mxu0 0
      %1070 = vmatpush1.bf16.msra.mxu0 %v1056
      %1071 = vmatprep.subr.bf16.mxu0 0
      %1072 = vmatpush1.bf16.msra.mxu0 %v1057
      %1073 = vmatprep.subr.bf16.mxu0 0
      %1074 = vmatpush1.bf16.msra.mxu0 0
      %1075 = vmatprep.subr.bf16.mxu0 0
      %1076 = vmatpush1.bf16.msra.mxu0 0
      %1077 = vmatprep.subr.bf16.mxu0 0
      %1078 = vmatpush1.bf16.msra.mxu0 0
      %1079 = vmatprep.subr.bf16.mxu0 0
      %1080 = vmatpush1.bf16.msra.mxu0 0
      %1081 = vmatprep.subr.bf16.mxu0 0
      %1082 = vmatpush1.bf16.msra.mxu0 0
      %1083 = vmatprep.subr.bf16.mxu0 0
      %1084 = vmatpush1.bf16.msra.mxu0 0
      %1085 = vmatprep.subr.bf16.mxu0 0
      %1086 = vmatpush1.bf16.msra.mxu0 0
      %1087 = vmatprep.subr.bf16.mxu0 0
      %1088 = vmatpush1.bf16.msra.mxu0 0
      %1089 = vmatprep.subr.bf16.mxu0 0
      %1090 = vmatpush1.bf16.msra.mxu0 0
      %1091 = vmatprep.subr.bf16.mxu0 0
      %1092 = vmatpush1.bf16.msra.mxu0 0
      %1093 = vmatprep.subr.bf16.mxu0 0
      %1094 = vmatpush1.bf16.msra.mxu0 0
      %1095 = vmatprep.subr.bf16.mxu0 0
      %1096 = vmatpush1.bf16.msra.mxu0 0
      %1097 = vmatprep.subr.bf16.mxu0 0
      %1098 = vmatpush1.bf16.msra.mxu0 0
      %1099 = vmatprep.subr.bf16.mxu0 0
      %1100 = vmatpush1.bf16.msra.mxu0 0
      %1101 = vmatprep.mubr.bf16.mxu0 0
      %1102 = vmatmul.mubr.bf16.gmra.mrb[0].mxu0 %v1061
      %v1103 = vpop.f32.mrb[0].mxu0
      %v1104 = vadd.f32 0.0, %v1103
      %v1105 = vpop.f32.mrb[0].mxu0
      %v1106 = vpop.f32.mrb[0].mxu0
      %v1107 = vadd.f32 0.0, %v1106
      %v1108 = vpop.f32.mrb[0].mxu0
      %1109 = vmatprep.mubr.bf16.mxu0 0
      %1110 = vmatmul.mubr.bf16.gmra.mrb[0].mxu0 %v1064
      %v1111 = vpop.f32.mrb[0].mxu0
      %v1112 = vadd.f32 0.0, %v1111
      %v1113 = vpop.f32.mrb[0].mxu0
      %v1114 = vpop.f32.mrb[0].mxu0
      %v1115 = vadd.f32 0.0, %v1114
      %v1116 = vpop.f32.mrb[0].mxu0
      %1117 = vmatprep.mubr.bf16.mxu0 0
      %1118 = vmatmul.mubr.bf16.gmra.mrb[0].mxu0 %v1067
      %v1119 = vpop.f32.mrb[0].mxu0
      %v1120 = vadd.f32 0.0, %v1119
      %v1121 = vpop.f32.mrb[0].mxu0
      %v1122 = vpop.f32.mrb[0].mxu0
      %v1123 = vpop.f32.mrb[0].mxu0
      %1124 = vdwg.mxu0
      %v1125 = vadd.f32 %v1030, %v1104
      %v1126 = vadd.f32 %v1031, %v1107
      %v1127 = vadd.f32 %v1032, %v1112
      %v1128 = vadd.f32 %v1033, %v1115
      %v1129 = vadd.f32 %v1034, %v1120
      %v1130 = vld [vmem:[#allocation2 + $0xe] sm:$0xff]
      %v1131 = vld [vmem:[#allocation2 + $0x16] sm:$0xff]
      %v1132 = vld [vmem:[#allocation2 + $0x1e] sm:$0xff]
      %v1133 = vld [vmem:[#allocation2 + $0x26] sm:$0xff]
      %v1134 = vld [vmem:[#allocation2 + $0x2e] sm:$0xf]
      %v1135 = vpack.c.bf16 %v1131, %v1130
      %v1136 = vpack.c.bf16 %v1133, %v1132
      %v1137 = vpack.c.bf16 %v1134, %v1134
      %s1138 = scalar_lea.vmem %s4, 128
      %v1139 = vld [vmem:[%s1138] sm:$0xf]
      %v1140 = vld [vmem:[%s1138 + $0x4] sm:$0xf]
      %v1141 = vld [vmem:[%s1138 + $0x8] sm:$0xf]
      %v1142 = vld [vmem:[%s1138 + $0xc] sm:$0xf]
      %v1147 = vunpack.c.l.b16 %v1139
      %v1148 = vunpack.c.l.b16 %v1140
      %v1149 = vunpack.c.l.b16 %v1141
      %v1150 = vunpack.c.l.b16 %v1142
      %v1151 = vpack.c.b16 %v1148, %v1147
      %v1152 = vpack.c.b16 %v1150, %v1149
      %v1156 = vsel %vm366, %v1135, 0
      %v1159 = vsel %vm366, %v1136, 0
      %v1162 = vsel %vm366, %v1137, 0
      %1164 = vmatprep.subr.bf16.mxu0 0
      %1165 = vmatpush1.bf16.msra.mxu0 %v1151
      %1166 = vmatprep.subr.bf16.mxu0 0
      %1167 = vmatpush1.bf16.msra.mxu0 %v1152
      %1168 = vmatprep.subr.bf16.mxu0 0
      %1169 = vmatpush1.bf16.msra.mxu0 0
      %1170 = vmatprep.subr.bf16.mxu0 0
      %1171 = vmatpush1.bf16.msra.mxu0 0
      %1172 = vmatprep.subr.bf16.mxu0 0
      %1173 = vmatpush1.bf16.msra.mxu0 0
      %1174 = vmatprep.subr.bf16.mxu0 0
      %1175 = vmatpush1.bf16.msra.mxu0 0
      %1176 = vmatprep.subr.bf16.mxu0 0
      %1177 = vmatpush1.bf16.msra.mxu0 0
      %1178 = vmatprep.subr.bf16.mxu0 0
      %1179 = vmatpush1.bf16.msra.mxu0 0
      %1180 = vmatprep.subr.bf16.mxu0 0
      %1181 = vmatpush1.bf16.msra.mxu0 0
      %1182 = vmatprep.subr.bf16.mxu0 0
      %1183 = vmatpush1.bf16.msra.mxu0 0
      %1184 = vmatprep.subr.bf16.mxu0 0
      %1185 = vmatpush1.bf16.msra.mxu0 0
      %1186 = vmatprep.subr.bf16.mxu0 0
      %1187 = vmatpush1.bf16.msra.mxu0 0
      %1188 = vmatprep.subr.bf16.mxu0 0
      %1189 = vmatpush1.bf16.msra.mxu0 0
      %1190 = vmatprep.subr.bf16.mxu0 0
      %1191 = vmatpush1.bf16.msra.mxu0 0
      %1192 = vmatprep.subr.bf16.mxu0 0
      %1193 = vmatpush1.bf16.msra.mxu0 0
      %1194 = vmatprep.subr.bf16.mxu0 0
      %1195 = vmatpush1.bf16.msra.mxu0 0
      %1196 = vmatprep.mubr.bf16.mxu0 0
      %1197 = vmatmul.mubr.bf16.gmra.mrb[0].mxu0 %v1156
      %v1198 = vpop.f32.mrb[0].mxu0
      %v1199 = vadd.f32 0.0, %v1198
      %v1200 = vpop.f32.mrb[0].mxu0
      %v1201 = vpop.f32.mrb[0].mxu0
      %v1202 = vadd.f32 0.0, %v1201
      %v1203 = vpop.f32.mrb[0].mxu0
      %1204 = vmatprep.mubr.bf16.mxu0 0
      %1205 = vmatmul.mubr.bf16.gmra.mrb[0].mxu0 %v1159
      %v1206 = vpop.f32.mrb[0].mxu0
      %v1207 = vadd.f32 0.0, %v1206
      %v1208 = vpop.f32.mrb[0].mxu0
      %v1209 = vpop.f32.mrb[0].mxu0
      %v1210 = vadd.f32 0.0, %v1209
      %v1211 = vpop.f32.mrb[0].mxu0
      %1212 = vmatprep.mubr.bf16.mxu0 0
      %1213 = vmatmul.mubr.bf16.gmra.mrb[0].mxu0 %v1162
      %v1214 = vpop.f32.mrb[0].mxu0
      %v1215 = vadd.f32 0.0, %v1214
      %v1216 = vpop.f32.mrb[0].mxu0
      %v1217 = vpop.f32.mrb[0].mxu0
      %v1218 = vpop.f32.mrb[0].mxu0
      %1219 = vdwg.mxu0
      %v1220 = vadd.f32 %v1125, %v1199
      %v1221 = vadd.f32 %v1126, %v1202
      %v1222 = vadd.f32 %v1127, %v1207
      %v1223 = vadd.f32 %v1128, %v1210
      %v1224 = vadd.f32 %v1129, %v1215
      %v1225 = vld [vmem:[%s1] sm:$0xff]
      %v1226 = vld [vmem:[%s1 + $0x8] sm:$0xff]
      %v1227 = vld [vmem:[%s1 + $0x10] sm:$0xff]
      %v1228 = vld [vmem:[%s1 + $0x18] sm:$0xff]
      %v1229 = vld [vmem:[%s1 + $0x20] sm:$0xf]
      %1231 = vset.pattern.permute.xlu0 0
      %1232 = vperm.xlu0 %1231, %v1225
      %v1233 = vpop.permute.xlu0 %1232
      %1236 = vset.pattern.permute.xlu0 0
      %1237 = vperm.xlu0 %1236, %v1226
      %v1238 = vpop.permute.xlu0 %1237
      %1241 = vset.pattern.permute.xlu0 0
      %1242 = vperm.xlu0 %1241, %v1227
      %v1243 = vpop.permute.xlu0 %1242
      %1246 = vset.pattern.permute.xlu0 0
      %1247 = vperm.xlu0 %1246, %v1228
      %v1248 = vpop.permute.xlu0 %1247
      %1251 = vset.pattern.permute.xlu0 0
      %1252 = vperm.xlu0 %1251, %v1229
      %v1253 = vpop.permute.xlu0 %1252
      %v1255 = vmul.f32 %v1220, %v1233
      %v1256 = vmul.f32 %v1221, %v1238
      %v1257 = vmul.f32 %v1222, %v1243
      %v1258 = vmul.f32 %v1223, %v1248
      %v1259 = vmul.f32 %v1224, %v1253
      %vm1260 = vcmask 64512
      %1261 = vst.msk [vmem:[%s289] sm:$0xff] %vm1260, %v1255
      %1262 = vst.msk [vmem:[%s289 + $0x8] sm:$0xff] %vm1260, %v1256
      %1263 = vst.msk [vmem:[%s289 + $0x10] sm:$0xff] %vm1260, %v1257
      %1264 = vst.msk [vmem:[%s289 + $0x18] sm:$0xff] %vm1260, %v1258
      %vm1265 = vcmask 60416
      %1266 = vst.msk [vmem:[%s289 + $0x20] sm:$0xf] %vm1265, %v1259
      %v1267 = vsel %vm1260, %v1255, 0.0
      %v1268 = vsel %vm1260, %v1256, 0.0
      %v1269 = vadd.f32 %v1267, %v1268
      %v1270 = vsel %vm1260, %v1257, 0.0
      %v1271 = vadd.f32 %v1269, %v1270
      %v1272 = vsel %vm1260, %v1258, 0.0
      %v1273 = vadd.f32 %v1271, %v1272
      %v1274 = vsel %vm1265, %v1259, 0.0
      %v1275 = vadd.f32 %v1273, %v1274
      %v1276 = vrot.slane %v1275, 4
      %v1277 = vadd.f32 %v1275, %v1276
      %v1278 = vrot.slane %v1277, 2
      %v1279 = vadd.f32 %v1277, %v1278
      %v1280 = vrot.slane %v1279, 1
      %v1281 = vadd.f32 %v1279, %v1280
      %vm1282 = vcmask 57344
      %1283 = vst.msk [vmem:[%s292] sm:$0x1] %vm1282, %v1281
      %v1284 = vmul.f32 %v1255, %v1255
      %v1285 = vmul.f32 %v1256, %v1256
      %v1286 = vmul.f32 %v1257, %v1257
      %v1287 = vmul.f32 %v1258, %v1258
      %v1288 = vmul.f32 %v1259, %v1259
      %v1289 = vsel %vm1260, %v1284, 0.0
      %v1290 = vsel %vm1260, %v1285, 0.0
      %v1291 = vadd.f32 %v1289, %v1290
      %v1292 = vsel %vm1260, %v1286, 0.0
      %v1293 = vadd.f32 %v1291, %v1292
      %v1294 = vsel %vm1260, %v1287, 0.0
      %v1295 = vadd.f32 %v1293, %v1294
      %v1296 = vsel %vm1265, %v1288, 0.0
      %v1297 = vadd.f32 %v1295, %v1296
      %v1298 = vrot.slane %v1297, 4
      %v1299 = vadd.f32 %v1297, %v1298
      %v1300 = vrot.slane %v1299, 2
      %v1301 = vadd.f32 %v1299, %v1300
      %v1302 = vrot.slane %v1301, 1
      %v1303 = vadd.f32 %v1301, %v1302
      %1304 = vst.msk [vmem:[%s295] sm:$0x1] %vm1282, %v1303
      %p1305 = scmp.lt.s32.totalorder %s19, 1
      %s1306 = scalar_select %p1305, %s19, 1
      %s1307 = smul.addr %s1306, 5
      %s1308 = smul.addr %s1307, 8
      %s1309 = scalar_lea.vmem %s5, %s1308
      %p1310 = scmp.lt.s32.totalorder %s19, 1
      %s1311 = scalar_select %p1310, %s19, 1
      %s1312 = scalar_lea.vmem %s6, %s1311
      %p1313 = scmp.lt.s32.totalorder %s19, 1
      %s1314 = scalar_select %p1313, %s19, 1
      %s1315 = scalar_lea.vmem %s7, %s1314
      // Predicated region
      $region41: #{densenet_forward.24} parent=39 // pred_check
        %p1316 = pneg %p147
      $region42: #{densenet_forward.24} parent=39 // pred_check_branch
        %1318 = sbr.rel (%p1316) target = $region44
      $region43: #{densenet_forward.24} parent=39 // pred_region
        _
      $region44: #{densenet_forward.24} parent=39 // pred_fallthru
        _
      // Predicated region
      $region45: #{densenet_forward.24} parent=39 // pred_check
        %p1319 = pneg %p173
      $region46: #{densenet_forward.24} parent=39 // pred_check_branch
        %1321 = sbr.rel (%p1319) target = $region48
      $region47: #{densenet_forward.24} parent=39 // pred_region
        _
      $region48: #{densenet_forward.24} parent=39 // pred_fallthru
        _
      // Predicated region
      $region49: #{densenet_forward.24} parent=39 // pred_check
        %p1322 = pneg %p199
      $region50: #{densenet_forward.24} parent=39 // pred_check_branch
        %1324 = sbr.rel (%p1322) target = $region52
      $region51: #{densenet_forward.24} parent=39 // pred_region
        _
      $region52: #{densenet_forward.24} parent=39 // pred_fallthru
        _
    $region40: #{densenet_forward.24} parent=5 // pred_fallthru
      _
    %p1325 = scmp.le.s32.totalorder 2, %s14
    // Predicated region
    $region53: #{densenet_forward.24} parent=5 // pred_check
      %p1326 = pneg %p1325
    $region54: #{densenet_forward.24} parent=5 // pred_check_branch
      %1328 = sbr.rel (%p1326) target = $region56
    $region55: #{densenet_forward.24} parent=5 // pred_region
      %s1329 = ssub.s32 %s14, 2
      // Predicated region
      $region57: #{densenet_forward.24} parent=55 // pred_check
        %p1330 = pneg %p153
      $region58: #{densenet_forward.24} parent=55 // pred_check_branch
        %1332 = sbr.rel (%p1330) target = $region60
      $region59: #{densenet_forward.24} parent=55 // pred_region
        %p1333 = scmp.lt.s32.totalorder %s20, 1
        %s1334 = scalar_select %p1333, %s20, 1
        %s1335 = smul.addr %s1334, 5
        %s1336 = smul.addr %s1335, 8
        %s1337 = scalar_lea.vmem %s5, %s1336
      $region60: #{densenet_forward.24} parent=55 // pred_fallthru
        _
      // Predicated region
      $region61: #{densenet_forward.24} parent=55 // pred_check
        %p1338 = pneg %p179
      $region62: #{densenet_forward.24} parent=55 // pred_check_branch
        %1340 = sbr.rel (%p1338) target = $region64
      $region63: #{densenet_forward.24} parent=55 // pred_region
        %p1341 = scmp.lt.s32.totalorder %s20, 1
        %s1342 = scalar_select %p1341, %s20, 1
        %s1343 = scalar_lea.vmem %s6, %s1342
      $region64: #{densenet_forward.24} parent=55 // pred_fallthru
        _
      // Predicated region
      $region65: #{densenet_forward.24} parent=55 // pred_check
        %p1344 = pneg %p205
      $region66: #{densenet_forward.24} parent=55 // pred_check_branch
        %1346 = sbr.rel (%p1344) target = $region68
      $region67: #{densenet_forward.24} parent=55 // pred_region
        %p1347 = scmp.lt.s32.totalorder %s20, 1
        %s1348 = scalar_select %p1347, %s20, 1
        %s1349 = scalar_lea.vmem %s7, %s1348
      $region68: #{densenet_forward.24} parent=55 // pred_fallthru
        _
    $region56: #{densenet_forward.24} parent=5 // pred_fallthru
      _
  $region6: #{densenet_forward.24} parent=0 // loop_footer
    %s18 = sadd.s32 1, %s14
  $region7: #{densenet_forward.24} parent=0 // loop_footer_branch
    %13 = sbr.rel target = $region3
  $region8: #{densenet_forward.24} parent=0 // loop_exit
    _

// kernel: densenet_forward.25
$region0: #{densenet_forward.25}
  #allocation0 [shape = 'u32[]', space=smem, size = 0x4, offset = 0x4, fixed_abs, tag = 'smem constant byte address 0x4 - core index']
  #allocation1 [shape = 'u32[144,128]{1,0:T(1,128)}', space=vmem, size = 0x12000, scoped, tag = 'internal scratch']
  %s0 = inlined_call_operand.vmem [shape: f32[72,24], index: 0, kind: input, shape index: {}]
  %s1 = inlined_call_operand.vmem [shape: f32[72,1], index: 1, kind: input, shape index: {}]
  %s2 = inlined_call_operand.vmem [shape: f32[1,24], index: 2, kind: input, shape index: {}]
  %s3 = inlined_call_operand.vmem [shape: f32[1,24], index: 3, kind: input, shape index: {}]
  %s4 = inlined_call_operand.vmem [shape: bf16[24,32], index: 4, kind: input, shape index: {}]
  %s5 = inlined_call_operand.vmem [shape: f32[72,32], index: 5, kind: output, shape index: {0}]
  %s6 = inlined_call_operand.vmem [shape: f32[1,1,32], index: 6, kind: output, shape index: {1}]
  %s7 = inlined_call_operand.vmem [shape: f32[1,1,32], index: 7, kind: output, shape index: {2}]
  %8 = xla_tuple %s5, %s6, %s7
  %s9 = sld [smem:[#allocation0]]
  $region46: #{densenet_forward.25} parent=0
    _
  %s11 = ssub.s32 1, %s9
  %s12 = scalar_select 0, %s11, %s9
  // Predicated region
  $region2: #{densenet_forward.25} parent=0 // pred_check
    _
  $region3: #{densenet_forward.25} parent=0 // pred_check_branch
    %14 = sbr.rel (0) target = $region5
  $region4: #{densenet_forward.25} parent=0 // pred_region
    _
  $region5: #{densenet_forward.25} parent=0 // pred_fallthru
    _
  // Predicated region
  $region6: #{densenet_forward.25} parent=0 // pred_check
    _
  $region7: #{densenet_forward.25} parent=0 // pred_check_branch
    %16 = sbr.rel (0) target = $region9
  $region8: #{densenet_forward.25} parent=0 // pred_region
    _
  $region9: #{densenet_forward.25} parent=0 // pred_fallthru
    _
  // Predicated region
  $region10: #{densenet_forward.25} parent=0 // pred_check
    _
  $region11: #{densenet_forward.25} parent=0 // pred_check_branch
    %18 = sbr.rel (0) target = $region13
  $region12: #{densenet_forward.25} parent=0 // pred_region
    _
  $region13: #{densenet_forward.25} parent=0 // pred_fallthru
    _
  // Predicated region
  $region14: #{densenet_forward.25} parent=0 // pred_check
    _
  $region15: #{densenet_forward.25} parent=0 // pred_check_branch
    %20 = sbr.rel (0) target = $region17
  $region16: #{densenet_forward.25} parent=0 // pred_region
    _
  $region17: #{densenet_forward.25} parent=0 // pred_fallthru
    _
  // Predicated region
  $region18: #{densenet_forward.25} parent=0 // pred_check
    _
  $region19: #{densenet_forward.25} parent=0 // pred_check_branch
    %22 = sbr.rel (0) target = $region21
  $region20: #{densenet_forward.25} parent=0 // pred_region
    _
  $region21: #{densenet_forward.25} parent=0 // pred_fallthru
    _
  %s24 = smul.u32 0, 72
  %v25 = vlaneseq
  %v26 = vshrl.u32 %v25, 7
  %v27 = vadd.s32 %v26, 8
  %v28 = vadd.s32 %v26, 16
  %v29 = vadd.s32 %v26, 24
  %v30 = vadd.s32 %v26, 32
  %v31 = vadd.s32 %v26, 40
  %v32 = vadd.s32 %v26, 48
  %v33 = vadd.s32 %v26, 56
  %v34 = vadd.s32 %v26, 64
  %v35 = vstv %s24
  %v36 = vadd.s32 %v35, %v26
  %v37 = vadd.s32 %v35, %v27
  %v38 = vadd.s32 %v35, %v28
  %v39 = vadd.s32 %v35, %v29
  %v40 = vadd.s32 %v35, %v30
  %v41 = vadd.s32 %v35, %v31
  %v42 = vadd.s32 %v35, %v32
  %v43 = vadd.s32 %v35, %v33
  %v44 = vadd.s32 %v35, %v34
  %vm45 = vcmp.lt.s32.totalorder %v36, 72
  %vm46 = vcmp.lt.s32.totalorder %v37, 72
  %vm47 = vcmp.lt.s32.totalorder %v38, 72
  %vm48 = vcmp.lt.s32.totalorder %v39, 72
  %vm49 = vcmp.lt.s32.totalorder %v40, 72
  %vm50 = vcmp.lt.s32.totalorder %v41, 72
  %vm51 = vcmp.lt.s32.totalorder %v42, 72
  %vm52 = vcmp.lt.s32.totalorder %v43, 72
  %vm53 = vcmp.lt.s32.totalorder %v44, 72
  %v54 = vld [vmem:[%s0] sm:$0xff]
  %v55 = vld [vmem:[%s0 + $0x8] sm:$0xff]
  %v56 = vld [vmem:[%s0 + $0x10] sm:$0xff]
  %v57 = vld [vmem:[%s0 + $0x18] sm:$0xff]
  %v58 = vld [vmem:[%s0 + $0x20] sm:$0xff]
  %v59 = vld [vmem:[%s0 + $0x28] sm:$0xff]
  %v60 = vld [vmem:[%s0 + $0x30] sm:$0xff]
  %v61 = vld [vmem:[%s0 + $0x38] sm:$0xff]
  %v62 = vld [vmem:[%s0 + $0x40] sm:$0xff]
  %v63 = vld [vmem:[%s2] sm:$0x1]
  %v65 = vlaneseq
  %v66 = vshrl.u32 %v65, 7
  %v67 = vsub.s32 0, %v66
  %v68 = vrot.slane %v63, %v67
  %v70 = vmul.f32 %v54, %v68
  %v71 = vmul.f32 %v55, %v68
  %v72 = vmul.f32 %v56, %v68
  %v73 = vmul.f32 %v57, %v68
  %v74 = vmul.f32 %v58, %v68
  %v75 = vmul.f32 %v59, %v68
  %v76 = vmul.f32 %v60, %v68
  %v77 = vmul.f32 %v61, %v68
  %v78 = vmul.f32 %v62, %v68
  %v79 = vld [vmem:[%s3] sm:$0x1]
  %v81 = vlaneseq
  %v82 = vshrl.u32 %v81, 7
  %v83 = vsub.s32 0, %v82
  %v84 = vrot.slane %v79, %v83
  %v86 = vadd.f32 %v70, %v84
  %v87 = vadd.f32 %v71, %v84
  %v88 = vadd.f32 %v72, %v84
  %v89 = vadd.f32 %v73, %v84
  %v90 = vadd.f32 %v74, %v84
  %v91 = vadd.f32 %v75, %v84
  %v92 = vadd.f32 %v76, %v84
  %v93 = vadd.f32 %v77, %v84
  %v94 = vadd.f32 %v78, %v84
  %v95 = vmax.f32 %v86, 0.0
  %v96 = vmax.f32 %v87, 0.0
  %v97 = vmax.f32 %v88, 0.0
  %v98 = vmax.f32 %v89, 0.0
  %v99 = vmax.f32 %v90, 0.0
  %v100 = vmax.f32 %v91, 0.0
  %v101 = vmax.f32 %v92, 0.0
  %v102 = vmax.f32 %v93, 0.0
  %v103 = vmax.f32 %v94, 0.0
  %v104 = vld [vmem:[%s1] sm:$0xff]
  %v105 = vld [vmem:[%s1 + $0x8] sm:$0xff]
  %v106 = vld [vmem:[%s1 + $0x10] sm:$0xff]
  %v107 = vld [vmem:[%s1 + $0x18] sm:$0xff]
  %v108 = vld [vmem:[%s1 + $0x20] sm:$0xff]
  %v109 = vld [vmem:[%s1 + $0x28] sm:$0xff]
  %v110 = vld [vmem:[%s1 + $0x30] sm:$0xff]
  %v111 = vld [vmem:[%s1 + $0x38] sm:$0xff]
  %v112 = vld [vmem:[%s1 + $0x40] sm:$0xff]
  %114 = vset.pattern.permute.xlu0 0
  %115 = vperm.xlu0 %114, %v104
  %v116 = vpop.permute.xlu0 %115
  %119 = vset.pattern.permute.xlu0 0
  %120 = vperm.xlu0 %119, %v105
  %v121 = vpop.permute.xlu0 %120
  %124 = vset.pattern.permute.xlu0 0
  %125 = vperm.xlu0 %124, %v106
  %v126 = vpop.permute.xlu0 %125
  %129 = vset.pattern.permute.xlu0 0
  %130 = vperm.xlu0 %129, %v107
  %v131 = vpop.permute.xlu0 %130
  %134 = vset.pattern.permute.xlu0 0
  %135 = vperm.xlu0 %134, %v108
  %v136 = vpop.permute.xlu0 %135
  %139 = vset.pattern.permute.xlu0 0
  %140 = vperm.xlu0 %139, %v109
  %v141 = vpop.permute.xlu0 %140
  %144 = vset.pattern.permute.xlu0 0
  %145 = vperm.xlu0 %144, %v110
  %v146 = vpop.permute.xlu0 %145
  %149 = vset.pattern.permute.xlu0 0
  %150 = vperm.xlu0 %149, %v111
  %v151 = vpop.permute.xlu0 %150
  %154 = vset.pattern.permute.xlu0 0
  %155 = vperm.xlu0 %154, %v112
  %v156 = vpop.permute.xlu0 %155
  %v158 = vmul.f32 %v95, %v116
  %v159 = vmul.f32 %v96, %v121
  %v160 = vmul.f32 %v97, %v126
  %v161 = vmul.f32 %v98, %v131
  %v162 = vmul.f32 %v99, %v136
  %v163 = vmul.f32 %v100, %v141
  %v164 = vmul.f32 %v101, %v146
  %v165 = vmul.f32 %v102, %v151
  %v166 = vmul.f32 %v103, %v156
  %v167 = vsel %vm45, 1, 0
  %v168 = vsel %vm46, 1, 0
  %v169 = vsel %vm47, 1, 0
  %v170 = vsel %vm48, 1, 0
  %v171 = vsel %vm49, 1, 0
  %v172 = vsel %vm50, 1, 0
  %v173 = vsel %vm51, 1, 0
  %v174 = vsel %vm52, 1, 0
  %v175 = vsel %vm53, 1, 0
  %vm176 = vcmp.eq.s32.totalorder %v167, 1
  %vm177 = vcmp.eq.s32.totalorder %v168, 1
  %vm178 = vcmp.eq.s32.totalorder %v169, 1
  %vm179 = vcmp.eq.s32.totalorder %v170, 1
  %vm180 = vcmp.eq.s32.totalorder %v171, 1
  %vm181 = vcmp.eq.s32.totalorder %v172, 1
  %vm182 = vcmp.eq.s32.totalorder %v173, 1
  %vm183 = vcmp.eq.s32.totalorder %v174, 1
  %vm184 = vcmp.eq.s32.totalorder %v175, 1
  %v185 = vsel %vm176, %v158, 0.0
  %v186 = vsel %vm177, %v159, 0.0
  %v187 = vsel %vm178, %v160, 0.0
  %v188 = vsel %vm179, %v161, 0.0
  %v189 = vsel %vm180, %v162, 0.0
  %v190 = vsel %vm181, %v163, 0.0
  %v191 = vsel %vm182, %v164, 0.0
  %v192 = vsel %vm183, %v165, 0.0
  %v193 = vsel %vm184, %v166, 0.0
  %v194 = vpack.c.bf16 %v186, %v185
  %v195 = vpack.c.bf16 %v188, %v187
  %v196 = vpack.c.bf16 %v190, %v189
  %v197 = vpack.c.bf16 %v192, %v191
  %v198 = vpack.c.bf16 %v193, %v193
  %v199 = vld [vmem:[%s4] sm:$0xf]
  %v200 = vld [vmem:[%s4 + $0x4] sm:$0xf]
  %v201 = vld [vmem:[%s4 + $0x8] sm:$0xf]
  %v205 = vunpack.c.l.b16 %v199
  %v206 = vunpack.c.l.b16 %v200
  %v207 = vunpack.c.l.b16 %v201
  %v208 = vpack.c.b16 %v206, %v205
  %v209 = vpack.c.b16 %v207, %v207
  %vm211 = vcmask 195584
  %v213 = vsel %vm211, %v194, 0
  %v216 = vsel %vm211, %v195, 0
  %v219 = vsel %vm211, %v196, 0
  %v222 = vsel %vm211, %v197, 0
  %v225 = vsel %vm211, %v198, 0
  %vm227 = vcmask 1043456
  %v229 = vsel %vm227, %v209, 0
  %231 = vmatprep.subr.bf16.mxu0 0
  %232 = vmatpush1.bf16.msra.mxu0 %v208
  %233 = vmatprep.subr.bf16.mxu0 0
  %234 = vmatpush1.bf16.msra.mxu0 %v229
  %235 = vmatprep.subr.bf16.mxu0 0
  %236 = vmatpush1.bf16.msra.mxu0 0
  %237 = vmatprep.subr.bf16.mxu0 0
  %238 = vmatpush1.bf16.msra.mxu0 0
  %239 = vmatprep.subr.bf16.mxu0 0
  %240 = vmatpush1.bf16.msra.mxu0 0
  %241 = vmatprep.subr.bf16.mxu0 0
  %242 = vmatpush1.bf16.msra.mxu0 0
  %243 = vmatprep.subr.bf16.mxu0 0
  %244 = vmatpush1.bf16.msra.mxu0 0
  %245 = vmatprep.subr.bf16.mxu0 0
  %246 = vmatpush1.bf16.msra.mxu0 0
  %247 = vmatprep.subr.bf16.mxu0 0
  %248 = vmatpush1.bf16.msra.mxu0 0
  %249 = vmatprep.subr.bf16.mxu0 0
  %250 = vmatpush1.bf16.msra.mxu0 0
  %251 = vmatprep.subr.bf16.mxu0 0
  %252 = vmatpush1.bf16.msra.mxu0 0
  %253 = vmatprep.subr.bf16.mxu0 0
  %254 = vmatpush1.bf16.msra.mxu0 0
  %255 = vmatprep.subr.bf16.mxu0 0
  %256 = vmatpush1.bf16.msra.mxu0 0
  %257 = vmatprep.subr.bf16.mxu0 0
  %258 = vmatpush1.bf16.msra.mxu0 0
  %259 = vmatprep.subr.bf16.mxu0 0
  %260 = vmatpush1.bf16.msra.mxu0 0
  %261 = vmatprep.subr.bf16.mxu0 0
  %262 = vmatpush1.bf16.msra.mxu0 0
  %263 = vmatprep.mubr.bf16.mxu0 0
  %264 = vmatmul.mubr.bf16.gmra.mrb[0].mxu0 %v213
  %v265 = vpop.f32.mrb[0].mxu0
  %v266 = vadd.f32 0.0, %v265
  %v267 = vpop.f32.mrb[0].mxu0
  %v268 = vpop.f32.mrb[0].mxu0
  %v269 = vadd.f32 0.0, %v268
  %v270 = vpop.f32.mrb[0].mxu0
  %271 = vmatprep.mubr.bf16.mxu0 0
  %272 = vmatmul.mubr.bf16.gmra.mrb[0].mxu0 %v216
  %v273 = vpop.f32.mrb[0].mxu0
  %v274 = vadd.f32 0.0, %v273
  %v275 = vpop.f32.mrb[0].mxu0
  %v276 = vpop.f32.mrb[0].mxu0
  %v277 = vadd.f32 0.0, %v276
  %v278 = vpop.f32.mrb[0].mxu0
  %279 = vmatprep.mubr.bf16.mxu0 0
  %280 = vmatmul.mubr.bf16.gmra.mrb[0].mxu0 %v219
  %v281 = vpop.f32.mrb[0].mxu0
  %v282 = vadd.f32 0.0, %v281
  %v283 = vpop.f32.mrb[0].mxu0
  %v284 = vpop.f32.mrb[0].mxu0
  %v285 = vadd.f32 0.0, %v284
  %v286 = vpop.f32.mrb[0].mxu0
  %287 = vmatprep.mubr.bf16.mxu0 0
  %288 = vmatmul.mubr.bf16.gmra.mrb[0].mxu0 %v222
  %v289 = vpop.f32.mrb[0].mxu0
  %v290 = vadd.f32 0.0, %v289
  %v291 = vpop.f32.mrb[0].mxu0
  %v292 = vpop.f32.mrb[0].mxu0
  %v293 = vadd.f32 0.0, %v292
  %v294 = vpop.f32.mrb[0].mxu0
  %295 = vmatprep.mubr.bf16.mxu0 0
  %296 = vmatmul.mubr.bf16.gmra.mrb[0].mxu0 %v225
  %v297 = vpop.f32.mrb[0].mxu0
  %v298 = vadd.f32 0.0, %v297
  %v299 = vpop.f32.mrb[0].mxu0
  %v300 = vpop.f32.mrb[0].mxu0
  %v301 = vpop.f32.mrb[0].mxu0
  %302 = vdwg.mxu0
  %vm303 = vcmask 261120
  %304 = vst.msk [vmem:[%s5] sm:$0xff] %vm303, %v266
  %305 = vst.msk [vmem:[%s5 + $0x8] sm:$0xff] %vm303, %v269
  %306 = vst.msk [vmem:[%s5 + $0x10] sm:$0xff] %vm303, %v274
  %307 = vst.msk [vmem:[%s5 + $0x18] sm:$0xff] %vm303, %v277
  %308 = vst.msk [vmem:[%s5 + $0x20] sm:$0xff] %vm303, %v282
  %309 = vst.msk [vmem:[%s5 + $0x28] sm:$0xff] %vm303, %v285
  %310 = vst.msk [vmem:[%s5 + $0x30] sm:$0xff] %vm303, %v290
  %311 = vst.msk [vmem:[%s5 + $0x38] sm:$0xff] %vm303, %v293
  %312 = vst.msk [vmem:[%s5 + $0x40] sm:$0xff] %vm303, %v298
  %v313 = vsel %vm303, %v266, 0.0
  %v314 = vsel %vm303, %v269, 0.0
  %v315 = vadd.f32 %v313, %v314
  %v316 = vsel %vm303, %v274, 0.0
  %v317 = vadd.f32 %v315, %v316
  %v318 = vsel %vm303, %v277, 0.0
  %v319 = vadd.f32 %v317, %v318
  %v320 = vsel %vm303, %v282, 0.0
  %v321 = vadd.f32 %v319, %v320
  %v322 = vsel %vm303, %v285, 0.0
  %v323 = vadd.f32 %v321, %v322
  %v324 = vsel %vm303, %v290, 0.0
  %v325 = vadd.f32 %v323, %v324
  %v326 = vsel %vm303, %v293, 0.0
  %v327 = vadd.f32 %v325, %v326
  %v328 = vsel %vm303, %v298, 0.0
  %v329 = vadd.f32 %v327, %v328
  %v330 = vrot.slane %v329, 4
  %v331 = vadd.f32 %v329, %v330
  %v332 = vrot.slane %v331, 2
  %v333 = vadd.f32 %v331, %v332
  %v334 = vrot.slane %v333, 1
  %v335 = vadd.f32 %v333, %v334
  %vm336 = vcmask 253952
  %337 = vst.msk [vmem:[%s6] sm:$0x1] %vm336, %v335
  %v338 = vmul.f32 %v266, %v266
  %v339 = vmul.f32 %v269, %v269
  %v340 = vmul.f32 %v274, %v274
  %v341 = vmul.f32 %v277, %v277
  %v342 = vmul.f32 %v282, %v282
  %v343 = vmul.f32 %v285, %v285
  %v344 = vmul.f32 %v290, %v290
  %v345 = vmul.f32 %v293, %v293
  %v346 = vmul.f32 %v298, %v298
  %v347 = vsel %vm303, %v338, 0.0
  %v348 = vsel %vm303, %v339, 0.0
  %v349 = vadd.f32 %v347, %v348
  %v350 = vsel %vm303, %v340, 0.0
  %v351 = vadd.f32 %v349, %v350
  %v352 = vsel %vm303, %v341, 0.0
  %v353 = vadd.f32 %v351, %v352
  %v354 = vsel %vm303, %v342, 0.0
  %v355 = vadd.f32 %v353, %v354
  %v356 = vsel %vm303, %v343, 0.0
  %v357 = vadd.f32 %v355, %v356
  %v358 = vsel %vm303, %v344, 0.0
  %v359 = vadd.f32 %v357, %v358
  %v360 = vsel %vm303, %v345, 0.0
  %v361 = vadd.f32 %v359, %v360
  %v362 = vsel %vm303, %v346, 0.0
  %v363 = vadd.f32 %v361, %v362
  %v364 = vrot.slane %v363, 4
  %v365 = vadd.f32 %v363, %v364
  %v366 = vrot.slane %v365, 2
  %v367 = vadd.f32 %v365, %v366
  %v368 = vrot.slane %v367, 1
  %v369 = vadd.f32 %v367, %v368
  %370 = vst.msk [vmem:[%s7] sm:$0x1] %vm336, %v369
  // Predicated region
  $region22: #{densenet_forward.25} parent=0 // pred_check
    _
  $region23: #{densenet_forward.25} parent=0 // pred_check_branch
    %372 = sbr.rel (0) target = $region25
  $region24: #{densenet_forward.25} parent=0 // pred_region
    _
  $region25: #{densenet_forward.25} parent=0 // pred_fallthru
    _
  // Predicated region
  $region26: #{densenet_forward.25} parent=0 // pred_check
    _
  $region27: #{densenet_forward.25} parent=0 // pred_check_branch
    %374 = sbr.rel (0) target = $region29
  $region28: #{densenet_forward.25} parent=0 // pred_region
    _
  $region29: #{densenet_forward.25} parent=0 // pred_fallthru
    _
  // Predicated region
  $region30: #{densenet_forward.25} parent=0 // pred_check
    _
  $region31: #{densenet_forward.25} parent=0 // pred_check_branch
    %376 = sbr.rel (0) target = $region33
  $region32: #{densenet_forward.25} parent=0 // pred_region
    _
  $region33: #{densenet_forward.25} parent=0 // pred_fallthru
    _
  // Predicated region
  $region34: #{densenet_forward.25} parent=0 // pred_check
    _
  $region35: #{densenet_forward.25} parent=0 // pred_check_branch
    %378 = sbr.rel (0) target = $region37
  $region36: #{densenet_forward.25} parent=0 // pred_region
    _
  $region37: #{densenet_forward.25} parent=0 // pred_fallthru
    _
  // Predicated region
  $region38: #{densenet_forward.25} parent=0 // pred_check
    _
  $region39: #{densenet_forward.25} parent=0 // pred_check_branch
    %380 = sbr.rel (0) target = $region41
  $region40: #{densenet_forward.25} parent=0 // pred_region
    _
  $region41: #{densenet_forward.25} parent=0 // pred_fallthru
    _
  // Predicated region
  $region42: #{densenet_forward.25} parent=0 // pred_check
    _
  $region43: #{densenet_forward.25} parent=0 // pred_check_branch
    %382 = sbr.rel (0) target = $region45
  $region44: #{densenet_forward.25} parent=0 // pred_region
    _
  $region45: #{densenet_forward.25} parent=0 // pred_fallthru
    _

// kernel: densenet_forward.27
$region0: #{densenet_forward.27}
  #allocation0 [shape = 'u32[]', space=smem, size = 0x4, offset = 0x4, fixed_abs, tag = 'smem constant byte address 0x4 - core index']
  #allocation1 [shape = 'u32[144,128]{1,0:T(1,128)}', space=vmem, size = 0x12000, scoped, tag = 'internal scratch']
  %s0 = inlined_call_operand.vmem [shape: f32[2,36,32], index: 0, kind: input, shape index: {}]
  %s1 = inlined_call_operand.vmem [shape: f32[36,1], index: 1, kind: input, shape index: {}]
  %s2 = inlined_call_operand.vmem [shape: f32[1,32], index: 2, kind: input, shape index: {}]
  %s3 = inlined_call_operand.vmem [shape: f32[1,32], index: 3, kind: input, shape index: {}]
  %s4 = inlined_call_operand.vmem [shape: f32[32,17], index: 4, kind: input, shape index: {}]
  %s5 = inlined_call_operand.vmem [shape: f32[1,17], index: 5, kind: input, shape index: {}]
  %s6 = inlined_call_operand.hbm [shape: f32[2,1,17], index: 6, kind: output, shape index: {}]
  %s7 = sld [smem:[#allocation0]]
  $region57: #{densenet_forward.27} parent=0
    _
  %s9 = ssub.s32 1, %s7
  %s10 = scalar_select 0, %s9, %s7
  $region1: #{densenet_forward.27} parent=0
    #allocation2 [shape = 'u8[1024]{0}', space=vmem, size = 0x400, scoped, tag = 'output window, operand 0']
    #allocation3 [shape = 's32[2]{0}', space=sflag, size = 0x8, scoped, tag = 'scoped memory for densenet_forward.27']
    %11 = vsyncpa [#allocation3], 0
    %s12 = scalar_lea.sflag [#allocation3], 1
    %13 = vsyncpa %s12, 0
    loop: start=0, step=1, limit=4
    $region2: #{densenet_forward.27} parent=1 // loop_pre_header
      _
    $region3: #{densenet_forward.27} parent=1 // loop_header
      %s15 = sphi 0, %s19
      %p16 = scmp.ge.s32.totalorder %s15, 4
      %s25 = sphi 0, %s27
      %s28 = sphi 0, %s25
      %s29 = sphi 0, %s28
      %s45 = sphi 0, %s29
      %s49 = sphi 0, %s49
      %s51 = sphi 0, %s49
      %s52 = sphi 0, %s51
      %s66 = sphi 0, %s52
      %s70 = sphi 0, %s70
      %s72 = sphi 0, %s70
      %s73 = sphi 0, %s72
      %s87 = sphi 0, %s73
      %s91 = sphi 0, %s91
      %s93 = sphi 0, %s91
      %s94 = sphi 0, %s93
      %s108 = sphi 0, %s94
      %s112 = sphi 0, %s112
      %s114 = sphi 0, %s112
      %s115 = sphi 0, %s114
      %s129 = sphi 0, %s115
      %s133 = sphi 0, %s133
      %s135 = sphi 0, %s133
      %s136 = sphi 0, %s135
      %s150 = sphi 0, %s136
      %s156 = sphi 0, %s158
      %s159 = sphi 0, %s156
      %s160 = sphi 0, %s159
      %s176 = sphi 0, %s160
    $region4: #{densenet_forward.27} parent=1 // loop_header_branch
      %18 = sbr.rel (%p16) target = $region8
    $region5: #{densenet_forward.27} parent=1 // loop_body
      %s20 = ssub.s32 %s15, 1
      %s21 = ssub.s32 %s15, 2
      %s22 = sadd.s32 %s15, 1
      %s23 = ssub.s32 %s15, %s22
      %p24 = scmp.eq.s32.totalorder %s23, 0
      %s26 = sadd.s32 %s25, 1
      %s27 = scalar_select %p24, %s25, %s26
      %p30 = pneg %p24
      %p31 = scmp.eq.s32.totalorder %s15, 1
      %p32 = por %p30, %p31
      %p33 = scmp.ne.s32.totalorder %s25, %s28
      %p34 = scmp.eq.s32.totalorder %s15, 0
      %p35 = por %p33, %p34
      %p36 = scmp.ne.s32.totalorder %s25, %s28
      %p37 = scmp.eq.s32.totalorder %s20, 1
      %p38 = por %p36, %p37
      %p39 = scmp.ne.s32.totalorder %s28, %s29
      %p40 = scmp.eq.s32.totalorder %s20, 0
      %p41 = por %p39, %p40
      %p42 = scmp.ne.s32.totalorder %s28, %s29
      %p43 = scmp.eq.s32.totalorder %s21, 1
      %p44 = por %p42, %p43
      %p46 = scmp.ne.s32.totalorder %s29, %s45
      %p47 = scmp.eq.s32.totalorder %s21, 0
      %p48 = por %p46, %p47
      %s50 = sadd.s32 %s49, 1
      %p53 = scmp.eq.s32.totalorder %s15, 1
      %p54 = scmp.ne.s32.totalorder %s49, %s51
      %p55 = scmp.eq.s32.totalorder %s15, 0
      %p56 = por %p54, %p55
      %p57 = scmp.ne.s32.totalorder %s49, %s51
      %p58 = scmp.eq.s32.totalorder %s20, 1
      %p59 = por %p57, %p58
      %p60 = scmp.ne.s32.totalorder %s51, %s52
      %p61 = scmp.eq.s32.totalorder %s20, 0
      %p62 = por %p60, %p61
      %p63 = scmp.ne.s32.totalorder %s51, %s52
      %p64 = scmp.eq.s32.totalorder %s21, 1
      %p65 = por %p63, %p64
      %p67 = scmp.ne.s32.totalorder %s52, %s66
      %p68 = scmp.eq.s32.totalorder %s21, 0
      %p69 = por %p67, %p68
      %s71 = sadd.s32 %s70, 1
      %p74 = scmp.eq.s32.totalorder %s15, 1
      %p75 = scmp.ne.s32.totalorder %s70, %s72
      %p76 = scmp.eq.s32.totalorder %s15, 0
      %p77 = por %p75, %p76
      %p78 = scmp.ne.s32.totalorder %s70, %s72
      %p79 = scmp.eq.s32.totalorder %s20, 1
      %p80 = por %p78, %p79
      %p81 = scmp.ne.s32.totalorder %s72, %s73
      %p82 = scmp.eq.s32.totalorder %s20, 0
      %p83 = por %p81, %p82
      %p84 = scmp.ne.s32.totalorder %s72, %s73
      %p85 = scmp.eq.s32.totalorder %s21, 1
      %p86 = por %p84, %p85
      %p88 = scmp.ne.s32.totalorder %s73, %s87
      %p89 = scmp.eq.s32.totalorder %s21, 0
      %p90 = por %p88, %p89
      %s92 = sadd.s32 %s91, 1
      %p95 = scmp.eq.s32.totalorder %s15, 1
      %p96 = scmp.ne.s32.totalorder %s91, %s93
      %p97 = scmp.eq.s32.totalorder %s15, 0
      %p98 = por %p96, %p97
      %p99 = scmp.ne.s32.totalorder %s91, %s93
      %p100 = scmp.eq.s32.totalorder %s20, 1
      %p101 = por %p99, %p100
      %p102 = scmp.ne.s32.totalorder %s93, %s94
      %p103 = scmp.eq.s32.totalorder %s20, 0
      %p104 = por %p102, %p103
      %p105 = scmp.ne.s32.totalorder %s93, %s94
      %p106 = scmp.eq.s32.totalorder %s21, 1
      %p107 = por %p105, %p106
      %p109 = scmp.ne.s32.totalorder %s94, %s108
      %p110 = scmp.eq.s32.totalorder %s21, 0
      %p111 = por %p109, %p110
      %s113 = sadd.s32 %s112, 1
      %p116 = scmp.eq.s32.totalorder %s15, 1
      %p117 = scmp.ne.s32.totalorder %s112, %s114
      %p118 = scmp.eq.s32.totalorder %s15, 0
      %p119 = por %p117, %p118
      %p120 = scmp.ne.s32.totalorder %s112, %s114
      %p121 = scmp.eq.s32.totalorder %s20, 1
      %p122 = por %p120, %p121
      %p123 = scmp.ne.s32.totalorder %s114, %s115
      %p124 = scmp.eq.s32.totalorder %s20, 0
      %p125 = por %p123, %p124
      %p126 = scmp.ne.s32.totalorder %s114, %s115
      %p127 = scmp.eq.s32.totalorder %s21, 1
      %p128 = por %p126, %p127
      %p130 = scmp.ne.s32.totalorder %s115, %s129
      %p131 = scmp.eq.s32.totalorder %s21, 0
      %p132 = por %p130, %p131
      %s134 = sadd.s32 %s133, 1
      %p137 = scmp.eq.s32.totalorder %s15, 1
      %p138 = scmp.ne.s32.totalorder %s133, %s135
      %p139 = scmp.eq.s32.totalorder %s15, 0
      %p140 = por %p138, %p139
      %p141 = scmp.ne.s32.totalorder %s133, %s135
      %p142 = scmp.eq.s32.totalorder %s20, 1
      %p143 = por %p141, %p142
      %p144 = scmp.ne.s32.totalorder %s135, %s136
      %p145 = scmp.eq.s32.totalorder %s20, 0
      %p146 = por %p144, %p145
      %p147 = scmp.ne.s32.totalorder %s135, %s136
      %p148 = scmp.eq.s32.totalorder %s21, 1
      %p149 = por %p147, %p148
      %p151 = scmp.ne.s32.totalorder %s136, %s150
      %p152 = scmp.eq.s32.totalorder %s21, 0
      %p153 = por %p151, %p152
      %s154 = ssub.s32 %s15, %s22
      %p155 = scmp.eq.s32.totalorder %s154, 0
      %s157 = sadd.s32 %s156, 1
      %s158 = scalar_select %p155, %s156, %s157
      %p161 = pneg %p155
      %p162 = scmp.eq.s32.totalorder %s15, 1
      %p163 = por %p161, %p162
      %p164 = scmp.ne.s32.totalorder %s156, %s159
      %p165 = scmp.eq.s32.totalorder %s15, 0
      %p166 = por %p164, %p165
      %p167 = scmp.ne.s32.totalorder %s156, %s159
      %p168 = scmp.eq.s32.totalorder %s20, 1
      %p169 = por %p167, %p168
      %p170 = scmp.ne.s32.totalorder %s159, %s160
      %p171 = scmp.eq.s32.totalorder %s20, 0
      %p172 = por %p170, %p171
      %p173 = scmp.ne.s32.totalorder %s159, %s160
      %p174 = scmp.eq.s32.totalorder %s21, 1
      %p175 = por %p173, %p174
      %p177 = scmp.ne.s32.totalorder %s160, %s176
      %p178 = scmp.eq.s32.totalorder %s21, 0
      %p179 = por %p177, %p178
      %p180 = scmp.le.s32.totalorder 1, %s15
      %p181 = scmp.lt.s32.totalorder %s15, 3
      %p182 = pnand %p180, %p181
      %p183 = pneg %p182
      // Predicated region
      $region9: #{densenet_forward.27} parent=5 // pred_check
        _
      $region10: #{densenet_forward.27} parent=5 // pred_check_branch
        %185 = sbr.rel (%p182) target = $region12
      $region11: #{densenet_forward.27} parent=5 // pred_region
        %s186 = ssub.s32 %s15, 1
        // Predicated region
        $region13: #{densenet_forward.27} parent=11 // pred_check
          %p187 = pneg %p62
        $region14: #{densenet_forward.27} parent=11 // pred_check_branch
          %189 = sbr.rel (%p187) target = $region16
        $region15: #{densenet_forward.27} parent=11 // pred_region
          _
        $region16: #{densenet_forward.27} parent=11 // pred_fallthru
          _
        // Predicated region
        $region17: #{densenet_forward.27} parent=11 // pred_check
          %p190 = pneg %p83
        $region18: #{densenet_forward.27} parent=11 // pred_check_branch
          %192 = sbr.rel (%p190) target = $region20
        $region19: #{densenet_forward.27} parent=11 // pred_region
          _
        $region20: #{densenet_forward.27} parent=11 // pred_fallthru
          _
        // Predicated region
        $region21: #{densenet_forward.27} parent=11 // pred_check
          %p193 = pneg %p104
        $region22: #{densenet_forward.27} parent=11 // pred_check_branch
          %195 = sbr.rel (%p193) target = $region24
        $region23: #{densenet_forward.27} parent=11 // pred_region
          _
        $region24: #{densenet_forward.27} parent=11 // pred_fallthru
          _
        // Predicated region
        $region25: #{densenet_forward.27} parent=11 // pred_check
          %p196 = pneg %p125
        $region26: #{densenet_forward.27} parent=11 // pred_check_branch
          %198 = sbr.rel (%p196) target = $region28
        $region27: #{densenet_forward.27} parent=11 // pred_region
          _
        $region28: #{densenet_forward.27} parent=11 // pred_fallthru
          _
        // Predicated region
        $region29: #{densenet_forward.27} parent=11 // pred_check
          %p199 = pneg %p146
        $region30: #{densenet_forward.27} parent=11 // pred_check_branch
          %201 = sbr.rel (%p199) target = $region32
        $region31: #{densenet_forward.27} parent=11 // pred_region
          _
        $region32: #{densenet_forward.27} parent=11 // pred_fallthru
          _
      $region12: #{densenet_forward.27} parent=5 // pred_fallthru
        _
      %p202 = scmp.lt.s32.totalorder %s15, 2
      // Predicated region
      $region33: #{densenet_forward.27} parent=5 // pred_check
        %p203 = pneg %p202
      $region34: #{densenet_forward.27} parent=5 // pred_check_branch
        %205 = sbr.rel (%p203) target = $region36
      $region35: #{densenet_forward.27} parent=5 // pred_region
        // Predicated region
        $region37: #{densenet_forward.27} parent=35 // pred_check
          %p206 = pneg %p35
        $region38: #{densenet_forward.27} parent=35 // pred_check_branch
          %208 = sbr.rel (%p206) target = $region40
        $region39: #{densenet_forward.27} parent=35 // pred_region
          %p209 = scmp.lt.s32.totalorder %s15, 1
          %s210 = scalar_select %p209, %s15, 1
          %s211 = smul.addr %s210, 5
          %s212 = smul.addr %s211, 8
          %s213 = scalar_lea.vmem %s0, %s212
        $region40: #{densenet_forward.27} parent=35 // pred_fallthru
          _
      $region36: #{densenet_forward.27} parent=5 // pred_fallthru
        _
      %p214 = scmp.le.s32.totalorder 1, %s15
      %p215 = scmp.lt.s32.totalorder %s15, 3
      %p216 = pnand %p214, %p215
      %p217 = pneg %p216
      // Predicated region
      $region41: #{densenet_forward.27} parent=5 // pred_check
        _
      $region42: #{densenet_forward.27} parent=5 // pred_check_branch
        %219 = sbr.rel (%p216) target = $region44
      $region43: #{densenet_forward.27} parent=5 // pred_region
        %s220 = ssub.s32 %s15, 1
        %p221 = scmp.lt.s32.totalorder %s20, 1
        %s222 = scalar_select %p221, %s20, 1
        %s223 = smul.addr %s222, 5
        %s224 = smul.addr %s223, 8
        %s225 = scalar_lea.vmem %s0, %s224
        %p226 = pneg %p41
        %p227 = pneg %p38
        %p228 = pneg %p62
        %p229 = pneg %p59
        %p230 = pneg %p83
        %p231 = pneg %p80
        %p232 = pneg %p104
        %p233 = pneg %p101
        %p234 = pneg %p125
        %p235 = pneg %p122
        %p236 = pneg %p146
        %p237 = pneg %p143
        %p238 = pneg %p172
        %p239 = pneg %p169
        %s240 = sand.u32 %s159, 1
        %s241 = scalar_lea.sflag [#allocation3], %s240
        %s242 = sand.u32 %s159, 1
        %s243 = scalar_lea.vmem [#allocation2], %s242
        %p244 = scmp.lt.s32.totalorder %s20, 1
        %s245 = scalar_select %p244, %s20, 1
        %s246 = smul.addr %s245, 5
        %s247 = smul.addr %s246, 8
        %s248 = scalar_lea.vmem %s0, %s247
        %v249 = vld [vmem:[%s248] sm:$0xff]
        %v250 = vld [vmem:[%s248 + $0x8] sm:$0xff]
        %v251 = vld [vmem:[%s248 + $0x10] sm:$0xff]
        %v252 = vld [vmem:[%s248 + $0x18] sm:$0xff]
        %v253 = vld [vmem:[%s248 + $0x20] sm:$0xf]
        %v254 = vld [vmem:[%s2] sm:$0x1]
        %v256 = vlaneseq
        %v257 = vshrl.u32 %v256, 7
        %v258 = vsub.s32 0, %v257
        %v259 = vrot.slane %v254, %v258
        %v261 = vmul.f32 %v249, %v259
        %v262 = vmul.f32 %v250, %v259
        %v263 = vmul.f32 %v251, %v259
        %v264 = vmul.f32 %v252, %v259
        %v265 = vmul.f32 %v253, %v259
        %v266 = vld [vmem:[%s3] sm:$0x1]
        %v268 = vlaneseq
        %v269 = vshrl.u32 %v268, 7
        %v270 = vsub.s32 0, %v269
        %v271 = vrot.slane %v266, %v270
        %v273 = vadd.f32 %v261, %v271
        %v274 = vadd.f32 %v262, %v271
        %v275 = vadd.f32 %v263, %v271
        %v276 = vadd.f32 %v264, %v271
        %v277 = vadd.f32 %v265, %v271
        %v278 = vmax.f32 %v273, 0.0
        %v279 = vmax.f32 %v274, 0.0
        %v280 = vmax.f32 %v275, 0.0
        %v281 = vmax.f32 %v276, 0.0
        %v282 = vmax.f32 %v277, 0.0
        %v283 = vld [vmem:[%s1] sm:$0xff]
        %v284 = vld [vmem:[%s1 + $0x8] sm:$0xff]
        %v285 = vld [vmem:[%s1 + $0x10] sm:$0xff]
        %v286 = vld [vmem:[%s1 + $0x18] sm:$0xff]
        %v287 = vld [vmem:[%s1 + $0x20] sm:$0xf]
        %289 = vset.pattern.permute.xlu0 0
        %290 = vperm.xlu0 %289, %v283
        %v291 = vpop.permute.xlu0 %290
        %294 = vset.pattern.permute.xlu0 0
        %295 = vperm.xlu0 %294, %v284
        %v296 = vpop.permute.xlu0 %295
        %299 = vset.pattern.permute.xlu0 0
        %300 = vperm.xlu0 %299, %v285
        %v301 = vpop.permute.xlu0 %300
        %304 = vset.pattern.permute.xlu0 0
        %305 = vperm.xlu0 %304, %v286
        %v306 = vpop.permute.xlu0 %305
        %309 = vset.pattern.permute.xlu0 0
        %310 = vperm.xlu0 %309, %v287
        %v311 = vpop.permute.xlu0 %310
        %v313 = vmul.f32 %v278, %v291
        %v314 = vmul.f32 %v279, %v296
        %v315 = vmul.f32 %v280, %v301
        %v316 = vmul.f32 %v281, %v306
        %v317 = vmul.f32 %v282, %v311
        %vm318 = vcmask 261120
        %v319 = vsel %vm318, %v313, 0.0
        %v320 = vsel %vm318, %v314, 0.0
        %v321 = vadd.f32 %v319, %v320
        %v322 = vsel %vm318, %v315, 0.0
        %v323 = vadd.f32 %v321, %v322
        %v324 = vsel %vm318, %v316, 0.0
        %v325 = vadd.f32 %v323, %v324
        %vm326 = vcmask 257024
        %v327 = vsel %vm326, %v317, 0.0
        %v328 = vadd.f32 %v325, %v327
        %v329 = vrot.slane %v328, 4
        %v330 = vadd.f32 %v328, %v329
        %v331 = vrot.slane %v330, 2
        %v332 = vadd.f32 %v330, %v331
        %v333 = vrot.slane %v332, 1
        %v334 = vadd.f32 %v332, %v333
        %v335 = vmul.f32 %v334, 0.0625
        %v336 = vld [vmem:[%s4] sm:$0xff]
        %v337 = vld [vmem:[%s4 + $0x8] sm:$0xff]
        %v338 = vld [vmem:[%s4 + $0x10] sm:$0xff]
        %v339 = vld [vmem:[%s4 + $0x18] sm:$0xff]
        %v340 = vld [vmem:[%s5] sm:$0x1]
        %v342 = vsel %vm318, %v335, 0
        %344 = vmatprep.subr.mxu0 0.0
        %345 = vmatpush1.msra.mxu0 %v336
        %346 = vmatprep.subr.mxu0 0.0
        %347 = vmatpush1.msra.mxu0 %v337
        %348 = vmatprep.subr.mxu0 0.0
        %349 = vmatpush1.msra.mxu0 %v338
        %350 = vmatprep.subr.mxu0 0.0
        %351 = vmatpush1.msra.mxu0 %v339
        %352 = vmatprep.subr.mxu0 0.0
        %353 = vmatpush1.msra.mxu0 0.0
        %354 = vmatprep.subr.mxu0 0.0
        %355 = vmatpush1.msra.mxu0 0.0
        %356 = vmatprep.subr.mxu0 0.0
        %357 = vmatpush1.msra.mxu0 0.0
        %358 = vmatprep.subr.mxu0 0.0
        %359 = vmatpush1.msra.mxu0 0.0
        %360 = vmatprep.subr.mxu0 0.0
        %361 = vmatpush1.msra.mxu0 0.0
        %362 = vmatprep.subr.mxu0 0.0
        %363 = vmatpush1.msra.mxu0 0.0
        %364 = vmatprep.subr.mxu0 0.0
        %365 = vmatpush1.msra.mxu0 0.0
        %366 = vmatprep.subr.mxu0 0.0
        %367 = vmatpush1.msra.mxu0 0.0
        %368 = vmatprep.subr.mxu0 0.0
        %369 = vmatpush1.msra.mxu0 0.0
        %370 = vmatprep.subr.mxu0 0.0
        %371 = vmatpush1.msra.mxu0 0.0
        %372 = vmatprep.subr.mxu0 0.0
        %373 = vmatpush1.msra.mxu0 0.0
        %374 = vmatprep.subr.mxu0 0.0
        %375 = vmatpush1.msra.mxu0 0.0
        %376 = vmatprep.subr.mxu0 0.0
        %377 = vmatpush1.msra.mxu0 0.0
        %378 = vmatprep.subr.mxu0 0.0
        %379 = vmatpush1.msra.mxu0 0.0
        %380 = vmatprep.subr.mxu0 0.0
        %381 = vmatpush1.msra.mxu0 0.0
        %382 = vmatprep.subr.mxu0 0.0
        %383 = vmatpush1.msra.mxu0 0.0
        %384 = vmatprep.subr.mxu0 0.0
        %385 = vmatpush1.msra.mxu0 0.0
        %386 = vmatprep.subr.mxu0 0.0
        %387 = vmatpush1.msra.mxu0 0.0
        %388 = vmatprep.subr.mxu0 0.0
        %389 = vmatpush1.msra.mxu0 0.0
        %390 = vmatprep.subr.mxu0 0.0
        %391 = vmatpush1.msra.mxu0 0.0
        %392 = vmatprep.subr.mxu0 0.0
        %393 = vmatpush1.msra.mxu0 0.0
        %394 = vmatprep.subr.mxu0 0.0
        %395 = vmatpush1.msra.mxu0 0.0
        %396 = vmatprep.subr.mxu0 0.0
        %397 = vmatpush1.msra.mxu0 0.0
        %398 = vmatprep.subr.mxu0 0.0
        %399 = vmatpush1.msra.mxu0 0.0
        %400 = vmatprep.subr.mxu0 0.0
        %401 = vmatpush1.msra.mxu0 0.0
        %402 = vmatprep.subr.mxu0 0.0
        %403 = vmatpush1.msra.mxu0 0.0
        %404 = vmatprep.subr.mxu0 0.0
        %405 = vmatpush1.msra.mxu0 0.0
        %406 = vmatprep.subr.mxu0 0.0
        %407 = vmatpush1.msra.mxu0 0.0
        %408 = vmatprep.mubr.f32.mxu0 0.0
        %409 = vmatmul.mubr.f32.gmra.mrb[0].mxu0 %v342
        %v410 = vpop.f32.mrb[0].mxu0
        %v411 = vadd.f32 %v340, %v410
        %v412 = vpop.f32.mrb[0].mxu0
        %413 = vdwg.mxu0
        %vm414 = vcmask 131072
        %415 = vst.msk [vmem:[%s243] sm:$0x1] %vm414, %v411
        %s416 = sand.u32 %s159, 1
        %s417 = scalar_lea.sflag [#allocation3], %s416
        %s418 = sand.u32 %s159, 1
        %s419 = scalar_lea.vmem [#allocation2], %s418
        // Predicated region
        $region45: #{densenet_forward.27} parent=43 // pred_check
          %p420 = pneg %p169
        $region46: #{densenet_forward.27} parent=43 // pred_check_branch
          %422 = sbr.rel (%p420) target = $region48
        $region47: #{densenet_forward.27} parent=43 // pred_region
          %s424 = ssub.s32 16, 16
          %425 = vsyncadd %s417, %s424
          %s426 = smul.addr %s20, 16
          %s427 = scalar_lea.hbm %s6, %s426
          %s429 = sshll.u32 %s419, 4
          %s430 = int_to_ptr.vmem [resolvable:$true] %s429
          %432 = dma.vmem_to_hbm [thread:$0]  %s430, 16, %s427, %s417
        $region48: #{densenet_forward.27} parent=43 // pred_fallthru
          _
      $region44: #{densenet_forward.27} parent=5 // pred_fallthru
        _
      %p433 = scmp.le.s32.totalorder 2, %s15
      // Predicated region
      $region49: #{densenet_forward.27} parent=5 // pred_check
        %p434 = pneg %p433
      $region50: #{densenet_forward.27} parent=5 // pred_check_branch
        %436 = sbr.rel (%p434) target = $region52
      $region51: #{densenet_forward.27} parent=5 // pred_region
        %s437 = ssub.s32 %s15, 2
        // Predicated region
        $region53: #{densenet_forward.27} parent=51 // pred_check
          %p438 = pneg %p175
        $region54: #{densenet_forward.27} parent=51 // pred_check_branch
          %440 = sbr.rel (%p438) target = $region56
        $region55: #{densenet_forward.27} parent=51 // pred_region
          %s441 = sand.u32 %s160, 1
          %s442 = scalar_lea.sflag [#allocation3], %s441
          %s443 = sand.u32 %s160, 1
          %s444 = scalar_lea.vmem [#allocation2], %s443
          %445 = dma.done %s442, 16
        $region56: #{densenet_forward.27} parent=51 // pred_fallthru
          _
      $region52: #{densenet_forward.27} parent=5 // pred_fallthru
        _
    $region6: #{densenet_forward.27} parent=1 // loop_footer
      %s19 = sadd.s32 1, %s15
    $region7: #{densenet_forward.27} parent=1 // loop_footer_branch
      %14 = sbr.rel target = $region3
    $region8: #{densenet_forward.27} parent=1 // loop_exit
      _
    %446 = vsyncpa [#allocation3], 1
    %s447 = scalar_lea.sflag [#allocation3], 1
    %448 = vsyncpa %s447, 1

</llo_original>
